<compile_context>
chip_gen: v7x
topology: tpu7x:2x2x1
jax: 0.10.0
libtpu: 0.0.40
codegen_flags: <defaults>
</compile_context>

<pallas_src>
import functools
import math

import jax
import jax.numpy as jnp
from jax.experimental import pallas as pl
from jax.experimental.pallas import tpu as pltpu

F32 = jnp.float32
BF16 = jnp.bfloat16


# ----------------------------- Pallas kernel --------------------------------

def _zero_border(pad_ref):
    """Zero only the padding a 3x3/stride-2 'same' conv on an even-sized input
    actually reads: the top row and the left column.  The interior is fully
    overwritten later; the bottom/right border is never consumed."""
    p = pad_ref.shape[0]
    pad_ref[pl.ds(0, 1), :, :] = jnp.zeros((1, p, 32), F32)
    pad_ref[:, pl.ds(0, 1), :] = jnp.zeros((p, 1, 32), F32)


def _conv_stage(pad_ref, skip_ref, wm_ref, ws_ref, b_ref):
    """relu( conv3x3_s2(pad) + skip_patches @ ws + merged_bias ) -> (g*g, 32) f32.

    pad_ref : (2g+2, 2g+2, 32) f32  zero-border-padded input activation
    skip_ref: (g*g, 32)        bf16 pre-extracted skip patches (K 27 -> 32)
    wm_ref  : (288, 32)        bf16 main weights, rows ordered (ky, kx, cin)
    ws_ref  : (32, 32)         bf16 skip weights (rows zero-padded)
    b_ref   : (1, 32)          f32  merged bias (b_main + b_skip - const)
    """
    g = (pad_ref.shape[0] - 2) // 2
    m = g * g

    # Skip branch + merged bias initialise the accumulator ("10th tap").
    acc = jnp.dot(skip_ref[...], ws_ref[...], preferred_element_type=F32)
    acc = acc + b_ref[...]

    # 3x3/stride-2 conv = 9 whole-slab matmul accumulations.
    for kx in range(3):
        # Column stride-2: one sublane-strided ref load per kx.
        col = pad_ref[:, pl.ds(kx, g, stride=2), :]        # (2g+2, g, 32) f32
        # Row stride-2: split rows by parity with a leading-dim-only reshape,
        # then pick the needed contiguous band per ky (value-level, no stride).
        colr = col.reshape(g + 1, 2, g, 32)
        even = colr[:, 0, :, :]                            # pad rows 0,2,...,2g
        odd = colr[:, 1, :, :]                             # pad rows 1,3,...,2g+1
        slabs = (even[0:g], odd[0:g], even[1:g + 1])       # ky = 0, 1, 2
        for ky in range(3):
            lhs = slabs[ky].reshape(m, 32).astype(BF16)
            w_blk = wm_ref[pl.ds(32 * (3 * ky + kx), 32), :]
            acc = acc + jnp.dot(lhs, w_blk, preferred_element_type=F32)

    return jnp.maximum(acc, 0.0)


def _fused_net_kernel(p1_ref, w1_ref, b1_ref,
                      s2_ref, wm2_ref, ws2_ref, b2_ref,
                      s3_ref, wm3_ref, ws3_ref, b3_ref,
                      s4_ref, wm4_ref, ws4_ref, b4_ref,
                      s5_ref, wm5_ref, ws5_ref, b5_ref,
                      o_ref,
                      pad1, pad2, pad3, pad4):
    """Whole network in one kernel invocation; intermediates stay in VMEM."""
    # Border-only zeroing of the padded activation scratches.
    for z in (pad1, pad2, pad3, pad4):
        _zero_border(z)

    # ---- Stage 1: relu(conv1(x1) + conv9(x3) - 2) --------------------------
    # Main + skip patches are merged along K (27+27 -> 64) in the wrapper.
    # Process M in chunks of 8 output image rows and store each chunk straight
    # into pad1's interior (bounds vreg pressure, writes each row once).
    h0 = pad1.shape[0] - 2
    for c in range(h0 // 8):
        v = jnp.dot(p1_ref[pl.ds(c * 8 * h0, 8 * h0), :], w1_ref[...],
                    preferred_element_type=F32)
        v = jnp.maximum(v + b1_ref[...], 0.0)              # (8*h0, 32)
        pad1[pl.ds(1 + 8 * c, 8), pl.ds(1, h0), :] = v.reshape(8, h0, 32)

    # ---- Stage 2: relu(conv2(v3)  + conv8(x2)      - 0.3) ------------------
    g = h0 // 2
    pad2[pl.ds(1, g), pl.ds(1, g), :] = _conv_stage(
        pad1, s2_ref, wm2_ref, ws2_ref, b2_ref).reshape(g, g, 32)
    # ---- Stage 3: relu(conv3(v6)  + conv7(ds4(x1)) - 0.7) ------------------
    g //= 2
    pad3[pl.ds(1, g), pl.ds(1, g), :] = _conv_stage(
        pad2, s3_ref, wm3_ref, ws3_ref, b3_ref).reshape(g, g, 32)
    # ---- Stage 4: relu(conv4(v9)  + conv6(ds8(x3)) - 1.2) ------------------
    g //= 2
    pad4[pl.ds(1, g), pl.ds(1, g), :] = _conv_stage(
        pad3, s4_ref, wm4_ref, ws4_ref, b4_ref).reshape(g, g, 32)
    # ---- Stage 5: relu(conv5(v12) + conv9(ds8(x2)) - 1.8) + 1.5 ------------
    o_ref[...] = _conv_stage(pad4, s5_ref, wm5_ref, ws5_ref, b5_ref) + 1.5


def fused_net(p1, w1, b1, s2, wm2, ws2, b2, s3, wm3, ws3, b3,
              s4, wm4, ws4, b4, s5, wm5, ws5, b5):
    """Single pallas_call for the whole 5-stage network.  Returns (m5, 32)."""
    h0 = math.isqrt(p1.shape[0])          # first-stage output spatial extent
    assert h0 * h0 == p1.shape[0] and h0 % 16 == 0
    hs = [h0, h0 // 2, h0 // 4, h0 // 8, h0 // 16]     # 32,16,8,4,2

    args = (p1, w1, b1, s2, wm2, ws2, b2, s3, wm3, ws3, b3,
            s4, wm4, ws4, b4, s5, wm5, ws5, b5)
    vmem_spec = pl.BlockSpec(memory_space=pltpu.MemorySpace.VMEM)

    return pl.pallas_call(
        _fused_net_kernel,
        out_shape=jax.ShapeDtypeStruct((hs[4] * hs[4], 32), F32),
        in_specs=[vmem_spec] * len(args),
        out_specs=vmem_spec,
        scratch_shapes=[
            pltpu.VMEM((hs[0] + 2, hs[0] + 2, 32), F32),   # v3  padded
            pltpu.VMEM((hs[1] + 2, hs[1] + 2, 32), F32),   # v6  padded
            pltpu.VMEM((hs[2] + 2, hs[2] + 2, 32), F32),   # v9  padded
            pltpu.VMEM((hs[3] + 2, hs[3] + 2, 32), F32),   # v12 padded
        ],
    )(*args)


# ------------------------------- JAX glue ------------------------------------

def extract_patches(x_nhwc, k=3, stride=2, pad=1):
    """im2col for a 3x3/stride-2/pad-1 conv -> (N*Ho*Wo, k*k*C), cols (ky,kx,c)."""
    n, h, w, c = x_nhwc.shape
    xp = jnp.pad(x_nhwc, ((0, 0), (pad, pad), (pad, pad), (0, 0)))
    ho = (h + 2 * pad - k) // stride + 1
    wo = (w + 2 * pad - k) // stride + 1
    cols = [xp[:, ky:ky + stride * ho:stride, kx:kx + stride * wo:stride, :]
            for ky in range(k) for kx in range(k)]
    return jnp.concatenate(cols, axis=-1).reshape(n * ho * wo, k * k * c)


def avg_downsample(x_nhwc, f):
    if f == 1:
        return x_nhwc
    n, h, w, c = x_nhwc.shape
    return x_nhwc.reshape(n, h // f, f, w // f, f, c).mean(axis=(2, 4))


def init_conv(key, cin, cout, k=3):
    """Deterministic init mirroring torch Conv2d default (U[-1/sqrt(fan_in),.])."""
    kw, kb = jax.random.split(key)
    fan_in = cin * k * k
    bound = 1.0 / math.sqrt(fan_in)
    w = jax.random.uniform(kw, (k, k, cin, cout), F32, -bound, bound)
    b = jax.random.uniform(kb, (1, cout), F32, -bound, bound)
    return w.reshape(k * k * cin, cout), b          # rows ordered (ky, kx, cin)


def model_forward(params, x1_nchw, x2_nchw, x3_nchw):
    assert x1_nchw.shape[0] == 1            # kernel handles batch 1
    x1 = jnp.transpose(x1_nchw, (0, 2, 3, 1))
    x2 = jnp.transpose(x2_nchw, (0, 2, 3, 1))
    x3 = jnp.transpose(x3_nchw, (0, 2, 3, 1))

    # Stage 1: main (conv1 on x1) and skip (conv9 on x3) merged along K.
    wm1, bm1 = params["conv1"]
    ws9, bs9 = params["conv9"]
    pm1 = extract_patches(x1)                              # (M1, 27)
    ps1 = extract_patches(x3)                              # (M1, 27)
    p1 = jnp.concatenate([pm1, ps1], axis=1)               # (M1, 54)
    p1 = jnp.pad(p1, ((0, 0), (0, 64 - p1.shape[1]))).astype(BF16)
    w1 = jnp.concatenate(
        [wm1, ws9,
         jnp.zeros((64 - wm1.shape[0] - ws9.shape[0], 32), F32)],
        axis=0).astype(BF16)
    b1 = (bm1 + bs9 - 2.0).astype(F32)

    def skip_prep(x_skip, main_p, skip_p, sub_c):
        """Skip patches / weights zero-padded to K=32, bf16, plus merged bias."""
        wm, bm = main_p
        ws, bs = skip_p
        ps = extract_patches(x_skip)                                   # (M, 27)
        ps = jnp.pad(ps, ((0, 0), (0, 32 - ps.shape[1]))).astype(BF16)
        wsp = jnp.pad(ws, ((0, 32 - ws.shape[0]), (0, 0))).astype(BF16)
        return ps, wm.astype(BF16), wsp, (bm + bs - sub_c).astype(F32)

    s2, wm2, ws2, b2 = skip_prep(x2, params["conv2"], params["conv8"], 0.3)
    s3, wm3, ws3, b3 = skip_prep(avg_downsample(x1, 4),
                                 params["conv3"], params["conv7"], 0.7)
    s4, wm4, ws4, b4 = skip_prep(avg_downsample(x3, 8),
                                 params["conv4"], params["conv6"], 1.2)
    s5, wm5, ws5, b5 = skip_prep(avg_downsample(x2, 8),
                                 params["conv5"], params["conv9"], 1.8)

    out = fused_net(p1, w1, b1, s2, wm2, ws2, b2, s3, wm3, ws3, b3,
                    s4, wm4, ws4, b4, s5, wm5, ws5, b5)    # (m5, 32)

    ho = x1.shape[1] // 32
    out = out.reshape(1, ho, ho, 32)
    return jnp.transpose(out, (0, 3, 1, 2))        # back to NCHW


def model_forward_ref(params, x1_nchw, x2_nchw, x3_nchw):
    """Pure-JAX (XLA, f32) reference with identical conv/weight conventions."""
    def to_nhwc(x):
        return jnp.transpose(x, (0, 2, 3, 1))

    def conv(x_nhwc, p):
        w, b = p
        n, h, wd, _ = x_nhwc.shape
        out = extract_patches(x_nhwc) @ w + b
        return out.reshape(n, h // 2, wd // 2, -1)

    relu = lambda t: jnp.maximum(t, 0.0)
    x1, x2, x3 = to_nhwc(x1_nchw), to_nhwc(x2_nchw), to_nhwc(x3_nchw)
    v3 = relu(conv(x1, params["conv1"]) + conv(x3, params["conv9"]) - 2.0)
    v6 = relu(conv(v3, params["conv2"]) + conv(x2, params["conv8"]) - 0.3)
    v9 = relu(conv(v6, params["conv3"])
              + conv(avg_downsample(x1, 4), params["conv7"]) - 0.7)
    v12 = relu(conv(v9, params["conv4"])
               + conv(avg_downsample(x3, 8), params["conv6"]) - 1.2)
    v16 = relu(conv(v12, params["conv5"])
               + conv(avg_downsample(x2, 8), params["conv9"]) - 1.8) + 1.5
    return jnp.transpose(v16, (0, 3, 1, 2))


# --------------------------------- main ---------------------------------------

if __name__ == "__main__":
    key = jax.random.PRNGKey(0)
    keys = jax.random.split(key, 12)

    params = {
        "conv1": init_conv(keys[0], 3, 32),
        "conv2": init_conv(keys[1], 32, 32),
        "conv3": init_conv(keys[2], 32, 32),
        "conv4": init_conv(keys[3], 32, 32),
        "conv5": init_conv(keys[4], 32, 32),
        # TODO(synk): conv6..conv9 are declared with in_channels=32 in the
        # original module but applied to 3-channel raw inputs; use in_channels=3.
        "conv6": init_conv(keys[5], 3, 32),
        "conv7": init_conv(keys[6], 3, 32),
        "conv8": init_conv(keys[7], 3, 32),
        "conv9": init_conv(keys[8], 3, 32),
    }

    # Small shapes consistent with the module's 128/64 structure (halved twice).
    x1 = jax.random.normal(keys[9], (1, 3, 64, 64), F32)
    x2 = jax.random.normal(keys[10], (1, 3, 32, 32), F32)
    x3 = jax.random.normal(keys[11], (1, 3, 64, 64), F32)

    fwd = jax.jit(functools.partial(model_forward, params))
    out = fwd(x1, x2, x3)
    jax.block_until_ready(out)

    ref = jax.jit(functools.partial(model_forward_ref, params))(x1, x2, x3)
    ref = jax.block_until_ready(ref)

    assert out.shape == (1, 32, 2, 2), out.shape
    assert out.dtype == jnp.float32
    assert jnp.allclose(out, ref, atol=5e-2, rtol=5e-2), \
        float(jnp.max(jnp.abs(out - ref)))
    print("KERNEL_OK")
</pallas_src>

<mosaic_0001>
module attributes {stable_mosaic.version = 11 : i64} {
  func.func @_fused_net_kernel(%arg0: memref<1024x64xbf16, #tpu.memory_space<vmem>>, %arg1: memref<64x32xbf16, #tpu.memory_space<vmem>>, %arg2: memref<1x32xf32, #tpu.memory_space<vmem>>, %arg3: memref<256x32xbf16, #tpu.memory_space<vmem>>, %arg4: memref<288x32xbf16, #tpu.memory_space<vmem>>, %arg5: memref<32x32xbf16, #tpu.memory_space<vmem>>, %arg6: memref<1x32xf32, #tpu.memory_space<vmem>>, %arg7: memref<64x32xbf16, #tpu.memory_space<vmem>>, %arg8: memref<288x32xbf16, #tpu.memory_space<vmem>>, %arg9: memref<32x32xbf16, #tpu.memory_space<vmem>>, %arg10: memref<1x32xf32, #tpu.memory_space<vmem>>, %arg11: memref<16x32xbf16, #tpu.memory_space<vmem>>, %arg12: memref<288x32xbf16, #tpu.memory_space<vmem>>, %arg13: memref<32x32xbf16, #tpu.memory_space<vmem>>, %arg14: memref<1x32xf32, #tpu.memory_space<vmem>>, %arg15: memref<4x32xbf16, #tpu.memory_space<vmem>>, %arg16: memref<288x32xbf16, #tpu.memory_space<vmem>>, %arg17: memref<32x32xbf16, #tpu.memory_space<vmem>>, %arg18: memref<1x32xf32, #tpu.memory_space<vmem>>, %arg19: memref<4x32xf32, #tpu.memory_space<vmem>>, %arg20: memref<34x34x32xf32, #tpu.memory_space<vmem>>, %arg21: memref<18x18x32xf32, #tpu.memory_space<vmem>>, %arg22: memref<10x10x32xf32, #tpu.memory_space<vmem>>, %arg23: memref<6x6x32xf32, #tpu.memory_space<vmem>>) attributes {dimension_semantics = [], scalar_prefetch = 0 : i64, scratch_operands = 4 : i64, tpu.core_type = #tpu.core_type<tc>} {
    %cst = arith.constant 0.000000e+00 : f32
    %0 = vector.broadcast %cst : f32 to vector<1x34x32xf32>
    %c0 = arith.constant 0 : index
    %c0_0 = arith.constant 0 : index
    %c0_1 = arith.constant 0 : index
    %1 = vector.load %arg20[%c0, %c0_0, %c0_1] : memref<34x34x32xf32, #tpu.memory_space<vmem>>, vector<1x34x32xf32>
    tpu.vector_store %arg20[%c0, %c0_0, %c0_1], %0 {strides = array<i32>} : memref<34x34x32xf32, #tpu.memory_space<vmem>>, vector<1x34x32xf32>,
    %cst_2 = arith.constant 0.000000e+00 : f32
    %2 = vector.broadcast %cst_2 : f32 to vector<34x1x32xf32>
    %c0_3 = arith.constant 0 : index
    %c0_4 = arith.constant 0 : index
    %c0_5 = arith.constant 0 : index
    %3 = vector.load %arg20[%c0_3, %c0_4, %c0_5] : memref<34x34x32xf32, #tpu.memory_space<vmem>>, vector<34x1x32xf32>
    tpu.vector_store %arg20[%c0_3, %c0_4, %c0_5], %2 {strides = array<i32>} : memref<34x34x32xf32, #tpu.memory_space<vmem>>, vector<34x1x32xf32>,
    %cst_6 = arith.constant 0.000000e+00 : f32
    %4 = vector.broadcast %cst_6 : f32 to vector<1x18x32xf32>
    %c0_7 = arith.constant 0 : index
    %c0_8 = arith.constant 0 : index
    %c0_9 = arith.constant 0 : index
    %5 = vector.load %arg21[%c0_7, %c0_8, %c0_9] : memref<18x18x32xf32, #tpu.memory_space<vmem>>, vector<1x18x32xf32>
    tpu.vector_store %arg21[%c0_7, %c0_8, %c0_9], %4 {strides = array<i32>} : memref<18x18x32xf32, #tpu.memory_space<vmem>>, vector<1x18x32xf32>,
    %cst_10 = arith.constant 0.000000e+00 : f32
    %6 = vector.broadcast %cst_10 : f32 to vector<18x1x32xf32>
    %c0_11 = arith.constant 0 : index
    %c0_12 = arith.constant 0 : index
    %c0_13 = arith.constant 0 : index
    %7 = vector.load %arg21[%c0_11, %c0_12, %c0_13] : memref<18x18x32xf32, #tpu.memory_space<vmem>>, vector<18x1x32xf32>
    tpu.vector_store %arg21[%c0_11, %c0_12, %c0_13], %6 {strides = array<i32>} : memref<18x18x32xf32, #tpu.memory_space<vmem>>, vector<18x1x32xf32>,
    %cst_14 = arith.constant 0.000000e+00 : f32
    %8 = vector.broadcast %cst_14 : f32 to vector<1x10x32xf32>
    %c0_15 = arith.constant 0 : index
    %c0_16 = arith.constant 0 : index
    %c0_17 = arith.constant 0 : index
    %9 = vector.load %arg22[%c0_15, %c0_16, %c0_17] : memref<10x10x32xf32, #tpu.memory_space<vmem>>, vector<1x10x32xf32>
    tpu.vector_store %arg22[%c0_15, %c0_16, %c0_17], %8 {strides = array<i32>} : memref<10x10x32xf32, #tpu.memory_space<vmem>>, vector<1x10x32xf32>,
    %cst_18 = arith.constant 0.000000e+00 : f32
    %10 = vector.broadcast %cst_18 : f32 to vector<10x1x32xf32>
    %c0_19 = arith.constant 0 : index
    %c0_20 = arith.constant 0 : index
    %c0_21 = arith.constant 0 : index
    %11 = vector.load %arg22[%c0_19, %c0_20, %c0_21] : memref<10x10x32xf32, #tpu.memory_space<vmem>>, vector<10x1x32xf32>
    tpu.vector_store %arg22[%c0_19, %c0_20, %c0_21], %10 {strides = array<i32>} : memref<10x10x32xf32, #tpu.memory_space<vmem>>, vector<10x1x32xf32>,
    %cst_22 = arith.constant 0.000000e+00 : f32
    %12 = vector.broadcast %cst_22 : f32 to vector<1x6x32xf32>
    %c0_23 = arith.constant 0 : index
    %c0_24 = arith.constant 0 : index
    %c0_25 = arith.constant 0 : index
    %13 = vector.load %arg23[%c0_23, %c0_24, %c0_25] : memref<6x6x32xf32, #tpu.memory_space<vmem>>, vector<1x6x32xf32>
    tpu.vector_store %arg23[%c0_23, %c0_24, %c0_25], %12 {strides = array<i32>} : memref<6x6x32xf32, #tpu.memory_space<vmem>>, vector<1x6x32xf32>,
    %cst_26 = arith.constant 0.000000e+00 : f32
    %14 = vector.broadcast %cst_26 : f32 to vector<6x1x32xf32>
    %c0_27 = arith.constant 0 : index
    %c0_28 = arith.constant 0 : index
    %c0_29 = arith.constant 0 : index
    %15 = vector.load %arg23[%c0_27, %c0_28, %c0_29] : memref<6x6x32xf32, #tpu.memory_space<vmem>>, vector<6x1x32xf32>
    tpu.vector_store %arg23[%c0_27, %c0_28, %c0_29], %14 {strides = array<i32>} : memref<6x6x32xf32, #tpu.memory_space<vmem>>, vector<6x1x32xf32>,
    %c0_30 = arith.constant 0 : index
    %c0_31 = arith.constant 0 : index
    %16 = vector.load %arg0[%c0_30, %c0_31] : memref<1024x64xbf16, #tpu.memory_space<vmem>>, vector<256x64xbf16>
    %c0_32 = arith.constant 0 : index
    %c0_33 = arith.constant 0 : index
    %17 = vector.load %arg1[%c0_32, %c0_33] : memref<64x32xbf16, #tpu.memory_space<vmem>>, vector<64x32xbf16>
    %cst_34 = arith.constant dense<0.000000e+00> : vector<256x32xf32>
    %18 = tpu.matmul %16, %17, %cst_34 {dimension_numbers = #tpu.dot_dimension_numbers<[1], [0], [0], [1], [0, 0, 1, 1], [], []>} : vector<256x64xbf16>, vector<64x32xbf16>, vector<256x32xf32> -> vector<256x32xf32>
    %c0_35 = arith.constant 0 : index
    %c0_36 = arith.constant 0 : index
    %19 = vector.load %arg2[%c0_35, %c0_36] : memref<1x32xf32, #tpu.memory_space<vmem>>, vector<1x32xf32>
    %20 = vector.broadcast %19 : vector<1x32xf32> to vector<256x32xf32>
    %21 = arith.addf %18, %20 : vector<256x32xf32>
    %cst_37 = arith.constant 0.000000e+00 : f32
    %22 = vector.broadcast %cst_37 : f32 to vector<256x32xf32>
    %23 = arith.maximumf %21, %22 : vector<256x32xf32>
    %24 = vector.shape_cast %23 : vector<256x32xf32> to vector<8x32x32xf32>
    %c1 = arith.constant 1 : index
    %c1_38 = arith.constant 1 : index
    %c0_39 = arith.constant 0 : index
    %25 = vector.load %arg20[%c1, %c1_38, %c0_39] : memref<34x34x32xf32, #tpu.memory_space<vmem>>, vector<8x32x32xf32>
    tpu.vector_store %arg20[%c1, %c1_38, %c0_39], %24 {strides = array<i32>} : memref<34x34x32xf32, #tpu.memory_space<vmem>>, vector<8x32x32xf32>,
    %c256 = arith.constant 256 : index
    %c0_40 = arith.constant 0 : index
    %26 = vector.load %arg0[%c256, %c0_40] : memref<1024x64xbf16, #tpu.memory_space<vmem>>, vector<256x64xbf16>
    %c0_41 = arith.constant 0 : index
    %c0_42 = arith.constant 0 : index
    %27 = vector.load %arg1[%c0_41, %c0_42] : memref<64x32xbf16, #tpu.memory_space<vmem>>, vector<64x32xbf16>
    %cst_43 = arith.constant dense<0.000000e+00> : vector<256x32xf32>
    %28 = tpu.matmul %26, %27, %cst_43 {dimension_numbers = #tpu.dot_dimension_numbers<[1], [0], [0], [1], [0, 0, 1, 1], [], []>} : vector<256x64xbf16>, vector<64x32xbf16>, vector<256x32xf32> -> vector<256x32xf32>
    %c0_44 = arith.constant 0 : index
    %c0_45 = arith.constant 0 : index
    %29 = vector.load %arg2[%c0_44, %c0_45] : memref<1x32xf32, #tpu.memory_space<vmem>>, vector<1x32xf32>
    %30 = vector.broadcast %29 : vector<1x32xf32> to vector<256x32xf32>
    %31 = arith.addf %28, %30 : vector<256x32xf32>
    %cst_46 = arith.constant 0.000000e+00 : f32
    %32 = vector.broadcast %cst_46 : f32 to vector<256x32xf32>
    %33 = arith.maximumf %31, %32 : vector<256x32xf32>
    %34 = vector.shape_cast %33 : vector<256x32xf32> to vector<8x32x32xf32>
    %c9 = arith.constant 9 : index
    %c1_47 = arith.constant 1 : index
    %c0_48 = arith.constant 0 : index
    %35 = vector.load %arg20[%c9, %c1_47, %c0_48] : memref<34x34x32xf32, #tpu.memory_space<vmem>>, vector<8x32x32xf32>
    tpu.vector_store %arg20[%c9, %c1_47, %c0_48], %34 {strides = array<i32>} : memref<34x34x32xf32, #tpu.memory_space<vmem>>, vector<8x32x32xf32>,
    %c512 = arith.constant 512 : index
    %c0_49 = arith.constant 0 : index
    %36 = vector.load %arg0[%c512, %c0_49] : memref<1024x64xbf16, #tpu.memory_space<vmem>>, vector<256x64xbf16>
    %c0_50 = arith.constant 0 : index
    %c0_51 = arith.constant 0 : index
    %37 = vector.load %arg1[%c0_50, %c0_51] : memref<64x32xbf16, #tpu.memory_space<vmem>>, vector<64x32xbf16>
    %cst_52 = arith.constant dense<0.000000e+00> : vector<256x32xf32>
    %38 = tpu.matmul %36, %37, %cst_52 {dimension_numbers = #tpu.dot_dimension_numbers<[1], [0], [0], [1], [0, 0, 1, 1], [], []>} : vector<256x64xbf16>, vector<64x32xbf16>, vector<256x32xf32> -> vector<256x32xf32>
    %c0_53 = arith.constant 0 : index
    %c0_54 = arith.constant 0 : index
    %39 = vector.load %arg2[%c0_53, %c0_54] : memref<1x32xf32, #tpu.memory_space<vmem>>, vector<1x32xf32>
    %40 = vector.broadcast %39 : vector<1x32xf32> to vector<256x32xf32>
    %41 = arith.addf %38, %40 : vector<256x32xf32>
    %cst_55 = arith.constant 0.000000e+00 : f32
    %42 = vector.broadcast %cst_55 : f32 to vector<256x32xf32>
    %43 = arith.maximumf %41, %42 : vector<256x32xf32>
    %44 = vector.shape_cast %43 : vector<256x32xf32> to vector<8x32x32xf32>
    %c17 = arith.constant 17 : index
    %c1_56 = arith.constant 1 : index
    %c0_57 = arith.constant 0 : index
    %45 = vector.load %arg20[%c17, %c1_56, %c0_57] : memref<34x34x32xf32, #tpu.memory_space<vmem>>, vector<8x32x32xf32>
    tpu.vector_store %arg20[%c17, %c1_56, %c0_57], %44 {strides = array<i32>} : memref<34x34x32xf32, #tpu.memory_space<vmem>>, vector<8x32x32xf32>,
    %c768 = arith.constant 768 : index
    %c0_58 = arith.constant 0 : index
    %46 = vector.load %arg0[%c768, %c0_58] : memref<1024x64xbf16, #tpu.memory_space<vmem>>, vector<256x64xbf16>
    %c0_59 = arith.constant 0 : index
    %c0_60 = arith.constant 0 : index
    %47 = vector.load %arg1[%c0_59, %c0_60] : memref<64x32xbf16, #tpu.memory_space<vmem>>, vector<64x32xbf16>
    %cst_61 = arith.constant dense<0.000000e+00> : vector<256x32xf32>
    %48 = tpu.matmul %46, %47, %cst_61 {dimension_numbers = #tpu.dot_dimension_numbers<[1], [0], [0], [1], [0, 0, 1, 1], [], []>} : vector<256x64xbf16>, vector<64x32xbf16>, vector<256x32xf32> -> vector<256x32xf32>
    %c0_62 = arith.constant 0 : index
    %c0_63 = arith.constant 0 : index
    %49 = vector.load %arg2[%c0_62, %c0_63] : memref<1x32xf32, #tpu.memory_space<vmem>>, vector<1x32xf32>
    %50 = vector.broadcast %49 : vector<1x32xf32> to vector<256x32xf32>
    %51 = arith.addf %48, %50 : vector<256x32xf32>
    %cst_64 = arith.constant 0.000000e+00 : f32
    %52 = vector.broadcast %cst_64 : f32 to vector<256x32xf32>
    %53 = arith.maximumf %51, %52 : vector<256x32xf32>
    %54 = vector.shape_cast %53 : vector<256x32xf32> to vector<8x32x32xf32>
    %c25 = arith.constant 25 : index
    %c1_65 = arith.constant 1 : index
    %c0_66 = arith.constant 0 : index
    %55 = vector.load %arg20[%c25, %c1_65, %c0_66] : memref<34x34x32xf32, #tpu.memory_space<vmem>>, vector<8x32x32xf32>
    tpu.vector_store %arg20[%c25, %c1_65, %c0_66], %54 {strides = array<i32>} : memref<34x34x32xf32, #tpu.memory_space<vmem>>, vector<8x32x32xf32>,
    %c0_67 = arith.constant 0 : index
    %c0_68 = arith.constant 0 : index
    %56 = vector.load %arg3[%c0_67, %c0_68] : memref<256x32xbf16, #tpu.memory_space<vmem>>, vector<256x32xbf16>
    %c0_69 = arith.constant 0 : index
    %c0_70 = arith.constant 0 : index
    %57 = vector.load %arg5[%c0_69, %c0_70] : memref<32x32xbf16, #tpu.memory_space<vmem>>, vector<32x32xbf16>
    %cst_71 = arith.constant dense<0.000000e+00> : vector<256x32xf32>
    %58 = tpu.matmul %56, %57, %cst_71 {dimension_numbers = #tpu.dot_dimension_numbers<[1], [0], [0], [1], [0, 0, 1, 1], [], []>} : vector<256x32xbf16>, vector<32x32xbf16>, vector<256x32xf32> -> vector<256x32xf32>
    %c0_72 = arith.constant 0 : index
    %c0_73 = arith.constant 0 : index
    %59 = vector.load %arg6[%c0_72, %c0_73] : memref<1x32xf32, #tpu.memory_space<vmem>>, vector<1x32xf32>
    %60 = vector.broadcast %59 : vector<1x32xf32> to vector<256x32xf32>
    %61 = arith.addf %58, %60 : vector<256x32xf32>
    %c0_74 = arith.constant 0 : index
    %c0_75 = arith.constant 0 : index
    %c0_76 = arith.constant 0 : index
    %62 = tpu.strided_load %arg20[%c0_74, %c0_75, %c0_76] {strides = array<i32: 1, 2, 1>} : memref<34x34x32xf32, #tpu.memory_space<vmem>>, vector<34x16x32xf32>
    %63 = vector.shape_cast %62 : vector<34x16x32xf32> to vector<17x2x16x32xf32>
    %64 = vector.extract_strided_slice %63 {offsets = [0, 0, 0, 0], sizes = [17, 1, 16, 32], strides = [1, 1, 1, 1]} : vector<17x2x16x32xf32> to vector<17x1x16x32xf32>
    %65 = vector.shape_cast %64 : vector<17x1x16x32xf32> to vector<17x16x32xf32>
    %66 = vector.extract_strided_slice %63 {offsets = [0, 1, 0, 0], sizes = [17, 1, 16, 32], strides = [1, 1, 1, 1]} : vector<17x2x16x32xf32> to vector<17x1x16x32xf32>
    %67 = vector.shape_cast %66 : vector<17x1x16x32xf32> to vector<17x16x32xf32>
    %68 = vector.extract_strided_slice %65 {offsets = [0, 0, 0], sizes = [16, 16, 32], strides = [1, 1, 1]} : vector<17x16x32xf32> to vector<16x16x32xf32>
    %69 = vector.extract_strided_slice %67 {offsets = [0, 0, 0], sizes = [16, 16, 32], strides = [1, 1, 1]} : vector<17x16x32xf32> to vector<16x16x32xf32>
    %70 = vector.extract_strided_slice %65 {offsets = [1, 0, 0], sizes = [16, 16, 32], strides = [1, 1, 1]} : vector<17x16x32xf32> to vector<16x16x32xf32>
    %71 = vector.shape_cast %68 : vector<16x16x32xf32> to vector<256x32xf32>
    %72 = arith.truncf %71 : vector<256x32xf32> to vector<256x32xbf16>
    %c0_77 = arith.constant 0 : index
    %c0_78 = arith.constant 0 : index
    %73 = vector.load %arg4[%c0_77, %c0_78] : memref<288x32xbf16, #tpu.memory_space<vmem>>, vector<32x32xbf16>
    %cst_79 = arith.constant dense<0.000000e+00> : vector<256x32xf32>
    %74 = tpu.matmul %72, %73, %cst_79 {dimension_numbers = #tpu.dot_dimension_numbers<[1], [0], [0], [1], [0, 0, 1, 1], [], []>} : vector<256x32xbf16>, vector<32x32xbf16>, vector<256x32xf32> -> vector<256x32xf32>
    %75 = arith.addf %61, %74 : vector<256x32xf32>
    %76 = vector.shape_cast %69 : vector<16x16x32xf32> to vector<256x32xf32>
    %77 = arith.truncf %76 : vector<256x32xf32> to vector<256x32xbf16>
    %c96 = arith.constant 96 : index
    %c0_80 = arith.constant 0 : index
    %78 = vector.load %arg4[%c96, %c0_80] : memref<288x32xbf16, #tpu.memory_space<vmem>>, vector<32x32xbf16>
    %cst_81 = arith.constant dense<0.000000e+00> : vector<256x32xf32>
    %79 = tpu.matmul %77, %78, %cst_81 {dimension_numbers = #tpu.dot_dimension_numbers<[1], [0], [0], [1], [0, 0, 1, 1], [], []>} : vector<256x32xbf16>, vector<32x32xbf16>, vector<256x32xf32> -> vector<256x32xf32>
    %80 = arith.addf %75, %79 : vector<256x32xf32>
    %81 = vector.shape_cast %70 : vector<16x16x32xf32> to vector<256x32xf32>
    %82 = arith.truncf %81 : vector<256x32xf32> to vector<256x32xbf16>
    %c192 = arith.constant 192 : index
    %c0_82 = arith.constant 0 : index
    %83 = vector.load %arg4[%c192, %c0_82] : memref<288x32xbf16, #tpu.memory_space<vmem>>, vector<32x32xbf16>
    %cst_83 = arith.constant dense<0.000000e+00> : vector<256x32xf32>
    %84 = tpu.matmul %82, %83, %cst_83 {dimension_numbers = #tpu.dot_dimension_numbers<[1], [0], [0], [1], [0, 0, 1, 1], [], []>} : vector<256x32xbf16>, vector<32x32xbf16>, vector<256x32xf32> -> vector<256x32xf32>
    %85 = arith.addf %80, %84 : vector<256x32xf32>
    %c0_84 = arith.constant 0 : index
    %c1_85 = arith.constant 1 : index
    %c0_86 = arith.constant 0 : index
    %86 = tpu.strided_load %arg20[%c0_84, %c1_85, %c0_86] {strides = array<i32: 1, 2, 1>} : memref<34x34x32xf32, #tpu.memory_space<vmem>>, vector<34x16x32xf32>
    %87 = vector.shape_cast %86 : vector<34x16x32xf32> to vector<17x2x16x32xf32>
    %88 = vector.extract_strided_slice %87 {offsets = [0, 0, 0, 0], sizes = [17, 1, 16, 32], strides = [1, 1, 1, 1]} : vector<17x2x16x32xf32> to vector<17x1x16x32xf32>
    %89 = vector.shape_cast %88 : vector<17x1x16x32xf32> to vector<17x16x32xf32>
    %90 = vector.extract_strided_slice %87 {offsets = [0, 1, 0, 0], sizes = [17, 1, 16, 32], strides = [1, 1, 1, 1]} : vector<17x2x16x32xf32> to vector<17x1x16x32xf32>
    %91 = vector.shape_cast %90 : vector<17x1x16x32xf32> to vector<17x16x32xf32>
    %92 = vector.extract_strided_slice %89 {offsets = [0, 0, 0], sizes = [16, 16, 32], strides = [1, 1, 1]} : vector<17x16x32xf32> to vector<16x16x32xf32>
    %93 = vector.extract_strided_slice %91 {offsets = [0, 0, 0], sizes = [16, 16, 32], strides = [1, 1, 1]} : vector<17x16x32xf32> to vector<16x16x32xf32>
    %94 = vector.extract_strided_slice %89 {offsets = [1, 0, 0], sizes = [16, 16, 32], strides = [1, 1, 1]} : vector<17x16x32xf32> to vector<16x16x32xf32>
    %95 = vector.shape_cast %92 : vector<16x16x32xf32> to vector<256x32xf32>
    %96 = arith.truncf %95 : vector<256x32xf32> to vector<256x32xbf16>
    %c32 = arith.constant 32 : index
    %c0_87 = arith.constant 0 : index
    %97 = vector.load %arg4[%c32, %c0_87] : memref<288x32xbf16, #tpu.memory_space<vmem>>, vector<32x32xbf16>
    %cst_88 = arith.constant dense<0.000000e+00> : vector<256x32xf32>
    %98 = tpu.matmul %96, %97, %cst_88 {dimension_numbers = #tpu.dot_dimension_numbers<[1], [0], [0], [1], [0, 0, 1, 1], [], []>} : vector<256x32xbf16>, vector<32x32xbf16>, vector<256x32xf32> -> vector<256x32xf32>
    %99 = arith.addf %85, %98 : vector<256x32xf32>
    %100 = vector.shape_cast %93 : vector<16x16x32xf32> to vector<256x32xf32>
    %101 = arith.truncf %100 : vector<256x32xf32> to vector<256x32xbf16>
    %c128 = arith.constant 128 : index
    %c0_89 = arith.constant 0 : index
    %102 = vector.load %arg4[%c128, %c0_89] : memref<288x32xbf16, #tpu.memory_space<vmem>>, vector<32x32xbf16>
    %cst_90 = arith.constant dense<0.000000e+00> : vector<256x32xf32>
    %103 = tpu.matmul %101, %102, %cst_90 {dimension_numbers = #tpu.dot_dimension_numbers<[1], [0], [0], [1], [0, 0, 1, 1], [], []>} : vector<256x32xbf16>, vector<32x32xbf16>, vector<256x32xf32> -> vector<256x32xf32>
    %104 = arith.addf %99, %103 : vector<256x32xf32>
    %105 = vector.shape_cast %94 : vector<16x16x32xf32> to vector<256x32xf32>
    %106 = arith.truncf %105 : vector<256x32xf32> to vector<256x32xbf16>
    %c224 = arith.constant 224 : index
    %c0_91 = arith.constant 0 : index
    %107 = vector.load %arg4[%c224, %c0_91] : memref<288x32xbf16, #tpu.memory_space<vmem>>, vector<32x32xbf16>
    %cst_92 = arith.constant dense<0.000000e+00> : vector<256x32xf32>
    %108 = tpu.matmul %106, %107, %cst_92 {dimension_numbers = #tpu.dot_dimension_numbers<[1], [0], [0], [1], [0, 0, 1, 1], [], []>} : vector<256x32xbf16>, vector<32x32xbf16>, vector<256x32xf32> -> vector<256x32xf32>
    %109 = arith.addf %104, %108 : vector<256x32xf32>
    %c0_93 = arith.constant 0 : index
    %c2 = arith.constant 2 : index
    %c0_94 = arith.constant 0 : index
    %110 = tpu.strided_load %arg20[%c0_93, %c2, %c0_94] {strides = array<i32: 1, 2, 1>} : memref<34x34x32xf32, #tpu.memory_space<vmem>>, vector<34x16x32xf32>
    %111 = vector.shape_cast %110 : vector<34x16x32xf32> to vector<17x2x16x32xf32>
    %112 = vector.extract_strided_slice %111 {offsets = [0, 0, 0, 0], sizes = [17, 1, 16, 32], strides = [1, 1, 1, 1]} : vector<17x2x16x32xf32> to vector<17x1x16x32xf32>
    %113 = vector.shape_cast %112 : vector<17x1x16x32xf32> to vector<17x16x32xf32>
    %114 = vector.extract_strided_slice %111 {offsets = [0, 1, 0, 0], sizes = [17, 1, 16, 32], strides = [1, 1, 1, 1]} : vector<17x2x16x32xf32> to vector<17x1x16x32xf32>
    %115 = vector.shape_cast %114 : vector<17x1x16x32xf32> to vector<17x16x32xf32>
    %116 = vector.extract_strided_slice %113 {offsets = [0, 0, 0], sizes = [16, 16, 32], strides = [1, 1, 1]} : vector<17x16x32xf32> to vector<16x16x32xf32>
    %117 = vector.extract_strided_slice %115 {offsets = [0, 0, 0], sizes = [16, 16, 32], strides = [1, 1, 1]} : vector<17x16x32xf32> to vector<16x16x32xf32>
    %118 = vector.extract_strided_slice %113 {offsets = [1, 0, 0], sizes = [16, 16, 32], strides = [1, 1, 1]} : vector<17x16x32xf32> to vector<16x16x32xf32>
    %119 = vector.shape_cast %116 : vector<16x16x32xf32> to vector<256x32xf32>
    %120 = arith.truncf %119 : vector<256x32xf32> to vector<256x32xbf16>
    %c64 = arith.constant 64 : index
    %c0_95 = arith.constant 0 : index
    %121 = vector.load %arg4[%c64, %c0_95] : memref<288x32xbf16, #tpu.memory_space<vmem>>, vector<32x32xbf16>
    %cst_96 = arith.constant dense<0.000000e+00> : vector<256x32xf32>
    %122 = tpu.matmul %120, %121, %cst_96 {dimension_numbers = #tpu.dot_dimension_numbers<[1], [0], [0], [1], [0, 0, 1, 1], [], []>} : vector<256x32xbf16>, vector<32x32xbf16>, vector<256x32xf32> -> vector<256x32xf32>
    %123 = arith.addf %109, %122 : vector<256x32xf32>
    %124 = vector.shape_cast %117 : vector<16x16x32xf32> to vector<256x32xf32>
    %125 = arith.truncf %124 : vector<256x32xf32> to vector<256x32xbf16>
    %c160 = arith.constant 160 : index
    %c0_97 = arith.constant 0 : index
    %126 = vector.load %arg4[%c160, %c0_97] : memref<288x32xbf16, #tpu.memory_space<vmem>>, vector<32x32xbf16>
    %cst_98 = arith.constant dense<0.000000e+00> : vector<256x32xf32>
    %127 = tpu.matmul %125, %126, %cst_98 {dimension_numbers = #tpu.dot_dimension_numbers<[1], [0], [0], [1], [0, 0, 1, 1], [], []>} : vector<256x32xbf16>, vector<32x32xbf16>, vector<256x32xf32> -> vector<256x32xf32>
    %128 = arith.addf %123, %127 : vector<256x32xf32>
    %129 = vector.shape_cast %118 : vector<16x16x32xf32> to vector<256x32xf32>
    %130 = arith.truncf %129 : vector<256x32xf32> to vector<256x32xbf16>
    %c256_99 = arith.constant 256 : index
    %c0_100 = arith.constant 0 : index
    %131 = vector.load %arg4[%c256_99, %c0_100] : memref<288x32xbf16, #tpu.memory_space<vmem>>, vector<32x32xbf16>
    %cst_101 = arith.constant dense<0.000000e+00> : vector<256x32xf32>
    %132 = tpu.matmul %130, %131, %cst_101 {dimension_numbers = #tpu.dot_dimension_numbers<[1], [0], [0], [1], [0, 0, 1, 1], [], []>} : vector<256x32xbf16>, vector<32x32xbf16>, vector<256x32xf32> -> vector<256x32xf32>
    %133 = arith.addf %128, %132 : vector<256x32xf32>
    %cst_102 = arith.constant 0.000000e+00 : f32
    %134 = vector.broadcast %cst_102 : f32 to vector<256x32xf32>
    %135 = arith.maximumf %133, %134 : vector<256x32xf32>
    %136 = vector.shape_cast %135 : vector<256x32xf32> to vector<16x16x32xf32>
    %c1_103 = arith.constant 1 : index
    %c1_104 = arith.constant 1 : index
    %c0_105 = arith.constant 0 : index
    %137 = vector.load %arg21[%c1_103, %c1_104, %c0_105] : memref<18x18x32xf32, #tpu.memory_space<vmem>>, vector<16x16x32xf32>
    tpu.vector_store %arg21[%c1_103, %c1_104, %c0_105], %136 {strides = array<i32>} : memref<18x18x32xf32, #tpu.memory_space<vmem>>, vector<16x16x32xf32>,
    %c0_106 = arith.constant 0 : index
    %c0_107 = arith.constant 0 : index
    %138 = vector.load %arg7[%c0_106, %c0_107] : memref<64x32xbf16, #tpu.memory_space<vmem>>, vector<64x32xbf16>
    %c0_108 = arith.constant 0 : index
    %c0_109 = arith.constant 0 : index
    %139 = vector.load %arg9[%c0_108, %c0_109] : memref<32x32xbf16, #tpu.memory_space<vmem>>, vector<32x32xbf16>
    %cst_110 = arith.constant dense<0.000000e+00> : vector<64x32xf32>
    %140 = tpu.matmul %138, %139, %cst_110 {dimension_numbers = #tpu.dot_dimension_numbers<[1], [0], [0], [1], [0, 0, 1, 1], [], []>} : vector<64x32xbf16>, vector<32x32xbf16>, vector<64x32xf32> -> vector<64x32xf32>
    %c0_111 = arith.constant 0 : index
    %c0_112 = arith.constant 0 : index
    %141 = vector.load %arg10[%c0_111, %c0_112] : memref<1x32xf32, #tpu.memory_space<vmem>>, vector<1x32xf32>
    %142 = vector.broadcast %141 : vector<1x32xf32> to vector<64x32xf32>
    %143 = arith.addf %140, %142 : vector<64x32xf32>
    %c0_113 = arith.constant 0 : index
    %c0_114 = arith.constant 0 : index
    %c0_115 = arith.constant 0 : index
    %144 = tpu.strided_load %arg21[%c0_113, %c0_114, %c0_115] {strides = array<i32: 1, 2, 1>} : memref<18x18x32xf32, #tpu.memory_space<vmem>>, vector<18x8x32xf32>
    %145 = vector.shape_cast %144 : vector<18x8x32xf32> to vector<9x2x8x32xf32>
    %146 = vector.extract_strided_slice %145 {offsets = [0, 0, 0, 0], sizes = [9, 1, 8, 32], strides = [1, 1, 1, 1]} : vector<9x2x8x32xf32> to vector<9x1x8x32xf32>
    %147 = vector.shape_cast %146 : vector<9x1x8x32xf32> to vector<9x8x32xf32>
    %148 = vector.extract_strided_slice %145 {offsets = [0, 1, 0, 0], sizes = [9, 1, 8, 32], strides = [1, 1, 1, 1]} : vector<9x2x8x32xf32> to vector<9x1x8x32xf32>
    %149 = vector.shape_cast %148 : vector<9x1x8x32xf32> to vector<9x8x32xf32>
    %150 = vector.extract_strided_slice %147 {offsets = [0, 0, 0], sizes = [8, 8, 32], strides = [1, 1, 1]} : vector<9x8x32xf32> to vector<8x8x32xf32>
    %151 = vector.extract_strided_slice %149 {offsets = [0, 0, 0], sizes = [8, 8, 32], strides = [1, 1, 1]} : vector<9x8x32xf32> to vector<8x8x32xf32>
    %152 = vector.extract_strided_slice %147 {offsets = [1, 0, 0], sizes = [8, 8, 32], strides = [1, 1, 1]} : vector<9x8x32xf32> to vector<8x8x32xf32>
    %153 = vector.shape_cast %150 : vector<8x8x32xf32> to vector<64x32xf32>
    %154 = arith.truncf %153 : vector<64x32xf32> to vector<64x32xbf16>
    %c0_116 = arith.constant 0 : index
    %c0_117 = arith.constant 0 : index
    %155 = vector.load %arg8[%c0_116, %c0_117] : memref<288x32xbf16, #tpu.memory_space<vmem>>, vector<32x32xbf16>
    %cst_118 = arith.constant dense<0.000000e+00> : vector<64x32xf32>
    %156 = tpu.matmul %154, %155, %cst_118 {dimension_numbers = #tpu.dot_dimension_numbers<[1], [0], [0], [1], [0, 0, 1, 1], [], []>} : vector<64x32xbf16>, vector<32x32xbf16>, vector<64x32xf32> -> vector<64x32xf32>
    %157 = arith.addf %143, %156 : vector<64x32xf32>
    %158 = vector.shape_cast %151 : vector<8x8x32xf32> to vector<64x32xf32>
    %159 = arith.truncf %158 : vector<64x32xf32> to vector<64x32xbf16>
    %c96_119 = arith.constant 96 : index
    %c0_120 = arith.constant 0 : index
    %160 = vector.load %arg8[%c96_119, %c0_120] : memref<288x32xbf16, #tpu.memory_space<vmem>>, vector<32x32xbf16>
    %cst_121 = arith.constant dense<0.000000e+00> : vector<64x32xf32>
    %161 = tpu.matmul %159, %160, %cst_121 {dimension_numbers = #tpu.dot_dimension_numbers<[1], [0], [0], [1], [0, 0, 1, 1], [], []>} : vector<64x32xbf16>, vector<32x32xbf16>, vector<64x32xf32> -> vector<64x32xf32>
    %162 = arith.addf %157, %161 : vector<64x32xf32>
    %163 = vector.shape_cast %152 : vector<8x8x32xf32> to vector<64x32xf32>
    %164 = arith.truncf %163 : vector<64x32xf32> to vector<64x32xbf16>
    %c192_122 = arith.constant 192 : index
    %c0_123 = arith.constant 0 : index
    %165 = vector.load %arg8[%c192_122, %c0_123] : memref<288x32xbf16, #tpu.memory_space<vmem>>, vector<32x32xbf16>
    %cst_124 = arith.constant dense<0.000000e+00> : vector<64x32xf32>
    %166 = tpu.matmul %164, %165, %cst_124 {dimension_numbers = #tpu.dot_dimension_numbers<[1], [0], [0], [1], [0, 0, 1, 1], [], []>} : vector<64x32xbf16>, vector<32x32xbf16>, vector<64x32xf32> -> vector<64x32xf32>
    %167 = arith.addf %162, %166 : vector<64x32xf32>
    %c0_125 = arith.constant 0 : index
    %c1_126 = arith.constant 1 : index
    %c0_127 = arith.constant 0 : index
    %168 = tpu.strided_load %arg21[%c0_125, %c1_126, %c0_127] {strides = array<i32: 1, 2, 1>} : memref<18x18x32xf32, #tpu.memory_space<vmem>>, vector<18x8x32xf32>
    %169 = vector.shape_cast %168 : vector<18x8x32xf32> to vector<9x2x8x32xf32>
    %170 = vector.extract_strided_slice %169 {offsets = [0, 0, 0, 0], sizes = [9, 1, 8, 32], strides = [1, 1, 1, 1]} : vector<9x2x8x32xf32> to vector<9x1x8x32xf32>
    %171 = vector.shape_cast %170 : vector<9x1x8x32xf32> to vector<9x8x32xf32>
    %172 = vector.extract_strided_slice %169 {offsets = [0, 1, 0, 0], sizes = [9, 1, 8, 32], strides = [1, 1, 1, 1]} : vector<9x2x8x32xf32> to vector<9x1x8x32xf32>
    %173 = vector.shape_cast %172 : vector<9x1x8x32xf32> to vector<9x8x32xf32>
    %174 = vector.extract_strided_slice %171 {offsets = [0, 0, 0], sizes = [8, 8, 32], strides = [1, 1, 1]} : vector<9x8x32xf32> to vector<8x8x32xf32>
    %175 = vector.extract_strided_slice %173 {offsets = [0, 0, 0], sizes = [8, 8, 32], strides = [1, 1, 1]} : vector<9x8x32xf32> to vector<8x8x32xf32>
    %176 = vector.extract_strided_slice %171 {offsets = [1, 0, 0], sizes = [8, 8, 32], strides = [1, 1, 1]} : vector<9x8x32xf32> to vector<8x8x32xf32>
    %177 = vector.shape_cast %174 : vector<8x8x32xf32> to vector<64x32xf32>
    %178 = arith.truncf %177 : vector<64x32xf32> to vector<64x32xbf16>
    %c32_128 = arith.constant 32 : index
    %c0_129 = arith.constant 0 : index
    %179 = vector.load %arg8[%c32_128, %c0_129] : memref<288x32xbf16, #tpu.memory_space<vmem>>, vector<32x32xbf16>
    %cst_130 = arith.constant dense<0.000000e+00> : vector<64x32xf32>
    %180 = tpu.matmul %178, %179, %cst_130 {dimension_numbers = #tpu.dot_dimension_numbers<[1], [0], [0], [1], [0, 0, 1, 1], [], []>} : vector<64x32xbf16>, vector<32x32xbf16>, vector<64x32xf32> -> vector<64x32xf32>
    %181 = arith.addf %167, %180 : vector<64x32xf32>
    %182 = vector.shape_cast %175 : vector<8x8x32xf32> to vector<64x32xf32>
    %183 = arith.truncf %182 : vector<64x32xf32> to vector<64x32xbf16>
    %c128_131 = arith.constant 128 : index
    %c0_132 = arith.constant 0 : index
    %184 = vector.load %arg8[%c128_131, %c0_132] : memref<288x32xbf16, #tpu.memory_space<vmem>>, vector<32x32xbf16>
    %cst_133 = arith.constant dense<0.000000e+00> : vector<64x32xf32>
    %185 = tpu.matmul %183, %184, %cst_133 {dimension_numbers = #tpu.dot_dimension_numbers<[1], [0], [0], [1], [0, 0, 1, 1], [], []>} : vector<64x32xbf16>, vector<32x32xbf16>, vector<64x32xf32> -> vector<64x32xf32>
    %186 = arith.addf %181, %185 : vector<64x32xf32>
    %187 = vector.shape_cast %176 : vector<8x8x32xf32> to vector<64x32xf32>
    %188 = arith.truncf %187 : vector<64x32xf32> to vector<64x32xbf16>
    %c224_134 = arith.constant 224 : index
    %c0_135 = arith.constant 0 : index
    %189 = vector.load %arg8[%c224_134, %c0_135] : memref<288x32xbf16, #tpu.memory_space<vmem>>, vector<32x32xbf16>
    %cst_136 = arith.constant dense<0.000000e+00> : vector<64x32xf32>
    %190 = tpu.matmul %188, %189, %cst_136 {dimension_numbers = #tpu.dot_dimension_numbers<[1], [0], [0], [1], [0, 0, 1, 1], [], []>} : vector<64x32xbf16>, vector<32x32xbf16>, vector<64x32xf32> -> vector<64x32xf32>
    %191 = arith.addf %186, %190 : vector<64x32xf32>
    %c0_137 = arith.constant 0 : index
    %c2_138 = arith.constant 2 : index
    %c0_139 = arith.constant 0 : index
    %192 = tpu.strided_load %arg21[%c0_137, %c2_138, %c0_139] {strides = array<i32: 1, 2, 1>} : memref<18x18x32xf32, #tpu.memory_space<vmem>>, vector<18x8x32xf32>
    %193 = vector.shape_cast %192 : vector<18x8x32xf32> to vector<9x2x8x32xf32>
    %194 = vector.extract_strided_slice %193 {offsets = [0, 0, 0, 0], sizes = [9, 1, 8, 32], strides = [1, 1, 1, 1]} : vector<9x2x8x32xf32> to vector<9x1x8x32xf32>
    %195 = vector.shape_cast %194 : vector<9x1x8x32xf32> to vector<9x8x32xf32>
    %196 = vector.extract_strided_slice %193 {offsets = [0, 1, 0, 0], sizes = [9, 1, 8, 32], strides = [1, 1, 1, 1]} : vector<9x2x8x32xf32> to vector<9x1x8x32xf32>
    %197 = vector.shape_cast %196 : vector<9x1x8x32xf32> to vector<9x8x32xf32>
    %198 = vector.extract_strided_slice %195 {offsets = [0, 0, 0], sizes = [8, 8, 32], strides = [1, 1, 1]} : vector<9x8x32xf32> to vector<8x8x32xf32>
    %199 = vector.extract_strided_slice %197 {offsets = [0, 0, 0], sizes = [8, 8, 32], strides = [1, 1, 1]} : vector<9x8x32xf32> to vector<8x8x32xf32>
    %200 = vector.extract_strided_slice %195 {offsets = [1, 0, 0], sizes = [8, 8, 32], strides = [1, 1, 1]} : vector<9x8x32xf32> to vector<8x8x32xf32>
    %201 = vector.shape_cast %198 : vector<8x8x32xf32> to vector<64x32xf32>
    %202 = arith.truncf %201 : vector<64x32xf32> to vector<64x32xbf16>
    %c64_140 = arith.constant 64 : index
    %c0_141 = arith.constant 0 : index
    %203 = vector.load %arg8[%c64_140, %c0_141] : memref<288x32xbf16, #tpu.memory_space<vmem>>, vector<32x32xbf16>
    %cst_142 = arith.constant dense<0.000000e+00> : vector<64x32xf32>
    %204 = tpu.matmul %202, %203, %cst_142 {dimension_numbers = #tpu.dot_dimension_numbers<[1], [0], [0], [1], [0, 0, 1, 1], [], []>} : vector<64x32xbf16>, vector<32x32xbf16>, vector<64x32xf32> -> vector<64x32xf32>
    %205 = arith.addf %191, %204 : vector<64x32xf32>
    %206 = vector.shape_cast %199 : vector<8x8x32xf32> to vector<64x32xf32>
    %207 = arith.truncf %206 : vector<64x32xf32> to vector<64x32xbf16>
    %c160_143 = arith.constant 160 : index
    %c0_144 = arith.constant 0 : index
    %208 = vector.load %arg8[%c160_143, %c0_144] : memref<288x32xbf16, #tpu.memory_space<vmem>>, vector<32x32xbf16>
    %cst_145 = arith.constant dense<0.000000e+00> : vector<64x32xf32>
    %209 = tpu.matmul %207, %208, %cst_145 {dimension_numbers = #tpu.dot_dimension_numbers<[1], [0], [0], [1], [0, 0, 1, 1], [], []>} : vector<64x32xbf16>, vector<32x32xbf16>, vector<64x32xf32> -> vector<64x32xf32>
    %210 = arith.addf %205, %209 : vector<64x32xf32>
    %211 = vector.shape_cast %200 : vector<8x8x32xf32> to vector<64x32xf32>
    %212 = arith.truncf %211 : vector<64x32xf32> to vector<64x32xbf16>
    %c256_146 = arith.constant 256 : index
    %c0_147 = arith.constant 0 : index
    %213 = vector.load %arg8[%c256_146, %c0_147] : memref<288x32xbf16, #tpu.memory_space<vmem>>, vector<32x32xbf16>
    %cst_148 = arith.constant dense<0.000000e+00> : vector<64x32xf32>
    %214 = tpu.matmul %212, %213, %cst_148 {dimension_numbers = #tpu.dot_dimension_numbers<[1], [0], [0], [1], [0, 0, 1, 1], [], []>} : vector<64x32xbf16>, vector<32x32xbf16>, vector<64x32xf32> -> vector<64x32xf32>
    %215 = arith.addf %210, %214 : vector<64x32xf32>
    %cst_149 = arith.constant 0.000000e+00 : f32
    %216 = vector.broadcast %cst_149 : f32 to vector<64x32xf32>
    %217 = arith.maximumf %215, %216 : vector<64x32xf32>
    %218 = vector.shape_cast %217 : vector<64x32xf32> to vector<8x8x32xf32>
    %c1_150 = arith.constant 1 : index
    %c1_151 = arith.constant 1 : index
    %c0_152 = arith.constant 0 : index
    %219 = vector.load %arg22[%c1_150, %c1_151, %c0_152] : memref<10x10x32xf32, #tpu.memory_space<vmem>>, vector<8x8x32xf32>
    tpu.vector_store %arg22[%c1_150, %c1_151, %c0_152], %218 {strides = array<i32>} : memref<10x10x32xf32, #tpu.memory_space<vmem>>, vector<8x8x32xf32>,
    %c0_153 = arith.constant 0 : index
    %c0_154 = arith.constant 0 : index
    %220 = vector.load %arg11[%c0_153, %c0_154] : memref<16x32xbf16, #tpu.memory_space<vmem>>, vector<16x32xbf16>
    %c0_155 = arith.constant 0 : index
    %c0_156 = arith.constant 0 : index
    %221 = vector.load %arg13[%c0_155, %c0_156] : memref<32x32xbf16, #tpu.memory_space<vmem>>, vector<32x32xbf16>
    %cst_157 = arith.constant dense<0.000000e+00> : vector<16x32xf32>
    %222 = tpu.matmul %220, %221, %cst_157 {dimension_numbers = #tpu.dot_dimension_numbers<[1], [0], [0], [1], [0, 0, 1, 1], [], []>} : vector<16x32xbf16>, vector<32x32xbf16>, vector<16x32xf32> -> vector<16x32xf32>
    %c0_158 = arith.constant 0 : index
    %c0_159 = arith.constant 0 : index
    %223 = vector.load %arg14[%c0_158, %c0_159] : memref<1x32xf32, #tpu.memory_space<vmem>>, vector<1x32xf32>
    %224 = vector.broadcast %223 : vector<1x32xf32> to vector<16x32xf32>
    %225 = arith.addf %222, %224 : vector<16x32xf32>
    %c0_160 = arith.constant 0 : index
    %c0_161 = arith.constant 0 : index
    %c0_162 = arith.constant 0 : index
    %226 = tpu.strided_load %arg22[%c0_160, %c0_161, %c0_162] {strides = array<i32: 1, 2, 1>} : memref<10x10x32xf32, #tpu.memory_space<vmem>>, vector<10x4x32xf32>
    %227 = vector.shape_cast %226 : vector<10x4x32xf32> to vector<5x2x4x32xf32>
    %228 = vector.extract_strided_slice %227 {offsets = [0, 0, 0, 0], sizes = [5, 1, 4, 32], strides = [1, 1, 1, 1]} : vector<5x2x4x32xf32> to vector<5x1x4x32xf32>
    %229 = vector.shape_cast %228 : vector<5x1x4x32xf32> to vector<5x4x32xf32>
    %230 = vector.extract_strided_slice %227 {offsets = [0, 1, 0, 0], sizes = [5, 1, 4, 32], strides = [1, 1, 1, 1]} : vector<5x2x4x32xf32> to vector<5x1x4x32xf32>
    %231 = vector.shape_cast %230 : vector<5x1x4x32xf32> to vector<5x4x32xf32>
    %232 = vector.extract_strided_slice %229 {offsets = [0, 0, 0], sizes = [4, 4, 32], strides = [1, 1, 1]} : vector<5x4x32xf32> to vector<4x4x32xf32>
    %233 = vector.extract_strided_slice %231 {offsets = [0, 0, 0], sizes = [4, 4, 32], strides = [1, 1, 1]} : vector<5x4x32xf32> to vector<4x4x32xf32>
    %234 = vector.extract_strided_slice %229 {offsets = [1, 0, 0], sizes = [4, 4, 32], strides = [1, 1, 1]} : vector<5x4x32xf32> to vector<4x4x32xf32>
    %235 = vector.shape_cast %232 : vector<4x4x32xf32> to vector<16x32xf32>
    %236 = arith.truncf %235 : vector<16x32xf32> to vector<16x32xbf16>
    %c0_163 = arith.constant 0 : index
    %c0_164 = arith.constant 0 : index
    %237 = vector.load %arg12[%c0_163, %c0_164] : memref<288x32xbf16, #tpu.memory_space<vmem>>, vector<32x32xbf16>
    %cst_165 = arith.constant dense<0.000000e+00> : vector<16x32xf32>
    %238 = tpu.matmul %236, %237, %cst_165 {dimension_numbers = #tpu.dot_dimension_numbers<[1], [0], [0], [1], [0, 0, 1, 1], [], []>} : vector<16x32xbf16>, vector<32x32xbf16>, vector<16x32xf32> -> vector<16x32xf32>
    %239 = arith.addf %225, %238 : vector<16x32xf32>
    %240 = vector.shape_cast %233 : vector<4x4x32xf32> to vector<16x32xf32>
    %241 = arith.truncf %240 : vector<16x32xf32> to vector<16x32xbf16>
    %c96_166 = arith.constant 96 : index
    %c0_167 = arith.constant 0 : index
    %242 = vector.load %arg12[%c96_166, %c0_167] : memref<288x32xbf16, #tpu.memory_space<vmem>>, vector<32x32xbf16>
    %cst_168 = arith.constant dense<0.000000e+00> : vector<16x32xf32>
    %243 = tpu.matmul %241, %242, %cst_168 {dimension_numbers = #tpu.dot_dimension_numbers<[1], [0], [0], [1], [0, 0, 1, 1], [], []>} : vector<16x32xbf16>, vector<32x32xbf16>, vector<16x32xf32> -> vector<16x32xf32>
    %244 = arith.addf %239, %243 : vector<16x32xf32>
    %245 = vector.shape_cast %234 : vector<4x4x32xf32> to vector<16x32xf32>
    %246 = arith.truncf %245 : vector<16x32xf32> to vector<16x32xbf16>
    %c192_169 = arith.constant 192 : index
    %c0_170 = arith.constant 0 : index
    %247 = vector.load %arg12[%c192_169, %c0_170] : memref<288x32xbf16, #tpu.memory_space<vmem>>, vector<32x32xbf16>
    %cst_171 = arith.constant dense<0.000000e+00> : vector<16x32xf32>
    %248 = tpu.matmul %246, %247, %cst_171 {dimension_numbers = #tpu.dot_dimension_numbers<[1], [0], [0], [1], [0, 0, 1, 1], [], []>} : vector<16x32xbf16>, vector<32x32xbf16>, vector<16x32xf32> -> vector<16x32xf32>
    %249 = arith.addf %244, %248 : vector<16x32xf32>
    %c0_172 = arith.constant 0 : index
    %c1_173 = arith.constant 1 : index
    %c0_174 = arith.constant 0 : index
    %250 = tpu.strided_load %arg22[%c0_172, %c1_173, %c0_174] {strides = array<i32: 1, 2, 1>} : memref<10x10x32xf32, #tpu.memory_space<vmem>>, vector<10x4x32xf32>
    %251 = vector.shape_cast %250 : vector<10x4x32xf32> to vector<5x2x4x32xf32>
    %252 = vector.extract_strided_slice %251 {offsets = [0, 0, 0, 0], sizes = [5, 1, 4, 32], strides = [1, 1, 1, 1]} : vector<5x2x4x32xf32> to vector<5x1x4x32xf32>
    %253 = vector.shape_cast %252 : vector<5x1x4x32xf32> to vector<5x4x32xf32>
    %254 = vector.extract_strided_slice %251 {offsets = [0, 1, 0, 0], sizes = [5, 1, 4, 32], strides = [1, 1, 1, 1]} : vector<5x2x4x32xf32> to vector<5x1x4x32xf32>
    %255 = vector.shape_cast %254 : vector<5x1x4x32xf32> to vector<5x4x32xf32>
    %256 = vector.extract_strided_slice %253 {offsets = [0, 0, 0], sizes = [4, 4, 32], strides = [1, 1, 1]} : vector<5x4x32xf32> to vector<4x4x32xf32>
    %257 = vector.extract_strided_slice %255 {offsets = [0, 0, 0], sizes = [4, 4, 32], strides = [1, 1, 1]} : vector<5x4x32xf32> to vector<4x4x32xf32>
    %258 = vector.extract_strided_slice %253 {offsets = [1, 0, 0], sizes = [4, 4, 32], strides = [1, 1, 1]} : vector<5x4x32xf32> to vector<4x4x32xf32>
    %259 = vector.shape_cast %256 : vector<4x4x32xf32> to vector<16x32xf32>
    %260 = arith.truncf %259 : vector<16x32xf32> to vector<16x32xbf16>
    %c32_175 = arith.constant 32 : index
    %c0_176 = arith.constant 0 : index
    %261 = vector.load %arg12[%c32_175, %c0_176] : memref<288x32xbf16, #tpu.memory_space<vmem>>, vector<32x32xbf16>
    %cst_177 = arith.constant dense<0.000000e+00> : vector<16x32xf32>
    %262 = tpu.matmul %260, %261, %cst_177 {dimension_numbers = #tpu.dot_dimension_numbers<[1], [0], [0], [1], [0, 0, 1, 1], [], []>} : vector<16x32xbf16>, vector<32x32xbf16>, vector<16x32xf32> -> vector<16x32xf32>
    %263 = arith.addf %249, %262 : vector<16x32xf32>
    %264 = vector.shape_cast %257 : vector<4x4x32xf32> to vector<16x32xf32>
    %265 = arith.truncf %264 : vector<16x32xf32> to vector<16x32xbf16>
    %c128_178 = arith.constant 128 : index
    %c0_179 = arith.constant 0 : index
    %266 = vector.load %arg12[%c128_178, %c0_179] : memref<288x32xbf16, #tpu.memory_space<vmem>>, vector<32x32xbf16>
    %cst_180 = arith.constant dense<0.000000e+00> : vector<16x32xf32>
    %267 = tpu.matmul %265, %266, %cst_180 {dimension_numbers = #tpu.dot_dimension_numbers<[1], [0], [0], [1], [0, 0, 1, 1], [], []>} : vector<16x32xbf16>, vector<32x32xbf16>, vector<16x32xf32> -> vector<16x32xf32>
    %268 = arith.addf %263, %267 : vector<16x32xf32>
    %269 = vector.shape_cast %258 : vector<4x4x32xf32> to vector<16x32xf32>
    %270 = arith.truncf %269 : vector<16x32xf32> to vector<16x32xbf16>
    %c224_181 = arith.constant 224 : index
    %c0_182 = arith.constant 0 : index
    %271 = vector.load %arg12[%c224_181, %c0_182] : memref<288x32xbf16, #tpu.memory_space<vmem>>, vector<32x32xbf16>
    %cst_183 = arith.constant dense<0.000000e+00> : vector<16x32xf32>
    %272 = tpu.matmul %270, %271, %cst_183 {dimension_numbers = #tpu.dot_dimension_numbers<[1], [0], [0], [1], [0, 0, 1, 1], [], []>} : vector<16x32xbf16>, vector<32x32xbf16>, vector<16x32xf32> -> vector<16x32xf32>
    %273 = arith.addf %268, %272 : vector<16x32xf32>
    %c0_184 = arith.constant 0 : index
    %c2_185 = arith.constant 2 : index
    %c0_186 = arith.constant 0 : index
    %274 = tpu.strided_load %arg22[%c0_184, %c2_185, %c0_186] {strides = array<i32: 1, 2, 1>} : memref<10x10x32xf32, #tpu.memory_space<vmem>>, vector<10x4x32xf32>
    %275 = vector.shape_cast %274 : vector<10x4x32xf32> to vector<5x2x4x32xf32>
    %276 = vector.extract_strided_slice %275 {offsets = [0, 0, 0, 0], sizes = [5, 1, 4, 32], strides = [1, 1, 1, 1]} : vector<5x2x4x32xf32> to vector<5x1x4x32xf32>
    %277 = vector.shape_cast %276 : vector<5x1x4x32xf32> to vector<5x4x32xf32>
    %278 = vector.extract_strided_slice %275 {offsets = [0, 1, 0, 0], sizes = [5, 1, 4, 32], strides = [1, 1, 1, 1]} : vector<5x2x4x32xf32> to vector<5x1x4x32xf32>
    %279 = vector.shape_cast %278 : vector<5x1x4x32xf32> to vector<5x4x32xf32>
    %280 = vector.extract_strided_slice %277 {offsets = [0, 0, 0], sizes = [4, 4, 32], strides = [1, 1, 1]} : vector<5x4x32xf32> to vector<4x4x32xf32>
    %281 = vector.extract_strided_slice %279 {offsets = [0, 0, 0], sizes = [4, 4, 32], strides = [1, 1, 1]} : vector<5x4x32xf32> to vector<4x4x32xf32>
    %282 = vector.extract_strided_slice %277 {offsets = [1, 0, 0], sizes = [4, 4, 32], strides = [1, 1, 1]} : vector<5x4x32xf32> to vector<4x4x32xf32>
    %283 = vector.shape_cast %280 : vector<4x4x32xf32> to vector<16x32xf32>
    %284 = arith.truncf %283 : vector<16x32xf32> to vector<16x32xbf16>
    %c64_187 = arith.constant 64 : index
    %c0_188 = arith.constant 0 : index
    %285 = vector.load %arg12[%c64_187, %c0_188] : memref<288x32xbf16, #tpu.memory_space<vmem>>, vector<32x32xbf16>
    %cst_189 = arith.constant dense<0.000000e+00> : vector<16x32xf32>
    %286 = tpu.matmul %284, %285, %cst_189 {dimension_numbers = #tpu.dot_dimension_numbers<[1], [0], [0], [1], [0, 0, 1, 1], [], []>} : vector<16x32xbf16>, vector<32x32xbf16>, vector<16x32xf32> -> vector<16x32xf32>
    %287 = arith.addf %273, %286 : vector<16x32xf32>
    %288 = vector.shape_cast %281 : vector<4x4x32xf32> to vector<16x32xf32>
    %289 = arith.truncf %288 : vector<16x32xf32> to vector<16x32xbf16>
    %c160_190 = arith.constant 160 : index
    %c0_191 = arith.constant 0 : index
    %290 = vector.load %arg12[%c160_190, %c0_191] : memref<288x32xbf16, #tpu.memory_space<vmem>>, vector<32x32xbf16>
    %cst_192 = arith.constant dense<0.000000e+00> : vector<16x32xf32>
    %291 = tpu.matmul %289, %290, %cst_192 {dimension_numbers = #tpu.dot_dimension_numbers<[1], [0], [0], [1], [0, 0, 1, 1], [], []>} : vector<16x32xbf16>, vector<32x32xbf16>, vector<16x32xf32> -> vector<16x32xf32>
    %292 = arith.addf %287, %291 : vector<16x32xf32>
    %293 = vector.shape_cast %282 : vector<4x4x32xf32> to vector<16x32xf32>
    %294 = arith.truncf %293 : vector<16x32xf32> to vector<16x32xbf16>
    %c256_193 = arith.constant 256 : index
    %c0_194 = arith.constant 0 : index
    %295 = vector.load %arg12[%c256_193, %c0_194] : memref<288x32xbf16, #tpu.memory_space<vmem>>, vector<32x32xbf16>
    %cst_195 = arith.constant dense<0.000000e+00> : vector<16x32xf32>
    %296 = tpu.matmul %294, %295, %cst_195 {dimension_numbers = #tpu.dot_dimension_numbers<[1], [0], [0], [1], [0, 0, 1, 1], [], []>} : vector<16x32xbf16>, vector<32x32xbf16>, vector<16x32xf32> -> vector<16x32xf32>
    %297 = arith.addf %292, %296 : vector<16x32xf32>
    %cst_196 = arith.constant 0.000000e+00 : f32
    %298 = vector.broadcast %cst_196 : f32 to vector<16x32xf32>
    %299 = arith.maximumf %297, %298 : vector<16x32xf32>
    %300 = vector.shape_cast %299 : vector<16x32xf32> to vector<4x4x32xf32>
    %c1_197 = arith.constant 1 : index
    %c1_198 = arith.constant 1 : index
    %c0_199 = arith.constant 0 : index
    %301 = vector.load %arg23[%c1_197, %c1_198, %c0_199] : memref<6x6x32xf32, #tpu.memory_space<vmem>>, vector<4x4x32xf32>
    tpu.vector_store %arg23[%c1_197, %c1_198, %c0_199], %300 {strides = array<i32>} : memref<6x6x32xf32, #tpu.memory_space<vmem>>, vector<4x4x32xf32>,
    %c0_200 = arith.constant 0 : index
    %c0_201 = arith.constant 0 : index
    %302 = vector.load %arg15[%c0_200, %c0_201] : memref<4x32xbf16, #tpu.memory_space<vmem>>, vector<4x32xbf16>
    %c0_202 = arith.constant 0 : index
    %c0_203 = arith.constant 0 : index
    %303 = vector.load %arg17[%c0_202, %c0_203] : memref<32x32xbf16, #tpu.memory_space<vmem>>, vector<32x32xbf16>
    %cst_204 = arith.constant dense<0.000000e+00> : vector<4x32xf32>
    %304 = tpu.matmul %302, %303, %cst_204 {dimension_numbers = #tpu.dot_dimension_numbers<[1], [0], [0], [1], [0, 0, 1, 1], [], []>} : vector<4x32xbf16>, vector<32x32xbf16>, vector<4x32xf32> -> vector<4x32xf32>
    %c0_205 = arith.constant 0 : index
    %c0_206 = arith.constant 0 : index
    %305 = vector.load %arg18[%c0_205, %c0_206] : memref<1x32xf32, #tpu.memory_space<vmem>>, vector<1x32xf32>
    %306 = vector.broadcast %305 : vector<1x32xf32> to vector<4x32xf32>
    %307 = arith.addf %304, %306 : vector<4x32xf32>
    %c0_207 = arith.constant 0 : index
    %c0_208 = arith.constant 0 : index
    %c0_209 = arith.constant 0 : index
    %308 = tpu.strided_load %arg23[%c0_207, %c0_208, %c0_209] {strides = array<i32: 1, 2, 1>} : memref<6x6x32xf32, #tpu.memory_space<vmem>>, vector<6x2x32xf32>
    %309 = vector.shape_cast %308 : vector<6x2x32xf32> to vector<3x2x2x32xf32>
    %310 = vector.extract_strided_slice %309 {offsets = [0, 0, 0, 0], sizes = [3, 1, 2, 32], strides = [1, 1, 1, 1]} : vector<3x2x2x32xf32> to vector<3x1x2x32xf32>
    %311 = vector.shape_cast %310 : vector<3x1x2x32xf32> to vector<3x2x32xf32>
    %312 = vector.extract_strided_slice %309 {offsets = [0, 1, 0, 0], sizes = [3, 1, 2, 32], strides = [1, 1, 1, 1]} : vector<3x2x2x32xf32> to vector<3x1x2x32xf32>
    %313 = vector.shape_cast %312 : vector<3x1x2x32xf32> to vector<3x2x32xf32>
    %314 = vector.extract_strided_slice %311 {offsets = [0, 0, 0], sizes = [2, 2, 32], strides = [1, 1, 1]} : vector<3x2x32xf32> to vector<2x2x32xf32>
    %315 = vector.extract_strided_slice %313 {offsets = [0, 0, 0], sizes = [2, 2, 32], strides = [1, 1, 1]} : vector<3x2x32xf32> to vector<2x2x32xf32>
    %316 = vector.extract_strided_slice %311 {offsets = [1, 0, 0], sizes = [2, 2, 32], strides = [1, 1, 1]} : vector<3x2x32xf32> to vector<2x2x32xf32>
    %317 = vector.shape_cast %314 : vector<2x2x32xf32> to vector<4x32xf32>
    %318 = arith.truncf %317 : vector<4x32xf32> to vector<4x32xbf16>
    %c0_210 = arith.constant 0 : index
    %c0_211 = arith.constant 0 : index
    %319 = vector.load %arg16[%c0_210, %c0_211] : memref<288x32xbf16, #tpu.memory_space<vmem>>, vector<32x32xbf16>
    %cst_212 = arith.constant dense<0.000000e+00> : vector<4x32xf32>
    %320 = tpu.matmul %318, %319, %cst_212 {dimension_numbers = #tpu.dot_dimension_numbers<[1], [0], [0], [1], [0, 0, 1, 1], [], []>} : vector<4x32xbf16>, vector<32x32xbf16>, vector<4x32xf32> -> vector<4x32xf32>
    %321 = arith.addf %307, %320 : vector<4x32xf32>
    %322 = vector.shape_cast %315 : vector<2x2x32xf32> to vector<4x32xf32>
    %323 = arith.truncf %322 : vector<4x32xf32> to vector<4x32xbf16>
    %c96_213 = arith.constant 96 : index
    %c0_214 = arith.constant 0 : index
    %324 = vector.load %arg16[%c96_213, %c0_214] : memref<288x32xbf16, #tpu.memory_space<vmem>>, vector<32x32xbf16>
    %cst_215 = arith.constant dense<0.000000e+00> : vector<4x32xf32>
    %325 = tpu.matmul %323, %324, %cst_215 {dimension_numbers = #tpu.dot_dimension_numbers<[1], [0], [0], [1], [0, 0, 1, 1], [], []>} : vector<4x32xbf16>, vector<32x32xbf16>, vector<4x32xf32> -> vector<4x32xf32>
    %326 = arith.addf %321, %325 : vector<4x32xf32>
    %327 = vector.shape_cast %316 : vector<2x2x32xf32> to vector<4x32xf32>
    %328 = arith.truncf %327 : vector<4x32xf32> to vector<4x32xbf16>
    %c192_216 = arith.constant 192 : index
    %c0_217 = arith.constant 0 : index
    %329 = vector.load %arg16[%c192_216, %c0_217] : memref<288x32xbf16, #tpu.memory_space<vmem>>, vector<32x32xbf16>
    %cst_218 = arith.constant dense<0.000000e+00> : vector<4x32xf32>
    %330 = tpu.matmul %328, %329, %cst_218 {dimension_numbers = #tpu.dot_dimension_numbers<[1], [0], [0], [1], [0, 0, 1, 1], [], []>} : vector<4x32xbf16>, vector<32x32xbf16>, vector<4x32xf32> -> vector<4x32xf32>
    %331 = arith.addf %326, %330 : vector<4x32xf32>
    %c0_219 = arith.constant 0 : index
    %c1_220 = arith.constant 1 : index
    %c0_221 = arith.constant 0 : index
    %332 = tpu.strided_load %arg23[%c0_219, %c1_220, %c0_221] {strides = array<i32: 1, 2, 1>} : memref<6x6x32xf32, #tpu.memory_space<vmem>>, vector<6x2x32xf32>
    %333 = vector.shape_cast %332 : vector<6x2x32xf32> to vector<3x2x2x32xf32>
    %334 = vector.extract_strided_slice %333 {offsets = [0, 0, 0, 0], sizes = [3, 1, 2, 32], strides = [1, 1, 1, 1]} : vector<3x2x2x32xf32> to vector<3x1x2x32xf32>
    %335 = vector.shape_cast %334 : vector<3x1x2x32xf32> to vector<3x2x32xf32>
    %336 = vector.extract_strided_slice %333 {offsets = [0, 1, 0, 0], sizes = [3, 1, 2, 32], strides = [1, 1, 1, 1]} : vector<3x2x2x32xf32> to vector<3x1x2x32xf32>
    %337 = vector.shape_cast %336 : vector<3x1x2x32xf32> to vector<3x2x32xf32>
    %338 = vector.extract_strided_slice %335 {offsets = [0, 0, 0], sizes = [2, 2, 32], strides = [1, 1, 1]} : vector<3x2x32xf32> to vector<2x2x32xf32>
    %339 = vector.extract_strided_slice %337 {offsets = [0, 0, 0], sizes = [2, 2, 32], strides = [1, 1, 1]} : vector<3x2x32xf32> to vector<2x2x32xf32>
    %340 = vector.extract_strided_slice %335 {offsets = [1, 0, 0], sizes = [2, 2, 32], strides = [1, 1, 1]} : vector<3x2x32xf32> to vector<2x2x32xf32>
    %341 = vector.shape_cast %338 : vector<2x2x32xf32> to vector<4x32xf32>
    %342 = arith.truncf %341 : vector<4x32xf32> to vector<4x32xbf16>
    %c32_222 = arith.constant 32 : index
    %c0_223 = arith.constant 0 : index
    %343 = vector.load %arg16[%c32_222, %c0_223] : memref<288x32xbf16, #tpu.memory_space<vmem>>, vector<32x32xbf16>
    %cst_224 = arith.constant dense<0.000000e+00> : vector<4x32xf32>
    %344 = tpu.matmul %342, %343, %cst_224 {dimension_numbers = #tpu.dot_dimension_numbers<[1], [0], [0], [1], [0, 0, 1, 1], [], []>} : vector<4x32xbf16>, vector<32x32xbf16>, vector<4x32xf32> -> vector<4x32xf32>
    %345 = arith.addf %331, %344 : vector<4x32xf32>
    %346 = vector.shape_cast %339 : vector<2x2x32xf32> to vector<4x32xf32>
    %347 = arith.truncf %346 : vector<4x32xf32> to vector<4x32xbf16>
    %c128_225 = arith.constant 128 : index
    %c0_226 = arith.constant 0 : index
    %348 = vector.load %arg16[%c128_225, %c0_226] : memref<288x32xbf16, #tpu.memory_space<vmem>>, vector<32x32xbf16>
    %cst_227 = arith.constant dense<0.000000e+00> : vector<4x32xf32>
    %349 = tpu.matmul %347, %348, %cst_227 {dimension_numbers = #tpu.dot_dimension_numbers<[1], [0], [0], [1], [0, 0, 1, 1], [], []>} : vector<4x32xbf16>, vector<32x32xbf16>, vector<4x32xf32> -> vector<4x32xf32>
    %350 = arith.addf %345, %349 : vector<4x32xf32>
    %351 = vector.shape_cast %340 : vector<2x2x32xf32> to vector<4x32xf32>
    %352 = arith.truncf %351 : vector<4x32xf32> to vector<4x32xbf16>
    %c224_228 = arith.constant 224 : index
    %c0_229 = arith.constant 0 : index
    %353 = vector.load %arg16[%c224_228, %c0_229] : memref<288x32xbf16, #tpu.memory_space<vmem>>, vector<32x32xbf16>
    %cst_230 = arith.constant dense<0.000000e+00> : vector<4x32xf32>
    %354 = tpu.matmul %352, %353, %cst_230 {dimension_numbers = #tpu.dot_dimension_numbers<[1], [0], [0], [1], [0, 0, 1, 1], [], []>} : vector<4x32xbf16>, vector<32x32xbf16>, vector<4x32xf32> -> vector<4x32xf32>
    %355 = arith.addf %350, %354 : vector<4x32xf32>
    %c0_231 = arith.constant 0 : index
    %c2_232 = arith.constant 2 : index
    %c0_233 = arith.constant 0 : index
    %356 = tpu.strided_load %arg23[%c0_231, %c2_232, %c0_233] {strides = array<i32: 1, 2, 1>} : memref<6x6x32xf32, #tpu.memory_space<vmem>>, vector<6x2x32xf32>
    %357 = vector.shape_cast %356 : vector<6x2x32xf32> to vector<3x2x2x32xf32>
    %358 = vector.extract_strided_slice %357 {offsets = [0, 0, 0, 0], sizes = [3, 1, 2, 32], strides = [1, 1, 1, 1]} : vector<3x2x2x32xf32> to vector<3x1x2x32xf32>
    %359 = vector.shape_cast %358 : vector<3x1x2x32xf32> to vector<3x2x32xf32>
    %360 = vector.extract_strided_slice %357 {offsets = [0, 1, 0, 0], sizes = [3, 1, 2, 32], strides = [1, 1, 1, 1]} : vector<3x2x2x32xf32> to vector<3x1x2x32xf32>
    %361 = vector.shape_cast %360 : vector<3x1x2x32xf32> to vector<3x2x32xf32>
    %362 = vector.extract_strided_slice %359 {offsets = [0, 0, 0], sizes = [2, 2, 32], strides = [1, 1, 1]} : vector<3x2x32xf32> to vector<2x2x32xf32>
    %363 = vector.extract_strided_slice %361 {offsets = [0, 0, 0], sizes = [2, 2, 32], strides = [1, 1, 1]} : vector<3x2x32xf32> to vector<2x2x32xf32>
    %364 = vector.extract_strided_slice %359 {offsets = [1, 0, 0], sizes = [2, 2, 32], strides = [1, 1, 1]} : vector<3x2x32xf32> to vector<2x2x32xf32>
    %365 = vector.shape_cast %362 : vector<2x2x32xf32> to vector<4x32xf32>
    %366 = arith.truncf %365 : vector<4x32xf32> to vector<4x32xbf16>
    %c64_234 = arith.constant 64 : index
    %c0_235 = arith.constant 0 : index
    %367 = vector.load %arg16[%c64_234, %c0_235] : memref<288x32xbf16, #tpu.memory_space<vmem>>, vector<32x32xbf16>
    %cst_236 = arith.constant dense<0.000000e+00> : vector<4x32xf32>
    %368 = tpu.matmul %366, %367, %cst_236 {dimension_numbers = #tpu.dot_dimension_numbers<[1], [0], [0], [1], [0, 0, 1, 1], [], []>} : vector<4x32xbf16>, vector<32x32xbf16>, vector<4x32xf32> -> vector<4x32xf32>
    %369 = arith.addf %355, %368 : vector<4x32xf32>
    %370 = vector.shape_cast %363 : vector<2x2x32xf32> to vector<4x32xf32>
    %371 = arith.truncf %370 : vector<4x32xf32> to vector<4x32xbf16>
    %c160_237 = arith.constant 160 : index
    %c0_238 = arith.constant 0 : index
    %372 = vector.load %arg16[%c160_237, %c0_238] : memref<288x32xbf16, #tpu.memory_space<vmem>>, vector<32x32xbf16>
    %cst_239 = arith.constant dense<0.000000e+00> : vector<4x32xf32>
    %373 = tpu.matmul %371, %372, %cst_239 {dimension_numbers = #tpu.dot_dimension_numbers<[1], [0], [0], [1], [0, 0, 1, 1], [], []>} : vector<4x32xbf16>, vector<32x32xbf16>, vector<4x32xf32> -> vector<4x32xf32>
    %374 = arith.addf %369, %373 : vector<4x32xf32>
    %375 = vector.shape_cast %364 : vector<2x2x32xf32> to vector<4x32xf32>
    %376 = arith.truncf %375 : vector<4x32xf32> to vector<4x32xbf16>
    %c256_240 = arith.constant 256 : index
    %c0_241 = arith.constant 0 : index
    %377 = vector.load %arg16[%c256_240, %c0_241] : memref<288x32xbf16, #tpu.memory_space<vmem>>, vector<32x32xbf16>
    %cst_242 = arith.constant dense<0.000000e+00> : vector<4x32xf32>
    %378 = tpu.matmul %376, %377, %cst_242 {dimension_numbers = #tpu.dot_dimension_numbers<[1], [0], [0], [1], [0, 0, 1, 1], [], []>} : vector<4x32xbf16>, vector<32x32xbf16>, vector<4x32xf32> -> vector<4x32xf32>
    %379 = arith.addf %374, %378 : vector<4x32xf32>
    %cst_243 = arith.constant 0.000000e+00 : f32
    %380 = vector.broadcast %cst_243 : f32 to vector<4x32xf32>
    %381 = arith.maximumf %379, %380 : vector<4x32xf32>
    %cst_244 = arith.constant 1.500000e+00 : f32
    %382 = vector.broadcast %cst_244 : f32 to vector<4x32xf32>
    %383 = arith.addf %381, %382 : vector<4x32xf32>
    %c0_245 = arith.constant 0 : index
    %c0_246 = arith.constant 0 : index
    %384 = vector.load %arg19[%c0_245, %c0_246] : memref<4x32xf32, #tpu.memory_space<vmem>>, vector<4x32xf32>
    tpu.vector_store %arg19[%c0_245, %c0_246], %383 {strides = array<i32>} : memref<4x32xf32, #tpu.memory_space<vmem>>, vector<4x32xf32>,
    return
  }
}

</mosaic_0001>

<llo_original>
// kernel: model_forward.1
$region0: #{model_forward.1}
  #allocation0 [shape = 'u32[]', space=smem, size = 0x4, offset = 0x4, fixed_abs, tag = 'smem constant byte address 0x4 - core index']
  #allocation1 [shape = 'u32[144,128]{1,0:T(1,128)}', space=vmem, size = 0x12000, scoped, tag = 'internal scratch']
  #allocation2 [shape = 'f32[34,34,32]{2,1,0:T(8,128)}', space=vmem, size = 0xaa000, scoped, tag = 'scratch operand']
  #allocation3 [shape = 'f32[18,18,32]{2,1,0:T(8,128)}', space=vmem, size = 0x36000, scoped, tag = 'scratch operand']
  #allocation4 [shape = 'f32[10,10,32]{2,1,0:T(8,128)}', space=vmem, size = 0x14000, scoped, tag = 'scratch operand']
  #allocation5 [shape = 'f32[6,6,32]{2,1,0:T(8,128)}', space=vmem, size = 0x6000, scoped, tag = 'scratch operand']
  %s0 = inlined_call_operand.vmem [shape: bf16[1024,64], index: 0, kind: input, shape index: {}]
  %s1 = inlined_call_operand.vmem [shape: bf16[64,32], index: 1, kind: input, shape index: {}]
  %s2 = inlined_call_operand.vmem [shape: f32[1,32], index: 2, kind: input, shape index: {}]
  %s3 = inlined_call_operand.vmem [shape: bf16[256,32], index: 3, kind: input, shape index: {}]
  %s4 = inlined_call_operand.vmem [shape: bf16[288,32], index: 4, kind: input, shape index: {}]
  %s5 = inlined_call_operand.vmem [shape: bf16[32,32], index: 5, kind: input, shape index: {}]
  %s6 = inlined_call_operand.vmem [shape: f32[1,32], index: 6, kind: input, shape index: {}]
  %s7 = inlined_call_operand.vmem [shape: bf16[64,32], index: 7, kind: input, shape index: {}]
  %s8 = inlined_call_operand.vmem [shape: bf16[288,32], index: 8, kind: input, shape index: {}]
  %s9 = inlined_call_operand.vmem [shape: bf16[32,32], index: 9, kind: input, shape index: {}]
  %s10 = inlined_call_operand.vmem [shape: f32[1,32], index: 10, kind: input, shape index: {}]
  %s11 = inlined_call_operand.vmem [shape: bf16[16,32], index: 11, kind: input, shape index: {}]
  %s12 = inlined_call_operand.vmem [shape: bf16[288,32], index: 12, kind: input, shape index: {}]
  %s13 = inlined_call_operand.vmem [shape: bf16[32,32], index: 13, kind: input, shape index: {}]
  %s14 = inlined_call_operand.vmem [shape: f32[1,32], index: 14, kind: input, shape index: {}]
  %s15 = inlined_call_operand.vmem [shape: bf16[4,32], index: 15, kind: input, shape index: {}]
  %s16 = inlined_call_operand.vmem [shape: bf16[288,32], index: 16, kind: input, shape index: {}]
  %s17 = inlined_call_operand.vmem [shape: bf16[32,32], index: 17, kind: input, shape index: {}]
  %s18 = inlined_call_operand.vmem [shape: f32[1,32], index: 18, kind: input, shape index: {}]
  %s19 = inlined_call_operand.hbm [shape: f32[4,32], index: 19, kind: output, shape index: {}]
  %s20 = sld [smem:[#allocation0]]
  $region86: #{model_forward.1} parent=0
    _
  %s22 = ssub.s32 1, %s20
  %s23 = scalar_select 0, %s22, %s20
  $region1: #{model_forward.1} parent=0
    #allocation6 [shape = 'u8[2048]{0}', space=vmem, size = 0x800, scoped, tag = 'output window, operand 0, single buffered']
    #allocation7 [shape = 's32[1]{0}', space=sflag, size = 0x4, scoped, tag = 'scoped memory for model_forward.1']
    %24 = vsyncpa [#allocation7], 0
    // Predicated region
    $region2: #{model_forward.1} parent=1 // pred_check
      _
    $region3: #{model_forward.1} parent=1 // pred_check_branch
      %26 = sbr.rel (0) target = $region5
    $region4: #{model_forward.1} parent=1 // pred_region
      _
    $region5: #{model_forward.1} parent=1 // pred_fallthru
      _
    // Predicated region
    $region6: #{model_forward.1} parent=1 // pred_check
      _
    $region7: #{model_forward.1} parent=1 // pred_check_branch
      %28 = sbr.rel (0) target = $region9
    $region8: #{model_forward.1} parent=1 // pred_region
      _
    $region9: #{model_forward.1} parent=1 // pred_fallthru
      _
    // Predicated region
    $region10: #{model_forward.1} parent=1 // pred_check
      _
    $region11: #{model_forward.1} parent=1 // pred_check_branch
      %30 = sbr.rel (0) target = $region13
    $region12: #{model_forward.1} parent=1 // pred_region
      _
    $region13: #{model_forward.1} parent=1 // pred_fallthru
      _
    // Predicated region
    $region14: #{model_forward.1} parent=1 // pred_check
      _
    $region15: #{model_forward.1} parent=1 // pred_check_branch
      %32 = sbr.rel (0) target = $region17
    $region16: #{model_forward.1} parent=1 // pred_region
      _
    $region17: #{model_forward.1} parent=1 // pred_fallthru
      _
    // Predicated region
    $region18: #{model_forward.1} parent=1 // pred_check
      _
    $region19: #{model_forward.1} parent=1 // pred_check_branch
      %34 = sbr.rel (0) target = $region21
    $region20: #{model_forward.1} parent=1 // pred_region
      _
    $region21: #{model_forward.1} parent=1 // pred_fallthru
      _
    // Predicated region
    $region22: #{model_forward.1} parent=1 // pred_check
      _
    $region23: #{model_forward.1} parent=1 // pred_check_branch
      %36 = sbr.rel (0) target = $region25
    $region24: #{model_forward.1} parent=1 // pred_region
      _
    $region25: #{model_forward.1} parent=1 // pred_fallthru
      _
    // Predicated region
    $region26: #{model_forward.1} parent=1 // pred_check
      _
    $region27: #{model_forward.1} parent=1 // pred_check_branch
      %38 = sbr.rel (0) target = $region29
    $region28: #{model_forward.1} parent=1 // pred_region
      _
    $region29: #{model_forward.1} parent=1 // pred_fallthru
      _
    // Predicated region
    $region30: #{model_forward.1} parent=1 // pred_check
      _
    $region31: #{model_forward.1} parent=1 // pred_check_branch
      %40 = sbr.rel (0) target = $region33
    $region32: #{model_forward.1} parent=1 // pred_region
      _
    $region33: #{model_forward.1} parent=1 // pred_fallthru
      _
    // Predicated region
    $region34: #{model_forward.1} parent=1 // pred_check
      _
    $region35: #{model_forward.1} parent=1 // pred_check_branch
      %42 = sbr.rel (0) target = $region37
    $region36: #{model_forward.1} parent=1 // pred_region
      _
    $region37: #{model_forward.1} parent=1 // pred_fallthru
      _
    // Predicated region
    $region38: #{model_forward.1} parent=1 // pred_check
      _
    $region39: #{model_forward.1} parent=1 // pred_check_branch
      %44 = sbr.rel (0) target = $region41
    $region40: #{model_forward.1} parent=1 // pred_region
      _
    $region41: #{model_forward.1} parent=1 // pred_fallthru
      _
    // Predicated region
    $region42: #{model_forward.1} parent=1 // pred_check
      _
    $region43: #{model_forward.1} parent=1 // pred_check_branch
      %46 = sbr.rel (0) target = $region45
    $region44: #{model_forward.1} parent=1 // pred_region
      _
    $region45: #{model_forward.1} parent=1 // pred_fallthru
      _
    // Predicated region
    $region46: #{model_forward.1} parent=1 // pred_check
      _
    $region47: #{model_forward.1} parent=1 // pred_check_branch
      %48 = sbr.rel (0) target = $region49
    $region48: #{model_forward.1} parent=1 // pred_region
      _
    $region49: #{model_forward.1} parent=1 // pred_fallthru
      _
    // Predicated region
    $region50: #{model_forward.1} parent=1 // pred_check
      _
    $region51: #{model_forward.1} parent=1 // pred_check_branch
      %50 = sbr.rel (0) target = $region53
    $region52: #{model_forward.1} parent=1 // pred_region
      _
    $region53: #{model_forward.1} parent=1 // pred_fallthru
      _
    // Predicated region
    $region54: #{model_forward.1} parent=1 // pred_check
      _
    $region55: #{model_forward.1} parent=1 // pred_check_branch
      %52 = sbr.rel (0) target = $region57
    $region56: #{model_forward.1} parent=1 // pred_region
      _
    $region57: #{model_forward.1} parent=1 // pred_fallthru
      _
    // Predicated region
    $region58: #{model_forward.1} parent=1 // pred_check
      _
    $region59: #{model_forward.1} parent=1 // pred_check_branch
      %54 = sbr.rel (0) target = $region61
    $region60: #{model_forward.1} parent=1 // pred_region
      _
    $region61: #{model_forward.1} parent=1 // pred_fallthru
      _
    // Predicated region
    $region62: #{model_forward.1} parent=1 // pred_check
      _
    $region63: #{model_forward.1} parent=1 // pred_check_branch
      %56 = sbr.rel (0) target = $region65
    $region64: #{model_forward.1} parent=1 // pred_region
      _
    $region65: #{model_forward.1} parent=1 // pred_fallthru
      _
    // Predicated region
    $region66: #{model_forward.1} parent=1 // pred_check
      _
    $region67: #{model_forward.1} parent=1 // pred_check_branch
      %58 = sbr.rel (0) target = $region69
    $region68: #{model_forward.1} parent=1 // pred_region
      _
    $region69: #{model_forward.1} parent=1 // pred_fallthru
      _
    // Predicated region
    $region70: #{model_forward.1} parent=1 // pred_check
      _
    $region71: #{model_forward.1} parent=1 // pred_check_branch
      %60 = sbr.rel (0) target = $region73
    $region72: #{model_forward.1} parent=1 // pred_region
      _
    $region73: #{model_forward.1} parent=1 // pred_fallthru
      _
    // Predicated region
    $region74: #{model_forward.1} parent=1 // pred_check
      _
    $region75: #{model_forward.1} parent=1 // pred_check_branch
      %62 = sbr.rel (0) target = $region77
    $region76: #{model_forward.1} parent=1 // pred_region
      _
    $region77: #{model_forward.1} parent=1 // pred_fallthru
      _
    %vm64 = vcmask 261120
    %65 = vst.msk [vmem:[#allocation2] sm:$0xff] %vm64, 0.0
    %66 = vst.msk [vmem:[#allocation2 + $0x8] sm:$0xff] %vm64, 0.0
    %67 = vst.msk [vmem:[#allocation2 + $0x10] sm:$0xff] %vm64, 0.0
    %68 = vst.msk [vmem:[#allocation2 + $0x18] sm:$0xff] %vm64, 0.0
    %vm69 = vcmask 254976
    %70 = vst.msk [vmem:[#allocation2 + $0x20] sm:$0x3] %vm69, 0.0
    %vm71 = vcmask 253952
    %72 = vst.msk [vmem:[#allocation2] sm:$0x1] %vm71, 0.0
    %73 = vst.msk [vmem:[#allocation2 + $0x28] sm:$0x1] %vm71, 0.0
    %74 = vst.msk [vmem:[#allocation2 + $0x50] sm:$0x1] %vm71, 0.0
    %75 = vst.msk [vmem:[#allocation2 + $0x78] sm:$0x1] %vm71, 0.0
    %76 = vst.msk [vmem:[#allocation2 + $0xa0] sm:$0x1] %vm71, 0.0
    %77 = vst.msk [vmem:[#allocation2 + $0xc8] sm:$0x1] %vm71, 0.0
    %78 = vst.msk [vmem:[#allocation2 + $0xf0] sm:$0x1] %vm71, 0.0
    %79 = vst.msk [vmem:[#allocation2 + $0x118] sm:$0x1] %vm71, 0.0
    %80 = vst.msk [vmem:[#allocation2 + $0x140] sm:$0x1] %vm71, 0.0
    %81 = vst.msk [vmem:[#allocation2 + $0x168] sm:$0x1] %vm71, 0.0
    %82 = vst.msk [vmem:[#allocation2 + $0x190] sm:$0x1] %vm71, 0.0
    %83 = vst.msk [vmem:[#allocation2 + $0x1b8] sm:$0x1] %vm71, 0.0
    %84 = vst.msk [vmem:[#allocation2 + $0x1e0] sm:$0x1] %vm71, 0.0
    %85 = vst.msk [vmem:[#allocation2 + $0x208] sm:$0x1] %vm71, 0.0
    %86 = vst.msk [vmem:[#allocation2 + $0x230] sm:$0x1] %vm71, 0.0
    %87 = vst.msk [vmem:[#allocation2 + $0x258] sm:$0x1] %vm71, 0.0
    %88 = vst.msk [vmem:[#allocation2 + $0x280] sm:$0x1] %vm71, 0.0
    %89 = vst.msk [vmem:[#allocation2 + $0x2a8] sm:$0x1] %vm71, 0.0
    %90 = vst.msk [vmem:[#allocation2 + $0x2d0] sm:$0x1] %vm71, 0.0
    %91 = vst.msk [vmem:[#allocation2 + $0x2f8] sm:$0x1] %vm71, 0.0
    %92 = vst.msk [vmem:[#allocation2 + $0x320] sm:$0x1] %vm71, 0.0
    %93 = vst.msk [vmem:[#allocation2 + $0x348] sm:$0x1] %vm71, 0.0
    %94 = vst.msk [vmem:[#allocation2 + $0x370] sm:$0x1] %vm71, 0.0
    %95 = vst.msk [vmem:[#allocation2 + $0x398] sm:$0x1] %vm71, 0.0
    %96 = vst.msk [vmem:[#allocation2 + $0x3c0] sm:$0x1] %vm71, 0.0
    %97 = vst.msk [vmem:[#allocation2 + $0x3e8] sm:$0x1] %vm71, 0.0
    %98 = vst.msk [vmem:[#allocation2 + $0x410] sm:$0x1] %vm71, 0.0
    %99 = vst.msk [vmem:[#allocation2 + $0x438] sm:$0x1] %vm71, 0.0
    %100 = vst.msk [vmem:[#allocation2 + $0x460] sm:$0x1] %vm71, 0.0
    %101 = vst.msk [vmem:[#allocation2 + $0x488] sm:$0x1] %vm71, 0.0
    %102 = vst.msk [vmem:[#allocation2 + $0x4b0] sm:$0x1] %vm71, 0.0
    %103 = vst.msk [vmem:[#allocation2 + $0x4d8] sm:$0x1] %vm71, 0.0
    %104 = vst.msk [vmem:[#allocation2 + $0x500] sm:$0x1] %vm71, 0.0
    %105 = vst.msk [vmem:[#allocation2 + $0x528] sm:$0x1] %vm71, 0.0
    %106 = vst.msk [vmem:[#allocation3] sm:$0xff] %vm64, 0.0
    %107 = vst.msk [vmem:[#allocation3 + $0x8] sm:$0xff] %vm64, 0.0
    %108 = vst.msk [vmem:[#allocation3 + $0x10] sm:$0x3] %vm69, 0.0
    %109 = vst.msk [vmem:[#allocation3] sm:$0x1] %vm71, 0.0
    %110 = vst.msk [vmem:[#allocation3 + $0x18] sm:$0x1] %vm71, 0.0
    %111 = vst.msk [vmem:[#allocation3 + $0x30] sm:$0x1] %vm71, 0.0
    %112 = vst.msk [vmem:[#allocation3 + $0x48] sm:$0x1] %vm71, 0.0
    %113 = vst.msk [vmem:[#allocation3 + $0x60] sm:$0x1] %vm71, 0.0
    %114 = vst.msk [vmem:[#allocation3 + $0x78] sm:$0x1] %vm71, 0.0
    %115 = vst.msk [vmem:[#allocation3 + $0x90] sm:$0x1] %vm71, 0.0
    %116 = vst.msk [vmem:[#allocation3 + $0xa8] sm:$0x1] %vm71, 0.0
    %117 = vst.msk [vmem:[#allocation3 + $0xc0] sm:$0x1] %vm71, 0.0
    %118 = vst.msk [vmem:[#allocation3 + $0xd8] sm:$0x1] %vm71, 0.0
    %119 = vst.msk [vmem:[#allocation3 + $0xf0] sm:$0x1] %vm71, 0.0
    %120 = vst.msk [vmem:[#allocation3 + $0x108] sm:$0x1] %vm71, 0.0
    %121 = vst.msk [vmem:[#allocation3 + $0x120] sm:$0x1] %vm71, 0.0
    %122 = vst.msk [vmem:[#allocation3 + $0x138] sm:$0x1] %vm71, 0.0
    %123 = vst.msk [vmem:[#allocation3 + $0x150] sm:$0x1] %vm71, 0.0
    %124 = vst.msk [vmem:[#allocation3 + $0x168] sm:$0x1] %vm71, 0.0
    %125 = vst.msk [vmem:[#allocation3 + $0x180] sm:$0x1] %vm71, 0.0
    %126 = vst.msk [vmem:[#allocation3 + $0x198] sm:$0x1] %vm71, 0.0
    %127 = vst.msk [vmem:[#allocation4] sm:$0xff] %vm64, 0.0
    %128 = vst.msk [vmem:[#allocation4 + $0x8] sm:$0x3] %vm69, 0.0
    %129 = vst.msk [vmem:[#allocation4] sm:$0x1] %vm71, 0.0
    %130 = vst.msk [vmem:[#allocation4 + $0x10] sm:$0x1] %vm71, 0.0
    %131 = vst.msk [vmem:[#allocation4 + $0x20] sm:$0x1] %vm71, 0.0
    %132 = vst.msk [vmem:[#allocation4 + $0x30] sm:$0x1] %vm71, 0.0
    %133 = vst.msk [vmem:[#allocation4 + $0x40] sm:$0x1] %vm71, 0.0
    %134 = vst.msk [vmem:[#allocation4 + $0x50] sm:$0x1] %vm71, 0.0
    %135 = vst.msk [vmem:[#allocation4 + $0x60] sm:$0x1] %vm71, 0.0
    %136 = vst.msk [vmem:[#allocation4 + $0x70] sm:$0x1] %vm71, 0.0
    %137 = vst.msk [vmem:[#allocation4 + $0x80] sm:$0x1] %vm71, 0.0
    %138 = vst.msk [vmem:[#allocation4 + $0x90] sm:$0x1] %vm71, 0.0
    %vm139 = vcmask 259072
    %140 = vst.msk [vmem:[#allocation5] sm:$0x3f] %vm139, 0.0
    %141 = vst.msk [vmem:[#allocation5] sm:$0x1] %vm71, 0.0
    %142 = vst.msk [vmem:[#allocation5 + $0x8] sm:$0x1] %vm71, 0.0
    %143 = vst.msk [vmem:[#allocation5 + $0x10] sm:$0x1] %vm71, 0.0
    %144 = vst.msk [vmem:[#allocation5 + $0x18] sm:$0x1] %vm71, 0.0
    %145 = vst.msk [vmem:[#allocation5 + $0x20] sm:$0x1] %vm71, 0.0
    %146 = vst.msk [vmem:[#allocation5 + $0x28] sm:$0x1] %vm71, 0.0
    %v147 = vld [vmem:[%s0] sm:$0xf]
    %v148 = vld [vmem:[%s0 + $0x4] sm:$0xf]
    %v149 = vld [vmem:[%s0 + $0x8] sm:$0xf]
    %v150 = vld [vmem:[%s0 + $0xc] sm:$0xf]
    %v151 = vld [vmem:[%s0 + $0x10] sm:$0xf]
    %v152 = vld [vmem:[%s0 + $0x14] sm:$0xf]
    %v153 = vld [vmem:[%s0 + $0x18] sm:$0xf]
    %v154 = vld [vmem:[%s0 + $0x1c] sm:$0xf]
    %v155 = vld [vmem:[%s0 + $0x20] sm:$0xf]
    %v156 = vld [vmem:[%s0 + $0x24] sm:$0xf]
    %v157 = vld [vmem:[%s0 + $0x28] sm:$0xf]
    %v158 = vld [vmem:[%s0 + $0x2c] sm:$0xf]
    %v159 = vld [vmem:[%s0 + $0x30] sm:$0xf]
    %v160 = vld [vmem:[%s0 + $0x34] sm:$0xf]
    %v161 = vld [vmem:[%s0 + $0x38] sm:$0xf]
    %v162 = vld [vmem:[%s0 + $0x3c] sm:$0xf]
    %v163 = vld [vmem:[%s0 + $0x40] sm:$0xf]
    %v164 = vld [vmem:[%s0 + $0x44] sm:$0xf]
    %v165 = vld [vmem:[%s0 + $0x48] sm:$0xf]
    %v166 = vld [vmem:[%s0 + $0x4c] sm:$0xf]
    %v167 = vld [vmem:[%s0 + $0x50] sm:$0xf]
    %v168 = vld [vmem:[%s0 + $0x54] sm:$0xf]
    %v169 = vld [vmem:[%s0 + $0x58] sm:$0xf]
    %v170 = vld [vmem:[%s0 + $0x5c] sm:$0xf]
    %v171 = vld [vmem:[%s0 + $0x60] sm:$0xf]
    %v172 = vld [vmem:[%s0 + $0x64] sm:$0xf]
    %v173 = vld [vmem:[%s0 + $0x68] sm:$0xf]
    %v174 = vld [vmem:[%s0 + $0x6c] sm:$0xf]
    %v175 = vld [vmem:[%s0 + $0x70] sm:$0xf]
    %v176 = vld [vmem:[%s0 + $0x74] sm:$0xf]
    %v177 = vld [vmem:[%s0 + $0x78] sm:$0xf]
    %v178 = vld [vmem:[%s0 + $0x7c] sm:$0xf]
    %v179 = vld [vmem:[%s1] sm:$0xf]
    %v180 = vld [vmem:[%s1 + $0x4] sm:$0xf]
    %v181 = vld [vmem:[%s1 + $0x8] sm:$0xf]
    %v182 = vld [vmem:[%s1 + $0xc] sm:$0xf]
    %v183 = vld [vmem:[%s1 + $0x10] sm:$0xf]
    %v184 = vld [vmem:[%s1 + $0x14] sm:$0xf]
    %v185 = vld [vmem:[%s1 + $0x18] sm:$0xf]
    %v186 = vld [vmem:[%s1 + $0x1c] sm:$0xf]
    %v187 = vld [vmem:[%s2] sm:$0x1]
    %v189 = vlaneseq
    %v190 = vshrl.u32 %v189, 7
    %v191 = vsub.s32 0, %v190
    %v192 = vrot.slane %v187, %v191
    %v226 = vunpack.c.l.b16 %v147
    %v227 = vunpack.c.l.b16 %v148
    %v228 = vunpack.c.l.b16 %v149
    %v229 = vunpack.c.l.b16 %v150
    %v230 = vunpack.c.l.b16 %v151
    %v231 = vunpack.c.l.b16 %v152
    %v232 = vunpack.c.l.b16 %v153
    %v233 = vunpack.c.l.b16 %v154
    %v234 = vunpack.c.l.b16 %v155
    %v235 = vunpack.c.l.b16 %v156
    %v236 = vunpack.c.l.b16 %v157
    %v237 = vunpack.c.l.b16 %v158
    %v238 = vunpack.c.l.b16 %v159
    %v239 = vunpack.c.l.b16 %v160
    %v240 = vunpack.c.l.b16 %v161
    %v241 = vunpack.c.l.b16 %v162
    %v242 = vunpack.c.l.b16 %v163
    %v243 = vunpack.c.l.b16 %v164
    %v244 = vunpack.c.l.b16 %v165
    %v245 = vunpack.c.l.b16 %v166
    %v246 = vunpack.c.l.b16 %v167
    %v247 = vunpack.c.l.b16 %v168
    %v248 = vunpack.c.l.b16 %v169
    %v249 = vunpack.c.l.b16 %v170
    %v250 = vunpack.c.l.b16 %v171
    %v251 = vunpack.c.l.b16 %v172
    %v252 = vunpack.c.l.b16 %v173
    %v253 = vunpack.c.l.b16 %v174
    %v254 = vunpack.c.l.b16 %v175
    %v255 = vunpack.c.l.b16 %v176
    %v256 = vunpack.c.l.b16 %v177
    %v257 = vunpack.c.l.b16 %v178
    %v258 = vpack.c.b16 %v227, %v226
    %v259 = vpack.c.b16 %v229, %v228
    %v260 = vpack.c.b16 %v231, %v230
    %v261 = vpack.c.b16 %v233, %v232
    %v262 = vpack.c.b16 %v235, %v234
    %v263 = vpack.c.b16 %v237, %v236
    %v264 = vpack.c.b16 %v239, %v238
    %v265 = vpack.c.b16 %v241, %v240
    %v266 = vpack.c.b16 %v243, %v242
    %v267 = vpack.c.b16 %v245, %v244
    %v268 = vpack.c.b16 %v247, %v246
    %v269 = vpack.c.b16 %v249, %v248
    %v270 = vpack.c.b16 %v251, %v250
    %v271 = vpack.c.b16 %v253, %v252
    %v272 = vpack.c.b16 %v255, %v254
    %v273 = vpack.c.b16 %v257, %v256
    %v282 = vunpack.c.l.b16 %v179
    %v283 = vunpack.c.l.b16 %v180
    %v284 = vunpack.c.l.b16 %v181
    %v285 = vunpack.c.l.b16 %v182
    %v286 = vunpack.c.l.b16 %v183
    %v287 = vunpack.c.l.b16 %v184
    %v288 = vunpack.c.l.b16 %v185
    %v289 = vunpack.c.l.b16 %v186
    %v290 = vpack.c.b16 %v283, %v282
    %v291 = vpack.c.b16 %v285, %v284
    %v292 = vpack.c.b16 %v287, %v286
    %v293 = vpack.c.b16 %v289, %v288
    %vm298 = vcmask 523264
    %v300 = vsel %vm298, %v258, 0
    %v303 = vsel %vm298, %v259, 0
    %v306 = vsel %vm298, %v260, 0
    %v309 = vsel %vm298, %v261, 0
    %v312 = vsel %vm298, %v262, 0
    %v315 = vsel %vm298, %v263, 0
    %v318 = vsel %vm298, %v264, 0
    %v321 = vsel %vm298, %v265, 0
    %v324 = vsel %vm298, %v266, 0
    %v327 = vsel %vm298, %v267, 0
    %v330 = vsel %vm298, %v268, 0
    %v333 = vsel %vm298, %v269, 0
    %v336 = vsel %vm298, %v270, 0
    %v339 = vsel %vm298, %v271, 0
    %v342 = vsel %vm298, %v272, 0
    %v345 = vsel %vm298, %v273, 0
    %347 = vmatprep.subr.bf16.mxu0 0
    %348 = vmatpush1.bf16.msra.mxu0 %v290
    %349 = vmatprep.subr.bf16.mxu0 0
    %350 = vmatpush1.bf16.msra.mxu0 %v291
    %351 = vmatprep.subr.bf16.mxu0 0
    %352 = vmatpush1.bf16.msra.mxu0 %v292
    %353 = vmatprep.subr.bf16.mxu0 0
    %354 = vmatpush1.bf16.msra.mxu0 %v293
    %355 = vmatprep.subr.bf16.mxu0 0
    %356 = vmatpush1.bf16.msra.mxu0 0
    %357 = vmatprep.subr.bf16.mxu0 0
    %358 = vmatpush1.bf16.msra.mxu0 0
    %359 = vmatprep.subr.bf16.mxu0 0
    %360 = vmatpush1.bf16.msra.mxu0 0
    %361 = vmatprep.subr.bf16.mxu0 0
    %362 = vmatpush1.bf16.msra.mxu0 0
    %363 = vmatprep.subr.bf16.mxu0 0
    %364 = vmatpush1.bf16.msra.mxu0 0
    %365 = vmatprep.subr.bf16.mxu0 0
    %366 = vmatpush1.bf16.msra.mxu0 0
    %367 = vmatprep.subr.bf16.mxu0 0
    %368 = vmatpush1.bf16.msra.mxu0 0
    %369 = vmatprep.subr.bf16.mxu0 0
    %370 = vmatpush1.bf16.msra.mxu0 0
    %371 = vmatprep.subr.bf16.mxu0 0
    %372 = vmatpush1.bf16.msra.mxu0 0
    %373 = vmatprep.subr.bf16.mxu0 0
    %374 = vmatpush1.bf16.msra.mxu0 0
    %375 = vmatprep.subr.bf16.mxu0 0
    %376 = vmatpush1.bf16.msra.mxu0 0
    %377 = vmatprep.subr.bf16.mxu0 0
    %378 = vmatpush1.bf16.msra.mxu0 0
    %379 = vmatprep.mubr.bf16.mxu0 0
    %380 = vmatmul.mubr.bf16.gmra.mrb[0].mxu0 %v300
    %v381 = vpop.f32.mrb[0].mxu0
    %v382 = vadd.f32 %v192, %v381
    %v383 = vpop.f32.mrb[0].mxu0
    %v384 = vpop.f32.mrb[0].mxu0
    %v385 = vadd.f32 %v192, %v384
    %v386 = vpop.f32.mrb[0].mxu0
    %387 = vmatprep.mubr.bf16.mxu0 0
    %388 = vmatmul.mubr.bf16.gmra.mrb[0].mxu0 %v303
    %v389 = vpop.f32.mrb[0].mxu0
    %v390 = vadd.f32 %v192, %v389
    %v391 = vpop.f32.mrb[0].mxu0
    %v392 = vpop.f32.mrb[0].mxu0
    %v393 = vadd.f32 %v192, %v392
    %v394 = vpop.f32.mrb[0].mxu0
    %395 = vmatprep.mubr.bf16.mxu0 0
    %396 = vmatmul.mubr.bf16.gmra.mrb[0].mxu0 %v306
    %v397 = vpop.f32.mrb[0].mxu0
    %v398 = vadd.f32 %v192, %v397
    %v399 = vpop.f32.mrb[0].mxu0
    %v400 = vpop.f32.mrb[0].mxu0
    %v401 = vadd.f32 %v192, %v400
    %v402 = vpop.f32.mrb[0].mxu0
    %403 = vmatprep.mubr.bf16.mxu0 0
    %404 = vmatmul.mubr.bf16.gmra.mrb[0].mxu0 %v309
    %v405 = vpop.f32.mrb[0].mxu0
    %v406 = vadd.f32 %v192, %v405
    %v407 = vpop.f32.mrb[0].mxu0
    %v408 = vpop.f32.mrb[0].mxu0
    %v409 = vadd.f32 %v192, %v408
    %v410 = vpop.f32.mrb[0].mxu0
    %411 = vmatprep.mubr.bf16.mxu0 0
    %412 = vmatmul.mubr.bf16.gmra.mrb[0].mxu0 %v312
    %v413 = vpop.f32.mrb[0].mxu0
    %v414 = vadd.f32 %v192, %v413
    %v415 = vpop.f32.mrb[0].mxu0
    %v416 = vpop.f32.mrb[0].mxu0
    %v417 = vadd.f32 %v192, %v416
    %v418 = vpop.f32.mrb[0].mxu0
    %419 = vmatprep.mubr.bf16.mxu0 0
    %420 = vmatmul.mubr.bf16.gmra.mrb[0].mxu0 %v315
    %v421 = vpop.f32.mrb[0].mxu0
    %v422 = vadd.f32 %v192, %v421
    %v423 = vpop.f32.mrb[0].mxu0
    %v424 = vpop.f32.mrb[0].mxu0
    %v425 = vadd.f32 %v192, %v424
    %v426 = vpop.f32.mrb[0].mxu0
    %427 = vmatprep.mubr.bf16.mxu0 0
    %428 = vmatmul.mubr.bf16.gmra.mrb[0].mxu0 %v318
    %v429 = vpop.f32.mrb[0].mxu0
    %v430 = vadd.f32 %v192, %v429
    %v431 = vpop.f32.mrb[0].mxu0
    %v432 = vpop.f32.mrb[0].mxu0
    %v433 = vadd.f32 %v192, %v432
    %v434 = vpop.f32.mrb[0].mxu0
    %435 = vmatprep.mubr.bf16.mxu0 0
    %436 = vmatmul.mubr.bf16.gmra.mrb[0].mxu0 %v321
    %v437 = vpop.f32.mrb[0].mxu0
    %v438 = vadd.f32 %v192, %v437
    %v439 = vpop.f32.mrb[0].mxu0
    %v440 = vpop.f32.mrb[0].mxu0
    %v441 = vadd.f32 %v192, %v440
    %v442 = vpop.f32.mrb[0].mxu0
    %443 = vmatprep.mubr.bf16.mxu0 0
    %444 = vmatmul.mubr.bf16.gmra.mrb[0].mxu0 %v324
    %v445 = vpop.f32.mrb[0].mxu0
    %v446 = vadd.f32 %v192, %v445
    %v447 = vpop.f32.mrb[0].mxu0
    %v448 = vpop.f32.mrb[0].mxu0
    %v449 = vadd.f32 %v192, %v448
    %v450 = vpop.f32.mrb[0].mxu0
    %451 = vmatprep.mubr.bf16.mxu0 0
    %452 = vmatmul.mubr.bf16.gmra.mrb[0].mxu0 %v327
    %v453 = vpop.f32.mrb[0].mxu0
    %v454 = vadd.f32 %v192, %v453
    %v455 = vpop.f32.mrb[0].mxu0
    %v456 = vpop.f32.mrb[0].mxu0
    %v457 = vadd.f32 %v192, %v456
    %v458 = vpop.f32.mrb[0].mxu0
    %459 = vmatprep.mubr.bf16.mxu0 0
    %460 = vmatmul.mubr.bf16.gmra.mrb[0].mxu0 %v330
    %v461 = vpop.f32.mrb[0].mxu0
    %v462 = vadd.f32 %v192, %v461
    %v463 = vpop.f32.mrb[0].mxu0
    %v464 = vpop.f32.mrb[0].mxu0
    %v465 = vadd.f32 %v192, %v464
    %v466 = vpop.f32.mrb[0].mxu0
    %467 = vmatprep.mubr.bf16.mxu0 0
    %468 = vmatmul.mubr.bf16.gmra.mrb[0].mxu0 %v333
    %v469 = vpop.f32.mrb[0].mxu0
    %v470 = vadd.f32 %v192, %v469
    %v471 = vpop.f32.mrb[0].mxu0
    %v472 = vpop.f32.mrb[0].mxu0
    %v473 = vadd.f32 %v192, %v472
    %v474 = vpop.f32.mrb[0].mxu0
    %475 = vmatprep.mubr.bf16.mxu0 0
    %476 = vmatmul.mubr.bf16.gmra.mrb[0].mxu0 %v336
    %v477 = vpop.f32.mrb[0].mxu0
    %v478 = vadd.f32 %v192, %v477
    %v479 = vpop.f32.mrb[0].mxu0
    %v480 = vpop.f32.mrb[0].mxu0
    %v481 = vadd.f32 %v192, %v480
    %v482 = vpop.f32.mrb[0].mxu0
    %483 = vmatprep.mubr.bf16.mxu0 0
    %484 = vmatmul.mubr.bf16.gmra.mrb[0].mxu0 %v339
    %v485 = vpop.f32.mrb[0].mxu0
    %v486 = vadd.f32 %v192, %v485
    %v487 = vpop.f32.mrb[0].mxu0
    %v488 = vpop.f32.mrb[0].mxu0
    %v489 = vadd.f32 %v192, %v488
    %v490 = vpop.f32.mrb[0].mxu0
    %491 = vmatprep.mubr.bf16.mxu0 0
    %492 = vmatmul.mubr.bf16.gmra.mrb[0].mxu0 %v342
    %v493 = vpop.f32.mrb[0].mxu0
    %v494 = vadd.f32 %v192, %v493
    %v495 = vpop.f32.mrb[0].mxu0
    %v496 = vpop.f32.mrb[0].mxu0
    %v497 = vadd.f32 %v192, %v496
    %v498 = vpop.f32.mrb[0].mxu0
    %499 = vmatprep.mubr.bf16.mxu0 0
    %500 = vmatmul.mubr.bf16.gmra.mrb[0].mxu0 %v345
    %v501 = vpop.f32.mrb[0].mxu0
    %v502 = vadd.f32 %v192, %v501
    %v503 = vpop.f32.mrb[0].mxu0
    %v504 = vpop.f32.mrb[0].mxu0
    %v505 = vadd.f32 %v192, %v504
    %v506 = vpop.f32.mrb[0].mxu0
    %507 = vdwg.mxu0
    %v508 = vmax.f32 %v382, 0.0
    %v509 = vmax.f32 %v385, 0.0
    %v510 = vmax.f32 %v390, 0.0
    %v511 = vmax.f32 %v393, 0.0
    %v512 = vmax.f32 %v398, 0.0
    %v513 = vmax.f32 %v401, 0.0
    %v514 = vmax.f32 %v406, 0.0
    %v515 = vmax.f32 %v409, 0.0
    %v516 = vmax.f32 %v414, 0.0
    %v517 = vmax.f32 %v417, 0.0
    %v518 = vmax.f32 %v422, 0.0
    %v519 = vmax.f32 %v425, 0.0
    %v520 = vmax.f32 %v430, 0.0
    %v521 = vmax.f32 %v433, 0.0
    %v522 = vmax.f32 %v438, 0.0
    %v523 = vmax.f32 %v441, 0.0
    %v524 = vmax.f32 %v446, 0.0
    %v525 = vmax.f32 %v449, 0.0
    %v526 = vmax.f32 %v454, 0.0
    %v527 = vmax.f32 %v457, 0.0
    %v528 = vmax.f32 %v462, 0.0
    %v529 = vmax.f32 %v465, 0.0
    %v530 = vmax.f32 %v470, 0.0
    %v531 = vmax.f32 %v473, 0.0
    %v532 = vmax.f32 %v478, 0.0
    %v533 = vmax.f32 %v481, 0.0
    %v534 = vmax.f32 %v486, 0.0
    %v535 = vmax.f32 %v489, 0.0
    %v536 = vmax.f32 %v494, 0.0
    %v537 = vmax.f32 %v497, 0.0
    %v538 = vmax.f32 %v502, 0.0
    %v539 = vmax.f32 %v505, 0.0
    %s540 = scalar_lea.vmem [#allocation2], 40
    %541 = vst.msk [vmem:[%s540 + $0x1] sm:$0xff] %vm64, %v508
    %542 = vst.msk [vmem:[%s540 + $0x9] sm:$0xff] %vm64, %v509
    %543 = vst.msk [vmem:[%s540 + $0x11] sm:$0xff] %vm64, %v510
    %544 = vst.msk [vmem:[%s540 + $0x19] sm:$0xff] %vm64, %v511
    %545 = vst.msk [vmem:[%s540 + $0x29] sm:$0xff] %vm64, %v512
    %546 = vst.msk [vmem:[%s540 + $0x31] sm:$0xff] %vm64, %v513
    %547 = vst.msk [vmem:[%s540 + $0x39] sm:$0xff] %vm64, %v514
    %548 = vst.msk [vmem:[%s540 + $0x41] sm:$0xff] %vm64, %v515
    %549 = vst.msk [vmem:[%s540 + $0x51] sm:$0xff] %vm64, %v516
    %550 = vst.msk [vmem:[%s540 + $0x59] sm:$0xff] %vm64, %v517
    %551 = vst.msk [vmem:[%s540 + $0x61] sm:$0xff] %vm64, %v518
    %552 = vst.msk [vmem:[%s540 + $0x69] sm:$0xff] %vm64, %v519
    %553 = vst.msk [vmem:[%s540 + $0x79] sm:$0xff] %vm64, %v520
    %554 = vst.msk [vmem:[%s540 + $0x81] sm:$0xff] %vm64, %v521
    %555 = vst.msk [vmem:[%s540 + $0x89] sm:$0xff] %vm64, %v522
    %556 = vst.msk [vmem:[%s540 + $0x91] sm:$0xff] %vm64, %v523
    %557 = vst.msk [vmem:[%s540 + $0xa1] sm:$0xff] %vm64, %v524
    %558 = vst.msk [vmem:[%s540 + $0xa9] sm:$0xff] %vm64, %v525
    %559 = vst.msk [vmem:[%s540 + $0xb1] sm:$0xff] %vm64, %v526
    %560 = vst.msk [vmem:[%s540 + $0xb9] sm:$0xff] %vm64, %v527
    %561 = vst.msk [vmem:[%s540 + $0xc9] sm:$0xff] %vm64, %v528
    %562 = vst.msk [vmem:[%s540 + $0xd1] sm:$0xff] %vm64, %v529
    %563 = vst.msk [vmem:[%s540 + $0xd9] sm:$0xff] %vm64, %v530
    %564 = vst.msk [vmem:[%s540 + $0xe1] sm:$0xff] %vm64, %v531
    %565 = vst.msk [vmem:[%s540 + $0xf1] sm:$0xff] %vm64, %v532
    %566 = vst.msk [vmem:[%s540 + $0xf9] sm:$0xff] %vm64, %v533
    %567 = vst.msk [vmem:[%s540 + $0x101] sm:$0xff] %vm64, %v534
    %568 = vst.msk [vmem:[%s540 + $0x109] sm:$0xff] %vm64, %v535
    %569 = vst.msk [vmem:[%s540 + $0x119] sm:$0xff] %vm64, %v536
    %570 = vst.msk [vmem:[%s540 + $0x121] sm:$0xff] %vm64, %v537
    %571 = vst.msk [vmem:[%s540 + $0x129] sm:$0xff] %vm64, %v538
    %572 = vst.msk [vmem:[%s540 + $0x131] sm:$0xff] %vm64, %v539
    %v573 = vld [vmem:[%s0 + $0x80] sm:$0xf]
    %v574 = vld [vmem:[%s0 + $0x84] sm:$0xf]
    %v575 = vld [vmem:[%s0 + $0x88] sm:$0xf]
    %v576 = vld [vmem:[%s0 + $0x8c] sm:$0xf]
    %v577 = vld [vmem:[%s0 + $0x90] sm:$0xf]
    %v578 = vld [vmem:[%s0 + $0x94] sm:$0xf]
    %v579 = vld [vmem:[%s0 + $0x98] sm:$0xf]
    %v580 = vld [vmem:[%s0 + $0x9c] sm:$0xf]
    %v581 = vld [vmem:[%s0 + $0xa0] sm:$0xf]
    %v582 = vld [vmem:[%s0 + $0xa4] sm:$0xf]
    %v583 = vld [vmem:[%s0 + $0xa8] sm:$0xf]
    %v584 = vld [vmem:[%s0 + $0xac] sm:$0xf]
    %v585 = vld [vmem:[%s0 + $0xb0] sm:$0xf]
    %v586 = vld [vmem:[%s0 + $0xb4] sm:$0xf]
    %v587 = vld [vmem:[%s0 + $0xb8] sm:$0xf]
    %v588 = vld [vmem:[%s0 + $0xbc] sm:$0xf]
    %v589 = vld [vmem:[%s0 + $0xc0] sm:$0xf]
    %v590 = vld [vmem:[%s0 + $0xc4] sm:$0xf]
    %v591 = vld [vmem:[%s0 + $0xc8] sm:$0xf]
    %v592 = vld [vmem:[%s0 + $0xcc] sm:$0xf]
    %v593 = vld [vmem:[%s0 + $0xd0] sm:$0xf]
    %v594 = vld [vmem:[%s0 + $0xd4] sm:$0xf]
    %v595 = vld [vmem:[%s0 + $0xd8] sm:$0xf]
    %v596 = vld [vmem:[%s0 + $0xdc] sm:$0xf]
    %v597 = vld [vmem:[%s0 + $0xe0] sm:$0xf]
    %v598 = vld [vmem:[%s0 + $0xe4] sm:$0xf]
    %v599 = vld [vmem:[%s0 + $0xe8] sm:$0xf]
    %v600 = vld [vmem:[%s0 + $0xec] sm:$0xf]
    %v601 = vld [vmem:[%s0 + $0xf0] sm:$0xf]
    %v602 = vld [vmem:[%s0 + $0xf4] sm:$0xf]
    %v603 = vld [vmem:[%s0 + $0xf8] sm:$0xf]
    %v604 = vld [vmem:[%s0 + $0xfc] sm:$0xf]
    %v605 = vld [vmem:[%s1] sm:$0xf]
    %v606 = vld [vmem:[%s1 + $0x4] sm:$0xf]
    %v607 = vld [vmem:[%s1 + $0x8] sm:$0xf]
    %v608 = vld [vmem:[%s1 + $0xc] sm:$0xf]
    %v609 = vld [vmem:[%s1 + $0x10] sm:$0xf]
    %v610 = vld [vmem:[%s1 + $0x14] sm:$0xf]
    %v611 = vld [vmem:[%s1 + $0x18] sm:$0xf]
    %v612 = vld [vmem:[%s1 + $0x1c] sm:$0xf]
    %v613 = vld [vmem:[%s2] sm:$0x1]
    %v615 = vlaneseq
    %v616 = vshrl.u32 %v615, 7
    %v617 = vsub.s32 0, %v616
    %v618 = vrot.slane %v613, %v617
    %v652 = vunpack.c.l.b16 %v573
    %v653 = vunpack.c.l.b16 %v574
    %v654 = vunpack.c.l.b16 %v575
    %v655 = vunpack.c.l.b16 %v576
    %v656 = vunpack.c.l.b16 %v577
    %v657 = vunpack.c.l.b16 %v578
    %v658 = vunpack.c.l.b16 %v579
    %v659 = vunpack.c.l.b16 %v580
    %v660 = vunpack.c.l.b16 %v581
    %v661 = vunpack.c.l.b16 %v582
    %v662 = vunpack.c.l.b16 %v583
    %v663 = vunpack.c.l.b16 %v584
    %v664 = vunpack.c.l.b16 %v585
    %v665 = vunpack.c.l.b16 %v586
    %v666 = vunpack.c.l.b16 %v587
    %v667 = vunpack.c.l.b16 %v588
    %v668 = vunpack.c.l.b16 %v589
    %v669 = vunpack.c.l.b16 %v590
    %v670 = vunpack.c.l.b16 %v591
    %v671 = vunpack.c.l.b16 %v592
    %v672 = vunpack.c.l.b16 %v593
    %v673 = vunpack.c.l.b16 %v594
    %v674 = vunpack.c.l.b16 %v595
    %v675 = vunpack.c.l.b16 %v596
    %v676 = vunpack.c.l.b16 %v597
    %v677 = vunpack.c.l.b16 %v598
    %v678 = vunpack.c.l.b16 %v599
    %v679 = vunpack.c.l.b16 %v600
    %v680 = vunpack.c.l.b16 %v601
    %v681 = vunpack.c.l.b16 %v602
    %v682 = vunpack.c.l.b16 %v603
    %v683 = vunpack.c.l.b16 %v604
    %v684 = vpack.c.b16 %v653, %v652
    %v685 = vpack.c.b16 %v655, %v654
    %v686 = vpack.c.b16 %v657, %v656
    %v687 = vpack.c.b16 %v659, %v658
    %v688 = vpack.c.b16 %v661, %v660
    %v689 = vpack.c.b16 %v663, %v662
    %v690 = vpack.c.b16 %v665, %v664
    %v691 = vpack.c.b16 %v667, %v666
    %v692 = vpack.c.b16 %v669, %v668
    %v693 = vpack.c.b16 %v671, %v670
    %v694 = vpack.c.b16 %v673, %v672
    %v695 = vpack.c.b16 %v675, %v674
    %v696 = vpack.c.b16 %v677, %v676
    %v697 = vpack.c.b16 %v679, %v678
    %v698 = vpack.c.b16 %v681, %v680
    %v699 = vpack.c.b16 %v683, %v682
    %v708 = vunpack.c.l.b16 %v605
    %v709 = vunpack.c.l.b16 %v606
    %v710 = vunpack.c.l.b16 %v607
    %v711 = vunpack.c.l.b16 %v608
    %v712 = vunpack.c.l.b16 %v609
    %v713 = vunpack.c.l.b16 %v610
    %v714 = vunpack.c.l.b16 %v611
    %v715 = vunpack.c.l.b16 %v612
    %v716 = vpack.c.b16 %v709, %v708
    %v717 = vpack.c.b16 %v711, %v710
    %v718 = vpack.c.b16 %v713, %v712
    %v719 = vpack.c.b16 %v715, %v714
    %v725 = vsel %vm298, %v684, 0
    %v728 = vsel %vm298, %v685, 0
    %v731 = vsel %vm298, %v686, 0
    %v734 = vsel %vm298, %v687, 0
    %v737 = vsel %vm298, %v688, 0
    %v740 = vsel %vm298, %v689, 0
    %v743 = vsel %vm298, %v690, 0
    %v746 = vsel %vm298, %v691, 0
    %v749 = vsel %vm298, %v692, 0
    %v752 = vsel %vm298, %v693, 0
    %v755 = vsel %vm298, %v694, 0
    %v758 = vsel %vm298, %v695, 0
    %v761 = vsel %vm298, %v696, 0
    %v764 = vsel %vm298, %v697, 0
    %v767 = vsel %vm298, %v698, 0
    %v770 = vsel %vm298, %v699, 0
    %772 = vmatprep.subr.bf16.mxu0 0
    %773 = vmatpush1.bf16.msra.mxu0 %v716
    %774 = vmatprep.subr.bf16.mxu0 0
    %775 = vmatpush1.bf16.msra.mxu0 %v717
    %776 = vmatprep.subr.bf16.mxu0 0
    %777 = vmatpush1.bf16.msra.mxu0 %v718
    %778 = vmatprep.subr.bf16.mxu0 0
    %779 = vmatpush1.bf16.msra.mxu0 %v719
    %780 = vmatprep.subr.bf16.mxu0 0
    %781 = vmatpush1.bf16.msra.mxu0 0
    %782 = vmatprep.subr.bf16.mxu0 0
    %783 = vmatpush1.bf16.msra.mxu0 0
    %784 = vmatprep.subr.bf16.mxu0 0
    %785 = vmatpush1.bf16.msra.mxu0 0
    %786 = vmatprep.subr.bf16.mxu0 0
    %787 = vmatpush1.bf16.msra.mxu0 0
    %788 = vmatprep.subr.bf16.mxu0 0
    %789 = vmatpush1.bf16.msra.mxu0 0
    %790 = vmatprep.subr.bf16.mxu0 0
    %791 = vmatpush1.bf16.msra.mxu0 0
    %792 = vmatprep.subr.bf16.mxu0 0
    %793 = vmatpush1.bf16.msra.mxu0 0
    %794 = vmatprep.subr.bf16.mxu0 0
    %795 = vmatpush1.bf16.msra.mxu0 0
    %796 = vmatprep.subr.bf16.mxu0 0
    %797 = vmatpush1.bf16.msra.mxu0 0
    %798 = vmatprep.subr.bf16.mxu0 0
    %799 = vmatpush1.bf16.msra.mxu0 0
    %800 = vmatprep.subr.bf16.mxu0 0
    %801 = vmatpush1.bf16.msra.mxu0 0
    %802 = vmatprep.subr.bf16.mxu0 0
    %803 = vmatpush1.bf16.msra.mxu0 0
    %804 = vmatprep.mubr.bf16.mxu0 0
    %805 = vmatmul.mubr.bf16.gmra.mrb[0].mxu0 %v725
    %v806 = vpop.f32.mrb[0].mxu0
    %v807 = vadd.f32 %v618, %v806
    %v808 = vpop.f32.mrb[0].mxu0
    %v809 = vpop.f32.mrb[0].mxu0
    %v810 = vadd.f32 %v618, %v809
    %v811 = vpop.f32.mrb[0].mxu0
    %812 = vmatprep.mubr.bf16.mxu0 0
    %813 = vmatmul.mubr.bf16.gmra.mrb[0].mxu0 %v728
    %v814 = vpop.f32.mrb[0].mxu0
    %v815 = vadd.f32 %v618, %v814
    %v816 = vpop.f32.mrb[0].mxu0
    %v817 = vpop.f32.mrb[0].mxu0
    %v818 = vadd.f32 %v618, %v817
    %v819 = vpop.f32.mrb[0].mxu0
    %820 = vmatprep.mubr.bf16.mxu0 0
    %821 = vmatmul.mubr.bf16.gmra.mrb[0].mxu0 %v731
    %v822 = vpop.f32.mrb[0].mxu0
    %v823 = vadd.f32 %v618, %v822
    %v824 = vpop.f32.mrb[0].mxu0
    %v825 = vpop.f32.mrb[0].mxu0
    %v826 = vadd.f32 %v618, %v825
    %v827 = vpop.f32.mrb[0].mxu0
    %828 = vmatprep.mubr.bf16.mxu0 0
    %829 = vmatmul.mubr.bf16.gmra.mrb[0].mxu0 %v734
    %v830 = vpop.f32.mrb[0].mxu0
    %v831 = vadd.f32 %v618, %v830
    %v832 = vpop.f32.mrb[0].mxu0
    %v833 = vpop.f32.mrb[0].mxu0
    %v834 = vadd.f32 %v618, %v833
    %v835 = vpop.f32.mrb[0].mxu0
    %836 = vmatprep.mubr.bf16.mxu0 0
    %837 = vmatmul.mubr.bf16.gmra.mrb[0].mxu0 %v737
    %v838 = vpop.f32.mrb[0].mxu0
    %v839 = vadd.f32 %v618, %v838
    %v840 = vpop.f32.mrb[0].mxu0
    %v841 = vpop.f32.mrb[0].mxu0
    %v842 = vadd.f32 %v618, %v841
    %v843 = vpop.f32.mrb[0].mxu0
    %844 = vmatprep.mubr.bf16.mxu0 0
    %845 = vmatmul.mubr.bf16.gmra.mrb[0].mxu0 %v740
    %v846 = vpop.f32.mrb[0].mxu0
    %v847 = vadd.f32 %v618, %v846
    %v848 = vpop.f32.mrb[0].mxu0
    %v849 = vpop.f32.mrb[0].mxu0
    %v850 = vadd.f32 %v618, %v849
    %v851 = vpop.f32.mrb[0].mxu0
    %852 = vmatprep.mubr.bf16.mxu0 0
    %853 = vmatmul.mubr.bf16.gmra.mrb[0].mxu0 %v743
    %v854 = vpop.f32.mrb[0].mxu0
    %v855 = vadd.f32 %v618, %v854
    %v856 = vpop.f32.mrb[0].mxu0
    %v857 = vpop.f32.mrb[0].mxu0
    %v858 = vadd.f32 %v618, %v857
    %v859 = vpop.f32.mrb[0].mxu0
    %860 = vmatprep.mubr.bf16.mxu0 0
    %861 = vmatmul.mubr.bf16.gmra.mrb[0].mxu0 %v746
    %v862 = vpop.f32.mrb[0].mxu0
    %v863 = vadd.f32 %v618, %v862
    %v864 = vpop.f32.mrb[0].mxu0
    %v865 = vpop.f32.mrb[0].mxu0
    %v866 = vadd.f32 %v618, %v865
    %v867 = vpop.f32.mrb[0].mxu0
    %868 = vmatprep.mubr.bf16.mxu0 0
    %869 = vmatmul.mubr.bf16.gmra.mrb[0].mxu0 %v749
    %v870 = vpop.f32.mrb[0].mxu0
    %v871 = vadd.f32 %v618, %v870
    %v872 = vpop.f32.mrb[0].mxu0
    %v873 = vpop.f32.mrb[0].mxu0
    %v874 = vadd.f32 %v618, %v873
    %v875 = vpop.f32.mrb[0].mxu0
    %876 = vmatprep.mubr.bf16.mxu0 0
    %877 = vmatmul.mubr.bf16.gmra.mrb[0].mxu0 %v752
    %v878 = vpop.f32.mrb[0].mxu0
    %v879 = vadd.f32 %v618, %v878
    %v880 = vpop.f32.mrb[0].mxu0
    %v881 = vpop.f32.mrb[0].mxu0
    %v882 = vadd.f32 %v618, %v881
    %v883 = vpop.f32.mrb[0].mxu0
    %884 = vmatprep.mubr.bf16.mxu0 0
    %885 = vmatmul.mubr.bf16.gmra.mrb[0].mxu0 %v755
    %v886 = vpop.f32.mrb[0].mxu0
    %v887 = vadd.f32 %v618, %v886
    %v888 = vpop.f32.mrb[0].mxu0
    %v889 = vpop.f32.mrb[0].mxu0
    %v890 = vadd.f32 %v618, %v889
    %v891 = vpop.f32.mrb[0].mxu0
    %892 = vmatprep.mubr.bf16.mxu0 0
    %893 = vmatmul.mubr.bf16.gmra.mrb[0].mxu0 %v758
    %v894 = vpop.f32.mrb[0].mxu0
    %v895 = vadd.f32 %v618, %v894
    %v896 = vpop.f32.mrb[0].mxu0
    %v897 = vpop.f32.mrb[0].mxu0
    %v898 = vadd.f32 %v618, %v897
    %v899 = vpop.f32.mrb[0].mxu0
    %900 = vmatprep.mubr.bf16.mxu0 0
    %901 = vmatmul.mubr.bf16.gmra.mrb[0].mxu0 %v761
    %v902 = vpop.f32.mrb[0].mxu0
    %v903 = vadd.f32 %v618, %v902
    %v904 = vpop.f32.mrb[0].mxu0
    %v905 = vpop.f32.mrb[0].mxu0
    %v906 = vadd.f32 %v618, %v905
    %v907 = vpop.f32.mrb[0].mxu0
    %908 = vmatprep.mubr.bf16.mxu0 0
    %909 = vmatmul.mubr.bf16.gmra.mrb[0].mxu0 %v764
    %v910 = vpop.f32.mrb[0].mxu0
    %v911 = vadd.f32 %v618, %v910
    %v912 = vpop.f32.mrb[0].mxu0
    %v913 = vpop.f32.mrb[0].mxu0
    %v914 = vadd.f32 %v618, %v913
    %v915 = vpop.f32.mrb[0].mxu0
    %916 = vmatprep.mubr.bf16.mxu0 0
    %917 = vmatmul.mubr.bf16.gmra.mrb[0].mxu0 %v767
    %v918 = vpop.f32.mrb[0].mxu0
    %v919 = vadd.f32 %v618, %v918
    %v920 = vpop.f32.mrb[0].mxu0
    %v921 = vpop.f32.mrb[0].mxu0
    %v922 = vadd.f32 %v618, %v921
    %v923 = vpop.f32.mrb[0].mxu0
    %924 = vmatprep.mubr.bf16.mxu0 0
    %925 = vmatmul.mubr.bf16.gmra.mrb[0].mxu0 %v770
    %v926 = vpop.f32.mrb[0].mxu0
    %v927 = vadd.f32 %v618, %v926
    %v928 = vpop.f32.mrb[0].mxu0
    %v929 = vpop.f32.mrb[0].mxu0
    %v930 = vadd.f32 %v618, %v929
    %v931 = vpop.f32.mrb[0].mxu0
    %932 = vdwg.mxu0
    %v933 = vmax.f32 %v807, 0.0
    %v934 = vmax.f32 %v810, 0.0
    %v935 = vmax.f32 %v815, 0.0
    %v936 = vmax.f32 %v818, 0.0
    %v937 = vmax.f32 %v823, 0.0
    %v938 = vmax.f32 %v826, 0.0
    %v939 = vmax.f32 %v831, 0.0
    %v940 = vmax.f32 %v834, 0.0
    %v941 = vmax.f32 %v839, 0.0
    %v942 = vmax.f32 %v842, 0.0
    %v943 = vmax.f32 %v847, 0.0
    %v944 = vmax.f32 %v850, 0.0
    %v945 = vmax.f32 %v855, 0.0
    %v946 = vmax.f32 %v858, 0.0
    %v947 = vmax.f32 %v863, 0.0
    %v948 = vmax.f32 %v866, 0.0
    %v949 = vmax.f32 %v871, 0.0
    %v950 = vmax.f32 %v874, 0.0
    %v951 = vmax.f32 %v879, 0.0
    %v952 = vmax.f32 %v882, 0.0
    %v953 = vmax.f32 %v887, 0.0
    %v954 = vmax.f32 %v890, 0.0
    %v955 = vmax.f32 %v895, 0.0
    %v956 = vmax.f32 %v898, 0.0
    %v957 = vmax.f32 %v903, 0.0
    %v958 = vmax.f32 %v906, 0.0
    %v959 = vmax.f32 %v911, 0.0
    %v960 = vmax.f32 %v914, 0.0
    %v961 = vmax.f32 %v919, 0.0
    %v962 = vmax.f32 %v922, 0.0
    %v963 = vmax.f32 %v927, 0.0
    %v964 = vmax.f32 %v930, 0.0
    %s965 = scalar_lea.vmem [#allocation2], 360
    %966 = vst.msk [vmem:[%s965 + $0x1] sm:$0xff] %vm64, %v933
    %967 = vst.msk [vmem:[%s965 + $0x9] sm:$0xff] %vm64, %v934
    %968 = vst.msk [vmem:[%s965 + $0x11] sm:$0xff] %vm64, %v935
    %969 = vst.msk [vmem:[%s965 + $0x19] sm:$0xff] %vm64, %v936
    %970 = vst.msk [vmem:[%s965 + $0x29] sm:$0xff] %vm64, %v937
    %971 = vst.msk [vmem:[%s965 + $0x31] sm:$0xff] %vm64, %v938
    %972 = vst.msk [vmem:[%s965 + $0x39] sm:$0xff] %vm64, %v939
    %973 = vst.msk [vmem:[%s965 + $0x41] sm:$0xff] %vm64, %v940
    %974 = vst.msk [vmem:[%s965 + $0x51] sm:$0xff] %vm64, %v941
    %975 = vst.msk [vmem:[%s965 + $0x59] sm:$0xff] %vm64, %v942
    %976 = vst.msk [vmem:[%s965 + $0x61] sm:$0xff] %vm64, %v943
    %977 = vst.msk [vmem:[%s965 + $0x69] sm:$0xff] %vm64, %v944
    %978 = vst.msk [vmem:[%s965 + $0x79] sm:$0xff] %vm64, %v945
    %979 = vst.msk [vmem:[%s965 + $0x81] sm:$0xff] %vm64, %v946
    %980 = vst.msk [vmem:[%s965 + $0x89] sm:$0xff] %vm64, %v947
    %981 = vst.msk [vmem:[%s965 + $0x91] sm:$0xff] %vm64, %v948
    %982 = vst.msk [vmem:[%s965 + $0xa1] sm:$0xff] %vm64, %v949
    %983 = vst.msk [vmem:[%s965 + $0xa9] sm:$0xff] %vm64, %v950
    %984 = vst.msk [vmem:[%s965 + $0xb1] sm:$0xff] %vm64, %v951
    %985 = vst.msk [vmem:[%s965 + $0xb9] sm:$0xff] %vm64, %v952
    %986 = vst.msk [vmem:[%s965 + $0xc9] sm:$0xff] %vm64, %v953
    %987 = vst.msk [vmem:[%s965 + $0xd1] sm:$0xff] %vm64, %v954
    %988 = vst.msk [vmem:[%s965 + $0xd9] sm:$0xff] %vm64, %v955
    %989 = vst.msk [vmem:[%s965 + $0xe1] sm:$0xff] %vm64, %v956
    %990 = vst.msk [vmem:[%s965 + $0xf1] sm:$0xff] %vm64, %v957
    %991 = vst.msk [vmem:[%s965 + $0xf9] sm:$0xff] %vm64, %v958
    %992 = vst.msk [vmem:[%s965 + $0x101] sm:$0xff] %vm64, %v959
    %993 = vst.msk [vmem:[%s965 + $0x109] sm:$0xff] %vm64, %v960
    %994 = vst.msk [vmem:[%s965 + $0x119] sm:$0xff] %vm64, %v961
    %995 = vst.msk [vmem:[%s965 + $0x121] sm:$0xff] %vm64, %v962
    %996 = vst.msk [vmem:[%s965 + $0x129] sm:$0xff] %vm64, %v963
    %997 = vst.msk [vmem:[%s965 + $0x131] sm:$0xff] %vm64, %v964
    %v998 = vld [vmem:[%s0 + $0x100] sm:$0xf]
    %v999 = vld [vmem:[%s0 + $0x104] sm:$0xf]
    %v1000 = vld [vmem:[%s0 + $0x108] sm:$0xf]
    %v1001 = vld [vmem:[%s0 + $0x10c] sm:$0xf]
    %v1002 = vld [vmem:[%s0 + $0x110] sm:$0xf]
    %v1003 = vld [vmem:[%s0 + $0x114] sm:$0xf]
    %v1004 = vld [vmem:[%s0 + $0x118] sm:$0xf]
    %v1005 = vld [vmem:[%s0 + $0x11c] sm:$0xf]
    %v1006 = vld [vmem:[%s0 + $0x120] sm:$0xf]
    %v1007 = vld [vmem:[%s0 + $0x124] sm:$0xf]
    %v1008 = vld [vmem:[%s0 + $0x128] sm:$0xf]
    %v1009 = vld [vmem:[%s0 + $0x12c] sm:$0xf]
    %v1010 = vld [vmem:[%s0 + $0x130] sm:$0xf]
    %v1011 = vld [vmem:[%s0 + $0x134] sm:$0xf]
    %v1012 = vld [vmem:[%s0 + $0x138] sm:$0xf]
    %v1013 = vld [vmem:[%s0 + $0x13c] sm:$0xf]
    %v1014 = vld [vmem:[%s0 + $0x140] sm:$0xf]
    %v1015 = vld [vmem:[%s0 + $0x144] sm:$0xf]
    %v1016 = vld [vmem:[%s0 + $0x148] sm:$0xf]
    %v1017 = vld [vmem:[%s0 + $0x14c] sm:$0xf]
    %v1018 = vld [vmem:[%s0 + $0x150] sm:$0xf]
    %v1019 = vld [vmem:[%s0 + $0x154] sm:$0xf]
    %v1020 = vld [vmem:[%s0 + $0x158] sm:$0xf]
    %v1021 = vld [vmem:[%s0 + $0x15c] sm:$0xf]
    %v1022 = vld [vmem:[%s0 + $0x160] sm:$0xf]
    %v1023 = vld [vmem:[%s0 + $0x164] sm:$0xf]
    %v1024 = vld [vmem:[%s0 + $0x168] sm:$0xf]
    %v1025 = vld [vmem:[%s0 + $0x16c] sm:$0xf]
    %v1026 = vld [vmem:[%s0 + $0x170] sm:$0xf]
    %v1027 = vld [vmem:[%s0 + $0x174] sm:$0xf]
    %v1028 = vld [vmem:[%s0 + $0x178] sm:$0xf]
    %v1029 = vld [vmem:[%s0 + $0x17c] sm:$0xf]
    %v1030 = vld [vmem:[%s1] sm:$0xf]
    %v1031 = vld [vmem:[%s1 + $0x4] sm:$0xf]
    %v1032 = vld [vmem:[%s1 + $0x8] sm:$0xf]
    %v1033 = vld [vmem:[%s1 + $0xc] sm:$0xf]
    %v1034 = vld [vmem:[%s1 + $0x10] sm:$0xf]
    %v1035 = vld [vmem:[%s1 + $0x14] sm:$0xf]
    %v1036 = vld [vmem:[%s1 + $0x18] sm:$0xf]
    %v1037 = vld [vmem:[%s1 + $0x1c] sm:$0xf]
    %v1038 = vld [vmem:[%s2] sm:$0x1]
    %v1040 = vlaneseq
    %v1041 = vshrl.u32 %v1040, 7
    %v1042 = vsub.s32 0, %v1041
    %v1043 = vrot.slane %v1038, %v1042
    %v1077 = vunpack.c.l.b16 %v998
    %v1078 = vunpack.c.l.b16 %v999
    %v1079 = vunpack.c.l.b16 %v1000
    %v1080 = vunpack.c.l.b16 %v1001
    %v1081 = vunpack.c.l.b16 %v1002
    %v1082 = vunpack.c.l.b16 %v1003
    %v1083 = vunpack.c.l.b16 %v1004
    %v1084 = vunpack.c.l.b16 %v1005
    %v1085 = vunpack.c.l.b16 %v1006
    %v1086 = vunpack.c.l.b16 %v1007
    %v1087 = vunpack.c.l.b16 %v1008
    %v1088 = vunpack.c.l.b16 %v1009
    %v1089 = vunpack.c.l.b16 %v1010
    %v1090 = vunpack.c.l.b16 %v1011
    %v1091 = vunpack.c.l.b16 %v1012
    %v1092 = vunpack.c.l.b16 %v1013
    %v1093 = vunpack.c.l.b16 %v1014
    %v1094 = vunpack.c.l.b16 %v1015
    %v1095 = vunpack.c.l.b16 %v1016
    %v1096 = vunpack.c.l.b16 %v1017
    %v1097 = vunpack.c.l.b16 %v1018
    %v1098 = vunpack.c.l.b16 %v1019
    %v1099 = vunpack.c.l.b16 %v1020
    %v1100 = vunpack.c.l.b16 %v1021
    %v1101 = vunpack.c.l.b16 %v1022
    %v1102 = vunpack.c.l.b16 %v1023
    %v1103 = vunpack.c.l.b16 %v1024
    %v1104 = vunpack.c.l.b16 %v1025
    %v1105 = vunpack.c.l.b16 %v1026
    %v1106 = vunpack.c.l.b16 %v1027
    %v1107 = vunpack.c.l.b16 %v1028
    %v1108 = vunpack.c.l.b16 %v1029
    %v1109 = vpack.c.b16 %v1078, %v1077
    %v1110 = vpack.c.b16 %v1080, %v1079
    %v1111 = vpack.c.b16 %v1082, %v1081
    %v1112 = vpack.c.b16 %v1084, %v1083
    %v1113 = vpack.c.b16 %v1086, %v1085
    %v1114 = vpack.c.b16 %v1088, %v1087
    %v1115 = vpack.c.b16 %v1090, %v1089
    %v1116 = vpack.c.b16 %v1092, %v1091
    %v1117 = vpack.c.b16 %v1094, %v1093
    %v1118 = vpack.c.b16 %v1096, %v1095
    %v1119 = vpack.c.b16 %v1098, %v1097
    %v1120 = vpack.c.b16 %v1100, %v1099
    %v1121 = vpack.c.b16 %v1102, %v1101
    %v1122 = vpack.c.b16 %v1104, %v1103
    %v1123 = vpack.c.b16 %v1106, %v1105
    %v1124 = vpack.c.b16 %v1108, %v1107
    %v1133 = vunpack.c.l.b16 %v1030
    %v1134 = vunpack.c.l.b16 %v1031
    %v1135 = vunpack.c.l.b16 %v1032
    %v1136 = vunpack.c.l.b16 %v1033
    %v1137 = vunpack.c.l.b16 %v1034
    %v1138 = vunpack.c.l.b16 %v1035
    %v1139 = vunpack.c.l.b16 %v1036
    %v1140 = vunpack.c.l.b16 %v1037
    %v1141 = vpack.c.b16 %v1134, %v1133
    %v1142 = vpack.c.b16 %v1136, %v1135
    %v1143 = vpack.c.b16 %v1138, %v1137
    %v1144 = vpack.c.b16 %v1140, %v1139
    %v1150 = vsel %vm298, %v1109, 0
    %v1153 = vsel %vm298, %v1110, 0
    %v1156 = vsel %vm298, %v1111, 0
    %v1159 = vsel %vm298, %v1112, 0
    %v1162 = vsel %vm298, %v1113, 0
    %v1165 = vsel %vm298, %v1114, 0
    %v1168 = vsel %vm298, %v1115, 0
    %v1171 = vsel %vm298, %v1116, 0
    %v1174 = vsel %vm298, %v1117, 0
    %v1177 = vsel %vm298, %v1118, 0
    %v1180 = vsel %vm298, %v1119, 0
    %v1183 = vsel %vm298, %v1120, 0
    %v1186 = vsel %vm298, %v1121, 0
    %v1189 = vsel %vm298, %v1122, 0
    %v1192 = vsel %vm298, %v1123, 0
    %v1195 = vsel %vm298, %v1124, 0
    %1197 = vmatprep.subr.bf16.mxu0 0
    %1198 = vmatpush1.bf16.msra.mxu0 %v1141
    %1199 = vmatprep.subr.bf16.mxu0 0
    %1200 = vmatpush1.bf16.msra.mxu0 %v1142
    %1201 = vmatprep.subr.bf16.mxu0 0
    %1202 = vmatpush1.bf16.msra.mxu0 %v1143
    %1203 = vmatprep.subr.bf16.mxu0 0
    %1204 = vmatpush1.bf16.msra.mxu0 %v1144
    %1205 = vmatprep.subr.bf16.mxu0 0
    %1206 = vmatpush1.bf16.msra.mxu0 0
    %1207 = vmatprep.subr.bf16.mxu0 0
    %1208 = vmatpush1.bf16.msra.mxu0 0
    %1209 = vmatprep.subr.bf16.mxu0 0
    %1210 = vmatpush1.bf16.msra.mxu0 0
    %1211 = vmatprep.subr.bf16.mxu0 0
    %1212 = vmatpush1.bf16.msra.mxu0 0
    %1213 = vmatprep.subr.bf16.mxu0 0
    %1214 = vmatpush1.bf16.msra.mxu0 0
    %1215 = vmatprep.subr.bf16.mxu0 0
    %1216 = vmatpush1.bf16.msra.mxu0 0
    %1217 = vmatprep.subr.bf16.mxu0 0
    %1218 = vmatpush1.bf16.msra.mxu0 0
    %1219 = vmatprep.subr.bf16.mxu0 0
    %1220 = vmatpush1.bf16.msra.mxu0 0
    %1221 = vmatprep.subr.bf16.mxu0 0
    %1222 = vmatpush1.bf16.msra.mxu0 0
    %1223 = vmatprep.subr.bf16.mxu0 0
    %1224 = vmatpush1.bf16.msra.mxu0 0
    %1225 = vmatprep.subr.bf16.mxu0 0
    %1226 = vmatpush1.bf16.msra.mxu0 0
    %1227 = vmatprep.subr.bf16.mxu0 0
    %1228 = vmatpush1.bf16.msra.mxu0 0
    %1229 = vmatprep.mubr.bf16.mxu0 0
    %1230 = vmatmul.mubr.bf16.gmra.mrb[0].mxu0 %v1150
    %v1231 = vpop.f32.mrb[0].mxu0
    %v1232 = vadd.f32 %v1043, %v1231
    %v1233 = vpop.f32.mrb[0].mxu0
    %v1234 = vpop.f32.mrb[0].mxu0
    %v1235 = vadd.f32 %v1043, %v1234
    %v1236 = vpop.f32.mrb[0].mxu0
    %1237 = vmatprep.mubr.bf16.mxu0 0
    %1238 = vmatmul.mubr.bf16.gmra.mrb[0].mxu0 %v1153
    %v1239 = vpop.f32.mrb[0].mxu0
    %v1240 = vadd.f32 %v1043, %v1239
    %v1241 = vpop.f32.mrb[0].mxu0
    %v1242 = vpop.f32.mrb[0].mxu0
    %v1243 = vadd.f32 %v1043, %v1242
    %v1244 = vpop.f32.mrb[0].mxu0
    %1245 = vmatprep.mubr.bf16.mxu0 0
    %1246 = vmatmul.mubr.bf16.gmra.mrb[0].mxu0 %v1156
    %v1247 = vpop.f32.mrb[0].mxu0
    %v1248 = vadd.f32 %v1043, %v1247
    %v1249 = vpop.f32.mrb[0].mxu0
    %v1250 = vpop.f32.mrb[0].mxu0
    %v1251 = vadd.f32 %v1043, %v1250
    %v1252 = vpop.f32.mrb[0].mxu0
    %1253 = vmatprep.mubr.bf16.mxu0 0
    %1254 = vmatmul.mubr.bf16.gmra.mrb[0].mxu0 %v1159
    %v1255 = vpop.f32.mrb[0].mxu0
    %v1256 = vadd.f32 %v1043, %v1255
    %v1257 = vpop.f32.mrb[0].mxu0
    %v1258 = vpop.f32.mrb[0].mxu0
    %v1259 = vadd.f32 %v1043, %v1258
    %v1260 = vpop.f32.mrb[0].mxu0
    %1261 = vmatprep.mubr.bf16.mxu0 0
    %1262 = vmatmul.mubr.bf16.gmra.mrb[0].mxu0 %v1162
    %v1263 = vpop.f32.mrb[0].mxu0
    %v1264 = vadd.f32 %v1043, %v1263
    %v1265 = vpop.f32.mrb[0].mxu0
    %v1266 = vpop.f32.mrb[0].mxu0
    %v1267 = vadd.f32 %v1043, %v1266
    %v1268 = vpop.f32.mrb[0].mxu0
    %1269 = vmatprep.mubr.bf16.mxu0 0
    %1270 = vmatmul.mubr.bf16.gmra.mrb[0].mxu0 %v1165
    %v1271 = vpop.f32.mrb[0].mxu0
    %v1272 = vadd.f32 %v1043, %v1271
    %v1273 = vpop.f32.mrb[0].mxu0
    %v1274 = vpop.f32.mrb[0].mxu0
    %v1275 = vadd.f32 %v1043, %v1274
    %v1276 = vpop.f32.mrb[0].mxu0
    %1277 = vmatprep.mubr.bf16.mxu0 0
    %1278 = vmatmul.mubr.bf16.gmra.mrb[0].mxu0 %v1168
    %v1279 = vpop.f32.mrb[0].mxu0
    %v1280 = vadd.f32 %v1043, %v1279
    %v1281 = vpop.f32.mrb[0].mxu0
    %v1282 = vpop.f32.mrb[0].mxu0
    %v1283 = vadd.f32 %v1043, %v1282
    %v1284 = vpop.f32.mrb[0].mxu0
    %1285 = vmatprep.mubr.bf16.mxu0 0
    %1286 = vmatmul.mubr.bf16.gmra.mrb[0].mxu0 %v1171
    %v1287 = vpop.f32.mrb[0].mxu0
    %v1288 = vadd.f32 %v1043, %v1287
    %v1289 = vpop.f32.mrb[0].mxu0
    %v1290 = vpop.f32.mrb[0].mxu0
    %v1291 = vadd.f32 %v1043, %v1290
    %v1292 = vpop.f32.mrb[0].mxu0
    %1293 = vmatprep.mubr.bf16.mxu0 0
    %1294 = vmatmul.mubr.bf16.gmra.mrb[0].mxu0 %v1174
    %v1295 = vpop.f32.mrb[0].mxu0
    %v1296 = vadd.f32 %v1043, %v1295
    %v1297 = vpop.f32.mrb[0].mxu0
    %v1298 = vpop.f32.mrb[0].mxu0
    %v1299 = vadd.f32 %v1043, %v1298
    %v1300 = vpop.f32.mrb[0].mxu0
    %1301 = vmatprep.mubr.bf16.mxu0 0
    %1302 = vmatmul.mubr.bf16.gmra.mrb[0].mxu0 %v1177
    %v1303 = vpop.f32.mrb[0].mxu0
    %v1304 = vadd.f32 %v1043, %v1303
    %v1305 = vpop.f32.mrb[0].mxu0
    %v1306 = vpop.f32.mrb[0].mxu0
    %v1307 = vadd.f32 %v1043, %v1306
    %v1308 = vpop.f32.mrb[0].mxu0
    %1309 = vmatprep.mubr.bf16.mxu0 0
    %1310 = vmatmul.mubr.bf16.gmra.mrb[0].mxu0 %v1180
    %v1311 = vpop.f32.mrb[0].mxu0
    %v1312 = vadd.f32 %v1043, %v1311
    %v1313 = vpop.f32.mrb[0].mxu0
    %v1314 = vpop.f32.mrb[0].mxu0
    %v1315 = vadd.f32 %v1043, %v1314
    %v1316 = vpop.f32.mrb[0].mxu0
    %1317 = vmatprep.mubr.bf16.mxu0 0
    %1318 = vmatmul.mubr.bf16.gmra.mrb[0].mxu0 %v1183
    %v1319 = vpop.f32.mrb[0].mxu0
    %v1320 = vadd.f32 %v1043, %v1319
    %v1321 = vpop.f32.mrb[0].mxu0
    %v1322 = vpop.f32.mrb[0].mxu0
    %v1323 = vadd.f32 %v1043, %v1322
    %v1324 = vpop.f32.mrb[0].mxu0
    %1325 = vmatprep.mubr.bf16.mxu0 0
    %1326 = vmatmul.mubr.bf16.gmra.mrb[0].mxu0 %v1186
    %v1327 = vpop.f32.mrb[0].mxu0
    %v1328 = vadd.f32 %v1043, %v1327
    %v1329 = vpop.f32.mrb[0].mxu0
    %v1330 = vpop.f32.mrb[0].mxu0
    %v1331 = vadd.f32 %v1043, %v1330
    %v1332 = vpop.f32.mrb[0].mxu0
    %1333 = vmatprep.mubr.bf16.mxu0 0
    %1334 = vmatmul.mubr.bf16.gmra.mrb[0].mxu0 %v1189
    %v1335 = vpop.f32.mrb[0].mxu0
    %v1336 = vadd.f32 %v1043, %v1335
    %v1337 = vpop.f32.mrb[0].mxu0
    %v1338 = vpop.f32.mrb[0].mxu0
    %v1339 = vadd.f32 %v1043, %v1338
    %v1340 = vpop.f32.mrb[0].mxu0
    %1341 = vmatprep.mubr.bf16.mxu0 0
    %1342 = vmatmul.mubr.bf16.gmra.mrb[0].mxu0 %v1192
    %v1343 = vpop.f32.mrb[0].mxu0
    %v1344 = vadd.f32 %v1043, %v1343
    %v1345 = vpop.f32.mrb[0].mxu0
    %v1346 = vpop.f32.mrb[0].mxu0
    %v1347 = vadd.f32 %v1043, %v1346
    %v1348 = vpop.f32.mrb[0].mxu0
    %1349 = vmatprep.mubr.bf16.mxu0 0
    %1350 = vmatmul.mubr.bf16.gmra.mrb[0].mxu0 %v1195
    %v1351 = vpop.f32.mrb[0].mxu0
    %v1352 = vadd.f32 %v1043, %v1351
    %v1353 = vpop.f32.mrb[0].mxu0
    %v1354 = vpop.f32.mrb[0].mxu0
    %v1355 = vadd.f32 %v1043, %v1354
    %v1356 = vpop.f32.mrb[0].mxu0
    %1357 = vdwg.mxu0
    %v1358 = vmax.f32 %v1232, 0.0
    %v1359 = vmax.f32 %v1235, 0.0
    %v1360 = vmax.f32 %v1240, 0.0
    %v1361 = vmax.f32 %v1243, 0.0
    %v1362 = vmax.f32 %v1248, 0.0
    %v1363 = vmax.f32 %v1251, 0.0
    %v1364 = vmax.f32 %v1256, 0.0
    %v1365 = vmax.f32 %v1259, 0.0
    %v1366 = vmax.f32 %v1264, 0.0
    %v1367 = vmax.f32 %v1267, 0.0
    %v1368 = vmax.f32 %v1272, 0.0
    %v1369 = vmax.f32 %v1275, 0.0
    %v1370 = vmax.f32 %v1280, 0.0
    %v1371 = vmax.f32 %v1283, 0.0
    %v1372 = vmax.f32 %v1288, 0.0
    %v1373 = vmax.f32 %v1291, 0.0
    %v1374 = vmax.f32 %v1296, 0.0
    %v1375 = vmax.f32 %v1299, 0.0
    %v1376 = vmax.f32 %v1304, 0.0
    %v1377 = vmax.f32 %v1307, 0.0
    %v1378 = vmax.f32 %v1312, 0.0
    %v1379 = vmax.f32 %v1315, 0.0
    %v1380 = vmax.f32 %v1320, 0.0
    %v1381 = vmax.f32 %v1323, 0.0
    %v1382 = vmax.f32 %v1328, 0.0
    %v1383 = vmax.f32 %v1331, 0.0
    %v1384 = vmax.f32 %v1336, 0.0
    %v1385 = vmax.f32 %v1339, 0.0
    %v1386 = vmax.f32 %v1344, 0.0
    %v1387 = vmax.f32 %v1347, 0.0
    %v1388 = vmax.f32 %v1352, 0.0
    %v1389 = vmax.f32 %v1355, 0.0
    %s1390 = scalar_lea.vmem [#allocation2], 680
    %1391 = vst.msk [vmem:[%s1390 + $0x1] sm:$0xff] %vm64, %v1358
    %1392 = vst.msk [vmem:[%s1390 + $0x9] sm:$0xff] %vm64, %v1359
    %1393 = vst.msk [vmem:[%s1390 + $0x11] sm:$0xff] %vm64, %v1360
    %1394 = vst.msk [vmem:[%s1390 + $0x19] sm:$0xff] %vm64, %v1361
    %1395 = vst.msk [vmem:[%s1390 + $0x29] sm:$0xff] %vm64, %v1362
    %1396 = vst.msk [vmem:[%s1390 + $0x31] sm:$0xff] %vm64, %v1363
    %1397 = vst.msk [vmem:[%s1390 + $0x39] sm:$0xff] %vm64, %v1364
    %1398 = vst.msk [vmem:[%s1390 + $0x41] sm:$0xff] %vm64, %v1365
    %1399 = vst.msk [vmem:[%s1390 + $0x51] sm:$0xff] %vm64, %v1366
    %1400 = vst.msk [vmem:[%s1390 + $0x59] sm:$0xff] %vm64, %v1367
    %1401 = vst.msk [vmem:[%s1390 + $0x61] sm:$0xff] %vm64, %v1368
    %1402 = vst.msk [vmem:[%s1390 + $0x69] sm:$0xff] %vm64, %v1369
    %1403 = vst.msk [vmem:[%s1390 + $0x79] sm:$0xff] %vm64, %v1370
    %1404 = vst.msk [vmem:[%s1390 + $0x81] sm:$0xff] %vm64, %v1371
    %1405 = vst.msk [vmem:[%s1390 + $0x89] sm:$0xff] %vm64, %v1372
    %1406 = vst.msk [vmem:[%s1390 + $0x91] sm:$0xff] %vm64, %v1373
    %1407 = vst.msk [vmem:[%s1390 + $0xa1] sm:$0xff] %vm64, %v1374
    %1408 = vst.msk [vmem:[%s1390 + $0xa9] sm:$0xff] %vm64, %v1375
    %1409 = vst.msk [vmem:[%s1390 + $0xb1] sm:$0xff] %vm64, %v1376
    %1410 = vst.msk [vmem:[%s1390 + $0xb9] sm:$0xff] %vm64, %v1377
    %1411 = vst.msk [vmem:[%s1390 + $0xc9] sm:$0xff] %vm64, %v1378
    %1412 = vst.msk [vmem:[%s1390 + $0xd1] sm:$0xff] %vm64, %v1379
    %1413 = vst.msk [vmem:[%s1390 + $0xd9] sm:$0xff] %vm64, %v1380
    %1414 = vst.msk [vmem:[%s1390 + $0xe1] sm:$0xff] %vm64, %v1381
    %1415 = vst.msk [vmem:[%s1390 + $0xf1] sm:$0xff] %vm64, %v1382
    %1416 = vst.msk [vmem:[%s1390 + $0xf9] sm:$0xff] %vm64, %v1383
    %1417 = vst.msk [vmem:[%s1390 + $0x101] sm:$0xff] %vm64, %v1384
    %1418 = vst.msk [vmem:[%s1390 + $0x109] sm:$0xff] %vm64, %v1385
    %1419 = vst.msk [vmem:[%s1390 + $0x119] sm:$0xff] %vm64, %v1386
    %1420 = vst.msk [vmem:[%s1390 + $0x121] sm:$0xff] %vm64, %v1387
    %1421 = vst.msk [vmem:[%s1390 + $0x129] sm:$0xff] %vm64, %v1388
    %1422 = vst.msk [vmem:[%s1390 + $0x131] sm:$0xff] %vm64, %v1389
    %v1423 = vld [vmem:[%s0 + $0x180] sm:$0xf]
    %v1424 = vld [vmem:[%s0 + $0x184] sm:$0xf]
    %v1425 = vld [vmem:[%s0 + $0x188] sm:$0xf]
    %v1426 = vld [vmem:[%s0 + $0x18c] sm:$0xf]
    %v1427 = vld [vmem:[%s0 + $0x190] sm:$0xf]
    %v1428 = vld [vmem:[%s0 + $0x194] sm:$0xf]
    %v1429 = vld [vmem:[%s0 + $0x198] sm:$0xf]
    %v1430 = vld [vmem:[%s0 + $0x19c] sm:$0xf]
    %v1431 = vld [vmem:[%s0 + $0x1a0] sm:$0xf]
    %v1432 = vld [vmem:[%s0 + $0x1a4] sm:$0xf]
    %v1433 = vld [vmem:[%s0 + $0x1a8] sm:$0xf]
    %v1434 = vld [vmem:[%s0 + $0x1ac] sm:$0xf]
    %v1435 = vld [vmem:[%s0 + $0x1b0] sm:$0xf]
    %v1436 = vld [vmem:[%s0 + $0x1b4] sm:$0xf]
    %v1437 = vld [vmem:[%s0 + $0x1b8] sm:$0xf]
    %v1438 = vld [vmem:[%s0 + $0x1bc] sm:$0xf]
    %v1439 = vld [vmem:[%s0 + $0x1c0] sm:$0xf]
    %v1440 = vld [vmem:[%s0 + $0x1c4] sm:$0xf]
    %v1441 = vld [vmem:[%s0 + $0x1c8] sm:$0xf]
    %v1442 = vld [vmem:[%s0 + $0x1cc] sm:$0xf]
    %v1443 = vld [vmem:[%s0 + $0x1d0] sm:$0xf]
    %v1444 = vld [vmem:[%s0 + $0x1d4] sm:$0xf]
    %v1445 = vld [vmem:[%s0 + $0x1d8] sm:$0xf]
    %v1446 = vld [vmem:[%s0 + $0x1dc] sm:$0xf]
    %v1447 = vld [vmem:[%s0 + $0x1e0] sm:$0xf]
    %v1448 = vld [vmem:[%s0 + $0x1e4] sm:$0xf]
    %v1449 = vld [vmem:[%s0 + $0x1e8] sm:$0xf]
    %v1450 = vld [vmem:[%s0 + $0x1ec] sm:$0xf]
    %v1451 = vld [vmem:[%s0 + $0x1f0] sm:$0xf]
    %v1452 = vld [vmem:[%s0 + $0x1f4] sm:$0xf]
    %v1453 = vld [vmem:[%s0 + $0x1f8] sm:$0xf]
    %v1454 = vld [vmem:[%s0 + $0x1fc] sm:$0xf]
    %v1455 = vld [vmem:[%s1] sm:$0xf]
    %v1456 = vld [vmem:[%s1 + $0x4] sm:$0xf]
    %v1457 = vld [vmem:[%s1 + $0x8] sm:$0xf]
    %v1458 = vld [vmem:[%s1 + $0xc] sm:$0xf]
    %v1459 = vld [vmem:[%s1 + $0x10] sm:$0xf]
    %v1460 = vld [vmem:[%s1 + $0x14] sm:$0xf]
    %v1461 = vld [vmem:[%s1 + $0x18] sm:$0xf]
    %v1462 = vld [vmem:[%s1 + $0x1c] sm:$0xf]
    %v1463 = vld [vmem:[%s2] sm:$0x1]
    %v1465 = vlaneseq
    %v1466 = vshrl.u32 %v1465, 7
    %v1467 = vsub.s32 0, %v1466
    %v1468 = vrot.slane %v1463, %v1467
    %v1502 = vunpack.c.l.b16 %v1423
    %v1503 = vunpack.c.l.b16 %v1424
    %v1504 = vunpack.c.l.b16 %v1425
    %v1505 = vunpack.c.l.b16 %v1426
    %v1506 = vunpack.c.l.b16 %v1427
    %v1507 = vunpack.c.l.b16 %v1428
    %v1508 = vunpack.c.l.b16 %v1429
    %v1509 = vunpack.c.l.b16 %v1430
    %v1510 = vunpack.c.l.b16 %v1431
    %v1511 = vunpack.c.l.b16 %v1432
    %v1512 = vunpack.c.l.b16 %v1433
    %v1513 = vunpack.c.l.b16 %v1434
    %v1514 = vunpack.c.l.b16 %v1435
    %v1515 = vunpack.c.l.b16 %v1436
    %v1516 = vunpack.c.l.b16 %v1437
    %v1517 = vunpack.c.l.b16 %v1438
    %v1518 = vunpack.c.l.b16 %v1439
    %v1519 = vunpack.c.l.b16 %v1440
    %v1520 = vunpack.c.l.b16 %v1441
    %v1521 = vunpack.c.l.b16 %v1442
    %v1522 = vunpack.c.l.b16 %v1443
    %v1523 = vunpack.c.l.b16 %v1444
    %v1524 = vunpack.c.l.b16 %v1445
    %v1525 = vunpack.c.l.b16 %v1446
    %v1526 = vunpack.c.l.b16 %v1447
    %v1527 = vunpack.c.l.b16 %v1448
    %v1528 = vunpack.c.l.b16 %v1449
    %v1529 = vunpack.c.l.b16 %v1450
    %v1530 = vunpack.c.l.b16 %v1451
    %v1531 = vunpack.c.l.b16 %v1452
    %v1532 = vunpack.c.l.b16 %v1453
    %v1533 = vunpack.c.l.b16 %v1454
    %v1534 = vpack.c.b16 %v1503, %v1502
    %v1535 = vpack.c.b16 %v1505, %v1504
    %v1536 = vpack.c.b16 %v1507, %v1506
    %v1537 = vpack.c.b16 %v1509, %v1508
    %v1538 = vpack.c.b16 %v1511, %v1510
    %v1539 = vpack.c.b16 %v1513, %v1512
    %v1540 = vpack.c.b16 %v1515, %v1514
    %v1541 = vpack.c.b16 %v1517, %v1516
    %v1542 = vpack.c.b16 %v1519, %v1518
    %v1543 = vpack.c.b16 %v1521, %v1520
    %v1544 = vpack.c.b16 %v1523, %v1522
    %v1545 = vpack.c.b16 %v1525, %v1524
    %v1546 = vpack.c.b16 %v1527, %v1526
    %v1547 = vpack.c.b16 %v1529, %v1528
    %v1548 = vpack.c.b16 %v1531, %v1530
    %v1549 = vpack.c.b16 %v1533, %v1532
    %v1558 = vunpack.c.l.b16 %v1455
    %v1559 = vunpack.c.l.b16 %v1456
    %v1560 = vunpack.c.l.b16 %v1457
    %v1561 = vunpack.c.l.b16 %v1458
    %v1562 = vunpack.c.l.b16 %v1459
    %v1563 = vunpack.c.l.b16 %v1460
    %v1564 = vunpack.c.l.b16 %v1461
    %v1565 = vunpack.c.l.b16 %v1462
    %v1566 = vpack.c.b16 %v1559, %v1558
    %v1567 = vpack.c.b16 %v1561, %v1560
    %v1568 = vpack.c.b16 %v1563, %v1562
    %v1569 = vpack.c.b16 %v1565, %v1564
    %v1575 = vsel %vm298, %v1534, 0
    %v1578 = vsel %vm298, %v1535, 0
    %v1581 = vsel %vm298, %v1536, 0
    %v1584 = vsel %vm298, %v1537, 0
    %v1587 = vsel %vm298, %v1538, 0
    %v1590 = vsel %vm298, %v1539, 0
    %v1593 = vsel %vm298, %v1540, 0
    %v1596 = vsel %vm298, %v1541, 0
    %v1599 = vsel %vm298, %v1542, 0
    %v1602 = vsel %vm298, %v1543, 0
    %v1605 = vsel %vm298, %v1544, 0
    %v1608 = vsel %vm298, %v1545, 0
    %v1611 = vsel %vm298, %v1546, 0
    %v1614 = vsel %vm298, %v1547, 0
    %v1617 = vsel %vm298, %v1548, 0
    %v1620 = vsel %vm298, %v1549, 0
    %1622 = vmatprep.subr.bf16.mxu0 0
    %1623 = vmatpush1.bf16.msra.mxu0 %v1566
    %1624 = vmatprep.subr.bf16.mxu0 0
    %1625 = vmatpush1.bf16.msra.mxu0 %v1567
    %1626 = vmatprep.subr.bf16.mxu0 0
    %1627 = vmatpush1.bf16.msra.mxu0 %v1568
    %1628 = vmatprep.subr.bf16.mxu0 0
    %1629 = vmatpush1.bf16.msra.mxu0 %v1569
    %1630 = vmatprep.subr.bf16.mxu0 0
    %1631 = vmatpush1.bf16.msra.mxu0 0
    %1632 = vmatprep.subr.bf16.mxu0 0
    %1633 = vmatpush1.bf16.msra.mxu0 0
    %1634 = vmatprep.subr.bf16.mxu0 0
    %1635 = vmatpush1.bf16.msra.mxu0 0
    %1636 = vmatprep.subr.bf16.mxu0 0
    %1637 = vmatpush1.bf16.msra.mxu0 0
    %1638 = vmatprep.subr.bf16.mxu0 0
    %1639 = vmatpush1.bf16.msra.mxu0 0
    %1640 = vmatprep.subr.bf16.mxu0 0
    %1641 = vmatpush1.bf16.msra.mxu0 0
    %1642 = vmatprep.subr.bf16.mxu0 0
    %1643 = vmatpush1.bf16.msra.mxu0 0
    %1644 = vmatprep.subr.bf16.mxu0 0
    %1645 = vmatpush1.bf16.msra.mxu0 0
    %1646 = vmatprep.subr.bf16.mxu0 0
    %1647 = vmatpush1.bf16.msra.mxu0 0
    %1648 = vmatprep.subr.bf16.mxu0 0
    %1649 = vmatpush1.bf16.msra.mxu0 0
    %1650 = vmatprep.subr.bf16.mxu0 0
    %1651 = vmatpush1.bf16.msra.mxu0 0
    %1652 = vmatprep.subr.bf16.mxu0 0
    %1653 = vmatpush1.bf16.msra.mxu0 0
    %1654 = vmatprep.mubr.bf16.mxu0 0
    %1655 = vmatmul.mubr.bf16.gmra.mrb[0].mxu0 %v1575
    %v1656 = vpop.f32.mrb[0].mxu0
    %v1657 = vadd.f32 %v1468, %v1656
    %v1658 = vpop.f32.mrb[0].mxu0
    %v1659 = vpop.f32.mrb[0].mxu0
    %v1660 = vadd.f32 %v1468, %v1659
    %v1661 = vpop.f32.mrb[0].mxu0
    %1662 = vmatprep.mubr.bf16.mxu0 0
    %1663 = vmatmul.mubr.bf16.gmra.mrb[0].mxu0 %v1578
    %v1664 = vpop.f32.mrb[0].mxu0
    %v1665 = vadd.f32 %v1468, %v1664
    %v1666 = vpop.f32.mrb[0].mxu0
    %v1667 = vpop.f32.mrb[0].mxu0
    %v1668 = vadd.f32 %v1468, %v1667
    %v1669 = vpop.f32.mrb[0].mxu0
    %1670 = vmatprep.mubr.bf16.mxu0 0
    %1671 = vmatmul.mubr.bf16.gmra.mrb[0].mxu0 %v1581
    %v1672 = vpop.f32.mrb[0].mxu0
    %v1673 = vadd.f32 %v1468, %v1672
    %v1674 = vpop.f32.mrb[0].mxu0
    %v1675 = vpop.f32.mrb[0].mxu0
    %v1676 = vadd.f32 %v1468, %v1675
    %v1677 = vpop.f32.mrb[0].mxu0
    %1678 = vmatprep.mubr.bf16.mxu0 0
    %1679 = vmatmul.mubr.bf16.gmra.mrb[0].mxu0 %v1584
    %v1680 = vpop.f32.mrb[0].mxu0
    %v1681 = vadd.f32 %v1468, %v1680
    %v1682 = vpop.f32.mrb[0].mxu0
    %v1683 = vpop.f32.mrb[0].mxu0
    %v1684 = vadd.f32 %v1468, %v1683
    %v1685 = vpop.f32.mrb[0].mxu0
    %1686 = vmatprep.mubr.bf16.mxu0 0
    %1687 = vmatmul.mubr.bf16.gmra.mrb[0].mxu0 %v1587
    %v1688 = vpop.f32.mrb[0].mxu0
    %v1689 = vadd.f32 %v1468, %v1688
    %v1690 = vpop.f32.mrb[0].mxu0
    %v1691 = vpop.f32.mrb[0].mxu0
    %v1692 = vadd.f32 %v1468, %v1691
    %v1693 = vpop.f32.mrb[0].mxu0
    %1694 = vmatprep.mubr.bf16.mxu0 0
    %1695 = vmatmul.mubr.bf16.gmra.mrb[0].mxu0 %v1590
    %v1696 = vpop.f32.mrb[0].mxu0
    %v1697 = vadd.f32 %v1468, %v1696
    %v1698 = vpop.f32.mrb[0].mxu0
    %v1699 = vpop.f32.mrb[0].mxu0
    %v1700 = vadd.f32 %v1468, %v1699
    %v1701 = vpop.f32.mrb[0].mxu0
    %1702 = vmatprep.mubr.bf16.mxu0 0
    %1703 = vmatmul.mubr.bf16.gmra.mrb[0].mxu0 %v1593
    %v1704 = vpop.f32.mrb[0].mxu0
    %v1705 = vadd.f32 %v1468, %v1704
    %v1706 = vpop.f32.mrb[0].mxu0
    %v1707 = vpop.f32.mrb[0].mxu0
    %v1708 = vadd.f32 %v1468, %v1707
    %v1709 = vpop.f32.mrb[0].mxu0
    %1710 = vmatprep.mubr.bf16.mxu0 0
    %1711 = vmatmul.mubr.bf16.gmra.mrb[0].mxu0 %v1596
    %v1712 = vpop.f32.mrb[0].mxu0
    %v1713 = vadd.f32 %v1468, %v1712
    %v1714 = vpop.f32.mrb[0].mxu0
    %v1715 = vpop.f32.mrb[0].mxu0
    %v1716 = vadd.f32 %v1468, %v1715
    %v1717 = vpop.f32.mrb[0].mxu0
    %1718 = vmatprep.mubr.bf16.mxu0 0
    %1719 = vmatmul.mubr.bf16.gmra.mrb[0].mxu0 %v1599
    %v1720 = vpop.f32.mrb[0].mxu0
    %v1721 = vadd.f32 %v1468, %v1720
    %v1722 = vpop.f32.mrb[0].mxu0
    %v1723 = vpop.f32.mrb[0].mxu0
    %v1724 = vadd.f32 %v1468, %v1723
    %v1725 = vpop.f32.mrb[0].mxu0
    %1726 = vmatprep.mubr.bf16.mxu0 0
    %1727 = vmatmul.mubr.bf16.gmra.mrb[0].mxu0 %v1602
    %v1728 = vpop.f32.mrb[0].mxu0
    %v1729 = vadd.f32 %v1468, %v1728
    %v1730 = vpop.f32.mrb[0].mxu0
    %v1731 = vpop.f32.mrb[0].mxu0
    %v1732 = vadd.f32 %v1468, %v1731
    %v1733 = vpop.f32.mrb[0].mxu0
    %1734 = vmatprep.mubr.bf16.mxu0 0
    %1735 = vmatmul.mubr.bf16.gmra.mrb[0].mxu0 %v1605
    %v1736 = vpop.f32.mrb[0].mxu0
    %v1737 = vadd.f32 %v1468, %v1736
    %v1738 = vpop.f32.mrb[0].mxu0
    %v1739 = vpop.f32.mrb[0].mxu0
    %v1740 = vadd.f32 %v1468, %v1739
    %v1741 = vpop.f32.mrb[0].mxu0
    %1742 = vmatprep.mubr.bf16.mxu0 0
    %1743 = vmatmul.mubr.bf16.gmra.mrb[0].mxu0 %v1608
    %v1744 = vpop.f32.mrb[0].mxu0
    %v1745 = vadd.f32 %v1468, %v1744
    %v1746 = vpop.f32.mrb[0].mxu0
    %v1747 = vpop.f32.mrb[0].mxu0
    %v1748 = vadd.f32 %v1468, %v1747
    %v1749 = vpop.f32.mrb[0].mxu0
    %1750 = vmatprep.mubr.bf16.mxu0 0
    %1751 = vmatmul.mubr.bf16.gmra.mrb[0].mxu0 %v1611
    %v1752 = vpop.f32.mrb[0].mxu0
    %v1753 = vadd.f32 %v1468, %v1752
    %v1754 = vpop.f32.mrb[0].mxu0
    %v1755 = vpop.f32.mrb[0].mxu0
    %v1756 = vadd.f32 %v1468, %v1755
    %v1757 = vpop.f32.mrb[0].mxu0
    %1758 = vmatprep.mubr.bf16.mxu0 0
    %1759 = vmatmul.mubr.bf16.gmra.mrb[0].mxu0 %v1614
    %v1760 = vpop.f32.mrb[0].mxu0
    %v1761 = vadd.f32 %v1468, %v1760
    %v1762 = vpop.f32.mrb[0].mxu0
    %v1763 = vpop.f32.mrb[0].mxu0
    %v1764 = vadd.f32 %v1468, %v1763
    %v1765 = vpop.f32.mrb[0].mxu0
    %1766 = vmatprep.mubr.bf16.mxu0 0
    %1767 = vmatmul.mubr.bf16.gmra.mrb[0].mxu0 %v1617
    %v1768 = vpop.f32.mrb[0].mxu0
    %v1769 = vadd.f32 %v1468, %v1768
    %v1770 = vpop.f32.mrb[0].mxu0
    %v1771 = vpop.f32.mrb[0].mxu0
    %v1772 = vadd.f32 %v1468, %v1771
    %v1773 = vpop.f32.mrb[0].mxu0
    %1774 = vmatprep.mubr.bf16.mxu0 0
    %1775 = vmatmul.mubr.bf16.gmra.mrb[0].mxu0 %v1620
    %v1776 = vpop.f32.mrb[0].mxu0
    %v1777 = vadd.f32 %v1468, %v1776
    %v1778 = vpop.f32.mrb[0].mxu0
    %v1779 = vpop.f32.mrb[0].mxu0
    %v1780 = vadd.f32 %v1468, %v1779
    %v1781 = vpop.f32.mrb[0].mxu0
    %1782 = vdwg.mxu0
    %v1783 = vmax.f32 %v1657, 0.0
    %v1784 = vmax.f32 %v1660, 0.0
    %v1785 = vmax.f32 %v1665, 0.0
    %v1786 = vmax.f32 %v1668, 0.0
    %v1787 = vmax.f32 %v1673, 0.0
    %v1788 = vmax.f32 %v1676, 0.0
    %v1789 = vmax.f32 %v1681, 0.0
    %v1790 = vmax.f32 %v1684, 0.0
    %v1791 = vmax.f32 %v1689, 0.0
    %v1792 = vmax.f32 %v1692, 0.0
    %v1793 = vmax.f32 %v1697, 0.0
    %v1794 = vmax.f32 %v1700, 0.0
    %v1795 = vmax.f32 %v1705, 0.0
    %v1796 = vmax.f32 %v1708, 0.0
    %v1797 = vmax.f32 %v1713, 0.0
    %v1798 = vmax.f32 %v1716, 0.0
    %v1799 = vmax.f32 %v1721, 0.0
    %v1800 = vmax.f32 %v1724, 0.0
    %v1801 = vmax.f32 %v1729, 0.0
    %v1802 = vmax.f32 %v1732, 0.0
    %v1803 = vmax.f32 %v1737, 0.0
    %v1804 = vmax.f32 %v1740, 0.0
    %v1805 = vmax.f32 %v1745, 0.0
    %v1806 = vmax.f32 %v1748, 0.0
    %v1807 = vmax.f32 %v1753, 0.0
    %v1808 = vmax.f32 %v1756, 0.0
    %v1809 = vmax.f32 %v1761, 0.0
    %v1810 = vmax.f32 %v1764, 0.0
    %v1811 = vmax.f32 %v1769, 0.0
    %v1812 = vmax.f32 %v1772, 0.0
    %v1813 = vmax.f32 %v1777, 0.0
    %v1814 = vmax.f32 %v1780, 0.0
    %s1815 = scalar_lea.vmem [#allocation2], 1000
    %1816 = vst.msk [vmem:[%s1815 + $0x1] sm:$0xff] %vm64, %v1783
    %1817 = vst.msk [vmem:[%s1815 + $0x9] sm:$0xff] %vm64, %v1784
    %1818 = vst.msk [vmem:[%s1815 + $0x11] sm:$0xff] %vm64, %v1785
    %1819 = vst.msk [vmem:[%s1815 + $0x19] sm:$0xff] %vm64, %v1786
    %1820 = vst.msk [vmem:[%s1815 + $0x29] sm:$0xff] %vm64, %v1787
    %1821 = vst.msk [vmem:[%s1815 + $0x31] sm:$0xff] %vm64, %v1788
    %1822 = vst.msk [vmem:[%s1815 + $0x39] sm:$0xff] %vm64, %v1789
    %1823 = vst.msk [vmem:[%s1815 + $0x41] sm:$0xff] %vm64, %v1790
    %1824 = vst.msk [vmem:[%s1815 + $0x51] sm:$0xff] %vm64, %v1791
    %1825 = vst.msk [vmem:[%s1815 + $0x59] sm:$0xff] %vm64, %v1792
    %1826 = vst.msk [vmem:[%s1815 + $0x61] sm:$0xff] %vm64, %v1793
    %1827 = vst.msk [vmem:[%s1815 + $0x69] sm:$0xff] %vm64, %v1794
    %1828 = vst.msk [vmem:[%s1815 + $0x79] sm:$0xff] %vm64, %v1795
    %1829 = vst.msk [vmem:[%s1815 + $0x81] sm:$0xff] %vm64, %v1796
    %1830 = vst.msk [vmem:[%s1815 + $0x89] sm:$0xff] %vm64, %v1797
    %1831 = vst.msk [vmem:[%s1815 + $0x91] sm:$0xff] %vm64, %v1798
    %1832 = vst.msk [vmem:[%s1815 + $0xa1] sm:$0xff] %vm64, %v1799
    %1833 = vst.msk [vmem:[%s1815 + $0xa9] sm:$0xff] %vm64, %v1800
    %1834 = vst.msk [vmem:[%s1815 + $0xb1] sm:$0xff] %vm64, %v1801
    %1835 = vst.msk [vmem:[%s1815 + $0xb9] sm:$0xff] %vm64, %v1802
    %1836 = vst.msk [vmem:[%s1815 + $0xc9] sm:$0xff] %vm64, %v1803
    %1837 = vst.msk [vmem:[%s1815 + $0xd1] sm:$0xff] %vm64, %v1804
    %1838 = vst.msk [vmem:[%s1815 + $0xd9] sm:$0xff] %vm64, %v1805
    %1839 = vst.msk [vmem:[%s1815 + $0xe1] sm:$0xff] %vm64, %v1806
    %1840 = vst.msk [vmem:[%s1815 + $0xf1] sm:$0xff] %vm64, %v1807
    %1841 = vst.msk [vmem:[%s1815 + $0xf9] sm:$0xff] %vm64, %v1808
    %1842 = vst.msk [vmem:[%s1815 + $0x101] sm:$0xff] %vm64, %v1809
    %1843 = vst.msk [vmem:[%s1815 + $0x109] sm:$0xff] %vm64, %v1810
    %1844 = vst.msk [vmem:[%s1815 + $0x119] sm:$0xff] %vm64, %v1811
    %1845 = vst.msk [vmem:[%s1815 + $0x121] sm:$0xff] %vm64, %v1812
    %1846 = vst.msk [vmem:[%s1815 + $0x129] sm:$0xff] %vm64, %v1813
    %1847 = vst.msk [vmem:[%s1815 + $0x131] sm:$0xff] %vm64, %v1814
    %v1848 = vld [vmem:[%s3] sm:$0xf]
    %v1849 = vld [vmem:[%s3 + $0x4] sm:$0xf]
    %v1850 = vld [vmem:[%s3 + $0x8] sm:$0xf]
    %v1851 = vld [vmem:[%s3 + $0xc] sm:$0xf]
    %v1852 = vld [vmem:[%s3 + $0x10] sm:$0xf]
    %v1853 = vld [vmem:[%s3 + $0x14] sm:$0xf]
    %v1854 = vld [vmem:[%s3 + $0x18] sm:$0xf]
    %v1855 = vld [vmem:[%s3 + $0x1c] sm:$0xf]
    %v1856 = vld [vmem:[%s3 + $0x20] sm:$0xf]
    %v1857 = vld [vmem:[%s3 + $0x24] sm:$0xf]
    %v1858 = vld [vmem:[%s3 + $0x28] sm:$0xf]
    %v1859 = vld [vmem:[%s3 + $0x2c] sm:$0xf]
    %v1860 = vld [vmem:[%s3 + $0x30] sm:$0xf]
    %v1861 = vld [vmem:[%s3 + $0x34] sm:$0xf]
    %v1862 = vld [vmem:[%s3 + $0x38] sm:$0xf]
    %v1863 = vld [vmem:[%s3 + $0x3c] sm:$0xf]
    %v1864 = vld [vmem:[%s3 + $0x40] sm:$0xf]
    %v1865 = vld [vmem:[%s3 + $0x44] sm:$0xf]
    %v1866 = vld [vmem:[%s3 + $0x48] sm:$0xf]
    %v1867 = vld [vmem:[%s3 + $0x4c] sm:$0xf]
    %v1868 = vld [vmem:[%s3 + $0x50] sm:$0xf]
    %v1869 = vld [vmem:[%s3 + $0x54] sm:$0xf]
    %v1870 = vld [vmem:[%s3 + $0x58] sm:$0xf]
    %v1871 = vld [vmem:[%s3 + $0x5c] sm:$0xf]
    %v1872 = vld [vmem:[%s3 + $0x60] sm:$0xf]
    %v1873 = vld [vmem:[%s3 + $0x64] sm:$0xf]
    %v1874 = vld [vmem:[%s3 + $0x68] sm:$0xf]
    %v1875 = vld [vmem:[%s3 + $0x6c] sm:$0xf]
    %v1876 = vld [vmem:[%s3 + $0x70] sm:$0xf]
    %v1877 = vld [vmem:[%s3 + $0x74] sm:$0xf]
    %v1878 = vld [vmem:[%s3 + $0x78] sm:$0xf]
    %v1879 = vld [vmem:[%s3 + $0x7c] sm:$0xf]
    %v1880 = vld [vmem:[%s5] sm:$0xf]
    %v1881 = vld [vmem:[%s5 + $0x4] sm:$0xf]
    %v1882 = vld [vmem:[%s5 + $0x8] sm:$0xf]
    %v1883 = vld [vmem:[%s5 + $0xc] sm:$0xf]
    %v1884 = vld [vmem:[%s6] sm:$0x1]
    %v1886 = vlaneseq
    %v1887 = vshrl.u32 %v1886, 7
    %v1888 = vsub.s32 0, %v1887
    %v1889 = vrot.slane %v1884, %v1888
    %v1923 = vunpack.c.l.b16 %v1848
    %v1924 = vunpack.c.l.b16 %v1849
    %v1925 = vunpack.c.l.b16 %v1850
    %v1926 = vunpack.c.l.b16 %v1851
    %v1927 = vunpack.c.l.b16 %v1852
    %v1928 = vunpack.c.l.b16 %v1853
    %v1929 = vunpack.c.l.b16 %v1854
    %v1930 = vunpack.c.l.b16 %v1855
    %v1931 = vunpack.c.l.b16 %v1856
    %v1932 = vunpack.c.l.b16 %v1857
    %v1933 = vunpack.c.l.b16 %v1858
    %v1934 = vunpack.c.l.b16 %v1859
    %v1935 = vunpack.c.l.b16 %v1860
    %v1936 = vunpack.c.l.b16 %v1861
    %v1937 = vunpack.c.l.b16 %v1862
    %v1938 = vunpack.c.l.b16 %v1863
    %v1939 = vunpack.c.l.b16 %v1864
    %v1940 = vunpack.c.l.b16 %v1865
    %v1941 = vunpack.c.l.b16 %v1866
    %v1942 = vunpack.c.l.b16 %v1867
    %v1943 = vunpack.c.l.b16 %v1868
    %v1944 = vunpack.c.l.b16 %v1869
    %v1945 = vunpack.c.l.b16 %v1870
    %v1946 = vunpack.c.l.b16 %v1871
    %v1947 = vunpack.c.l.b16 %v1872
    %v1948 = vunpack.c.l.b16 %v1873
    %v1949 = vunpack.c.l.b16 %v1874
    %v1950 = vunpack.c.l.b16 %v1875
    %v1951 = vunpack.c.l.b16 %v1876
    %v1952 = vunpack.c.l.b16 %v1877
    %v1953 = vunpack.c.l.b16 %v1878
    %v1954 = vunpack.c.l.b16 %v1879
    %v1955 = vpack.c.b16 %v1924, %v1923
    %v1956 = vpack.c.b16 %v1926, %v1925
    %v1957 = vpack.c.b16 %v1928, %v1927
    %v1958 = vpack.c.b16 %v1930, %v1929
    %v1959 = vpack.c.b16 %v1932, %v1931
    %v1960 = vpack.c.b16 %v1934, %v1933
    %v1961 = vpack.c.b16 %v1936, %v1935
    %v1962 = vpack.c.b16 %v1938, %v1937
    %v1963 = vpack.c.b16 %v1940, %v1939
    %v1964 = vpack.c.b16 %v1942, %v1941
    %v1965 = vpack.c.b16 %v1944, %v1943
    %v1966 = vpack.c.b16 %v1946, %v1945
    %v1967 = vpack.c.b16 %v1948, %v1947
    %v1968 = vpack.c.b16 %v1950, %v1949
    %v1969 = vpack.c.b16 %v1952, %v1951
    %v1970 = vpack.c.b16 %v1954, %v1953
    %v1975 = vunpack.c.l.b16 %v1880
    %v1976 = vunpack.c.l.b16 %v1881
    %v1977 = vunpack.c.l.b16 %v1882
    %v1978 = vunpack.c.l.b16 %v1883
    %v1979 = vpack.c.b16 %v1976, %v1975
    %v1980 = vpack.c.b16 %v1978, %v1977
    %v1984 = vsel %vm64, %v1955, 0
    %v1987 = vsel %vm64, %v1956, 0
    %v1990 = vsel %vm64, %v1957, 0
    %v1993 = vsel %vm64, %v1958, 0
    %v1996 = vsel %vm64, %v1959, 0
    %v1999 = vsel %vm64, %v1960, 0
    %v2002 = vsel %vm64, %v1961, 0
    %v2005 = vsel %vm64, %v1962, 0
    %v2008 = vsel %vm64, %v1963, 0
    %v2011 = vsel %vm64, %v1964, 0
    %v2014 = vsel %vm64, %v1965, 0
    %v2017 = vsel %vm64, %v1966, 0
    %v2020 = vsel %vm64, %v1967, 0
    %v2023 = vsel %vm64, %v1968, 0
    %v2026 = vsel %vm64, %v1969, 0
    %v2029 = vsel %vm64, %v1970, 0
    %2031 = vmatprep.subr.bf16.mxu0 0
    %2032 = vmatpush1.bf16.msra.mxu0 %v1979
    %2033 = vmatprep.subr.bf16.mxu0 0
    %2034 = vmatpush1.bf16.msra.mxu0 %v1980
    %2035 = vmatprep.subr.bf16.mxu0 0
    %2036 = vmatpush1.bf16.msra.mxu0 0
    %2037 = vmatprep.subr.bf16.mxu0 0
    %2038 = vmatpush1.bf16.msra.mxu0 0
    %2039 = vmatprep.subr.bf16.mxu0 0
    %2040 = vmatpush1.bf16.msra.mxu0 0
    %2041 = vmatprep.subr.bf16.mxu0 0
    %2042 = vmatpush1.bf16.msra.mxu0 0
    %2043 = vmatprep.subr.bf16.mxu0 0
    %2044 = vmatpush1.bf16.msra.mxu0 0
    %2045 = vmatprep.subr.bf16.mxu0 0
    %2046 = vmatpush1.bf16.msra.mxu0 0
    %2047 = vmatprep.subr.bf16.mxu0 0
    %2048 = vmatpush1.bf16.msra.mxu0 0
    %2049 = vmatprep.subr.bf16.mxu0 0
    %2050 = vmatpush1.bf16.msra.mxu0 0
    %2051 = vmatprep.subr.bf16.mxu0 0
    %2052 = vmatpush1.bf16.msra.mxu0 0
    %2053 = vmatprep.subr.bf16.mxu0 0
    %2054 = vmatpush1.bf16.msra.mxu0 0
    %2055 = vmatprep.subr.bf16.mxu0 0
    %2056 = vmatpush1.bf16.msra.mxu0 0
    %2057 = vmatprep.subr.bf16.mxu0 0
    %2058 = vmatpush1.bf16.msra.mxu0 0
    %2059 = vmatprep.subr.bf16.mxu0 0
    %2060 = vmatpush1.bf16.msra.mxu0 0
    %2061 = vmatprep.subr.bf16.mxu0 0
    %2062 = vmatpush1.bf16.msra.mxu0 0
    %2063 = vmatprep.mubr.bf16.mxu0 0
    %2064 = vmatmul.mubr.bf16.gmra.mrb[0].mxu0 %v1984
    %v2065 = vpop.f32.mrb[0].mxu0
    %v2066 = vadd.f32 %v1889, %v2065
    %v2067 = vpop.f32.mrb[0].mxu0
    %v2068 = vpop.f32.mrb[0].mxu0
    %v2069 = vadd.f32 %v1889, %v2068
    %v2070 = vpop.f32.mrb[0].mxu0
    %2071 = vmatprep.mubr.bf16.mxu0 0
    %2072 = vmatmul.mubr.bf16.gmra.mrb[0].mxu0 %v1987
    %v2073 = vpop.f32.mrb[0].mxu0
    %v2074 = vadd.f32 %v1889, %v2073
    %v2075 = vpop.f32.mrb[0].mxu0
    %v2076 = vpop.f32.mrb[0].mxu0
    %v2077 = vadd.f32 %v1889, %v2076
    %v2078 = vpop.f32.mrb[0].mxu0
    %2079 = vmatprep.mubr.bf16.mxu0 0
    %2080 = vmatmul.mubr.bf16.gmra.mrb[0].mxu0 %v1990
    %v2081 = vpop.f32.mrb[0].mxu0
    %v2082 = vadd.f32 %v1889, %v2081
    %v2083 = vpop.f32.mrb[0].mxu0
    %v2084 = vpop.f32.mrb[0].mxu0
    %v2085 = vadd.f32 %v1889, %v2084
    %v2086 = vpop.f32.mrb[0].mxu0
    %2087 = vmatprep.mubr.bf16.mxu0 0
    %2088 = vmatmul.mubr.bf16.gmra.mrb[0].mxu0 %v1993
    %v2089 = vpop.f32.mrb[0].mxu0
    %v2090 = vadd.f32 %v1889, %v2089
    %v2091 = vpop.f32.mrb[0].mxu0
    %v2092 = vpop.f32.mrb[0].mxu0
    %v2093 = vadd.f32 %v1889, %v2092
    %v2094 = vpop.f32.mrb[0].mxu0
    %2095 = vmatprep.mubr.bf16.mxu0 0
    %2096 = vmatmul.mubr.bf16.gmra.mrb[0].mxu0 %v1996
    %v2097 = vpop.f32.mrb[0].mxu0
    %v2098 = vadd.f32 %v1889, %v2097
    %v2099 = vpop.f32.mrb[0].mxu0
    %v2100 = vpop.f32.mrb[0].mxu0
    %v2101 = vadd.f32 %v1889, %v2100
    %v2102 = vpop.f32.mrb[0].mxu0
    %2103 = vmatprep.mubr.bf16.mxu0 0
    %2104 = vmatmul.mubr.bf16.gmra.mrb[0].mxu0 %v1999
    %v2105 = vpop.f32.mrb[0].mxu0
    %v2106 = vadd.f32 %v1889, %v2105
    %v2107 = vpop.f32.mrb[0].mxu0
    %v2108 = vpop.f32.mrb[0].mxu0
    %v2109 = vadd.f32 %v1889, %v2108
    %v2110 = vpop.f32.mrb[0].mxu0
    %2111 = vmatprep.mubr.bf16.mxu0 0
    %2112 = vmatmul.mubr.bf16.gmra.mrb[0].mxu0 %v2002
    %v2113 = vpop.f32.mrb[0].mxu0
    %v2114 = vadd.f32 %v1889, %v2113
    %v2115 = vpop.f32.mrb[0].mxu0
    %v2116 = vpop.f32.mrb[0].mxu0
    %v2117 = vadd.f32 %v1889, %v2116
    %v2118 = vpop.f32.mrb[0].mxu0
    %2119 = vmatprep.mubr.bf16.mxu0 0
    %2120 = vmatmul.mubr.bf16.gmra.mrb[0].mxu0 %v2005
    %v2121 = vpop.f32.mrb[0].mxu0
    %v2122 = vadd.f32 %v1889, %v2121
    %v2123 = vpop.f32.mrb[0].mxu0
    %v2124 = vpop.f32.mrb[0].mxu0
    %v2125 = vadd.f32 %v1889, %v2124
    %v2126 = vpop.f32.mrb[0].mxu0
    %2127 = vmatprep.mubr.bf16.mxu0 0
    %2128 = vmatmul.mubr.bf16.gmra.mrb[0].mxu0 %v2008
    %v2129 = vpop.f32.mrb[0].mxu0
    %v2130 = vadd.f32 %v1889, %v2129
    %v2131 = vpop.f32.mrb[0].mxu0
    %v2132 = vpop.f32.mrb[0].mxu0
    %v2133 = vadd.f32 %v1889, %v2132
    %v2134 = vpop.f32.mrb[0].mxu0
    %2135 = vmatprep.mubr.bf16.mxu0 0
    %2136 = vmatmul.mubr.bf16.gmra.mrb[0].mxu0 %v2011
    %v2137 = vpop.f32.mrb[0].mxu0
    %v2138 = vadd.f32 %v1889, %v2137
    %v2139 = vpop.f32.mrb[0].mxu0
    %v2140 = vpop.f32.mrb[0].mxu0
    %v2141 = vadd.f32 %v1889, %v2140
    %v2142 = vpop.f32.mrb[0].mxu0
    %2143 = vmatprep.mubr.bf16.mxu0 0
    %2144 = vmatmul.mubr.bf16.gmra.mrb[0].mxu0 %v2014
    %v2145 = vpop.f32.mrb[0].mxu0
    %v2146 = vadd.f32 %v1889, %v2145
    %v2147 = vpop.f32.mrb[0].mxu0
    %v2148 = vpop.f32.mrb[0].mxu0
    %v2149 = vadd.f32 %v1889, %v2148
    %v2150 = vpop.f32.mrb[0].mxu0
    %2151 = vmatprep.mubr.bf16.mxu0 0
    %2152 = vmatmul.mubr.bf16.gmra.mrb[0].mxu0 %v2017
    %v2153 = vpop.f32.mrb[0].mxu0
    %v2154 = vadd.f32 %v1889, %v2153
    %v2155 = vpop.f32.mrb[0].mxu0
    %v2156 = vpop.f32.mrb[0].mxu0
    %v2157 = vadd.f32 %v1889, %v2156
    %v2158 = vpop.f32.mrb[0].mxu0
    %2159 = vmatprep.mubr.bf16.mxu0 0
    %2160 = vmatmul.mubr.bf16.gmra.mrb[0].mxu0 %v2020
    %v2161 = vpop.f32.mrb[0].mxu0
    %v2162 = vadd.f32 %v1889, %v2161
    %v2163 = vpop.f32.mrb[0].mxu0
    %v2164 = vpop.f32.mrb[0].mxu0
    %v2165 = vadd.f32 %v1889, %v2164
    %v2166 = vpop.f32.mrb[0].mxu0
    %2167 = vmatprep.mubr.bf16.mxu0 0
    %2168 = vmatmul.mubr.bf16.gmra.mrb[0].mxu0 %v2023
    %v2169 = vpop.f32.mrb[0].mxu0
    %v2170 = vadd.f32 %v1889, %v2169
    %v2171 = vpop.f32.mrb[0].mxu0
    %v2172 = vpop.f32.mrb[0].mxu0
    %v2173 = vadd.f32 %v1889, %v2172
    %v2174 = vpop.f32.mrb[0].mxu0
    %2175 = vmatprep.mubr.bf16.mxu0 0
    %2176 = vmatmul.mubr.bf16.gmra.mrb[0].mxu0 %v2026
    %v2177 = vpop.f32.mrb[0].mxu0
    %v2178 = vadd.f32 %v1889, %v2177
    %v2179 = vpop.f32.mrb[0].mxu0
    %v2180 = vpop.f32.mrb[0].mxu0
    %v2181 = vadd.f32 %v1889, %v2180
    %v2182 = vpop.f32.mrb[0].mxu0
    %2183 = vmatprep.mubr.bf16.mxu0 0
    %2184 = vmatmul.mubr.bf16.gmra.mrb[0].mxu0 %v2029
    %v2185 = vpop.f32.mrb[0].mxu0
    %v2186 = vadd.f32 %v1889, %v2185
    %v2187 = vpop.f32.mrb[0].mxu0
    %v2188 = vpop.f32.mrb[0].mxu0
    %v2189 = vadd.f32 %v1889, %v2188
    %v2190 = vpop.f32.mrb[0].mxu0
    %2191 = vdwg.mxu0
    %v2192 = vld [vmem:[#allocation2] ss:$2 sm:$0xff]
    %s2193 = scalar_lea.vmem [#allocation2], 16
    %v2194 = vld [vmem:[%s2193] ss:$2 sm:$0xff]
    %s2195 = scalar_lea.vmem [#allocation2], 40
    %v2196 = vld [vmem:[%s2195] ss:$2 sm:$0xff]
    %s2197 = scalar_lea.vmem [#allocation2], 56
    %v2198 = vld [vmem:[%s2197] ss:$2 sm:$0xff]
    %s2199 = scalar_lea.vmem [#allocation2], 80
    %v2200 = vld [vmem:[%s2199] ss:$2 sm:$0xff]
    %s2201 = scalar_lea.vmem [#allocation2], 96
    %v2202 = vld [vmem:[%s2201] ss:$2 sm:$0xff]
    %s2203 = scalar_lea.vmem [#allocation2], 120
    %v2204 = vld [vmem:[%s2203] ss:$2 sm:$0xff]
    %s2205 = scalar_lea.vmem [#allocation2], 136
    %v2206 = vld [vmem:[%s2205] ss:$2 sm:$0xff]
    %s2207 = scalar_lea.vmem [#allocation2], 160
    %v2208 = vld [vmem:[%s2207] ss:$2 sm:$0xff]
    %s2209 = scalar_lea.vmem [#allocation2], 176
    %v2210 = vld [vmem:[%s2209] ss:$2 sm:$0xff]
    %s2211 = scalar_lea.vmem [#allocation2], 200
    %v2212 = vld [vmem:[%s2211] ss:$2 sm:$0xff]
    %s2213 = scalar_lea.vmem [#allocation2], 216
    %v2214 = vld [vmem:[%s2213] ss:$2 sm:$0xff]
    %s2215 = scalar_lea.vmem [#allocation2], 240
    %v2216 = vld [vmem:[%s2215] ss:$2 sm:$0xff]
    %s2217 = scalar_lea.vmem [#allocation2], 256
    %v2218 = vld [vmem:[%s2217] ss:$2 sm:$0xff]
    %s2219 = scalar_lea.vmem [#allocation2], 280
    %v2220 = vld [vmem:[%s2219] ss:$2 sm:$0xff]
    %s2221 = scalar_lea.vmem [#allocation2], 296
    %v2222 = vld [vmem:[%s2221] ss:$2 sm:$0xff]
    %s2223 = scalar_lea.vmem [#allocation2], 320
    %v2224 = vld [vmem:[%s2223] ss:$2 sm:$0xff]
    %s2225 = scalar_lea.vmem [#allocation2], 336
    %v2226 = vld [vmem:[%s2225] ss:$2 sm:$0xff]
    %s2227 = scalar_lea.vmem [#allocation2], 360
    %v2228 = vld [vmem:[%s2227] ss:$2 sm:$0xff]
    %s2229 = scalar_lea.vmem [#allocation2], 376
    %v2230 = vld [vmem:[%s2229] ss:$2 sm:$0xff]
    %s2231 = scalar_lea.vmem [#allocation2], 400
    %v2232 = vld [vmem:[%s2231] ss:$2 sm:$0xff]
    %s2233 = scalar_lea.vmem [#allocation2], 416
    %v2234 = vld [vmem:[%s2233] ss:$2 sm:$0xff]
    %s2235 = scalar_lea.vmem [#allocation2], 440
    %v2236 = vld [vmem:[%s2235] ss:$2 sm:$0xff]
    %s2237 = scalar_lea.vmem [#allocation2], 456
    %v2238 = vld [vmem:[%s2237] ss:$2 sm:$0xff]
    %s2239 = scalar_lea.vmem [#allocation2], 480
    %v2240 = vld [vmem:[%s2239] ss:$2 sm:$0xff]
    %s2241 = scalar_lea.vmem [#allocation2], 496
    %v2242 = vld [vmem:[%s2241] ss:$2 sm:$0xff]
    %s2243 = scalar_lea.vmem [#allocation2], 520
    %v2244 = vld [vmem:[%s2243] ss:$2 sm:$0xff]
    %s2245 = scalar_lea.vmem [#allocation2], 536
    %v2246 = vld [vmem:[%s2245] ss:$2 sm:$0xff]
    %s2247 = scalar_lea.vmem [#allocation2], 560
    %v2248 = vld [vmem:[%s2247] ss:$2 sm:$0xff]
    %s2249 = scalar_lea.vmem [#allocation2], 576
    %v2250 = vld [vmem:[%s2249] ss:$2 sm:$0xff]
    %s2251 = scalar_lea.vmem [#allocation2], 600
    %v2252 = vld [vmem:[%s2251] ss:$2 sm:$0xff]
    %s2253 = scalar_lea.vmem [#allocation2], 616
    %v2254 = vld [vmem:[%s2253] ss:$2 sm:$0xff]
    %s2255 = scalar_lea.vmem [#allocation2], 640
    %v2256 = vld [vmem:[%s2255] ss:$2 sm:$0xff]
    %s2257 = scalar_lea.vmem [#allocation2], 656
    %v2258 = vld [vmem:[%s2257] ss:$2 sm:$0xff]
    %s2259 = scalar_lea.vmem [#allocation2], 680
    %v2260 = vld [vmem:[%s2259] ss:$2 sm:$0xff]
    %s2261 = scalar_lea.vmem [#allocation2], 696
    %v2262 = vld [vmem:[%s2261] ss:$2 sm:$0xff]
    %s2263 = scalar_lea.vmem [#allocation2], 720
    %v2264 = vld [vmem:[%s2263] ss:$2 sm:$0xff]
    %s2265 = scalar_lea.vmem [#allocation2], 736
    %v2266 = vld [vmem:[%s2265] ss:$2 sm:$0xff]
    %s2267 = scalar_lea.vmem [#allocation2], 760
    %v2268 = vld [vmem:[%s2267] ss:$2 sm:$0xff]
    %s2269 = scalar_lea.vmem [#allocation2], 776
    %v2270 = vld [vmem:[%s2269] ss:$2 sm:$0xff]
    %s2271 = scalar_lea.vmem [#allocation2], 800
    %v2272 = vld [vmem:[%s2271] ss:$2 sm:$0xff]
    %s2273 = scalar_lea.vmem [#allocation2], 816
    %v2274 = vld [vmem:[%s2273] ss:$2 sm:$0xff]
    %s2275 = scalar_lea.vmem [#allocation2], 840
    %v2276 = vld [vmem:[%s2275] ss:$2 sm:$0xff]
    %s2277 = scalar_lea.vmem [#allocation2], 856
    %v2278 = vld [vmem:[%s2277] ss:$2 sm:$0xff]
    %s2279 = scalar_lea.vmem [#allocation2], 880
    %v2280 = vld [vmem:[%s2279] ss:$2 sm:$0xff]
    %s2281 = scalar_lea.vmem [#allocation2], 896
    %v2282 = vld [vmem:[%s2281] ss:$2 sm:$0xff]
    %s2283 = scalar_lea.vmem [#allocation2], 920
    %v2284 = vld [vmem:[%s2283] ss:$2 sm:$0xff]
    %s2285 = scalar_lea.vmem [#allocation2], 936
    %v2286 = vld [vmem:[%s2285] ss:$2 sm:$0xff]
    %s2287 = scalar_lea.vmem [#allocation2], 960
    %v2288 = vld [vmem:[%s2287] ss:$2 sm:$0xff]
    %s2289 = scalar_lea.vmem [#allocation2], 976
    %v2290 = vld [vmem:[%s2289] ss:$2 sm:$0xff]
    %s2291 = scalar_lea.vmem [#allocation2], 1000
    %v2292 = vld [vmem:[%s2291] ss:$2 sm:$0xff]
    %s2293 = scalar_lea.vmem [#allocation2], 1016
    %v2294 = vld [vmem:[%s2293] ss:$2 sm:$0xff]
    %s2295 = scalar_lea.vmem [#allocation2], 1040
    %v2296 = vld [vmem:[%s2295] ss:$2 sm:$0xff]
    %s2297 = scalar_lea.vmem [#allocation2], 1056
    %v2298 = vld [vmem:[%s2297] ss:$2 sm:$0xff]
    %s2299 = scalar_lea.vmem [#allocation2], 1080
    %v2300 = vld [vmem:[%s2299] ss:$2 sm:$0xff]
    %s2301 = scalar_lea.vmem [#allocation2], 1096
    %v2302 = vld [vmem:[%s2301] ss:$2 sm:$0xff]
    %s2303 = scalar_lea.vmem [#allocation2], 1120
    %v2304 = vld [vmem:[%s2303] ss:$2 sm:$0xff]
    %s2305 = scalar_lea.vmem [#allocation2], 1136
    %v2306 = vld [vmem:[%s2305] ss:$2 sm:$0xff]
    %s2307 = scalar_lea.vmem [#allocation2], 1160
    %v2308 = vld [vmem:[%s2307] ss:$2 sm:$0xff]
    %s2309 = scalar_lea.vmem [#allocation2], 1176
    %v2310 = vld [vmem:[%s2309] ss:$2 sm:$0xff]
    %s2311 = scalar_lea.vmem [#allocation2], 1200
    %v2312 = vld [vmem:[%s2311] ss:$2 sm:$0xff]
    %s2313 = scalar_lea.vmem [#allocation2], 1216
    %v2314 = vld [vmem:[%s2313] ss:$2 sm:$0xff]
    %s2315 = scalar_lea.vmem [#allocation2], 1240
    %v2316 = vld [vmem:[%s2315] ss:$2 sm:$0xff]
    %s2317 = scalar_lea.vmem [#allocation2], 1256
    %v2318 = vld [vmem:[%s2317] ss:$2 sm:$0xff]
    %s2319 = scalar_lea.vmem [#allocation2], 1280
    %v2320 = vld [vmem:[%s2319] ss:$2 sm:$0xff]
    %s2321 = scalar_lea.vmem [#allocation2], 1296
    %v2322 = vld [vmem:[%s2321] ss:$2 sm:$0xff]
    %v2323 = vpack.c.bf16 %v2194, %v2192
    %v2324 = vpack.c.bf16 %v2202, %v2200
    %v2325 = vpack.c.bf16 %v2210, %v2208
    %v2326 = vpack.c.bf16 %v2218, %v2216
    %v2327 = vpack.c.bf16 %v2226, %v2224
    %v2328 = vpack.c.bf16 %v2234, %v2232
    %v2329 = vpack.c.bf16 %v2242, %v2240
    %v2330 = vpack.c.bf16 %v2250, %v2248
    %v2331 = vpack.c.bf16 %v2258, %v2256
    %v2332 = vpack.c.bf16 %v2266, %v2264
    %v2333 = vpack.c.bf16 %v2274, %v2272
    %v2334 = vpack.c.bf16 %v2282, %v2280
    %v2335 = vpack.c.bf16 %v2290, %v2288
    %v2336 = vpack.c.bf16 %v2298, %v2296
    %v2337 = vpack.c.bf16 %v2306, %v2304
    %v2338 = vpack.c.bf16 %v2314, %v2312
    %v2339 = vld [vmem:[%s4] sm:$0xf]
    %v2340 = vld [vmem:[%s4 + $0x4] sm:$0xf]
    %v2341 = vld [vmem:[%s4 + $0x8] sm:$0xf]
    %v2342 = vld [vmem:[%s4 + $0xc] sm:$0xf]
    %v2347 = vunpack.c.l.b16 %v2339
    %v2348 = vunpack.c.l.b16 %v2340
    %v2349 = vunpack.c.l.b16 %v2341
    %v2350 = vunpack.c.l.b16 %v2342
    %v2351 = vpack.c.b16 %v2348, %v2347
    %v2352 = vpack.c.b16 %v2350, %v2349
    %v2356 = vsel %vm64, %v2323, 0
    %v2359 = vsel %vm64, %v2324, 0
    %v2362 = vsel %vm64, %v2325, 0
    %v2365 = vsel %vm64, %v2326, 0
    %v2368 = vsel %vm64, %v2327, 0
    %v2371 = vsel %vm64, %v2328, 0
    %v2374 = vsel %vm64, %v2329, 0
    %v2377 = vsel %vm64, %v2330, 0
    %v2380 = vsel %vm64, %v2331, 0
    %v2383 = vsel %vm64, %v2332, 0
    %v2386 = vsel %vm64, %v2333, 0
    %v2389 = vsel %vm64, %v2334, 0
    %v2392 = vsel %vm64, %v2335, 0
    %v2395 = vsel %vm64, %v2336, 0
    %v2398 = vsel %vm64, %v2337, 0
    %v2401 = vsel %vm64, %v2338, 0
    %2403 = vmatprep.subr.bf16.mxu0 0
    %2404 = vmatpush1.bf16.msra.mxu0 %v2351
    %2405 = vmatprep.subr.bf16.mxu0 0
    %2406 = vmatpush1.bf16.msra.mxu0 %v2352
    %2407 = vmatprep.subr.bf16.mxu0 0
    %2408 = vmatpush1.bf16.msra.mxu0 0
    %2409 = vmatprep.subr.bf16.mxu0 0
    %2410 = vmatpush1.bf16.msra.mxu0 0
    %2411 = vmatprep.subr.bf16.mxu0 0
    %2412 = vmatpush1.bf16.msra.mxu0 0
    %2413 = vmatprep.subr.bf16.mxu0 0
    %2414 = vmatpush1.bf16.msra.mxu0 0
    %2415 = vmatprep.subr.bf16.mxu0 0
    %2416 = vmatpush1.bf16.msra.mxu0 0
    %2417 = vmatprep.subr.bf16.mxu0 0
    %2418 = vmatpush1.bf16.msra.mxu0 0
    %2419 = vmatprep.subr.bf16.mxu0 0
    %2420 = vmatpush1.bf16.msra.mxu0 0
    %2421 = vmatprep.subr.bf16.mxu0 0
    %2422 = vmatpush1.bf16.msra.mxu0 0
    %2423 = vmatprep.subr.bf16.mxu0 0
    %2424 = vmatpush1.bf16.msra.mxu0 0
    %2425 = vmatprep.subr.bf16.mxu0 0
    %2426 = vmatpush1.bf16.msra.mxu0 0
    %2427 = vmatprep.subr.bf16.mxu0 0
    %2428 = vmatpush1.bf16.msra.mxu0 0
    %2429 = vmatprep.subr.bf16.mxu0 0
    %2430 = vmatpush1.bf16.msra.mxu0 0
    %2431 = vmatprep.subr.bf16.mxu0 0
    %2432 = vmatpush1.bf16.msra.mxu0 0
    %2433 = vmatprep.subr.bf16.mxu0 0
    %2434 = vmatpush1.bf16.msra.mxu0 0
    %2435 = vmatprep.mubr.bf16.mxu0 0
    %2436 = vmatmul.mubr.bf16.gmra.mrb[0].mxu0 %v2356
    %v2437 = vpop.f32.mrb[0].mxu0
    %v2438 = vadd.f32 0.0, %v2437
    %v2439 = vpop.f32.mrb[0].mxu0
    %v2440 = vpop.f32.mrb[0].mxu0
    %v2441 = vadd.f32 0.0, %v2440
    %v2442 = vpop.f32.mrb[0].mxu0
    %2443 = vmatprep.mubr.bf16.mxu0 0
    %2444 = vmatmul.mubr.bf16.gmra.mrb[0].mxu0 %v2359
    %v2445 = vpop.f32.mrb[0].mxu0
    %v2446 = vadd.f32 0.0, %v2445
    %v2447 = vpop.f32.mrb[0].mxu0
    %v2448 = vpop.f32.mrb[0].mxu0
    %v2449 = vadd.f32 0.0, %v2448
    %v2450 = vpop.f32.mrb[0].mxu0
    %2451 = vmatprep.mubr.bf16.mxu0 0
    %2452 = vmatmul.mubr.bf16.gmra.mrb[0].mxu0 %v2362
    %v2453 = vpop.f32.mrb[0].mxu0
    %v2454 = vadd.f32 0.0, %v2453
    %v2455 = vpop.f32.mrb[0].mxu0
    %v2456 = vpop.f32.mrb[0].mxu0
    %v2457 = vadd.f32 0.0, %v2456
    %v2458 = vpop.f32.mrb[0].mxu0
    %2459 = vmatprep.mubr.bf16.mxu0 0
    %2460 = vmatmul.mubr.bf16.gmra.mrb[0].mxu0 %v2365
    %v2461 = vpop.f32.mrb[0].mxu0
    %v2462 = vadd.f32 0.0, %v2461
    %v2463 = vpop.f32.mrb[0].mxu0
    %v2464 = vpop.f32.mrb[0].mxu0
    %v2465 = vadd.f32 0.0, %v2464
    %v2466 = vpop.f32.mrb[0].mxu0
    %2467 = vmatprep.mubr.bf16.mxu0 0
    %2468 = vmatmul.mubr.bf16.gmra.mrb[0].mxu0 %v2368
    %v2469 = vpop.f32.mrb[0].mxu0
    %v2470 = vadd.f32 0.0, %v2469
    %v2471 = vpop.f32.mrb[0].mxu0
    %v2472 = vpop.f32.mrb[0].mxu0
    %v2473 = vadd.f32 0.0, %v2472
    %v2474 = vpop.f32.mrb[0].mxu0
    %2475 = vmatprep.mubr.bf16.mxu0 0
    %2476 = vmatmul.mubr.bf16.gmra.mrb[0].mxu0 %v2371
    %v2477 = vpop.f32.mrb[0].mxu0
    %v2478 = vadd.f32 0.0, %v2477
    %v2479 = vpop.f32.mrb[0].mxu0
    %v2480 = vpop.f32.mrb[0].mxu0
    %v2481 = vadd.f32 0.0, %v2480
    %v2482 = vpop.f32.mrb[0].mxu0
    %2483 = vmatprep.mubr.bf16.mxu0 0
    %2484 = vmatmul.mubr.bf16.gmra.mrb[0].mxu0 %v2374
    %v2485 = vpop.f32.mrb[0].mxu0
    %v2486 = vadd.f32 0.0, %v2485
    %v2487 = vpop.f32.mrb[0].mxu0
    %v2488 = vpop.f32.mrb[0].mxu0
    %v2489 = vadd.f32 0.0, %v2488
    %v2490 = vpop.f32.mrb[0].mxu0
    %2491 = vmatprep.mubr.bf16.mxu0 0
    %2492 = vmatmul.mubr.bf16.gmra.mrb[0].mxu0 %v2377
    %v2493 = vpop.f32.mrb[0].mxu0
    %v2494 = vadd.f32 0.0, %v2493
    %v2495 = vpop.f32.mrb[0].mxu0
    %v2496 = vpop.f32.mrb[0].mxu0
    %v2497 = vadd.f32 0.0, %v2496
    %v2498 = vpop.f32.mrb[0].mxu0
    %2499 = vmatprep.mubr.bf16.mxu0 0
    %2500 = vmatmul.mubr.bf16.gmra.mrb[0].mxu0 %v2380
    %v2501 = vpop.f32.mrb[0].mxu0
    %v2502 = vadd.f32 0.0, %v2501
    %v2503 = vpop.f32.mrb[0].mxu0
    %v2504 = vpop.f32.mrb[0].mxu0
    %v2505 = vadd.f32 0.0, %v2504
    %v2506 = vpop.f32.mrb[0].mxu0
    %2507 = vmatprep.mubr.bf16.mxu0 0
    %2508 = vmatmul.mubr.bf16.gmra.mrb[0].mxu0 %v2383
    %v2509 = vpop.f32.mrb[0].mxu0
    %v2510 = vadd.f32 0.0, %v2509
    %v2511 = vpop.f32.mrb[0].mxu0
    %v2512 = vpop.f32.mrb[0].mxu0
    %v2513 = vadd.f32 0.0, %v2512
    %v2514 = vpop.f32.mrb[0].mxu0
    %2515 = vmatprep.mubr.bf16.mxu0 0
    %2516 = vmatmul.mubr.bf16.gmra.mrb[0].mxu0 %v2386
    %v2517 = vpop.f32.mrb[0].mxu0
    %v2518 = vadd.f32 0.0, %v2517
    %v2519 = vpop.f32.mrb[0].mxu0
    %v2520 = vpop.f32.mrb[0].mxu0
    %v2521 = vadd.f32 0.0, %v2520
    %v2522 = vpop.f32.mrb[0].mxu0
    %2523 = vmatprep.mubr.bf16.mxu0 0
    %2524 = vmatmul.mubr.bf16.gmra.mrb[0].mxu0 %v2389
    %v2525 = vpop.f32.mrb[0].mxu0
    %v2526 = vadd.f32 0.0, %v2525
    %v2527 = vpop.f32.mrb[0].mxu0
    %v2528 = vpop.f32.mrb[0].mxu0
    %v2529 = vadd.f32 0.0, %v2528
    %v2530 = vpop.f32.mrb[0].mxu0
    %2531 = vmatprep.mubr.bf16.mxu0 0
    %2532 = vmatmul.mubr.bf16.gmra.mrb[0].mxu0 %v2392
    %v2533 = vpop.f32.mrb[0].mxu0
    %v2534 = vadd.f32 0.0, %v2533
    %v2535 = vpop.f32.mrb[0].mxu0
    %v2536 = vpop.f32.mrb[0].mxu0
    %v2537 = vadd.f32 0.0, %v2536
    %v2538 = vpop.f32.mrb[0].mxu0
    %2539 = vmatprep.mubr.bf16.mxu0 0
    %2540 = vmatmul.mubr.bf16.gmra.mrb[0].mxu0 %v2395
    %v2541 = vpop.f32.mrb[0].mxu0
    %v2542 = vadd.f32 0.0, %v2541
    %v2543 = vpop.f32.mrb[0].mxu0
    %v2544 = vpop.f32.mrb[0].mxu0
    %v2545 = vadd.f32 0.0, %v2544
    %v2546 = vpop.f32.mrb[0].mxu0
    %2547 = vmatprep.mubr.bf16.mxu0 0
    %2548 = vmatmul.mubr.bf16.gmra.mrb[0].mxu0 %v2398
    %v2549 = vpop.f32.mrb[0].mxu0
    %v2550 = vadd.f32 0.0, %v2549
    %v2551 = vpop.f32.mrb[0].mxu0
    %v2552 = vpop.f32.mrb[0].mxu0
    %v2553 = vadd.f32 0.0, %v2552
    %v2554 = vpop.f32.mrb[0].mxu0
    %2555 = vmatprep.mubr.bf16.mxu0 0
    %2556 = vmatmul.mubr.bf16.gmra.mrb[0].mxu0 %v2401
    %v2557 = vpop.f32.mrb[0].mxu0
    %v2558 = vadd.f32 0.0, %v2557
    %v2559 = vpop.f32.mrb[0].mxu0
    %v2560 = vpop.f32.mrb[0].mxu0
    %v2561 = vadd.f32 0.0, %v2560
    %v2562 = vpop.f32.mrb[0].mxu0
    %2563 = vdwg.mxu0
    %v2564 = vadd.f32 %v2066, %v2438
    %v2565 = vadd.f32 %v2069, %v2441
    %v2566 = vadd.f32 %v2074, %v2446
    %v2567 = vadd.f32 %v2077, %v2449
    %v2568 = vadd.f32 %v2082, %v2454
    %v2569 = vadd.f32 %v2085, %v2457
    %v2570 = vadd.f32 %v2090, %v2462
    %v2571 = vadd.f32 %v2093, %v2465
    %v2572 = vadd.f32 %v2098, %v2470
    %v2573 = vadd.f32 %v2101, %v2473
    %v2574 = vadd.f32 %v2106, %v2478
    %v2575 = vadd.f32 %v2109, %v2481
    %v2576 = vadd.f32 %v2114, %v2486
    %v2577 = vadd.f32 %v2117, %v2489
    %v2578 = vadd.f32 %v2122, %v2494
    %v2579 = vadd.f32 %v2125, %v2497
    %v2580 = vadd.f32 %v2130, %v2502
    %v2581 = vadd.f32 %v2133, %v2505
    %v2582 = vadd.f32 %v2138, %v2510
    %v2583 = vadd.f32 %v2141, %v2513
    %v2584 = vadd.f32 %v2146, %v2518
    %v2585 = vadd.f32 %v2149, %v2521
    %v2586 = vadd.f32 %v2154, %v2526
    %v2587 = vadd.f32 %v2157, %v2529
    %v2588 = vadd.f32 %v2162, %v2534
    %v2589 = vadd.f32 %v2165, %v2537
    %v2590 = vadd.f32 %v2170, %v2542
    %v2591 = vadd.f32 %v2173, %v2545
    %v2592 = vadd.f32 %v2178, %v2550
    %v2593 = vadd.f32 %v2181, %v2553
    %v2594 = vadd.f32 %v2186, %v2558
    %v2595 = vadd.f32 %v2189, %v2561
    %v2596 = vpack.c.bf16 %v2198, %v2196
    %v2597 = vpack.c.bf16 %v2206, %v2204
    %v2598 = vpack.c.bf16 %v2214, %v2212
    %v2599 = vpack.c.bf16 %v2222, %v2220
    %v2600 = vpack.c.bf16 %v2230, %v2228
    %v2601 = vpack.c.bf16 %v2238, %v2236
    %v2602 = vpack.c.bf16 %v2246, %v2244
    %v2603 = vpack.c.bf16 %v2254, %v2252
    %v2604 = vpack.c.bf16 %v2262, %v2260
    %v2605 = vpack.c.bf16 %v2270, %v2268
    %v2606 = vpack.c.bf16 %v2278, %v2276
    %v2607 = vpack.c.bf16 %v2286, %v2284
    %v2608 = vpack.c.bf16 %v2294, %v2292
    %v2609 = vpack.c.bf16 %v2302, %v2300
    %v2610 = vpack.c.bf16 %v2310, %v2308
    %v2611 = vpack.c.bf16 %v2318, %v2316
    %v2612 = vld [vmem:[%s4 + $0x30] sm:$0xf]
    %v2613 = vld [vmem:[%s4 + $0x34] sm:$0xf]
    %v2614 = vld [vmem:[%s4 + $0x38] sm:$0xf]
    %v2615 = vld [vmem:[%s4 + $0x3c] sm:$0xf]
    %v2620 = vunpack.c.l.b16 %v2612
    %v2621 = vunpack.c.l.b16 %v2613
    %v2622 = vunpack.c.l.b16 %v2614
    %v2623 = vunpack.c.l.b16 %v2615
    %v2624 = vpack.c.b16 %v2621, %v2620
    %v2625 = vpack.c.b16 %v2623, %v2622
    %v2629 = vsel %vm64, %v2596, 0
    %v2632 = vsel %vm64, %v2597, 0
    %v2635 = vsel %vm64, %v2598, 0
    %v2638 = vsel %vm64, %v2599, 0
    %v2641 = vsel %vm64, %v2600, 0
    %v2644 = vsel %vm64, %v2601, 0
    %v2647 = vsel %vm64, %v2602, 0
    %v2650 = vsel %vm64, %v2603, 0
    %v2653 = vsel %vm64, %v2604, 0
    %v2656 = vsel %vm64, %v2605, 0
    %v2659 = vsel %vm64, %v2606, 0
    %v2662 = vsel %vm64, %v2607, 0
    %v2665 = vsel %vm64, %v2608, 0
    %v2668 = vsel %vm64, %v2609, 0
    %v2671 = vsel %vm64, %v2610, 0
    %v2674 = vsel %vm64, %v2611, 0
    %2676 = vmatprep.subr.bf16.mxu0 0
    %2677 = vmatpush1.bf16.msra.mxu0 %v2624
    %2678 = vmatprep.subr.bf16.mxu0 0
    %2679 = vmatpush1.bf16.msra.mxu0 %v2625
    %2680 = vmatprep.subr.bf16.mxu0 0
    %2681 = vmatpush1.bf16.msra.mxu0 0
    %2682 = vmatprep.subr.bf16.mxu0 0
    %2683 = vmatpush1.bf16.msra.mxu0 0
    %2684 = vmatprep.subr.bf16.mxu0 0
    %2685 = vmatpush1.bf16.msra.mxu0 0
    %2686 = vmatprep.subr.bf16.mxu0 0
    %2687 = vmatpush1.bf16.msra.mxu0 0
    %2688 = vmatprep.subr.bf16.mxu0 0
    %2689 = vmatpush1.bf16.msra.mxu0 0
    %2690 = vmatprep.subr.bf16.mxu0 0
    %2691 = vmatpush1.bf16.msra.mxu0 0
    %2692 = vmatprep.subr.bf16.mxu0 0
    %2693 = vmatpush1.bf16.msra.mxu0 0
    %2694 = vmatprep.subr.bf16.mxu0 0
    %2695 = vmatpush1.bf16.msra.mxu0 0
    %2696 = vmatprep.subr.bf16.mxu0 0
    %2697 = vmatpush1.bf16.msra.mxu0 0
    %2698 = vmatprep.subr.bf16.mxu0 0
    %2699 = vmatpush1.bf16.msra.mxu0 0
    %2700 = vmatprep.subr.bf16.mxu0 0
    %2701 = vmatpush1.bf16.msra.mxu0 0
    %2702 = vmatprep.subr.bf16.mxu0 0
    %2703 = vmatpush1.bf16.msra.mxu0 0
    %2704 = vmatprep.subr.bf16.mxu0 0
    %2705 = vmatpush1.bf16.msra.mxu0 0
    %2706 = vmatprep.subr.bf16.mxu0 0
    %2707 = vmatpush1.bf16.msra.mxu0 0
    %2708 = vmatprep.mubr.bf16.mxu0 0
    %2709 = vmatmul.mubr.bf16.gmra.mrb[0].mxu0 %v2629
    %v2710 = vpop.f32.mrb[0].mxu0
    %v2711 = vadd.f32 0.0, %v2710
    %v2712 = vpop.f32.mrb[0].mxu0
    %v2713 = vpop.f32.mrb[0].mxu0
    %v2714 = vadd.f32 0.0, %v2713
    %v2715 = vpop.f32.mrb[0].mxu0
    %2716 = vmatprep.mubr.bf16.mxu0 0
    %2717 = vmatmul.mubr.bf16.gmra.mrb[0].mxu0 %v2632
    %v2718 = vpop.f32.mrb[0].mxu0
    %v2719 = vadd.f32 0.0, %v2718
    %v2720 = vpop.f32.mrb[0].mxu0
    %v2721 = vpop.f32.mrb[0].mxu0
    %v2722 = vadd.f32 0.0, %v2721
    %v2723 = vpop.f32.mrb[0].mxu0
    %2724 = vmatprep.mubr.bf16.mxu0 0
    %2725 = vmatmul.mubr.bf16.gmra.mrb[0].mxu0 %v2635
    %v2726 = vpop.f32.mrb[0].mxu0
    %v2727 = vadd.f32 0.0, %v2726
    %v2728 = vpop.f32.mrb[0].mxu0
    %v2729 = vpop.f32.mrb[0].mxu0
    %v2730 = vadd.f32 0.0, %v2729
    %v2731 = vpop.f32.mrb[0].mxu0
    %2732 = vmatprep.mubr.bf16.mxu0 0
    %2733 = vmatmul.mubr.bf16.gmra.mrb[0].mxu0 %v2638
    %v2734 = vpop.f32.mrb[0].mxu0
    %v2735 = vadd.f32 0.0, %v2734
    %v2736 = vpop.f32.mrb[0].mxu0
    %v2737 = vpop.f32.mrb[0].mxu0
    %v2738 = vadd.f32 0.0, %v2737
    %v2739 = vpop.f32.mrb[0].mxu0
    %2740 = vmatprep.mubr.bf16.mxu0 0
    %2741 = vmatmul.mubr.bf16.gmra.mrb[0].mxu0 %v2641
    %v2742 = vpop.f32.mrb[0].mxu0
    %v2743 = vadd.f32 0.0, %v2742
    %v2744 = vpop.f32.mrb[0].mxu0
    %v2745 = vpop.f32.mrb[0].mxu0
    %v2746 = vadd.f32 0.0, %v2745
    %v2747 = vpop.f32.mrb[0].mxu0
    %2748 = vmatprep.mubr.bf16.mxu0 0
    %2749 = vmatmul.mubr.bf16.gmra.mrb[0].mxu0 %v2644
    %v2750 = vpop.f32.mrb[0].mxu0
    %v2751 = vadd.f32 0.0, %v2750
    %v2752 = vpop.f32.mrb[0].mxu0
    %v2753 = vpop.f32.mrb[0].mxu0
    %v2754 = vadd.f32 0.0, %v2753
    %v2755 = vpop.f32.mrb[0].mxu0
    %2756 = vmatprep.mubr.bf16.mxu0 0
    %2757 = vmatmul.mubr.bf16.gmra.mrb[0].mxu0 %v2647
    %v2758 = vpop.f32.mrb[0].mxu0
    %v2759 = vadd.f32 0.0, %v2758
    %v2760 = vpop.f32.mrb[0].mxu0
    %v2761 = vpop.f32.mrb[0].mxu0
    %v2762 = vadd.f32 0.0, %v2761
    %v2763 = vpop.f32.mrb[0].mxu0
    %2764 = vmatprep.mubr.bf16.mxu0 0
    %2765 = vmatmul.mubr.bf16.gmra.mrb[0].mxu0 %v2650
    %v2766 = vpop.f32.mrb[0].mxu0
    %v2767 = vadd.f32 0.0, %v2766
    %v2768 = vpop.f32.mrb[0].mxu0
    %v2769 = vpop.f32.mrb[0].mxu0
    %v2770 = vadd.f32 0.0, %v2769
    %v2771 = vpop.f32.mrb[0].mxu0
    %2772 = vmatprep.mubr.bf16.mxu0 0
    %2773 = vmatmul.mubr.bf16.gmra.mrb[0].mxu0 %v2653
    %v2774 = vpop.f32.mrb[0].mxu0
    %v2775 = vadd.f32 0.0, %v2774
    %v2776 = vpop.f32.mrb[0].mxu0
    %v2777 = vpop.f32.mrb[0].mxu0
    %v2778 = vadd.f32 0.0, %v2777
    %v2779 = vpop.f32.mrb[0].mxu0
    %2780 = vmatprep.mubr.bf16.mxu0 0
    %2781 = vmatmul.mubr.bf16.gmra.mrb[0].mxu0 %v2656
    %v2782 = vpop.f32.mrb[0].mxu0
    %v2783 = vadd.f32 0.0, %v2782
    %v2784 = vpop.f32.mrb[0].mxu0
    %v2785 = vpop.f32.mrb[0].mxu0
    %v2786 = vadd.f32 0.0, %v2785
    %v2787 = vpop.f32.mrb[0].mxu0
    %2788 = vmatprep.mubr.bf16.mxu0 0
    %2789 = vmatmul.mubr.bf16.gmra.mrb[0].mxu0 %v2659
    %v2790 = vpop.f32.mrb[0].mxu0
    %v2791 = vadd.f32 0.0, %v2790
    %v2792 = vpop.f32.mrb[0].mxu0
    %v2793 = vpop.f32.mrb[0].mxu0
    %v2794 = vadd.f32 0.0, %v2793
    %v2795 = vpop.f32.mrb[0].mxu0
    %2796 = vmatprep.mubr.bf16.mxu0 0
    %2797 = vmatmul.mubr.bf16.gmra.mrb[0].mxu0 %v2662
    %v2798 = vpop.f32.mrb[0].mxu0
    %v2799 = vadd.f32 0.0, %v2798
    %v2800 = vpop.f32.mrb[0].mxu0
    %v2801 = vpop.f32.mrb[0].mxu0
    %v2802 = vadd.f32 0.0, %v2801
    %v2803 = vpop.f32.mrb[0].mxu0
    %2804 = vmatprep.mubr.bf16.mxu0 0
    %2805 = vmatmul.mubr.bf16.gmra.mrb[0].mxu0 %v2665
    %v2806 = vpop.f32.mrb[0].mxu0
    %v2807 = vadd.f32 0.0, %v2806
    %v2808 = vpop.f32.mrb[0].mxu0
    %v2809 = vpop.f32.mrb[0].mxu0
    %v2810 = vadd.f32 0.0, %v2809
    %v2811 = vpop.f32.mrb[0].mxu0
    %2812 = vmatprep.mubr.bf16.mxu0 0
    %2813 = vmatmul.mubr.bf16.gmra.mrb[0].mxu0 %v2668
    %v2814 = vpop.f32.mrb[0].mxu0
    %v2815 = vadd.f32 0.0, %v2814
    %v2816 = vpop.f32.mrb[0].mxu0
    %v2817 = vpop.f32.mrb[0].mxu0
    %v2818 = vadd.f32 0.0, %v2817
    %v2819 = vpop.f32.mrb[0].mxu0
    %2820 = vmatprep.mubr.bf16.mxu0 0
    %2821 = vmatmul.mubr.bf16.gmra.mrb[0].mxu0 %v2671
    %v2822 = vpop.f32.mrb[0].mxu0
    %v2823 = vadd.f32 0.0, %v2822
    %v2824 = vpop.f32.mrb[0].mxu0
    %v2825 = vpop.f32.mrb[0].mxu0
    %v2826 = vadd.f32 0.0, %v2825
    %v2827 = vpop.f32.mrb[0].mxu0
    %2828 = vmatprep.mubr.bf16.mxu0 0
    %2829 = vmatmul.mubr.bf16.gmra.mrb[0].mxu0 %v2674
    %v2830 = vpop.f32.mrb[0].mxu0
    %v2831 = vadd.f32 0.0, %v2830
    %v2832 = vpop.f32.mrb[0].mxu0
    %v2833 = vpop.f32.mrb[0].mxu0
    %v2834 = vadd.f32 0.0, %v2833
    %v2835 = vpop.f32.mrb[0].mxu0
    %2836 = vdwg.mxu0
    %v2837 = vadd.f32 %v2564, %v2711
    %v2838 = vadd.f32 %v2565, %v2714
    %v2839 = vadd.f32 %v2566, %v2719
    %v2840 = vadd.f32 %v2567, %v2722
    %v2841 = vadd.f32 %v2568, %v2727
    %v2842 = vadd.f32 %v2569, %v2730
    %v2843 = vadd.f32 %v2570, %v2735
    %v2844 = vadd.f32 %v2571, %v2738
    %v2845 = vadd.f32 %v2572, %v2743
    %v2846 = vadd.f32 %v2573, %v2746
    %v2847 = vadd.f32 %v2574, %v2751
    %v2848 = vadd.f32 %v2575, %v2754
    %v2849 = vadd.f32 %v2576, %v2759
    %v2850 = vadd.f32 %v2577, %v2762
    %v2851 = vadd.f32 %v2578, %v2767
    %v2852 = vadd.f32 %v2579, %v2770
    %v2853 = vadd.f32 %v2580, %v2775
    %v2854 = vadd.f32 %v2581, %v2778
    %v2855 = vadd.f32 %v2582, %v2783
    %v2856 = vadd.f32 %v2583, %v2786
    %v2857 = vadd.f32 %v2584, %v2791
    %v2858 = vadd.f32 %v2585, %v2794
    %v2859 = vadd.f32 %v2586, %v2799
    %v2860 = vadd.f32 %v2587, %v2802
    %v2861 = vadd.f32 %v2588, %v2807
    %v2862 = vadd.f32 %v2589, %v2810
    %v2863 = vadd.f32 %v2590, %v2815
    %v2864 = vadd.f32 %v2591, %v2818
    %v2865 = vadd.f32 %v2592, %v2823
    %v2866 = vadd.f32 %v2593, %v2826
    %v2867 = vadd.f32 %v2594, %v2831
    %v2868 = vadd.f32 %v2595, %v2834
    %v2869 = vpack.c.bf16 %v2322, %v2320
    %v2870 = vld [vmem:[%s4 + $0x60] sm:$0xf]
    %v2871 = vld [vmem:[%s4 + $0x64] sm:$0xf]
    %v2872 = vld [vmem:[%s4 + $0x68] sm:$0xf]
    %v2873 = vld [vmem:[%s4 + $0x6c] sm:$0xf]
    %v2878 = vunpack.c.l.b16 %v2870
    %v2879 = vunpack.c.l.b16 %v2871
    %v2880 = vunpack.c.l.b16 %v2872
    %v2881 = vunpack.c.l.b16 %v2873
    %v2882 = vpack.c.b16 %v2879, %v2878
    %v2883 = vpack.c.b16 %v2881, %v2880
    %v2887 = vsel %vm64, %v2869, 0
    %2889 = vmatprep.subr.bf16.mxu0 0
    %2890 = vmatpush1.bf16.msra.mxu0 %v2882
    %2891 = vmatprep.subr.bf16.mxu0 0
    %2892 = vmatpush1.bf16.msra.mxu0 %v2883
    %2893 = vmatprep.subr.bf16.mxu0 0
    %2894 = vmatpush1.bf16.msra.mxu0 0
    %2895 = vmatprep.subr.bf16.mxu0 0
    %2896 = vmatpush1.bf16.msra.mxu0 0
    %2897 = vmatprep.subr.bf16.mxu0 0
    %2898 = vmatpush1.bf16.msra.mxu0 0
    %2899 = vmatprep.subr.bf16.mxu0 0
    %2900 = vmatpush1.bf16.msra.mxu0 0
    %2901 = vmatprep.subr.bf16.mxu0 0
    %2902 = vmatpush1.bf16.msra.mxu0 0
    %2903 = vmatprep.subr.bf16.mxu0 0
    %2904 = vmatpush1.bf16.msra.mxu0 0
    %2905 = vmatprep.subr.bf16.mxu0 0
    %2906 = vmatpush1.bf16.msra.mxu0 0
    %2907 = vmatprep.subr.bf16.mxu0 0
    %2908 = vmatpush1.bf16.msra.mxu0 0
    %2909 = vmatprep.subr.bf16.mxu0 0
    %2910 = vmatpush1.bf16.msra.mxu0 0
    %2911 = vmatprep.subr.bf16.mxu0 0
    %2912 = vmatpush1.bf16.msra.mxu0 0
    %2913 = vmatprep.subr.bf16.mxu0 0
    %2914 = vmatpush1.bf16.msra.mxu0 0
    %2915 = vmatprep.subr.bf16.mxu0 0
    %2916 = vmatpush1.bf16.msra.mxu0 0
    %2917 = vmatprep.subr.bf16.mxu0 0
    %2918 = vmatpush1.bf16.msra.mxu0 0
    %2919 = vmatprep.subr.bf16.mxu0 0
    %2920 = vmatpush1.bf16.msra.mxu0 0
    %2921 = vmatprep.mubr.bf16.mxu0 0
    %2922 = vmatmul.mubr.bf16.gmra.mrb[0].mxu0 %v2359
    %v2923 = vpop.f32.mrb[0].mxu0
    %v2924 = vadd.f32 0.0, %v2923
    %v2925 = vpop.f32.mrb[0].mxu0
    %v2926 = vpop.f32.mrb[0].mxu0
    %v2927 = vadd.f32 0.0, %v2926
    %v2928 = vpop.f32.mrb[0].mxu0
    %2929 = vmatprep.mubr.bf16.mxu0 0
    %2930 = vmatmul.mubr.bf16.gmra.mrb[0].mxu0 %v2362
    %v2931 = vpop.f32.mrb[0].mxu0
    %v2932 = vadd.f32 0.0, %v2931
    %v2933 = vpop.f32.mrb[0].mxu0
    %v2934 = vpop.f32.mrb[0].mxu0
    %v2935 = vadd.f32 0.0, %v2934
    %v2936 = vpop.f32.mrb[0].mxu0
    %2937 = vmatprep.mubr.bf16.mxu0 0
    %2938 = vmatmul.mubr.bf16.gmra.mrb[0].mxu0 %v2365
    %v2939 = vpop.f32.mrb[0].mxu0
    %v2940 = vadd.f32 0.0, %v2939
    %v2941 = vpop.f32.mrb[0].mxu0
    %v2942 = vpop.f32.mrb[0].mxu0
    %v2943 = vadd.f32 0.0, %v2942
    %v2944 = vpop.f32.mrb[0].mxu0
    %2945 = vmatprep.mubr.bf16.mxu0 0
    %2946 = vmatmul.mubr.bf16.gmra.mrb[0].mxu0 %v2368
    %v2947 = vpop.f32.mrb[0].mxu0
    %v2948 = vadd.f32 0.0, %v2947
    %v2949 = vpop.f32.mrb[0].mxu0
    %v2950 = vpop.f32.mrb[0].mxu0
    %v2951 = vadd.f32 0.0, %v2950
    %v2952 = vpop.f32.mrb[0].mxu0
    %2953 = vmatprep.mubr.bf16.mxu0 0
    %2954 = vmatmul.mubr.bf16.gmra.mrb[0].mxu0 %v2371
    %v2955 = vpop.f32.mrb[0].mxu0
    %v2956 = vadd.f32 0.0, %v2955
    %v2957 = vpop.f32.mrb[0].mxu0
    %v2958 = vpop.f32.mrb[0].mxu0
    %v2959 = vadd.f32 0.0, %v2958
    %v2960 = vpop.f32.mrb[0].mxu0
    %2961 = vmatprep.mubr.bf16.mxu0 0
    %2962 = vmatmul.mubr.bf16.gmra.mrb[0].mxu0 %v2374
    %v2963 = vpop.f32.mrb[0].mxu0
    %v2964 = vadd.f32 0.0, %v2963
    %v2965 = vpop.f32.mrb[0].mxu0
    %v2966 = vpop.f32.mrb[0].mxu0
    %v2967 = vadd.f32 0.0, %v2966
    %v2968 = vpop.f32.mrb[0].mxu0
    %2969 = vmatprep.mubr.bf16.mxu0 0
    %2970 = vmatmul.mubr.bf16.gmra.mrb[0].mxu0 %v2377
    %v2971 = vpop.f32.mrb[0].mxu0
    %v2972 = vadd.f32 0.0, %v2971
    %v2973 = vpop.f32.mrb[0].mxu0
    %v2974 = vpop.f32.mrb[0].mxu0
    %v2975 = vadd.f32 0.0, %v2974
    %v2976 = vpop.f32.mrb[0].mxu0
    %2977 = vmatprep.mubr.bf16.mxu0 0
    %2978 = vmatmul.mubr.bf16.gmra.mrb[0].mxu0 %v2380
    %v2979 = vpop.f32.mrb[0].mxu0
    %v2980 = vadd.f32 0.0, %v2979
    %v2981 = vpop.f32.mrb[0].mxu0
    %v2982 = vpop.f32.mrb[0].mxu0
    %v2983 = vadd.f32 0.0, %v2982
    %v2984 = vpop.f32.mrb[0].mxu0
    %2985 = vmatprep.mubr.bf16.mxu0 0
    %2986 = vmatmul.mubr.bf16.gmra.mrb[0].mxu0 %v2383
    %v2987 = vpop.f32.mrb[0].mxu0
    %v2988 = vadd.f32 0.0, %v2987
    %v2989 = vpop.f32.mrb[0].mxu0
    %v2990 = vpop.f32.mrb[0].mxu0
    %v2991 = vadd.f32 0.0, %v2990
    %v2992 = vpop.f32.mrb[0].mxu0
    %2993 = vmatprep.mubr.bf16.mxu0 0
    %2994 = vmatmul.mubr.bf16.gmra.mrb[0].mxu0 %v2386
    %v2995 = vpop.f32.mrb[0].mxu0
    %v2996 = vadd.f32 0.0, %v2995
    %v2997 = vpop.f32.mrb[0].mxu0
    %v2998 = vpop.f32.mrb[0].mxu0
    %v2999 = vadd.f32 0.0, %v2998
    %v3000 = vpop.f32.mrb[0].mxu0
    %3001 = vmatprep.mubr.bf16.mxu0 0
    %3002 = vmatmul.mubr.bf16.gmra.mrb[0].mxu0 %v2389
    %v3003 = vpop.f32.mrb[0].mxu0
    %v3004 = vadd.f32 0.0, %v3003
    %v3005 = vpop.f32.mrb[0].mxu0
    %v3006 = vpop.f32.mrb[0].mxu0
    %v3007 = vadd.f32 0.0, %v3006
    %v3008 = vpop.f32.mrb[0].mxu0
    %3009 = vmatprep.mubr.bf16.mxu0 0
    %3010 = vmatmul.mubr.bf16.gmra.mrb[0].mxu0 %v2392
    %v3011 = vpop.f32.mrb[0].mxu0
    %v3012 = vadd.f32 0.0, %v3011
    %v3013 = vpop.f32.mrb[0].mxu0
    %v3014 = vpop.f32.mrb[0].mxu0
    %v3015 = vadd.f32 0.0, %v3014
    %v3016 = vpop.f32.mrb[0].mxu0
    %3017 = vmatprep.mubr.bf16.mxu0 0
    %3018 = vmatmul.mubr.bf16.gmra.mrb[0].mxu0 %v2395
    %v3019 = vpop.f32.mrb[0].mxu0
    %v3020 = vadd.f32 0.0, %v3019
    %v3021 = vpop.f32.mrb[0].mxu0
    %v3022 = vpop.f32.mrb[0].mxu0
    %v3023 = vadd.f32 0.0, %v3022
    %v3024 = vpop.f32.mrb[0].mxu0
    %3025 = vmatprep.mubr.bf16.mxu0 0
    %3026 = vmatmul.mubr.bf16.gmra.mrb[0].mxu0 %v2398
    %v3027 = vpop.f32.mrb[0].mxu0
    %v3028 = vadd.f32 0.0, %v3027
    %v3029 = vpop.f32.mrb[0].mxu0
    %v3030 = vpop.f32.mrb[0].mxu0
    %v3031 = vadd.f32 0.0, %v3030
    %v3032 = vpop.f32.mrb[0].mxu0
    %3033 = vmatprep.mubr.bf16.mxu0 0
    %3034 = vmatmul.mubr.bf16.gmra.mrb[0].mxu0 %v2401
    %v3035 = vpop.f32.mrb[0].mxu0
    %v3036 = vadd.f32 0.0, %v3035
    %v3037 = vpop.f32.mrb[0].mxu0
    %v3038 = vpop.f32.mrb[0].mxu0
    %v3039 = vadd.f32 0.0, %v3038
    %v3040 = vpop.f32.mrb[0].mxu0
    %3041 = vmatprep.mubr.bf16.mxu0 0
    %3042 = vmatmul.mubr.bf16.gmra.mrb[0].mxu0 %v2887
    %v3043 = vpop.f32.mrb[0].mxu0
    %v3044 = vadd.f32 0.0, %v3043
    %v3045 = vpop.f32.mrb[0].mxu0
    %v3046 = vpop.f32.mrb[0].mxu0
    %v3047 = vadd.f32 0.0, %v3046
    %v3048 = vpop.f32.mrb[0].mxu0
    %3049 = vdwg.mxu0
    %v3050 = vadd.f32 %v2837, %v2924
    %v3051 = vadd.f32 %v2838, %v2927
    %v3052 = vadd.f32 %v2839, %v2932
    %v3053 = vadd.f32 %v2840, %v2935
    %v3054 = vadd.f32 %v2841, %v2940
    %v3055 = vadd.f32 %v2842, %v2943
    %v3056 = vadd.f32 %v2843, %v2948
    %v3057 = vadd.f32 %v2844, %v2951
    %v3058 = vadd.f32 %v2845, %v2956
    %v3059 = vadd.f32 %v2846, %v2959
    %v3060 = vadd.f32 %v2847, %v2964
    %v3061 = vadd.f32 %v2848, %v2967
    %v3062 = vadd.f32 %v2849, %v2972
    %v3063 = vadd.f32 %v2850, %v2975
    %v3064 = vadd.f32 %v2851, %v2980
    %v3065 = vadd.f32 %v2852, %v2983
    %v3066 = vadd.f32 %v2853, %v2988
    %v3067 = vadd.f32 %v2854, %v2991
    %v3068 = vadd.f32 %v2855, %v2996
    %v3069 = vadd.f32 %v2856, %v2999
    %v3070 = vadd.f32 %v2857, %v3004
    %v3071 = vadd.f32 %v2858, %v3007
    %v3072 = vadd.f32 %v2859, %v3012
    %v3073 = vadd.f32 %v2860, %v3015
    %v3074 = vadd.f32 %v2861, %v3020
    %v3075 = vadd.f32 %v2862, %v3023
    %v3076 = vadd.f32 %v2863, %v3028
    %v3077 = vadd.f32 %v2864, %v3031
    %v3078 = vadd.f32 %v2865, %v3036
    %v3079 = vadd.f32 %v2866, %v3039
    %v3080 = vadd.f32 %v2867, %v3044
    %v3081 = vadd.f32 %v2868, %v3047
    %s3082 = scalar_lea.vmem [#allocation2], 1
    %v3083 = vld [vmem:[%s3082] ss:$2 sm:$0xff]
    %s3084 = scalar_lea.vmem [#allocation2], 17
    %v3085 = vld [vmem:[%s3084] ss:$2 sm:$0xff]
    %s3086 = scalar_lea.vmem [#allocation2], 41
    %v3087 = vld [vmem:[%s3086] ss:$2 sm:$0xff]
    %s3088 = scalar_lea.vmem [#allocation2], 57
    %v3089 = vld [vmem:[%s3088] ss:$2 sm:$0xff]
    %s3090 = scalar_lea.vmem [#allocation2], 81
    %v3091 = vld [vmem:[%s3090] ss:$2 sm:$0xff]
    %s3092 = scalar_lea.vmem [#allocation2], 97
    %v3093 = vld [vmem:[%s3092] ss:$2 sm:$0xff]
    %s3094 = scalar_lea.vmem [#allocation2], 121
    %v3095 = vld [vmem:[%s3094] ss:$2 sm:$0xff]
    %s3096 = scalar_lea.vmem [#allocation2], 137
    %v3097 = vld [vmem:[%s3096] ss:$2 sm:$0xff]
    %s3098 = scalar_lea.vmem [#allocation2], 161
    %v3099 = vld [vmem:[%s3098] ss:$2 sm:$0xff]
    %s3100 = scalar_lea.vmem [#allocation2], 177
    %v3101 = vld [vmem:[%s3100] ss:$2 sm:$0xff]
    %s3102 = scalar_lea.vmem [#allocation2], 201
    %v3103 = vld [vmem:[%s3102] ss:$2 sm:$0xff]
    %s3104 = scalar_lea.vmem [#allocation2], 217
    %v3105 = vld [vmem:[%s3104] ss:$2 sm:$0xff]
    %s3106 = scalar_lea.vmem [#allocation2], 241
    %v3107 = vld [vmem:[%s3106] ss:$2 sm:$0xff]
    %s3108 = scalar_lea.vmem [#allocation2], 257
    %v3109 = vld [vmem:[%s3108] ss:$2 sm:$0xff]
    %s3110 = scalar_lea.vmem [#allocation2], 281
    %v3111 = vld [vmem:[%s3110] ss:$2 sm:$0xff]
    %s3112 = scalar_lea.vmem [#allocation2], 297
    %v3113 = vld [vmem:[%s3112] ss:$2 sm:$0xff]
    %s3114 = scalar_lea.vmem [#allocation2], 321
    %v3115 = vld [vmem:[%s3114] ss:$2 sm:$0xff]
    %s3116 = scalar_lea.vmem [#allocation2], 337
    %v3117 = vld [vmem:[%s3116] ss:$2 sm:$0xff]
    %s3118 = scalar_lea.vmem [#allocation2], 361
    %v3119 = vld [vmem:[%s3118] ss:$2 sm:$0xff]
    %s3120 = scalar_lea.vmem [#allocation2], 377
    %v3121 = vld [vmem:[%s3120] ss:$2 sm:$0xff]
    %s3122 = scalar_lea.vmem [#allocation2], 401
    %v3123 = vld [vmem:[%s3122] ss:$2 sm:$0xff]
    %s3124 = scalar_lea.vmem [#allocation2], 417
    %v3125 = vld [vmem:[%s3124] ss:$2 sm:$0xff]
    %s3126 = scalar_lea.vmem [#allocation2], 441
    %v3127 = vld [vmem:[%s3126] ss:$2 sm:$0xff]
    %s3128 = scalar_lea.vmem [#allocation2], 457
    %v3129 = vld [vmem:[%s3128] ss:$2 sm:$0xff]
    %s3130 = scalar_lea.vmem [#allocation2], 481
    %v3131 = vld [vmem:[%s3130] ss:$2 sm:$0xff]
    %s3132 = scalar_lea.vmem [#allocation2], 497
    %v3133 = vld [vmem:[%s3132] ss:$2 sm:$0xff]
    %s3134 = scalar_lea.vmem [#allocation2], 521
    %v3135 = vld [vmem:[%s3134] ss:$2 sm:$0xff]
    %s3136 = scalar_lea.vmem [#allocation2], 537
    %v3137 = vld [vmem:[%s3136] ss:$2 sm:$0xff]
    %s3138 = scalar_lea.vmem [#allocation2], 561
    %v3139 = vld [vmem:[%s3138] ss:$2 sm:$0xff]
    %s3140 = scalar_lea.vmem [#allocation2], 577
    %v3141 = vld [vmem:[%s3140] ss:$2 sm:$0xff]
    %s3142 = scalar_lea.vmem [#allocation2], 601
    %v3143 = vld [vmem:[%s3142] ss:$2 sm:$0xff]
    %s3144 = scalar_lea.vmem [#allocation2], 617
    %v3145 = vld [vmem:[%s3144] ss:$2 sm:$0xff]
    %s3146 = scalar_lea.vmem [#allocation2], 641
    %v3147 = vld [vmem:[%s3146] ss:$2 sm:$0xff]
    %s3148 = scalar_lea.vmem [#allocation2], 657
    %v3149 = vld [vmem:[%s3148] ss:$2 sm:$0xff]
    %s3150 = scalar_lea.vmem [#allocation2], 681
    %v3151 = vld [vmem:[%s3150] ss:$2 sm:$0xff]
    %s3152 = scalar_lea.vmem [#allocation2], 697
    %v3153 = vld [vmem:[%s3152] ss:$2 sm:$0xff]
    %s3154 = scalar_lea.vmem [#allocation2], 721
    %v3155 = vld [vmem:[%s3154] ss:$2 sm:$0xff]
    %s3156 = scalar_lea.vmem [#allocation2], 737
    %v3157 = vld [vmem:[%s3156] ss:$2 sm:$0xff]
    %s3158 = scalar_lea.vmem [#allocation2], 761
    %v3159 = vld [vmem:[%s3158] ss:$2 sm:$0xff]
    %s3160 = scalar_lea.vmem [#allocation2], 777
    %v3161 = vld [vmem:[%s3160] ss:$2 sm:$0xff]
    %s3162 = scalar_lea.vmem [#allocation2], 801
    %v3163 = vld [vmem:[%s3162] ss:$2 sm:$0xff]
    %s3164 = scalar_lea.vmem [#allocation2], 817
    %v3165 = vld [vmem:[%s3164] ss:$2 sm:$0xff]
    %s3166 = scalar_lea.vmem [#allocation2], 841
    %v3167 = vld [vmem:[%s3166] ss:$2 sm:$0xff]
    %s3168 = scalar_lea.vmem [#allocation2], 857
    %v3169 = vld [vmem:[%s3168] ss:$2 sm:$0xff]
    %s3170 = scalar_lea.vmem [#allocation2], 881
    %v3171 = vld [vmem:[%s3170] ss:$2 sm:$0xff]
    %s3172 = scalar_lea.vmem [#allocation2], 897
    %v3173 = vld [vmem:[%s3172] ss:$2 sm:$0xff]
    %s3174 = scalar_lea.vmem [#allocation2], 921
    %v3175 = vld [vmem:[%s3174] ss:$2 sm:$0xff]
    %s3176 = scalar_lea.vmem [#allocation2], 937
    %v3177 = vld [vmem:[%s3176] ss:$2 sm:$0xff]
    %s3178 = scalar_lea.vmem [#allocation2], 961
    %v3179 = vld [vmem:[%s3178] ss:$2 sm:$0xff]
    %s3180 = scalar_lea.vmem [#allocation2], 977
    %v3181 = vld [vmem:[%s3180] ss:$2 sm:$0xff]
    %s3182 = scalar_lea.vmem [#allocation2], 1001
    %v3183 = vld [vmem:[%s3182] ss:$2 sm:$0xff]
    %s3184 = scalar_lea.vmem [#allocation2], 1017
    %v3185 = vld [vmem:[%s3184] ss:$2 sm:$0xff]
    %s3186 = scalar_lea.vmem [#allocation2], 1041
    %v3187 = vld [vmem:[%s3186] ss:$2 sm:$0xff]
    %s3188 = scalar_lea.vmem [#allocation2], 1057
    %v3189 = vld [vmem:[%s3188] ss:$2 sm:$0xff]
    %s3190 = scalar_lea.vmem [#allocation2], 1081
    %v3191 = vld [vmem:[%s3190] ss:$2 sm:$0xff]
    %s3192 = scalar_lea.vmem [#allocation2], 1097
    %v3193 = vld [vmem:[%s3192] ss:$2 sm:$0xff]
    %s3194 = scalar_lea.vmem [#allocation2], 1121
    %v3195 = vld [vmem:[%s3194] ss:$2 sm:$0xff]
    %s3196 = scalar_lea.vmem [#allocation2], 1137
    %v3197 = vld [vmem:[%s3196] ss:$2 sm:$0xff]
    %s3198 = scalar_lea.vmem [#allocation2], 1161
    %v3199 = vld [vmem:[%s3198] ss:$2 sm:$0xff]
    %s3200 = scalar_lea.vmem [#allocation2], 1177
    %v3201 = vld [vmem:[%s3200] ss:$2 sm:$0xff]
    %s3202 = scalar_lea.vmem [#allocation2], 1201
    %v3203 = vld [vmem:[%s3202] ss:$2 sm:$0xff]
    %s3204 = scalar_lea.vmem [#allocation2], 1217
    %v3205 = vld [vmem:[%s3204] ss:$2 sm:$0xff]
    %s3206 = scalar_lea.vmem [#allocation2], 1241
    %v3207 = vld [vmem:[%s3206] ss:$2 sm:$0xff]
    %s3208 = scalar_lea.vmem [#allocation2], 1257
    %v3209 = vld [vmem:[%s3208] ss:$2 sm:$0xff]
    %s3210 = scalar_lea.vmem [#allocation2], 1281
    %v3211 = vld [vmem:[%s3210] ss:$2 sm:$0xff]
    %s3212 = scalar_lea.vmem [#allocation2], 1297
    %v3213 = vld [vmem:[%s3212] ss:$2 sm:$0xff]
    %v3214 = vpack.c.bf16 %v3085, %v3083
    %v3215 = vpack.c.bf16 %v3093, %v3091
    %v3216 = vpack.c.bf16 %v3101, %v3099
    %v3217 = vpack.c.bf16 %v3109, %v3107
    %v3218 = vpack.c.bf16 %v3117, %v3115
    %v3219 = vpack.c.bf16 %v3125, %v3123
    %v3220 = vpack.c.bf16 %v3133, %v3131
    %v3221 = vpack.c.bf16 %v3141, %v3139
    %v3222 = vpack.c.bf16 %v3149, %v3147
    %v3223 = vpack.c.bf16 %v3157, %v3155
    %v3224 = vpack.c.bf16 %v3165, %v3163
    %v3225 = vpack.c.bf16 %v3173, %v3171
    %v3226 = vpack.c.bf16 %v3181, %v3179
    %v3227 = vpack.c.bf16 %v3189, %v3187
    %v3228 = vpack.c.bf16 %v3197, %v3195
    %v3229 = vpack.c.bf16 %v3205, %v3203
    %v3230 = vld [vmem:[%s4 + $0x10] sm:$0xf]
    %v3231 = vld [vmem:[%s4 + $0x14] sm:$0xf]
    %v3232 = vld [vmem:[%s4 + $0x18] sm:$0xf]
    %v3233 = vld [vmem:[%s4 + $0x1c] sm:$0xf]
    %v3238 = vunpack.c.l.b16 %v3230
    %v3239 = vunpack.c.l.b16 %v3231
    %v3240 = vunpack.c.l.b16 %v3232
    %v3241 = vunpack.c.l.b16 %v3233
    %v3242 = vpack.c.b16 %v3239, %v3238
    %v3243 = vpack.c.b16 %v3241, %v3240
    %v3247 = vsel %vm64, %v3214, 0
    %v3250 = vsel %vm64, %v3215, 0
    %v3253 = vsel %vm64, %v3216, 0
    %v3256 = vsel %vm64, %v3217, 0
    %v3259 = vsel %vm64, %v3218, 0
    %v3262 = vsel %vm64, %v3219, 0
    %v3265 = vsel %vm64, %v3220, 0
    %v3268 = vsel %vm64, %v3221, 0
    %v3271 = vsel %vm64, %v3222, 0
    %v3274 = vsel %vm64, %v3223, 0
    %v3277 = vsel %vm64, %v3224, 0
    %v3280 = vsel %vm64, %v3225, 0
    %v3283 = vsel %vm64, %v3226, 0
    %v3286 = vsel %vm64, %v3227, 0
    %v3289 = vsel %vm64, %v3228, 0
    %v3292 = vsel %vm64, %v3229, 0
    %3294 = vmatprep.subr.bf16.mxu0 0
    %3295 = vmatpush1.bf16.msra.mxu0 %v3242
    %3296 = vmatprep.subr.bf16.mxu0 0
    %3297 = vmatpush1.bf16.msra.mxu0 %v3243
    %3298 = vmatprep.subr.bf16.mxu0 0
    %3299 = vmatpush1.bf16.msra.mxu0 0
    %3300 = vmatprep.subr.bf16.mxu0 0
    %3301 = vmatpush1.bf16.msra.mxu0 0
    %3302 = vmatprep.subr.bf16.mxu0 0
    %3303 = vmatpush1.bf16.msra.mxu0 0
    %3304 = vmatprep.subr.bf16.mxu0 0
    %3305 = vmatpush1.bf16.msra.mxu0 0
    %3306 = vmatprep.subr.bf16.mxu0 0
    %3307 = vmatpush1.bf16.msra.mxu0 0
    %3308 = vmatprep.subr.bf16.mxu0 0
    %3309 = vmatpush1.bf16.msra.mxu0 0
    %3310 = vmatprep.subr.bf16.mxu0 0
    %3311 = vmatpush1.bf16.msra.mxu0 0
    %3312 = vmatprep.subr.bf16.mxu0 0
    %3313 = vmatpush1.bf16.msra.mxu0 0
    %3314 = vmatprep.subr.bf16.mxu0 0
    %3315 = vmatpush1.bf16.msra.mxu0 0
    %3316 = vmatprep.subr.bf16.mxu0 0
    %3317 = vmatpush1.bf16.msra.mxu0 0
    %3318 = vmatprep.subr.bf16.mxu0 0
    %3319 = vmatpush1.bf16.msra.mxu0 0
    %3320 = vmatprep.subr.bf16.mxu0 0
    %3321 = vmatpush1.bf16.msra.mxu0 0
    %3322 = vmatprep.subr.bf16.mxu0 0
    %3323 = vmatpush1.bf16.msra.mxu0 0
    %3324 = vmatprep.subr.bf16.mxu0 0
    %3325 = vmatpush1.bf16.msra.mxu0 0
    %3326 = vmatprep.mubr.bf16.mxu0 0
    %3327 = vmatmul.mubr.bf16.gmra.mrb[0].mxu0 %v3247
    %v3328 = vpop.f32.mrb[0].mxu0
    %v3329 = vadd.f32 0.0, %v3328
    %v3330 = vpop.f32.mrb[0].mxu0
    %v3331 = vpop.f32.mrb[0].mxu0
    %v3332 = vadd.f32 0.0, %v3331
    %v3333 = vpop.f32.mrb[0].mxu0
    %3334 = vmatprep.mubr.bf16.mxu0 0
    %3335 = vmatmul.mubr.bf16.gmra.mrb[0].mxu0 %v3250
    %v3336 = vpop.f32.mrb[0].mxu0
    %v3337 = vadd.f32 0.0, %v3336
    %v3338 = vpop.f32.mrb[0].mxu0
    %v3339 = vpop.f32.mrb[0].mxu0
    %v3340 = vadd.f32 0.0, %v3339
    %v3341 = vpop.f32.mrb[0].mxu0
    %3342 = vmatprep.mubr.bf16.mxu0 0
    %3343 = vmatmul.mubr.bf16.gmra.mrb[0].mxu0 %v3253
    %v3344 = vpop.f32.mrb[0].mxu0
    %v3345 = vadd.f32 0.0, %v3344
    %v3346 = vpop.f32.mrb[0].mxu0
    %v3347 = vpop.f32.mrb[0].mxu0
    %v3348 = vadd.f32 0.0, %v3347
    %v3349 = vpop.f32.mrb[0].mxu0
    %3350 = vmatprep.mubr.bf16.mxu0 0
    %3351 = vmatmul.mubr.bf16.gmra.mrb[0].mxu0 %v3256
    %v3352 = vpop.f32.mrb[0].mxu0
    %v3353 = vadd.f32 0.0, %v3352
    %v3354 = vpop.f32.mrb[0].mxu0
    %v3355 = vpop.f32.mrb[0].mxu0
    %v3356 = vadd.f32 0.0, %v3355
    %v3357 = vpop.f32.mrb[0].mxu0
    %3358 = vmatprep.mubr.bf16.mxu0 0
    %3359 = vmatmul.mubr.bf16.gmra.mrb[0].mxu0 %v3259
    %v3360 = vpop.f32.mrb[0].mxu0
    %v3361 = vadd.f32 0.0, %v3360
    %v3362 = vpop.f32.mrb[0].mxu0
    %v3363 = vpop.f32.mrb[0].mxu0
    %v3364 = vadd.f32 0.0, %v3363
    %v3365 = vpop.f32.mrb[0].mxu0
    %3366 = vmatprep.mubr.bf16.mxu0 0
    %3367 = vmatmul.mubr.bf16.gmra.mrb[0].mxu0 %v3262
    %v3368 = vpop.f32.mrb[0].mxu0
    %v3369 = vadd.f32 0.0, %v3368
    %v3370 = vpop.f32.mrb[0].mxu0
    %v3371 = vpop.f32.mrb[0].mxu0
    %v3372 = vadd.f32 0.0, %v3371
    %v3373 = vpop.f32.mrb[0].mxu0
    %3374 = vmatprep.mubr.bf16.mxu0 0
    %3375 = vmatmul.mubr.bf16.gmra.mrb[0].mxu0 %v3265
    %v3376 = vpop.f32.mrb[0].mxu0
    %v3377 = vadd.f32 0.0, %v3376
    %v3378 = vpop.f32.mrb[0].mxu0
    %v3379 = vpop.f32.mrb[0].mxu0
    %v3380 = vadd.f32 0.0, %v3379
    %v3381 = vpop.f32.mrb[0].mxu0
    %3382 = vmatprep.mubr.bf16.mxu0 0
    %3383 = vmatmul.mubr.bf16.gmra.mrb[0].mxu0 %v3268
    %v3384 = vpop.f32.mrb[0].mxu0
    %v3385 = vadd.f32 0.0, %v3384
    %v3386 = vpop.f32.mrb[0].mxu0
    %v3387 = vpop.f32.mrb[0].mxu0
    %v3388 = vadd.f32 0.0, %v3387
    %v3389 = vpop.f32.mrb[0].mxu0
    %3390 = vmatprep.mubr.bf16.mxu0 0
    %3391 = vmatmul.mubr.bf16.gmra.mrb[0].mxu0 %v3271
    %v3392 = vpop.f32.mrb[0].mxu0
    %v3393 = vadd.f32 0.0, %v3392
    %v3394 = vpop.f32.mrb[0].mxu0
    %v3395 = vpop.f32.mrb[0].mxu0
    %v3396 = vadd.f32 0.0, %v3395
    %v3397 = vpop.f32.mrb[0].mxu0
    %3398 = vmatprep.mubr.bf16.mxu0 0
    %3399 = vmatmul.mubr.bf16.gmra.mrb[0].mxu0 %v3274
    %v3400 = vpop.f32.mrb[0].mxu0
    %v3401 = vadd.f32 0.0, %v3400
    %v3402 = vpop.f32.mrb[0].mxu0
    %v3403 = vpop.f32.mrb[0].mxu0
    %v3404 = vadd.f32 0.0, %v3403
    %v3405 = vpop.f32.mrb[0].mxu0
    %3406 = vmatprep.mubr.bf16.mxu0 0
    %3407 = vmatmul.mubr.bf16.gmra.mrb[0].mxu0 %v3277
    %v3408 = vpop.f32.mrb[0].mxu0
    %v3409 = vadd.f32 0.0, %v3408
    %v3410 = vpop.f32.mrb[0].mxu0
    %v3411 = vpop.f32.mrb[0].mxu0
    %v3412 = vadd.f32 0.0, %v3411
    %v3413 = vpop.f32.mrb[0].mxu0
    %3414 = vmatprep.mubr.bf16.mxu0 0
    %3415 = vmatmul.mubr.bf16.gmra.mrb[0].mxu0 %v3280
    %v3416 = vpop.f32.mrb[0].mxu0
    %v3417 = vadd.f32 0.0, %v3416
    %v3418 = vpop.f32.mrb[0].mxu0
    %v3419 = vpop.f32.mrb[0].mxu0
    %v3420 = vadd.f32 0.0, %v3419
    %v3421 = vpop.f32.mrb[0].mxu0
    %3422 = vmatprep.mubr.bf16.mxu0 0
    %3423 = vmatmul.mubr.bf16.gmra.mrb[0].mxu0 %v3283
    %v3424 = vpop.f32.mrb[0].mxu0
    %v3425 = vadd.f32 0.0, %v3424
    %v3426 = vpop.f32.mrb[0].mxu0
    %v3427 = vpop.f32.mrb[0].mxu0
    %v3428 = vadd.f32 0.0, %v3427
    %v3429 = vpop.f32.mrb[0].mxu0
    %3430 = vmatprep.mubr.bf16.mxu0 0
    %3431 = vmatmul.mubr.bf16.gmra.mrb[0].mxu0 %v3286
    %v3432 = vpop.f32.mrb[0].mxu0
    %v3433 = vadd.f32 0.0, %v3432
    %v3434 = vpop.f32.mrb[0].mxu0
    %v3435 = vpop.f32.mrb[0].mxu0
    %v3436 = vadd.f32 0.0, %v3435
    %v3437 = vpop.f32.mrb[0].mxu0
    %3438 = vmatprep.mubr.bf16.mxu0 0
    %3439 = vmatmul.mubr.bf16.gmra.mrb[0].mxu0 %v3289
    %v3440 = vpop.f32.mrb[0].mxu0
    %v3441 = vadd.f32 0.0, %v3440
    %v3442 = vpop.f32.mrb[0].mxu0
    %v3443 = vpop.f32.mrb[0].mxu0
    %v3444 = vadd.f32 0.0, %v3443
    %v3445 = vpop.f32.mrb[0].mxu0
    %3446 = vmatprep.mubr.bf16.mxu0 0
    %3447 = vmatmul.mubr.bf16.gmra.mrb[0].mxu0 %v3292
    %v3448 = vpop.f32.mrb[0].mxu0
    %v3449 = vadd.f32 0.0, %v3448
    %v3450 = vpop.f32.mrb[0].mxu0
    %v3451 = vpop.f32.mrb[0].mxu0
    %v3452 = vadd.f32 0.0, %v3451
    %v3453 = vpop.f32.mrb[0].mxu0
    %3454 = vdwg.mxu0
    %v3455 = vadd.f32 %v3050, %v3329
    %v3456 = vadd.f32 %v3051, %v3332
    %v3457 = vadd.f32 %v3052, %v3337
    %v3458 = vadd.f32 %v3053, %v3340
    %v3459 = vadd.f32 %v3054, %v3345
    %v3460 = vadd.f32 %v3055, %v3348
    %v3461 = vadd.f32 %v3056, %v3353
    %v3462 = vadd.f32 %v3057, %v3356
    %v3463 = vadd.f32 %v3058, %v3361
    %v3464 = vadd.f32 %v3059, %v3364
    %v3465 = vadd.f32 %v3060, %v3369
    %v3466 = vadd.f32 %v3061, %v3372
    %v3467 = vadd.f32 %v3062, %v3377
    %v3468 = vadd.f32 %v3063, %v3380
    %v3469 = vadd.f32 %v3064, %v3385
    %v3470 = vadd.f32 %v3065, %v3388
    %v3471 = vadd.f32 %v3066, %v3393
    %v3472 = vadd.f32 %v3067, %v3396
    %v3473 = vadd.f32 %v3068, %v3401
    %v3474 = vadd.f32 %v3069, %v3404
    %v3475 = vadd.f32 %v3070, %v3409
    %v3476 = vadd.f32 %v3071, %v3412
    %v3477 = vadd.f32 %v3072, %v3417
    %v3478 = vadd.f32 %v3073, %v3420
    %v3479 = vadd.f32 %v3074, %v3425
    %v3480 = vadd.f32 %v3075, %v3428
    %v3481 = vadd.f32 %v3076, %v3433
    %v3482 = vadd.f32 %v3077, %v3436
    %v3483 = vadd.f32 %v3078, %v3441
    %v3484 = vadd.f32 %v3079, %v3444
    %v3485 = vadd.f32 %v3080, %v3449
    %v3486 = vadd.f32 %v3081, %v3452
    %v3487 = vpack.c.bf16 %v3089, %v3087
    %v3488 = vpack.c.bf16 %v3097, %v3095
    %v3489 = vpack.c.bf16 %v3105, %v3103
    %v3490 = vpack.c.bf16 %v3113, %v3111
    %v3491 = vpack.c.bf16 %v3121, %v3119
    %v3492 = vpack.c.bf16 %v3129, %v3127
    %v3493 = vpack.c.bf16 %v3137, %v3135
    %v3494 = vpack.c.bf16 %v3145, %v3143
    %v3495 = vpack.c.bf16 %v3153, %v3151
    %v3496 = vpack.c.bf16 %v3161, %v3159
    %v3497 = vpack.c.bf16 %v3169, %v3167
    %v3498 = vpack.c.bf16 %v3177, %v3175
    %v3499 = vpack.c.bf16 %v3185, %v3183
    %v3500 = vpack.c.bf16 %v3193, %v3191
    %v3501 = vpack.c.bf16 %v3201, %v3199
    %v3502 = vpack.c.bf16 %v3209, %v3207
    %v3503 = vld [vmem:[%s4 + $0x40] sm:$0xf]
    %v3504 = vld [vmem:[%s4 + $0x44] sm:$0xf]
    %v3505 = vld [vmem:[%s4 + $0x48] sm:$0xf]
    %v3506 = vld [vmem:[%s4 + $0x4c] sm:$0xf]
    %v3511 = vunpack.c.l.b16 %v3503
    %v3512 = vunpack.c.l.b16 %v3504
    %v3513 = vunpack.c.l.b16 %v3505
    %v3514 = vunpack.c.l.b16 %v3506
    %v3515 = vpack.c.b16 %v3512, %v3511
    %v3516 = vpack.c.b16 %v3514, %v3513
    %v3520 = vsel %vm64, %v3487, 0
    %v3523 = vsel %vm64, %v3488, 0
    %v3526 = vsel %vm64, %v3489, 0
    %v3529 = vsel %vm64, %v3490, 0
    %v3532 = vsel %vm64, %v3491, 0
    %v3535 = vsel %vm64, %v3492, 0
    %v3538 = vsel %vm64, %v3493, 0
    %v3541 = vsel %vm64, %v3494, 0
    %v3544 = vsel %vm64, %v3495, 0
    %v3547 = vsel %vm64, %v3496, 0
    %v3550 = vsel %vm64, %v3497, 0
    %v3553 = vsel %vm64, %v3498, 0
    %v3556 = vsel %vm64, %v3499, 0
    %v3559 = vsel %vm64, %v3500, 0
    %v3562 = vsel %vm64, %v3501, 0
    %v3565 = vsel %vm64, %v3502, 0
    %3567 = vmatprep.subr.bf16.mxu0 0
    %3568 = vmatpush1.bf16.msra.mxu0 %v3515
    %3569 = vmatprep.subr.bf16.mxu0 0
    %3570 = vmatpush1.bf16.msra.mxu0 %v3516
    %3571 = vmatprep.subr.bf16.mxu0 0
    %3572 = vmatpush1.bf16.msra.mxu0 0
    %3573 = vmatprep.subr.bf16.mxu0 0
    %3574 = vmatpush1.bf16.msra.mxu0 0
    %3575 = vmatprep.subr.bf16.mxu0 0
    %3576 = vmatpush1.bf16.msra.mxu0 0
    %3577 = vmatprep.subr.bf16.mxu0 0
    %3578 = vmatpush1.bf16.msra.mxu0 0
    %3579 = vmatprep.subr.bf16.mxu0 0
    %3580 = vmatpush1.bf16.msra.mxu0 0
    %3581 = vmatprep.subr.bf16.mxu0 0
    %3582 = vmatpush1.bf16.msra.mxu0 0
    %3583 = vmatprep.subr.bf16.mxu0 0
    %3584 = vmatpush1.bf16.msra.mxu0 0
    %3585 = vmatprep.subr.bf16.mxu0 0
    %3586 = vmatpush1.bf16.msra.mxu0 0
    %3587 = vmatprep.subr.bf16.mxu0 0
    %3588 = vmatpush1.bf16.msra.mxu0 0
    %3589 = vmatprep.subr.bf16.mxu0 0
    %3590 = vmatpush1.bf16.msra.mxu0 0
    %3591 = vmatprep.subr.bf16.mxu0 0
    %3592 = vmatpush1.bf16.msra.mxu0 0
    %3593 = vmatprep.subr.bf16.mxu0 0
    %3594 = vmatpush1.bf16.msra.mxu0 0
    %3595 = vmatprep.subr.bf16.mxu0 0
    %3596 = vmatpush1.bf16.msra.mxu0 0
    %3597 = vmatprep.subr.bf16.mxu0 0
    %3598 = vmatpush1.bf16.msra.mxu0 0
    %3599 = vmatprep.mubr.bf16.mxu0 0
    %3600 = vmatmul.mubr.bf16.gmra.mrb[0].mxu0 %v3520
    %v3601 = vpop.f32.mrb[0].mxu0
    %v3602 = vadd.f32 0.0, %v3601
    %v3603 = vpop.f32.mrb[0].mxu0
    %v3604 = vpop.f32.mrb[0].mxu0
    %v3605 = vadd.f32 0.0, %v3604
    %v3606 = vpop.f32.mrb[0].mxu0
    %3607 = vmatprep.mubr.bf16.mxu0 0
    %3608 = vmatmul.mubr.bf16.gmra.mrb[0].mxu0 %v3523
    %v3609 = vpop.f32.mrb[0].mxu0
    %v3610 = vadd.f32 0.0, %v3609
    %v3611 = vpop.f32.mrb[0].mxu0
    %v3612 = vpop.f32.mrb[0].mxu0
    %v3613 = vadd.f32 0.0, %v3612
    %v3614 = vpop.f32.mrb[0].mxu0
    %3615 = vmatprep.mubr.bf16.mxu0 0
    %3616 = vmatmul.mubr.bf16.gmra.mrb[0].mxu0 %v3526
    %v3617 = vpop.f32.mrb[0].mxu0
    %v3618 = vadd.f32 0.0, %v3617
    %v3619 = vpop.f32.mrb[0].mxu0
    %v3620 = vpop.f32.mrb[0].mxu0
    %v3621 = vadd.f32 0.0, %v3620
    %v3622 = vpop.f32.mrb[0].mxu0
    %3623 = vmatprep.mubr.bf16.mxu0 0
    %3624 = vmatmul.mubr.bf16.gmra.mrb[0].mxu0 %v3529
    %v3625 = vpop.f32.mrb[0].mxu0
    %v3626 = vadd.f32 0.0, %v3625
    %v3627 = vpop.f32.mrb[0].mxu0
    %v3628 = vpop.f32.mrb[0].mxu0
    %v3629 = vadd.f32 0.0, %v3628
    %v3630 = vpop.f32.mrb[0].mxu0
    %3631 = vmatprep.mubr.bf16.mxu0 0
    %3632 = vmatmul.mubr.bf16.gmra.mrb[0].mxu0 %v3532
    %v3633 = vpop.f32.mrb[0].mxu0
    %v3634 = vadd.f32 0.0, %v3633
    %v3635 = vpop.f32.mrb[0].mxu0
    %v3636 = vpop.f32.mrb[0].mxu0
    %v3637 = vadd.f32 0.0, %v3636
    %v3638 = vpop.f32.mrb[0].mxu0
    %3639 = vmatprep.mubr.bf16.mxu0 0
    %3640 = vmatmul.mubr.bf16.gmra.mrb[0].mxu0 %v3535
    %v3641 = vpop.f32.mrb[0].mxu0
    %v3642 = vadd.f32 0.0, %v3641
    %v3643 = vpop.f32.mrb[0].mxu0
    %v3644 = vpop.f32.mrb[0].mxu0
    %v3645 = vadd.f32 0.0, %v3644
    %v3646 = vpop.f32.mrb[0].mxu0
    %3647 = vmatprep.mubr.bf16.mxu0 0
    %3648 = vmatmul.mubr.bf16.gmra.mrb[0].mxu0 %v3538
    %v3649 = vpop.f32.mrb[0].mxu0
    %v3650 = vadd.f32 0.0, %v3649
    %v3651 = vpop.f32.mrb[0].mxu0
    %v3652 = vpop.f32.mrb[0].mxu0
    %v3653 = vadd.f32 0.0, %v3652
    %v3654 = vpop.f32.mrb[0].mxu0
    %3655 = vmatprep.mubr.bf16.mxu0 0
    %3656 = vmatmul.mubr.bf16.gmra.mrb[0].mxu0 %v3541
    %v3657 = vpop.f32.mrb[0].mxu0
    %v3658 = vadd.f32 0.0, %v3657
    %v3659 = vpop.f32.mrb[0].mxu0
    %v3660 = vpop.f32.mrb[0].mxu0
    %v3661 = vadd.f32 0.0, %v3660
    %v3662 = vpop.f32.mrb[0].mxu0
    %3663 = vmatprep.mubr.bf16.mxu0 0
    %3664 = vmatmul.mubr.bf16.gmra.mrb[0].mxu0 %v3544
    %v3665 = vpop.f32.mrb[0].mxu0
    %v3666 = vadd.f32 0.0, %v3665
    %v3667 = vpop.f32.mrb[0].mxu0
    %v3668 = vpop.f32.mrb[0].mxu0
    %v3669 = vadd.f32 0.0, %v3668
    %v3670 = vpop.f32.mrb[0].mxu0
    %3671 = vmatprep.mubr.bf16.mxu0 0
    %3672 = vmatmul.mubr.bf16.gmra.mrb[0].mxu0 %v3547
    %v3673 = vpop.f32.mrb[0].mxu0
    %v3674 = vadd.f32 0.0, %v3673
    %v3675 = vpop.f32.mrb[0].mxu0
    %v3676 = vpop.f32.mrb[0].mxu0
    %v3677 = vadd.f32 0.0, %v3676
    %v3678 = vpop.f32.mrb[0].mxu0
    %3679 = vmatprep.mubr.bf16.mxu0 0
    %3680 = vmatmul.mubr.bf16.gmra.mrb[0].mxu0 %v3550
    %v3681 = vpop.f32.mrb[0].mxu0
    %v3682 = vadd.f32 0.0, %v3681
    %v3683 = vpop.f32.mrb[0].mxu0
    %v3684 = vpop.f32.mrb[0].mxu0
    %v3685 = vadd.f32 0.0, %v3684
    %v3686 = vpop.f32.mrb[0].mxu0
    %3687 = vmatprep.mubr.bf16.mxu0 0
    %3688 = vmatmul.mubr.bf16.gmra.mrb[0].mxu0 %v3553
    %v3689 = vpop.f32.mrb[0].mxu0
    %v3690 = vadd.f32 0.0, %v3689
    %v3691 = vpop.f32.mrb[0].mxu0
    %v3692 = vpop.f32.mrb[0].mxu0
    %v3693 = vadd.f32 0.0, %v3692
    %v3694 = vpop.f32.mrb[0].mxu0
    %3695 = vmatprep.mubr.bf16.mxu0 0
    %3696 = vmatmul.mubr.bf16.gmra.mrb[0].mxu0 %v3556
    %v3697 = vpop.f32.mrb[0].mxu0
    %v3698 = vadd.f32 0.0, %v3697
    %v3699 = vpop.f32.mrb[0].mxu0
    %v3700 = vpop.f32.mrb[0].mxu0
    %v3701 = vadd.f32 0.0, %v3700
    %v3702 = vpop.f32.mrb[0].mxu0
    %3703 = vmatprep.mubr.bf16.mxu0 0
    %3704 = vmatmul.mubr.bf16.gmra.mrb[0].mxu0 %v3559
    %v3705 = vpop.f32.mrb[0].mxu0
    %v3706 = vadd.f32 0.0, %v3705
    %v3707 = vpop.f32.mrb[0].mxu0
    %v3708 = vpop.f32.mrb[0].mxu0
    %v3709 = vadd.f32 0.0, %v3708
    %v3710 = vpop.f32.mrb[0].mxu0
    %3711 = vmatprep.mubr.bf16.mxu0 0
    %3712 = vmatmul.mubr.bf16.gmra.mrb[0].mxu0 %v3562
    %v3713 = vpop.f32.mrb[0].mxu0
    %v3714 = vadd.f32 0.0, %v3713
    %v3715 = vpop.f32.mrb[0].mxu0
    %v3716 = vpop.f32.mrb[0].mxu0
    %v3717 = vadd.f32 0.0, %v3716
    %v3718 = vpop.f32.mrb[0].mxu0
    %3719 = vmatprep.mubr.bf16.mxu0 0
    %3720 = vmatmul.mubr.bf16.gmra.mrb[0].mxu0 %v3565
    %v3721 = vpop.f32.mrb[0].mxu0
    %v3722 = vadd.f32 0.0, %v3721
    %v3723 = vpop.f32.mrb[0].mxu0
    %v3724 = vpop.f32.mrb[0].mxu0
    %v3725 = vadd.f32 0.0, %v3724
    %v3726 = vpop.f32.mrb[0].mxu0
    %3727 = vdwg.mxu0
    %v3728 = vadd.f32 %v3455, %v3602
    %v3729 = vadd.f32 %v3456, %v3605
    %v3730 = vadd.f32 %v3457, %v3610
    %v3731 = vadd.f32 %v3458, %v3613
    %v3732 = vadd.f32 %v3459, %v3618
    %v3733 = vadd.f32 %v3460, %v3621
    %v3734 = vadd.f32 %v3461, %v3626
    %v3735 = vadd.f32 %v3462, %v3629
    %v3736 = vadd.f32 %v3463, %v3634
    %v3737 = vadd.f32 %v3464, %v3637
    %v3738 = vadd.f32 %v3465, %v3642
    %v3739 = vadd.f32 %v3466, %v3645
    %v3740 = vadd.f32 %v3467, %v3650
    %v3741 = vadd.f32 %v3468, %v3653
    %v3742 = vadd.f32 %v3469, %v3658
    %v3743 = vadd.f32 %v3470, %v3661
    %v3744 = vadd.f32 %v3471, %v3666
    %v3745 = vadd.f32 %v3472, %v3669
    %v3746 = vadd.f32 %v3473, %v3674
    %v3747 = vadd.f32 %v3474, %v3677
    %v3748 = vadd.f32 %v3475, %v3682
    %v3749 = vadd.f32 %v3476, %v3685
    %v3750 = vadd.f32 %v3477, %v3690
    %v3751 = vadd.f32 %v3478, %v3693
    %v3752 = vadd.f32 %v3479, %v3698
    %v3753 = vadd.f32 %v3480, %v3701
    %v3754 = vadd.f32 %v3481, %v3706
    %v3755 = vadd.f32 %v3482, %v3709
    %v3756 = vadd.f32 %v3483, %v3714
    %v3757 = vadd.f32 %v3484, %v3717
    %v3758 = vadd.f32 %v3485, %v3722
    %v3759 = vadd.f32 %v3486, %v3725
    %v3760 = vpack.c.bf16 %v3213, %v3211
    %v3761 = vld [vmem:[%s4 + $0x70] sm:$0xf]
    %v3762 = vld [vmem:[%s4 + $0x74] sm:$0xf]
    %v3763 = vld [vmem:[%s4 + $0x78] sm:$0xf]
    %v3764 = vld [vmem:[%s4 + $0x7c] sm:$0xf]
    %v3769 = vunpack.c.l.b16 %v3761
    %v3770 = vunpack.c.l.b16 %v3762
    %v3771 = vunpack.c.l.b16 %v3763
    %v3772 = vunpack.c.l.b16 %v3764
    %v3773 = vpack.c.b16 %v3770, %v3769
    %v3774 = vpack.c.b16 %v3772, %v3771
    %v3778 = vsel %vm64, %v3760, 0
    %3780 = vmatprep.subr.bf16.mxu0 0
    %3781 = vmatpush1.bf16.msra.mxu0 %v3773
    %3782 = vmatprep.subr.bf16.mxu0 0
    %3783 = vmatpush1.bf16.msra.mxu0 %v3774
    %3784 = vmatprep.subr.bf16.mxu0 0
    %3785 = vmatpush1.bf16.msra.mxu0 0
    %3786 = vmatprep.subr.bf16.mxu0 0
    %3787 = vmatpush1.bf16.msra.mxu0 0
    %3788 = vmatprep.subr.bf16.mxu0 0
    %3789 = vmatpush1.bf16.msra.mxu0 0
    %3790 = vmatprep.subr.bf16.mxu0 0
    %3791 = vmatpush1.bf16.msra.mxu0 0
    %3792 = vmatprep.subr.bf16.mxu0 0
    %3793 = vmatpush1.bf16.msra.mxu0 0
    %3794 = vmatprep.subr.bf16.mxu0 0
    %3795 = vmatpush1.bf16.msra.mxu0 0
    %3796 = vmatprep.subr.bf16.mxu0 0
    %3797 = vmatpush1.bf16.msra.mxu0 0
    %3798 = vmatprep.subr.bf16.mxu0 0
    %3799 = vmatpush1.bf16.msra.mxu0 0
    %3800 = vmatprep.subr.bf16.mxu0 0
    %3801 = vmatpush1.bf16.msra.mxu0 0
    %3802 = vmatprep.subr.bf16.mxu0 0
    %3803 = vmatpush1.bf16.msra.mxu0 0
    %3804 = vmatprep.subr.bf16.mxu0 0
    %3805 = vmatpush1.bf16.msra.mxu0 0
    %3806 = vmatprep.subr.bf16.mxu0 0
    %3807 = vmatpush1.bf16.msra.mxu0 0
    %3808 = vmatprep.subr.bf16.mxu0 0
    %3809 = vmatpush1.bf16.msra.mxu0 0
    %3810 = vmatprep.subr.bf16.mxu0 0
    %3811 = vmatpush1.bf16.msra.mxu0 0
    %3812 = vmatprep.mubr.bf16.mxu0 0
    %3813 = vmatmul.mubr.bf16.gmra.mrb[0].mxu0 %v3250
    %v3814 = vpop.f32.mrb[0].mxu0
    %v3815 = vadd.f32 0.0, %v3814
    %v3816 = vpop.f32.mrb[0].mxu0
    %v3817 = vpop.f32.mrb[0].mxu0
    %v3818 = vadd.f32 0.0, %v3817
    %v3819 = vpop.f32.mrb[0].mxu0
    %3820 = vmatprep.mubr.bf16.mxu0 0
    %3821 = vmatmul.mubr.bf16.gmra.mrb[0].mxu0 %v3253
    %v3822 = vpop.f32.mrb[0].mxu0
    %v3823 = vadd.f32 0.0, %v3822
    %v3824 = vpop.f32.mrb[0].mxu0
    %v3825 = vpop.f32.mrb[0].mxu0
    %v3826 = vadd.f32 0.0, %v3825
    %v3827 = vpop.f32.mrb[0].mxu0
    %3828 = vmatprep.mubr.bf16.mxu0 0
    %3829 = vmatmul.mubr.bf16.gmra.mrb[0].mxu0 %v3256
    %v3830 = vpop.f32.mrb[0].mxu0
    %v3831 = vadd.f32 0.0, %v3830
    %v3832 = vpop.f32.mrb[0].mxu0
    %v3833 = vpop.f32.mrb[0].mxu0
    %v3834 = vadd.f32 0.0, %v3833
    %v3835 = vpop.f32.mrb[0].mxu0
    %3836 = vmatprep.mubr.bf16.mxu0 0
    %3837 = vmatmul.mubr.bf16.gmra.mrb[0].mxu0 %v3259
    %v3838 = vpop.f32.mrb[0].mxu0
    %v3839 = vadd.f32 0.0, %v3838
    %v3840 = vpop.f32.mrb[0].mxu0
    %v3841 = vpop.f32.mrb[0].mxu0
    %v3842 = vadd.f32 0.0, %v3841
    %v3843 = vpop.f32.mrb[0].mxu0
    %3844 = vmatprep.mubr.bf16.mxu0 0
    %3845 = vmatmul.mubr.bf16.gmra.mrb[0].mxu0 %v3262
    %v3846 = vpop.f32.mrb[0].mxu0
    %v3847 = vadd.f32 0.0, %v3846
    %v3848 = vpop.f32.mrb[0].mxu0
    %v3849 = vpop.f32.mrb[0].mxu0
    %v3850 = vadd.f32 0.0, %v3849
    %v3851 = vpop.f32.mrb[0].mxu0
    %3852 = vmatprep.mubr.bf16.mxu0 0
    %3853 = vmatmul.mubr.bf16.gmra.mrb[0].mxu0 %v3265
    %v3854 = vpop.f32.mrb[0].mxu0
    %v3855 = vadd.f32 0.0, %v3854
    %v3856 = vpop.f32.mrb[0].mxu0
    %v3857 = vpop.f32.mrb[0].mxu0
    %v3858 = vadd.f32 0.0, %v3857
    %v3859 = vpop.f32.mrb[0].mxu0
    %3860 = vmatprep.mubr.bf16.mxu0 0
    %3861 = vmatmul.mubr.bf16.gmra.mrb[0].mxu0 %v3268
    %v3862 = vpop.f32.mrb[0].mxu0
    %v3863 = vadd.f32 0.0, %v3862
    %v3864 = vpop.f32.mrb[0].mxu0
    %v3865 = vpop.f32.mrb[0].mxu0
    %v3866 = vadd.f32 0.0, %v3865
    %v3867 = vpop.f32.mrb[0].mxu0
    %3868 = vmatprep.mubr.bf16.mxu0 0
    %3869 = vmatmul.mubr.bf16.gmra.mrb[0].mxu0 %v3271
    %v3870 = vpop.f32.mrb[0].mxu0
    %v3871 = vadd.f32 0.0, %v3870
    %v3872 = vpop.f32.mrb[0].mxu0
    %v3873 = vpop.f32.mrb[0].mxu0
    %v3874 = vadd.f32 0.0, %v3873
    %v3875 = vpop.f32.mrb[0].mxu0
    %3876 = vmatprep.mubr.bf16.mxu0 0
    %3877 = vmatmul.mubr.bf16.gmra.mrb[0].mxu0 %v3274
    %v3878 = vpop.f32.mrb[0].mxu0
    %v3879 = vadd.f32 0.0, %v3878
    %v3880 = vpop.f32.mrb[0].mxu0
    %v3881 = vpop.f32.mrb[0].mxu0
    %v3882 = vadd.f32 0.0, %v3881
    %v3883 = vpop.f32.mrb[0].mxu0
    %3884 = vmatprep.mubr.bf16.mxu0 0
    %3885 = vmatmul.mubr.bf16.gmra.mrb[0].mxu0 %v3277
    %v3886 = vpop.f32.mrb[0].mxu0
    %v3887 = vadd.f32 0.0, %v3886
    %v3888 = vpop.f32.mrb[0].mxu0
    %v3889 = vpop.f32.mrb[0].mxu0
    %v3890 = vadd.f32 0.0, %v3889
    %v3891 = vpop.f32.mrb[0].mxu0
    %3892 = vmatprep.mubr.bf16.mxu0 0
    %3893 = vmatmul.mubr.bf16.gmra.mrb[0].mxu0 %v3280
    %v3894 = vpop.f32.mrb[0].mxu0
    %v3895 = vadd.f32 0.0, %v3894
    %v3896 = vpop.f32.mrb[0].mxu0
    %v3897 = vpop.f32.mrb[0].mxu0
    %v3898 = vadd.f32 0.0, %v3897
    %v3899 = vpop.f32.mrb[0].mxu0
    %3900 = vmatprep.mubr.bf16.mxu0 0
    %3901 = vmatmul.mubr.bf16.gmra.mrb[0].mxu0 %v3283
    %v3902 = vpop.f32.mrb[0].mxu0
    %v3903 = vadd.f32 0.0, %v3902
    %v3904 = vpop.f32.mrb[0].mxu0
    %v3905 = vpop.f32.mrb[0].mxu0
    %v3906 = vadd.f32 0.0, %v3905
    %v3907 = vpop.f32.mrb[0].mxu0
    %3908 = vmatprep.mubr.bf16.mxu0 0
    %3909 = vmatmul.mubr.bf16.gmra.mrb[0].mxu0 %v3286
    %v3910 = vpop.f32.mrb[0].mxu0
    %v3911 = vadd.f32 0.0, %v3910
    %v3912 = vpop.f32.mrb[0].mxu0
    %v3913 = vpop.f32.mrb[0].mxu0
    %v3914 = vadd.f32 0.0, %v3913
    %v3915 = vpop.f32.mrb[0].mxu0
    %3916 = vmatprep.mubr.bf16.mxu0 0
    %3917 = vmatmul.mubr.bf16.gmra.mrb[0].mxu0 %v3289
    %v3918 = vpop.f32.mrb[0].mxu0
    %v3919 = vadd.f32 0.0, %v3918
    %v3920 = vpop.f32.mrb[0].mxu0
    %v3921 = vpop.f32.mrb[0].mxu0
    %v3922 = vadd.f32 0.0, %v3921
    %v3923 = vpop.f32.mrb[0].mxu0
    %3924 = vmatprep.mubr.bf16.mxu0 0
    %3925 = vmatmul.mubr.bf16.gmra.mrb[0].mxu0 %v3292
    %v3926 = vpop.f32.mrb[0].mxu0
    %v3927 = vadd.f32 0.0, %v3926
    %v3928 = vpop.f32.mrb[0].mxu0
    %v3929 = vpop.f32.mrb[0].mxu0
    %v3930 = vadd.f32 0.0, %v3929
    %v3931 = vpop.f32.mrb[0].mxu0
    %3932 = vmatprep.mubr.bf16.mxu0 0
    %3933 = vmatmul.mubr.bf16.gmra.mrb[0].mxu0 %v3778
    %v3934 = vpop.f32.mrb[0].mxu0
    %v3935 = vadd.f32 0.0, %v3934
    %v3936 = vpop.f32.mrb[0].mxu0
    %v3937 = vpop.f32.mrb[0].mxu0
    %v3938 = vadd.f32 0.0, %v3937
    %v3939 = vpop.f32.mrb[0].mxu0
    %3940 = vdwg.mxu0
    %v3941 = vadd.f32 %v3728, %v3815
    %v3942 = vadd.f32 %v3729, %v3818
    %v3943 = vadd.f32 %v3730, %v3823
    %v3944 = vadd.f32 %v3731, %v3826
    %v3945 = vadd.f32 %v3732, %v3831
    %v3946 = vadd.f32 %v3733, %v3834
    %v3947 = vadd.f32 %v3734, %v3839
    %v3948 = vadd.f32 %v3735, %v3842
    %v3949 = vadd.f32 %v3736, %v3847
    %v3950 = vadd.f32 %v3737, %v3850
    %v3951 = vadd.f32 %v3738, %v3855
    %v3952 = vadd.f32 %v3739, %v3858
    %v3953 = vadd.f32 %v3740, %v3863
    %v3954 = vadd.f32 %v3741, %v3866
    %v3955 = vadd.f32 %v3742, %v3871
    %v3956 = vadd.f32 %v3743, %v3874
    %v3957 = vadd.f32 %v3744, %v3879
    %v3958 = vadd.f32 %v3745, %v3882
    %v3959 = vadd.f32 %v3746, %v3887
    %v3960 = vadd.f32 %v3747, %v3890
    %v3961 = vadd.f32 %v3748, %v3895
    %v3962 = vadd.f32 %v3749, %v3898
    %v3963 = vadd.f32 %v3750, %v3903
    %v3964 = vadd.f32 %v3751, %v3906
    %v3965 = vadd.f32 %v3752, %v3911
    %v3966 = vadd.f32 %v3753, %v3914
    %v3967 = vadd.f32 %v3754, %v3919
    %v3968 = vadd.f32 %v3755, %v3922
    %v3969 = vadd.f32 %v3756, %v3927
    %v3970 = vadd.f32 %v3757, %v3930
    %v3971 = vadd.f32 %v3758, %v3935
    %v3972 = vadd.f32 %v3759, %v3938
    %s3973 = scalar_lea.vmem [#allocation2], 2
    %v3974 = vld [vmem:[%s3973] ss:$2 sm:$0xff]
    %s3975 = scalar_lea.vmem [#allocation2], 18
    %v3976 = vld [vmem:[%s3975] ss:$2 sm:$0xff]
    %s3977 = scalar_lea.vmem [#allocation2], 42
    %v3978 = vld [vmem:[%s3977] ss:$2 sm:$0xff]
    %s3979 = scalar_lea.vmem [#allocation2], 58
    %v3980 = vld [vmem:[%s3979] ss:$2 sm:$0xff]
    %s3981 = scalar_lea.vmem [#allocation2], 82
    %v3982 = vld [vmem:[%s3981] ss:$2 sm:$0xff]
    %s3983 = scalar_lea.vmem [#allocation2], 98
    %v3984 = vld [vmem:[%s3983] ss:$2 sm:$0xff]
    %s3985 = scalar_lea.vmem [#allocation2], 122
    %v3986 = vld [vmem:[%s3985] ss:$2 sm:$0xff]
    %s3987 = scalar_lea.vmem [#allocation2], 138
    %v3988 = vld [vmem:[%s3987] ss:$2 sm:$0xff]
    %s3989 = scalar_lea.vmem [#allocation2], 162
    %v3990 = vld [vmem:[%s3989] ss:$2 sm:$0xff]
    %s3991 = scalar_lea.vmem [#allocation2], 178
    %v3992 = vld [vmem:[%s3991] ss:$2 sm:$0xff]
    %s3993 = scalar_lea.vmem [#allocation2], 202
    %v3994 = vld [vmem:[%s3993] ss:$2 sm:$0xff]
    %s3995 = scalar_lea.vmem [#allocation2], 218
    %v3996 = vld [vmem:[%s3995] ss:$2 sm:$0xff]
    %s3997 = scalar_lea.vmem [#allocation2], 242
    %v3998 = vld [vmem:[%s3997] ss:$2 sm:$0xff]
    %s3999 = scalar_lea.vmem [#allocation2], 258
    %v4000 = vld [vmem:[%s3999] ss:$2 sm:$0xff]
    %s4001 = scalar_lea.vmem [#allocation2], 282
    %v4002 = vld [vmem:[%s4001] ss:$2 sm:$0xff]
    %s4003 = scalar_lea.vmem [#allocation2], 298
    %v4004 = vld [vmem:[%s4003] ss:$2 sm:$0xff]
    %s4005 = scalar_lea.vmem [#allocation2], 322
    %v4006 = vld [vmem:[%s4005] ss:$2 sm:$0xff]
    %s4007 = scalar_lea.vmem [#allocation2], 338
    %v4008 = vld [vmem:[%s4007] ss:$2 sm:$0xff]
    %s4009 = scalar_lea.vmem [#allocation2], 362
    %v4010 = vld [vmem:[%s4009] ss:$2 sm:$0xff]
    %s4011 = scalar_lea.vmem [#allocation2], 378
    %v4012 = vld [vmem:[%s4011] ss:$2 sm:$0xff]
    %s4013 = scalar_lea.vmem [#allocation2], 402
    %v4014 = vld [vmem:[%s4013] ss:$2 sm:$0xff]
    %s4015 = scalar_lea.vmem [#allocation2], 418
    %v4016 = vld [vmem:[%s4015] ss:$2 sm:$0xff]
    %s4017 = scalar_lea.vmem [#allocation2], 442
    %v4018 = vld [vmem:[%s4017] ss:$2 sm:$0xff]
    %s4019 = scalar_lea.vmem [#allocation2], 458
    %v4020 = vld [vmem:[%s4019] ss:$2 sm:$0xff]
    %s4021 = scalar_lea.vmem [#allocation2], 482
    %v4022 = vld [vmem:[%s4021] ss:$2 sm:$0xff]
    %s4023 = scalar_lea.vmem [#allocation2], 498
    %v4024 = vld [vmem:[%s4023] ss:$2 sm:$0xff]
    %s4025 = scalar_lea.vmem [#allocation2], 522
    %v4026 = vld [vmem:[%s4025] ss:$2 sm:$0xff]
    %s4027 = scalar_lea.vmem [#allocation2], 538
    %v4028 = vld [vmem:[%s4027] ss:$2 sm:$0xff]
    %s4029 = scalar_lea.vmem [#allocation2], 562
    %v4030 = vld [vmem:[%s4029] ss:$2 sm:$0xff]
    %s4031 = scalar_lea.vmem [#allocation2], 578
    %v4032 = vld [vmem:[%s4031] ss:$2 sm:$0xff]
    %s4033 = scalar_lea.vmem [#allocation2], 602
    %v4034 = vld [vmem:[%s4033] ss:$2 sm:$0xff]
    %s4035 = scalar_lea.vmem [#allocation2], 618
    %v4036 = vld [vmem:[%s4035] ss:$2 sm:$0xff]
    %s4037 = scalar_lea.vmem [#allocation2], 642
    %v4038 = vld [vmem:[%s4037] ss:$2 sm:$0xff]
    %s4039 = scalar_lea.vmem [#allocation2], 658
    %v4040 = vld [vmem:[%s4039] ss:$2 sm:$0xff]
    %s4041 = scalar_lea.vmem [#allocation2], 682
    %v4042 = vld [vmem:[%s4041] ss:$2 sm:$0xff]
    %s4043 = scalar_lea.vmem [#allocation2], 698
    %v4044 = vld [vmem:[%s4043] ss:$2 sm:$0xff]
    %s4045 = scalar_lea.vmem [#allocation2], 722
    %v4046 = vld [vmem:[%s4045] ss:$2 sm:$0xff]
    %s4047 = scalar_lea.vmem [#allocation2], 738
    %v4048 = vld [vmem:[%s4047] ss:$2 sm:$0xff]
    %s4049 = scalar_lea.vmem [#allocation2], 762
    %v4050 = vld [vmem:[%s4049] ss:$2 sm:$0xff]
    %s4051 = scalar_lea.vmem [#allocation2], 778
    %v4052 = vld [vmem:[%s4051] ss:$2 sm:$0xff]
    %s4053 = scalar_lea.vmem [#allocation2], 802
    %v4054 = vld [vmem:[%s4053] ss:$2 sm:$0xff]
    %s4055 = scalar_lea.vmem [#allocation2], 818
    %v4056 = vld [vmem:[%s4055] ss:$2 sm:$0xff]
    %s4057 = scalar_lea.vmem [#allocation2], 842
    %v4058 = vld [vmem:[%s4057] ss:$2 sm:$0xff]
    %s4059 = scalar_lea.vmem [#allocation2], 858
    %v4060 = vld [vmem:[%s4059] ss:$2 sm:$0xff]
    %s4061 = scalar_lea.vmem [#allocation2], 882
    %v4062 = vld [vmem:[%s4061] ss:$2 sm:$0xff]
    %s4063 = scalar_lea.vmem [#allocation2], 898
    %v4064 = vld [vmem:[%s4063] ss:$2 sm:$0xff]
    %s4065 = scalar_lea.vmem [#allocation2], 922
    %v4066 = vld [vmem:[%s4065] ss:$2 sm:$0xff]
    %s4067 = scalar_lea.vmem [#allocation2], 938
    %v4068 = vld [vmem:[%s4067] ss:$2 sm:$0xff]
    %s4069 = scalar_lea.vmem [#allocation2], 962
    %v4070 = vld [vmem:[%s4069] ss:$2 sm:$0xff]
    %s4071 = scalar_lea.vmem [#allocation2], 978
    %v4072 = vld [vmem:[%s4071] ss:$2 sm:$0xff]
    %s4073 = scalar_lea.vmem [#allocation2], 1002
    %v4074 = vld [vmem:[%s4073] ss:$2 sm:$0xff]
    %s4075 = scalar_lea.vmem [#allocation2], 1018
    %v4076 = vld [vmem:[%s4075] ss:$2 sm:$0xff]
    %s4077 = scalar_lea.vmem [#allocation2], 1042
    %v4078 = vld [vmem:[%s4077] ss:$2 sm:$0xff]
    %s4079 = scalar_lea.vmem [#allocation2], 1058
    %v4080 = vld [vmem:[%s4079] ss:$2 sm:$0xff]
    %s4081 = scalar_lea.vmem [#allocation2], 1082
    %v4082 = vld [vmem:[%s4081] ss:$2 sm:$0xff]
    %s4083 = scalar_lea.vmem [#allocation2], 1098
    %v4084 = vld [vmem:[%s4083] ss:$2 sm:$0xff]
    %s4085 = scalar_lea.vmem [#allocation2], 1122
    %v4086 = vld [vmem:[%s4085] ss:$2 sm:$0xff]
    %s4087 = scalar_lea.vmem [#allocation2], 1138
    %v4088 = vld [vmem:[%s4087] ss:$2 sm:$0xff]
    %s4089 = scalar_lea.vmem [#allocation2], 1162
    %v4090 = vld [vmem:[%s4089] ss:$2 sm:$0xff]
    %s4091 = scalar_lea.vmem [#allocation2], 1178
    %v4092 = vld [vmem:[%s4091] ss:$2 sm:$0xff]
    %s4093 = scalar_lea.vmem [#allocation2], 1202
    %v4094 = vld [vmem:[%s4093] ss:$2 sm:$0xff]
    %s4095 = scalar_lea.vmem [#allocation2], 1218
    %v4096 = vld [vmem:[%s4095] ss:$2 sm:$0xff]
    %s4097 = scalar_lea.vmem [#allocation2], 1242
    %v4098 = vld [vmem:[%s4097] ss:$2 sm:$0xff]
    %s4099 = scalar_lea.vmem [#allocation2], 1258
    %v4100 = vld [vmem:[%s4099] ss:$2 sm:$0xff]
    %s4101 = scalar_lea.vmem [#allocation2], 1282
    %v4102 = vld [vmem:[%s4101] ss:$2 sm:$0xff]
    %s4103 = scalar_lea.vmem [#allocation2], 1298
    %v4104 = vld [vmem:[%s4103] ss:$2 sm:$0xff]
    %v4105 = vpack.c.bf16 %v3976, %v3974
    %v4106 = vpack.c.bf16 %v3984, %v3982
    %v4107 = vpack.c.bf16 %v3992, %v3990
    %v4108 = vpack.c.bf16 %v4000, %v3998
    %v4109 = vpack.c.bf16 %v4008, %v4006
    %v4110 = vpack.c.bf16 %v4016, %v4014
    %v4111 = vpack.c.bf16 %v4024, %v4022
    %v4112 = vpack.c.bf16 %v4032, %v4030
    %v4113 = vpack.c.bf16 %v4040, %v4038
    %v4114 = vpack.c.bf16 %v4048, %v4046
    %v4115 = vpack.c.bf16 %v4056, %v4054
    %v4116 = vpack.c.bf16 %v4064, %v4062
    %v4117 = vpack.c.bf16 %v4072, %v4070
    %v4118 = vpack.c.bf16 %v4080, %v4078
    %v4119 = vpack.c.bf16 %v4088, %v4086
    %v4120 = vpack.c.bf16 %v4096, %v4094
    %v4121 = vld [vmem:[%s4 + $0x20] sm:$0xf]
    %v4122 = vld [vmem:[%s4 + $0x24] sm:$0xf]
    %v4123 = vld [vmem:[%s4 + $0x28] sm:$0xf]
    %v4124 = vld [vmem:[%s4 + $0x2c] sm:$0xf]
    %v4129 = vunpack.c.l.b16 %v4121
    %v4130 = vunpack.c.l.b16 %v4122
    %v4131 = vunpack.c.l.b16 %v4123
    %v4132 = vunpack.c.l.b16 %v4124
    %v4133 = vpack.c.b16 %v4130, %v4129
    %v4134 = vpack.c.b16 %v4132, %v4131
    %v4138 = vsel %vm64, %v4105, 0
    %v4141 = vsel %vm64, %v4106, 0
    %v4144 = vsel %vm64, %v4107, 0
    %v4147 = vsel %vm64, %v4108, 0
    %v4150 = vsel %vm64, %v4109, 0
    %v4153 = vsel %vm64, %v4110, 0
    %v4156 = vsel %vm64, %v4111, 0
    %v4159 = vsel %vm64, %v4112, 0
    %v4162 = vsel %vm64, %v4113, 0
    %v4165 = vsel %vm64, %v4114, 0
    %v4168 = vsel %vm64, %v4115, 0
    %v4171 = vsel %vm64, %v4116, 0
    %v4174 = vsel %vm64, %v4117, 0
    %v4177 = vsel %vm64, %v4118, 0
    %v4180 = vsel %vm64, %v4119, 0
    %v4183 = vsel %vm64, %v4120, 0
    %4185 = vmatprep.subr.bf16.mxu0 0
    %4186 = vmatpush1.bf16.msra.mxu0 %v4133
    %4187 = vmatprep.subr.bf16.mxu0 0
    %4188 = vmatpush1.bf16.msra.mxu0 %v4134
    %4189 = vmatprep.subr.bf16.mxu0 0
    %4190 = vmatpush1.bf16.msra.mxu0 0
    %4191 = vmatprep.subr.bf16.mxu0 0
    %4192 = vmatpush1.bf16.msra.mxu0 0
    %4193 = vmatprep.subr.bf16.mxu0 0
    %4194 = vmatpush1.bf16.msra.mxu0 0
    %4195 = vmatprep.subr.bf16.mxu0 0
    %4196 = vmatpush1.bf16.msra.mxu0 0
    %4197 = vmatprep.subr.bf16.mxu0 0
    %4198 = vmatpush1.bf16.msra.mxu0 0
    %4199 = vmatprep.subr.bf16.mxu0 0
    %4200 = vmatpush1.bf16.msra.mxu0 0
    %4201 = vmatprep.subr.bf16.mxu0 0
    %4202 = vmatpush1.bf16.msra.mxu0 0
    %4203 = vmatprep.subr.bf16.mxu0 0
    %4204 = vmatpush1.bf16.msra.mxu0 0
    %4205 = vmatprep.subr.bf16.mxu0 0
    %4206 = vmatpush1.bf16.msra.mxu0 0
    %4207 = vmatprep.subr.bf16.mxu0 0
    %4208 = vmatpush1.bf16.msra.mxu0 0
    %4209 = vmatprep.subr.bf16.mxu0 0
    %4210 = vmatpush1.bf16.msra.mxu0 0
    %4211 = vmatprep.subr.bf16.mxu0 0
    %4212 = vmatpush1.bf16.msra.mxu0 0
    %4213 = vmatprep.subr.bf16.mxu0 0
    %4214 = vmatpush1.bf16.msra.mxu0 0
    %4215 = vmatprep.subr.bf16.mxu0 0
    %4216 = vmatpush1.bf16.msra.mxu0 0
    %4217 = vmatprep.mubr.bf16.mxu0 0
    %4218 = vmatmul.mubr.bf16.gmra.mrb[0].mxu0 %v4138
    %v4219 = vpop.f32.mrb[0].mxu0
    %v4220 = vadd.f32 0.0, %v4219
    %v4221 = vpop.f32.mrb[0].mxu0
    %v4222 = vpop.f32.mrb[0].mxu0
    %v4223 = vadd.f32 0.0, %v4222
    %v4224 = vpop.f32.mrb[0].mxu0
    %4225 = vmatprep.mubr.bf16.mxu0 0
    %4226 = vmatmul.mubr.bf16.gmra.mrb[0].mxu0 %v4141
    %v4227 = vpop.f32.mrb[0].mxu0
    %v4228 = vadd.f32 0.0, %v4227
    %v4229 = vpop.f32.mrb[0].mxu0
    %v4230 = vpop.f32.mrb[0].mxu0
    %v4231 = vadd.f32 0.0, %v4230
    %v4232 = vpop.f32.mrb[0].mxu0
    %4233 = vmatprep.mubr.bf16.mxu0 0
    %4234 = vmatmul.mubr.bf16.gmra.mrb[0].mxu0 %v4144
    %v4235 = vpop.f32.mrb[0].mxu0
    %v4236 = vadd.f32 0.0, %v4235
    %v4237 = vpop.f32.mrb[0].mxu0
    %v4238 = vpop.f32.mrb[0].mxu0
    %v4239 = vadd.f32 0.0, %v4238
    %v4240 = vpop.f32.mrb[0].mxu0
    %4241 = vmatprep.mubr.bf16.mxu0 0
    %4242 = vmatmul.mubr.bf16.gmra.mrb[0].mxu0 %v4147
    %v4243 = vpop.f32.mrb[0].mxu0
    %v4244 = vadd.f32 0.0, %v4243
    %v4245 = vpop.f32.mrb[0].mxu0
    %v4246 = vpop.f32.mrb[0].mxu0
    %v4247 = vadd.f32 0.0, %v4246
    %v4248 = vpop.f32.mrb[0].mxu0
    %4249 = vmatprep.mubr.bf16.mxu0 0
    %4250 = vmatmul.mubr.bf16.gmra.mrb[0].mxu0 %v4150
    %v4251 = vpop.f32.mrb[0].mxu0
    %v4252 = vadd.f32 0.0, %v4251
    %v4253 = vpop.f32.mrb[0].mxu0
    %v4254 = vpop.f32.mrb[0].mxu0
    %v4255 = vadd.f32 0.0, %v4254
    %v4256 = vpop.f32.mrb[0].mxu0
    %4257 = vmatprep.mubr.bf16.mxu0 0
    %4258 = vmatmul.mubr.bf16.gmra.mrb[0].mxu0 %v4153
    %v4259 = vpop.f32.mrb[0].mxu0
    %v4260 = vadd.f32 0.0, %v4259
    %v4261 = vpop.f32.mrb[0].mxu0
    %v4262 = vpop.f32.mrb[0].mxu0
    %v4263 = vadd.f32 0.0, %v4262
    %v4264 = vpop.f32.mrb[0].mxu0
    %4265 = vmatprep.mubr.bf16.mxu0 0
    %4266 = vmatmul.mubr.bf16.gmra.mrb[0].mxu0 %v4156
    %v4267 = vpop.f32.mrb[0].mxu0
    %v4268 = vadd.f32 0.0, %v4267
    %v4269 = vpop.f32.mrb[0].mxu0
    %v4270 = vpop.f32.mrb[0].mxu0
    %v4271 = vadd.f32 0.0, %v4270
    %v4272 = vpop.f32.mrb[0].mxu0
    %4273 = vmatprep.mubr.bf16.mxu0 0
    %4274 = vmatmul.mubr.bf16.gmra.mrb[0].mxu0 %v4159
    %v4275 = vpop.f32.mrb[0].mxu0
    %v4276 = vadd.f32 0.0, %v4275
    %v4277 = vpop.f32.mrb[0].mxu0
    %v4278 = vpop.f32.mrb[0].mxu0
    %v4279 = vadd.f32 0.0, %v4278
    %v4280 = vpop.f32.mrb[0].mxu0
    %4281 = vmatprep.mubr.bf16.mxu0 0
    %4282 = vmatmul.mubr.bf16.gmra.mrb[0].mxu0 %v4162
    %v4283 = vpop.f32.mrb[0].mxu0
    %v4284 = vadd.f32 0.0, %v4283
    %v4285 = vpop.f32.mrb[0].mxu0
    %v4286 = vpop.f32.mrb[0].mxu0
    %v4287 = vadd.f32 0.0, %v4286
    %v4288 = vpop.f32.mrb[0].mxu0
    %4289 = vmatprep.mubr.bf16.mxu0 0
    %4290 = vmatmul.mubr.bf16.gmra.mrb[0].mxu0 %v4165
    %v4291 = vpop.f32.mrb[0].mxu0
    %v4292 = vadd.f32 0.0, %v4291
    %v4293 = vpop.f32.mrb[0].mxu0
    %v4294 = vpop.f32.mrb[0].mxu0
    %v4295 = vadd.f32 0.0, %v4294
    %v4296 = vpop.f32.mrb[0].mxu0
    %4297 = vmatprep.mubr.bf16.mxu0 0
    %4298 = vmatmul.mubr.bf16.gmra.mrb[0].mxu0 %v4168
    %v4299 = vpop.f32.mrb[0].mxu0
    %v4300 = vadd.f32 0.0, %v4299
    %v4301 = vpop.f32.mrb[0].mxu0
    %v4302 = vpop.f32.mrb[0].mxu0
    %v4303 = vadd.f32 0.0, %v4302
    %v4304 = vpop.f32.mrb[0].mxu0
    %4305 = vmatprep.mubr.bf16.mxu0 0
    %4306 = vmatmul.mubr.bf16.gmra.mrb[0].mxu0 %v4171
    %v4307 = vpop.f32.mrb[0].mxu0
    %v4308 = vadd.f32 0.0, %v4307
    %v4309 = vpop.f32.mrb[0].mxu0
    %v4310 = vpop.f32.mrb[0].mxu0
    %v4311 = vadd.f32 0.0, %v4310
    %v4312 = vpop.f32.mrb[0].mxu0
    %4313 = vmatprep.mubr.bf16.mxu0 0
    %4314 = vmatmul.mubr.bf16.gmra.mrb[0].mxu0 %v4174
    %v4315 = vpop.f32.mrb[0].mxu0
    %v4316 = vadd.f32 0.0, %v4315
    %v4317 = vpop.f32.mrb[0].mxu0
    %v4318 = vpop.f32.mrb[0].mxu0
    %v4319 = vadd.f32 0.0, %v4318
    %v4320 = vpop.f32.mrb[0].mxu0
    %4321 = vmatprep.mubr.bf16.mxu0 0
    %4322 = vmatmul.mubr.bf16.gmra.mrb[0].mxu0 %v4177
    %v4323 = vpop.f32.mrb[0].mxu0
    %v4324 = vadd.f32 0.0, %v4323
    %v4325 = vpop.f32.mrb[0].mxu0
    %v4326 = vpop.f32.mrb[0].mxu0
    %v4327 = vadd.f32 0.0, %v4326
    %v4328 = vpop.f32.mrb[0].mxu0
    %4329 = vmatprep.mubr.bf16.mxu0 0
    %4330 = vmatmul.mubr.bf16.gmra.mrb[0].mxu0 %v4180
    %v4331 = vpop.f32.mrb[0].mxu0
    %v4332 = vadd.f32 0.0, %v4331
    %v4333 = vpop.f32.mrb[0].mxu0
    %v4334 = vpop.f32.mrb[0].mxu0
    %v4335 = vadd.f32 0.0, %v4334
    %v4336 = vpop.f32.mrb[0].mxu0
    %4337 = vmatprep.mubr.bf16.mxu0 0
    %4338 = vmatmul.mubr.bf16.gmra.mrb[0].mxu0 %v4183
    %v4339 = vpop.f32.mrb[0].mxu0
    %v4340 = vadd.f32 0.0, %v4339
    %v4341 = vpop.f32.mrb[0].mxu0
    %v4342 = vpop.f32.mrb[0].mxu0
    %v4343 = vadd.f32 0.0, %v4342
    %v4344 = vpop.f32.mrb[0].mxu0
    %4345 = vdwg.mxu0
    %v4346 = vadd.f32 %v3941, %v4220
    %v4347 = vadd.f32 %v3942, %v4223
    %v4348 = vadd.f32 %v3943, %v4228
    %v4349 = vadd.f32 %v3944, %v4231
    %v4350 = vadd.f32 %v3945, %v4236
    %v4351 = vadd.f32 %v3946, %v4239
    %v4352 = vadd.f32 %v3947, %v4244
    %v4353 = vadd.f32 %v3948, %v4247
    %v4354 = vadd.f32 %v3949, %v4252
    %v4355 = vadd.f32 %v3950, %v4255
    %v4356 = vadd.f32 %v3951, %v4260
    %v4357 = vadd.f32 %v3952, %v4263
    %v4358 = vadd.f32 %v3953, %v4268
    %v4359 = vadd.f32 %v3954, %v4271
    %v4360 = vadd.f32 %v3955, %v4276
    %v4361 = vadd.f32 %v3956, %v4279
    %v4362 = vadd.f32 %v3957, %v4284
    %v4363 = vadd.f32 %v3958, %v4287
    %v4364 = vadd.f32 %v3959, %v4292
    %v4365 = vadd.f32 %v3960, %v4295
    %v4366 = vadd.f32 %v3961, %v4300
    %v4367 = vadd.f32 %v3962, %v4303
    %v4368 = vadd.f32 %v3963, %v4308
    %v4369 = vadd.f32 %v3964, %v4311
    %v4370 = vadd.f32 %v3965, %v4316
    %v4371 = vadd.f32 %v3966, %v4319
    %v4372 = vadd.f32 %v3967, %v4324
    %v4373 = vadd.f32 %v3968, %v4327
    %v4374 = vadd.f32 %v3969, %v4332
    %v4375 = vadd.f32 %v3970, %v4335
    %v4376 = vadd.f32 %v3971, %v4340
    %v4377 = vadd.f32 %v3972, %v4343
    %v4378 = vpack.c.bf16 %v3980, %v3978
    %v4379 = vpack.c.bf16 %v3988, %v3986
    %v4380 = vpack.c.bf16 %v3996, %v3994
    %v4381 = vpack.c.bf16 %v4004, %v4002
    %v4382 = vpack.c.bf16 %v4012, %v4010
    %v4383 = vpack.c.bf16 %v4020, %v4018
    %v4384 = vpack.c.bf16 %v4028, %v4026
    %v4385 = vpack.c.bf16 %v4036, %v4034
    %v4386 = vpack.c.bf16 %v4044, %v4042
    %v4387 = vpack.c.bf16 %v4052, %v4050
    %v4388 = vpack.c.bf16 %v4060, %v4058
    %v4389 = vpack.c.bf16 %v4068, %v4066
    %v4390 = vpack.c.bf16 %v4076, %v4074
    %v4391 = vpack.c.bf16 %v4084, %v4082
    %v4392 = vpack.c.bf16 %v4092, %v4090
    %v4393 = vpack.c.bf16 %v4100, %v4098
    %v4394 = vld [vmem:[%s4 + $0x50] sm:$0xf]
    %v4395 = vld [vmem:[%s4 + $0x54] sm:$0xf]
    %v4396 = vld [vmem:[%s4 + $0x58] sm:$0xf]
    %v4397 = vld [vmem:[%s4 + $0x5c] sm:$0xf]
    %v4402 = vunpack.c.l.b16 %v4394
    %v4403 = vunpack.c.l.b16 %v4395
    %v4404 = vunpack.c.l.b16 %v4396
    %v4405 = vunpack.c.l.b16 %v4397
    %v4406 = vpack.c.b16 %v4403, %v4402
    %v4407 = vpack.c.b16 %v4405, %v4404
    %v4411 = vsel %vm64, %v4378, 0
    %v4414 = vsel %vm64, %v4379, 0
    %v4417 = vsel %vm64, %v4380, 0
    %v4420 = vsel %vm64, %v4381, 0
    %v4423 = vsel %vm64, %v4382, 0
    %v4426 = vsel %vm64, %v4383, 0
    %v4429 = vsel %vm64, %v4384, 0
    %v4432 = vsel %vm64, %v4385, 0
    %v4435 = vsel %vm64, %v4386, 0
    %v4438 = vsel %vm64, %v4387, 0
    %v4441 = vsel %vm64, %v4388, 0
    %v4444 = vsel %vm64, %v4389, 0
    %v4447 = vsel %vm64, %v4390, 0
    %v4450 = vsel %vm64, %v4391, 0
    %v4453 = vsel %vm64, %v4392, 0
    %v4456 = vsel %vm64, %v4393, 0
    %4458 = vmatprep.subr.bf16.mxu0 0
    %4459 = vmatpush1.bf16.msra.mxu0 %v4406
    %4460 = vmatprep.subr.bf16.mxu0 0
    %4461 = vmatpush1.bf16.msra.mxu0 %v4407
    %4462 = vmatprep.subr.bf16.mxu0 0
    %4463 = vmatpush1.bf16.msra.mxu0 0
    %4464 = vmatprep.subr.bf16.mxu0 0
    %4465 = vmatpush1.bf16.msra.mxu0 0
    %4466 = vmatprep.subr.bf16.mxu0 0
    %4467 = vmatpush1.bf16.msra.mxu0 0
    %4468 = vmatprep.subr.bf16.mxu0 0
    %4469 = vmatpush1.bf16.msra.mxu0 0
    %4470 = vmatprep.subr.bf16.mxu0 0
    %4471 = vmatpush1.bf16.msra.mxu0 0
    %4472 = vmatprep.subr.bf16.mxu0 0
    %4473 = vmatpush1.bf16.msra.mxu0 0
    %4474 = vmatprep.subr.bf16.mxu0 0
    %4475 = vmatpush1.bf16.msra.mxu0 0
    %4476 = vmatprep.subr.bf16.mxu0 0
    %4477 = vmatpush1.bf16.msra.mxu0 0
    %4478 = vmatprep.subr.bf16.mxu0 0
    %4479 = vmatpush1.bf16.msra.mxu0 0
    %4480 = vmatprep.subr.bf16.mxu0 0
    %4481 = vmatpush1.bf16.msra.mxu0 0
    %4482 = vmatprep.subr.bf16.mxu0 0
    %4483 = vmatpush1.bf16.msra.mxu0 0
    %4484 = vmatprep.subr.bf16.mxu0 0
    %4485 = vmatpush1.bf16.msra.mxu0 0
    %4486 = vmatprep.subr.bf16.mxu0 0
    %4487 = vmatpush1.bf16.msra.mxu0 0
    %4488 = vmatprep.subr.bf16.mxu0 0
    %4489 = vmatpush1.bf16.msra.mxu0 0
    %4490 = vmatprep.mubr.bf16.mxu0 0
    %4491 = vmatmul.mubr.bf16.gmra.mrb[0].mxu0 %v4411
    %v4492 = vpop.f32.mrb[0].mxu0
    %v4493 = vadd.f32 0.0, %v4492
    %v4494 = vpop.f32.mrb[0].mxu0
    %v4495 = vpop.f32.mrb[0].mxu0
    %v4496 = vadd.f32 0.0, %v4495
    %v4497 = vpop.f32.mrb[0].mxu0
    %4498 = vmatprep.mubr.bf16.mxu0 0
    %4499 = vmatmul.mubr.bf16.gmra.mrb[0].mxu0 %v4414
    %v4500 = vpop.f32.mrb[0].mxu0
    %v4501 = vadd.f32 0.0, %v4500
    %v4502 = vpop.f32.mrb[0].mxu0
    %v4503 = vpop.f32.mrb[0].mxu0
    %v4504 = vadd.f32 0.0, %v4503
    %v4505 = vpop.f32.mrb[0].mxu0
    %4506 = vmatprep.mubr.bf16.mxu0 0
    %4507 = vmatmul.mubr.bf16.gmra.mrb[0].mxu0 %v4417
    %v4508 = vpop.f32.mrb[0].mxu0
    %v4509 = vadd.f32 0.0, %v4508
    %v4510 = vpop.f32.mrb[0].mxu0
    %v4511 = vpop.f32.mrb[0].mxu0
    %v4512 = vadd.f32 0.0, %v4511
    %v4513 = vpop.f32.mrb[0].mxu0
    %4514 = vmatprep.mubr.bf16.mxu0 0
    %4515 = vmatmul.mubr.bf16.gmra.mrb[0].mxu0 %v4420
    %v4516 = vpop.f32.mrb[0].mxu0
    %v4517 = vadd.f32 0.0, %v4516
    %v4518 = vpop.f32.mrb[0].mxu0
    %v4519 = vpop.f32.mrb[0].mxu0
    %v4520 = vadd.f32 0.0, %v4519
    %v4521 = vpop.f32.mrb[0].mxu0
    %4522 = vmatprep.mubr.bf16.mxu0 0
    %4523 = vmatmul.mubr.bf16.gmra.mrb[0].mxu0 %v4423
    %v4524 = vpop.f32.mrb[0].mxu0
    %v4525 = vadd.f32 0.0, %v4524
    %v4526 = vpop.f32.mrb[0].mxu0
    %v4527 = vpop.f32.mrb[0].mxu0
    %v4528 = vadd.f32 0.0, %v4527
    %v4529 = vpop.f32.mrb[0].mxu0
    %4530 = vmatprep.mubr.bf16.mxu0 0
    %4531 = vmatmul.mubr.bf16.gmra.mrb[0].mxu0 %v4426
    %v4532 = vpop.f32.mrb[0].mxu0
    %v4533 = vadd.f32 0.0, %v4532
    %v4534 = vpop.f32.mrb[0].mxu0
    %v4535 = vpop.f32.mrb[0].mxu0
    %v4536 = vadd.f32 0.0, %v4535
    %v4537 = vpop.f32.mrb[0].mxu0
    %4538 = vmatprep.mubr.bf16.mxu0 0
    %4539 = vmatmul.mubr.bf16.gmra.mrb[0].mxu0 %v4429
    %v4540 = vpop.f32.mrb[0].mxu0
    %v4541 = vadd.f32 0.0, %v4540
    %v4542 = vpop.f32.mrb[0].mxu0
    %v4543 = vpop.f32.mrb[0].mxu0
    %v4544 = vadd.f32 0.0, %v4543
    %v4545 = vpop.f32.mrb[0].mxu0
    %4546 = vmatprep.mubr.bf16.mxu0 0
    %4547 = vmatmul.mubr.bf16.gmra.mrb[0].mxu0 %v4432
    %v4548 = vpop.f32.mrb[0].mxu0
    %v4549 = vadd.f32 0.0, %v4548
    %v4550 = vpop.f32.mrb[0].mxu0
    %v4551 = vpop.f32.mrb[0].mxu0
    %v4552 = vadd.f32 0.0, %v4551
    %v4553 = vpop.f32.mrb[0].mxu0
    %4554 = vmatprep.mubr.bf16.mxu0 0
    %4555 = vmatmul.mubr.bf16.gmra.mrb[0].mxu0 %v4435
    %v4556 = vpop.f32.mrb[0].mxu0
    %v4557 = vadd.f32 0.0, %v4556
    %v4558 = vpop.f32.mrb[0].mxu0
    %v4559 = vpop.f32.mrb[0].mxu0
    %v4560 = vadd.f32 0.0, %v4559
    %v4561 = vpop.f32.mrb[0].mxu0
    %4562 = vmatprep.mubr.bf16.mxu0 0
    %4563 = vmatmul.mubr.bf16.gmra.mrb[0].mxu0 %v4438
    %v4564 = vpop.f32.mrb[0].mxu0
    %v4565 = vadd.f32 0.0, %v4564
    %v4566 = vpop.f32.mrb[0].mxu0
    %v4567 = vpop.f32.mrb[0].mxu0
    %v4568 = vadd.f32 0.0, %v4567
    %v4569 = vpop.f32.mrb[0].mxu0
    %4570 = vmatprep.mubr.bf16.mxu0 0
    %4571 = vmatmul.mubr.bf16.gmra.mrb[0].mxu0 %v4441
    %v4572 = vpop.f32.mrb[0].mxu0
    %v4573 = vadd.f32 0.0, %v4572
    %v4574 = vpop.f32.mrb[0].mxu0
    %v4575 = vpop.f32.mrb[0].mxu0
    %v4576 = vadd.f32 0.0, %v4575
    %v4577 = vpop.f32.mrb[0].mxu0
    %4578 = vmatprep.mubr.bf16.mxu0 0
    %4579 = vmatmul.mubr.bf16.gmra.mrb[0].mxu0 %v4444
    %v4580 = vpop.f32.mrb[0].mxu0
    %v4581 = vadd.f32 0.0, %v4580
    %v4582 = vpop.f32.mrb[0].mxu0
    %v4583 = vpop.f32.mrb[0].mxu0
    %v4584 = vadd.f32 0.0, %v4583
    %v4585 = vpop.f32.mrb[0].mxu0
    %4586 = vmatprep.mubr.bf16.mxu0 0
    %4587 = vmatmul.mubr.bf16.gmra.mrb[0].mxu0 %v4447
    %v4588 = vpop.f32.mrb[0].mxu0
    %v4589 = vadd.f32 0.0, %v4588
    %v4590 = vpop.f32.mrb[0].mxu0
    %v4591 = vpop.f32.mrb[0].mxu0
    %v4592 = vadd.f32 0.0, %v4591
    %v4593 = vpop.f32.mrb[0].mxu0
    %4594 = vmatprep.mubr.bf16.mxu0 0
    %4595 = vmatmul.mubr.bf16.gmra.mrb[0].mxu0 %v4450
    %v4596 = vpop.f32.mrb[0].mxu0
    %v4597 = vadd.f32 0.0, %v4596
    %v4598 = vpop.f32.mrb[0].mxu0
    %v4599 = vpop.f32.mrb[0].mxu0
    %v4600 = vadd.f32 0.0, %v4599
    %v4601 = vpop.f32.mrb[0].mxu0
    %4602 = vmatprep.mubr.bf16.mxu0 0
    %4603 = vmatmul.mubr.bf16.gmra.mrb[0].mxu0 %v4453
    %v4604 = vpop.f32.mrb[0].mxu0
    %v4605 = vadd.f32 0.0, %v4604
    %v4606 = vpop.f32.mrb[0].mxu0
    %v4607 = vpop.f32.mrb[0].mxu0
    %v4608 = vadd.f32 0.0, %v4607
    %v4609 = vpop.f32.mrb[0].mxu0
    %4610 = vmatprep.mubr.bf16.mxu0 0
    %4611 = vmatmul.mubr.bf16.gmra.mrb[0].mxu0 %v4456
    %v4612 = vpop.f32.mrb[0].mxu0
    %v4613 = vadd.f32 0.0, %v4612
    %v4614 = vpop.f32.mrb[0].mxu0
    %v4615 = vpop.f32.mrb[0].mxu0
    %v4616 = vadd.f32 0.0, %v4615
    %v4617 = vpop.f32.mrb[0].mxu0
    %4618 = vdwg.mxu0
    %v4619 = vadd.f32 %v4346, %v4493
    %v4620 = vadd.f32 %v4347, %v4496
    %v4621 = vadd.f32 %v4348, %v4501
    %v4622 = vadd.f32 %v4349, %v4504
    %v4623 = vadd.f32 %v4350, %v4509
    %v4624 = vadd.f32 %v4351, %v4512
    %v4625 = vadd.f32 %v4352, %v4517
    %v4626 = vadd.f32 %v4353, %v4520
    %v4627 = vadd.f32 %v4354, %v4525
    %v4628 = vadd.f32 %v4355, %v4528
    %v4629 = vadd.f32 %v4356, %v4533
    %v4630 = vadd.f32 %v4357, %v4536
    %v4631 = vadd.f32 %v4358, %v4541
    %v4632 = vadd.f32 %v4359, %v4544
    %v4633 = vadd.f32 %v4360, %v4549
    %v4634 = vadd.f32 %v4361, %v4552
    %v4635 = vadd.f32 %v4362, %v4557
    %v4636 = vadd.f32 %v4363, %v4560
    %v4637 = vadd.f32 %v4364, %v4565
    %v4638 = vadd.f32 %v4365, %v4568
    %v4639 = vadd.f32 %v4366, %v4573
    %v4640 = vadd.f32 %v4367, %v4576
    %v4641 = vadd.f32 %v4368, %v4581
    %v4642 = vadd.f32 %v4369, %v4584
    %v4643 = vadd.f32 %v4370, %v4589
    %v4644 = vadd.f32 %v4371, %v4592
    %v4645 = vadd.f32 %v4372, %v4597
    %v4646 = vadd.f32 %v4373, %v4600
    %v4647 = vadd.f32 %v4374, %v4605
    %v4648 = vadd.f32 %v4375, %v4608
    %v4649 = vadd.f32 %v4376, %v4613
    %v4650 = vadd.f32 %v4377, %v4616
    %v4651 = vpack.c.bf16 %v4104, %v4102
    %v4652 = vld [vmem:[%s4 + $0x80] sm:$0xf]
    %v4653 = vld [vmem:[%s4 + $0x84] sm:$0xf]
    %v4654 = vld [vmem:[%s4 + $0x88] sm:$0xf]
    %v4655 = vld [vmem:[%s4 + $0x8c] sm:$0xf]
    %v4660 = vunpack.c.l.b16 %v4652
    %v4661 = vunpack.c.l.b16 %v4653
    %v4662 = vunpack.c.l.b16 %v4654
    %v4663 = vunpack.c.l.b16 %v4655
    %v4664 = vpack.c.b16 %v4661, %v4660
    %v4665 = vpack.c.b16 %v4663, %v4662
    %v4669 = vsel %vm64, %v4651, 0
    %4671 = vmatprep.subr.bf16.mxu0 0
    %4672 = vmatpush1.bf16.msra.mxu0 %v4664
    %4673 = vmatprep.subr.bf16.mxu0 0
    %4674 = vmatpush1.bf16.msra.mxu0 %v4665
    %4675 = vmatprep.subr.bf16.mxu0 0
    %4676 = vmatpush1.bf16.msra.mxu0 0
    %4677 = vmatprep.subr.bf16.mxu0 0
    %4678 = vmatpush1.bf16.msra.mxu0 0
    %4679 = vmatprep.subr.bf16.mxu0 0
    %4680 = vmatpush1.bf16.msra.mxu0 0
    %4681 = vmatprep.subr.bf16.mxu0 0
    %4682 = vmatpush1.bf16.msra.mxu0 0
    %4683 = vmatprep.subr.bf16.mxu0 0
    %4684 = vmatpush1.bf16.msra.mxu0 0
    %4685 = vmatprep.subr.bf16.mxu0 0
    %4686 = vmatpush1.bf16.msra.mxu0 0
    %4687 = vmatprep.subr.bf16.mxu0 0
    %4688 = vmatpush1.bf16.msra.mxu0 0
    %4689 = vmatprep.subr.bf16.mxu0 0
    %4690 = vmatpush1.bf16.msra.mxu0 0
    %4691 = vmatprep.subr.bf16.mxu0 0
    %4692 = vmatpush1.bf16.msra.mxu0 0
    %4693 = vmatprep.subr.bf16.mxu0 0
    %4694 = vmatpush1.bf16.msra.mxu0 0
    %4695 = vmatprep.subr.bf16.mxu0 0
    %4696 = vmatpush1.bf16.msra.mxu0 0
    %4697 = vmatprep.subr.bf16.mxu0 0
    %4698 = vmatpush1.bf16.msra.mxu0 0
    %4699 = vmatprep.subr.bf16.mxu0 0
    %4700 = vmatpush1.bf16.msra.mxu0 0
    %4701 = vmatprep.subr.bf16.mxu0 0
    %4702 = vmatpush1.bf16.msra.mxu0 0
    %4703 = vmatprep.mubr.bf16.mxu0 0
    %4704 = vmatmul.mubr.bf16.gmra.mrb[0].mxu0 %v4141
    %v4705 = vpop.f32.mrb[0].mxu0
    %v4706 = vadd.f32 0.0, %v4705
    %v4707 = vpop.f32.mrb[0].mxu0
    %v4708 = vpop.f32.mrb[0].mxu0
    %v4709 = vadd.f32 0.0, %v4708
    %v4710 = vpop.f32.mrb[0].mxu0
    %4711 = vmatprep.mubr.bf16.mxu0 0
    %4712 = vmatmul.mubr.bf16.gmra.mrb[0].mxu0 %v4144
    %v4713 = vpop.f32.mrb[0].mxu0
    %v4714 = vadd.f32 0.0, %v4713
    %v4715 = vpop.f32.mrb[0].mxu0
    %v4716 = vpop.f32.mrb[0].mxu0
    %v4717 = vadd.f32 0.0, %v4716
    %v4718 = vpop.f32.mrb[0].mxu0
    %4719 = vmatprep.mubr.bf16.mxu0 0
    %4720 = vmatmul.mubr.bf16.gmra.mrb[0].mxu0 %v4147
    %v4721 = vpop.f32.mrb[0].mxu0
    %v4722 = vadd.f32 0.0, %v4721
    %v4723 = vpop.f32.mrb[0].mxu0
    %v4724 = vpop.f32.mrb[0].mxu0
    %v4725 = vadd.f32 0.0, %v4724
    %v4726 = vpop.f32.mrb[0].mxu0
    %4727 = vmatprep.mubr.bf16.mxu0 0
    %4728 = vmatmul.mubr.bf16.gmra.mrb[0].mxu0 %v4150
    %v4729 = vpop.f32.mrb[0].mxu0
    %v4730 = vadd.f32 0.0, %v4729
    %v4731 = vpop.f32.mrb[0].mxu0
    %v4732 = vpop.f32.mrb[0].mxu0
    %v4733 = vadd.f32 0.0, %v4732
    %v4734 = vpop.f32.mrb[0].mxu0
    %4735 = vmatprep.mubr.bf16.mxu0 0
    %4736 = vmatmul.mubr.bf16.gmra.mrb[0].mxu0 %v4153
    %v4737 = vpop.f32.mrb[0].mxu0
    %v4738 = vadd.f32 0.0, %v4737
    %v4739 = vpop.f32.mrb[0].mxu0
    %v4740 = vpop.f32.mrb[0].mxu0
    %v4741 = vadd.f32 0.0, %v4740
    %v4742 = vpop.f32.mrb[0].mxu0
    %4743 = vmatprep.mubr.bf16.mxu0 0
    %4744 = vmatmul.mubr.bf16.gmra.mrb[0].mxu0 %v4156
    %v4745 = vpop.f32.mrb[0].mxu0
    %v4746 = vadd.f32 0.0, %v4745
    %v4747 = vpop.f32.mrb[0].mxu0
    %v4748 = vpop.f32.mrb[0].mxu0
    %v4749 = vadd.f32 0.0, %v4748
    %v4750 = vpop.f32.mrb[0].mxu0
    %4751 = vmatprep.mubr.bf16.mxu0 0
    %4752 = vmatmul.mubr.bf16.gmra.mrb[0].mxu0 %v4159
    %v4753 = vpop.f32.mrb[0].mxu0
    %v4754 = vadd.f32 0.0, %v4753
    %v4755 = vpop.f32.mrb[0].mxu0
    %v4756 = vpop.f32.mrb[0].mxu0
    %v4757 = vadd.f32 0.0, %v4756
    %v4758 = vpop.f32.mrb[0].mxu0
    %4759 = vmatprep.mubr.bf16.mxu0 0
    %4760 = vmatmul.mubr.bf16.gmra.mrb[0].mxu0 %v4162
    %v4761 = vpop.f32.mrb[0].mxu0
    %v4762 = vadd.f32 0.0, %v4761
    %v4763 = vpop.f32.mrb[0].mxu0
    %v4764 = vpop.f32.mrb[0].mxu0
    %v4765 = vadd.f32 0.0, %v4764
    %v4766 = vpop.f32.mrb[0].mxu0
    %4767 = vmatprep.mubr.bf16.mxu0 0
    %4768 = vmatmul.mubr.bf16.gmra.mrb[0].mxu0 %v4165
    %v4769 = vpop.f32.mrb[0].mxu0
    %v4770 = vadd.f32 0.0, %v4769
    %v4771 = vpop.f32.mrb[0].mxu0
    %v4772 = vpop.f32.mrb[0].mxu0
    %v4773 = vadd.f32 0.0, %v4772
    %v4774 = vpop.f32.mrb[0].mxu0
    %4775 = vmatprep.mubr.bf16.mxu0 0
    %4776 = vmatmul.mubr.bf16.gmra.mrb[0].mxu0 %v4168
    %v4777 = vpop.f32.mrb[0].mxu0
    %v4778 = vadd.f32 0.0, %v4777
    %v4779 = vpop.f32.mrb[0].mxu0
    %v4780 = vpop.f32.mrb[0].mxu0
    %v4781 = vadd.f32 0.0, %v4780
    %v4782 = vpop.f32.mrb[0].mxu0
    %4783 = vmatprep.mubr.bf16.mxu0 0
    %4784 = vmatmul.mubr.bf16.gmra.mrb[0].mxu0 %v4171
    %v4785 = vpop.f32.mrb[0].mxu0
    %v4786 = vadd.f32 0.0, %v4785
    %v4787 = vpop.f32.mrb[0].mxu0
    %v4788 = vpop.f32.mrb[0].mxu0
    %v4789 = vadd.f32 0.0, %v4788
    %v4790 = vpop.f32.mrb[0].mxu0
    %4791 = vmatprep.mubr.bf16.mxu0 0
    %4792 = vmatmul.mubr.bf16.gmra.mrb[0].mxu0 %v4174
    %v4793 = vpop.f32.mrb[0].mxu0
    %v4794 = vadd.f32 0.0, %v4793
    %v4795 = vpop.f32.mrb[0].mxu0
    %v4796 = vpop.f32.mrb[0].mxu0
    %v4797 = vadd.f32 0.0, %v4796
    %v4798 = vpop.f32.mrb[0].mxu0
    %4799 = vmatprep.mubr.bf16.mxu0 0
    %4800 = vmatmul.mubr.bf16.gmra.mrb[0].mxu0 %v4177
    %v4801 = vpop.f32.mrb[0].mxu0
    %v4802 = vadd.f32 0.0, %v4801
    %v4803 = vpop.f32.mrb[0].mxu0
    %v4804 = vpop.f32.mrb[0].mxu0
    %v4805 = vadd.f32 0.0, %v4804
    %v4806 = vpop.f32.mrb[0].mxu0
    %4807 = vmatprep.mubr.bf16.mxu0 0
    %4808 = vmatmul.mubr.bf16.gmra.mrb[0].mxu0 %v4180
    %v4809 = vpop.f32.mrb[0].mxu0
    %v4810 = vadd.f32 0.0, %v4809
    %v4811 = vpop.f32.mrb[0].mxu0
    %v4812 = vpop.f32.mrb[0].mxu0
    %v4813 = vadd.f32 0.0, %v4812
    %v4814 = vpop.f32.mrb[0].mxu0
    %4815 = vmatprep.mubr.bf16.mxu0 0
    %4816 = vmatmul.mubr.bf16.gmra.mrb[0].mxu0 %v4183
    %v4817 = vpop.f32.mrb[0].mxu0
    %v4818 = vadd.f32 0.0, %v4817
    %v4819 = vpop.f32.mrb[0].mxu0
    %v4820 = vpop.f32.mrb[0].mxu0
    %v4821 = vadd.f32 0.0, %v4820
    %v4822 = vpop.f32.mrb[0].mxu0
    %4823 = vmatprep.mubr.bf16.mxu0 0
    %4824 = vmatmul.mubr.bf16.gmra.mrb[0].mxu0 %v4669
    %v4825 = vpop.f32.mrb[0].mxu0
    %v4826 = vadd.f32 0.0, %v4825
    %v4827 = vpop.f32.mrb[0].mxu0
    %v4828 = vpop.f32.mrb[0].mxu0
    %v4829 = vadd.f32 0.0, %v4828
    %v4830 = vpop.f32.mrb[0].mxu0
    %4831 = vdwg.mxu0
    %v4832 = vadd.f32 %v4619, %v4706
    %v4833 = vadd.f32 %v4620, %v4709
    %v4834 = vadd.f32 %v4621, %v4714
    %v4835 = vadd.f32 %v4622, %v4717
    %v4836 = vadd.f32 %v4623, %v4722
    %v4837 = vadd.f32 %v4624, %v4725
    %v4838 = vadd.f32 %v4625, %v4730
    %v4839 = vadd.f32 %v4626, %v4733
    %v4840 = vadd.f32 %v4627, %v4738
    %v4841 = vadd.f32 %v4628, %v4741
    %v4842 = vadd.f32 %v4629, %v4746
    %v4843 = vadd.f32 %v4630, %v4749
    %v4844 = vadd.f32 %v4631, %v4754
    %v4845 = vadd.f32 %v4632, %v4757
    %v4846 = vadd.f32 %v4633, %v4762
    %v4847 = vadd.f32 %v4634, %v4765
    %v4848 = vadd.f32 %v4635, %v4770
    %v4849 = vadd.f32 %v4636, %v4773
    %v4850 = vadd.f32 %v4637, %v4778
    %v4851 = vadd.f32 %v4638, %v4781
    %v4852 = vadd.f32 %v4639, %v4786
    %v4853 = vadd.f32 %v4640, %v4789
    %v4854 = vadd.f32 %v4641, %v4794
    %v4855 = vadd.f32 %v4642, %v4797
    %v4856 = vadd.f32 %v4643, %v4802
    %v4857 = vadd.f32 %v4644, %v4805
    %v4858 = vadd.f32 %v4645, %v4810
    %v4859 = vadd.f32 %v4646, %v4813
    %v4860 = vadd.f32 %v4647, %v4818
    %v4861 = vadd.f32 %v4648, %v4821
    %v4862 = vadd.f32 %v4649, %v4826
    %v4863 = vadd.f32 %v4650, %v4829
    %v4864 = vmax.f32 %v4832, 0.0
    %v4865 = vmax.f32 %v4833, 0.0
    %v4866 = vmax.f32 %v4834, 0.0
    %v4867 = vmax.f32 %v4835, 0.0
    %v4868 = vmax.f32 %v4836, 0.0
    %v4869 = vmax.f32 %v4837, 0.0
    %v4870 = vmax.f32 %v4838, 0.0
    %v4871 = vmax.f32 %v4839, 0.0
    %v4872 = vmax.f32 %v4840, 0.0
    %v4873 = vmax.f32 %v4841, 0.0
    %v4874 = vmax.f32 %v4842, 0.0
    %v4875 = vmax.f32 %v4843, 0.0
    %v4876 = vmax.f32 %v4844, 0.0
    %v4877 = vmax.f32 %v4845, 0.0
    %v4878 = vmax.f32 %v4846, 0.0
    %v4879 = vmax.f32 %v4847, 0.0
    %v4880 = vmax.f32 %v4848, 0.0
    %v4881 = vmax.f32 %v4849, 0.0
    %v4882 = vmax.f32 %v4850, 0.0
    %v4883 = vmax.f32 %v4851, 0.0
    %v4884 = vmax.f32 %v4852, 0.0
    %v4885 = vmax.f32 %v4853, 0.0
    %v4886 = vmax.f32 %v4854, 0.0
    %v4887 = vmax.f32 %v4855, 0.0
    %v4888 = vmax.f32 %v4856, 0.0
    %v4889 = vmax.f32 %v4857, 0.0
    %v4890 = vmax.f32 %v4858, 0.0
    %v4891 = vmax.f32 %v4859, 0.0
    %v4892 = vmax.f32 %v4860, 0.0
    %v4893 = vmax.f32 %v4861, 0.0
    %v4894 = vmax.f32 %v4862, 0.0
    %v4895 = vmax.f32 %v4863, 0.0
    %s4896 = scalar_lea.vmem [#allocation3], 24
    %4897 = vst.msk [vmem:[%s4896 + $0x1] sm:$0xff] %vm64, %v4864
    %4898 = vst.msk [vmem:[%s4896 + $0x9] sm:$0xff] %vm64, %v4865
    %4899 = vst.msk [vmem:[%s4896 + $0x19] sm:$0xff] %vm64, %v4866
    %4900 = vst.msk [vmem:[%s4896 + $0x21] sm:$0xff] %vm64, %v4867
    %4901 = vst.msk [vmem:[%s4896 + $0x31] sm:$0xff] %vm64, %v4868
    %4902 = vst.msk [vmem:[%s4896 + $0x39] sm:$0xff] %vm64, %v4869
    %4903 = vst.msk [vmem:[%s4896 + $0x49] sm:$0xff] %vm64, %v4870
    %4904 = vst.msk [vmem:[%s4896 + $0x51] sm:$0xff] %vm64, %v4871
    %4905 = vst.msk [vmem:[%s4896 + $0x61] sm:$0xff] %vm64, %v4872
    %4906 = vst.msk [vmem:[%s4896 + $0x69] sm:$0xff] %vm64, %v4873
    %4907 = vst.msk [vmem:[%s4896 + $0x79] sm:$0xff] %vm64, %v4874
    %4908 = vst.msk [vmem:[%s4896 + $0x81] sm:$0xff] %vm64, %v4875
    %4909 = vst.msk [vmem:[%s4896 + $0x91] sm:$0xff] %vm64, %v4876
    %4910 = vst.msk [vmem:[%s4896 + $0x99] sm:$0xff] %vm64, %v4877
    %4911 = vst.msk [vmem:[%s4896 + $0xa9] sm:$0xff] %vm64, %v4878
    %4912 = vst.msk [vmem:[%s4896 + $0xb1] sm:$0xff] %vm64, %v4879
    %4913 = vst.msk [vmem:[%s4896 + $0xc1] sm:$0xff] %vm64, %v4880
    %4914 = vst.msk [vmem:[%s4896 + $0xc9] sm:$0xff] %vm64, %v4881
    %4915 = vst.msk [vmem:[%s4896 + $0xd9] sm:$0xff] %vm64, %v4882
    %4916 = vst.msk [vmem:[%s4896 + $0xe1] sm:$0xff] %vm64, %v4883
    %4917 = vst.msk [vmem:[%s4896 + $0xf1] sm:$0xff] %vm64, %v4884
    %4918 = vst.msk [vmem:[%s4896 + $0xf9] sm:$0xff] %vm64, %v4885
    %4919 = vst.msk [vmem:[%s4896 + $0x109] sm:$0xff] %vm64, %v4886
    %4920 = vst.msk [vmem:[%s4896 + $0x111] sm:$0xff] %vm64, %v4887
    %4921 = vst.msk [vmem:[%s4896 + $0x121] sm:$0xff] %vm64, %v4888
    %4922 = vst.msk [vmem:[%s4896 + $0x129] sm:$0xff] %vm64, %v4889
    %4923 = vst.msk [vmem:[%s4896 + $0x139] sm:$0xff] %vm64, %v4890
    %4924 = vst.msk [vmem:[%s4896 + $0x141] sm:$0xff] %vm64, %v4891
    %4925 = vst.msk [vmem:[%s4896 + $0x151] sm:$0xff] %vm64, %v4892
    %4926 = vst.msk [vmem:[%s4896 + $0x159] sm:$0xff] %vm64, %v4893
    %4927 = vst.msk [vmem:[%s4896 + $0x169] sm:$0xff] %vm64, %v4894
    %4928 = vst.msk [vmem:[%s4896 + $0x171] sm:$0xff] %vm64, %v4895
    %v4929 = vld [vmem:[%s7] sm:$0xf]
    %v4930 = vld [vmem:[%s7 + $0x4] sm:$0xf]
    %v4931 = vld [vmem:[%s7 + $0x8] sm:$0xf]
    %v4932 = vld [vmem:[%s7 + $0xc] sm:$0xf]
    %v4933 = vld [vmem:[%s7 + $0x10] sm:$0xf]
    %v4934 = vld [vmem:[%s7 + $0x14] sm:$0xf]
    %v4935 = vld [vmem:[%s7 + $0x18] sm:$0xf]
    %v4936 = vld [vmem:[%s7 + $0x1c] sm:$0xf]
    %v4937 = vld [vmem:[%s9] sm:$0xf]
    %v4938 = vld [vmem:[%s9 + $0x4] sm:$0xf]
    %v4939 = vld [vmem:[%s9 + $0x8] sm:$0xf]
    %v4940 = vld [vmem:[%s9 + $0xc] sm:$0xf]
    %v4941 = vld [vmem:[%s10] sm:$0x1]
    %v4943 = vlaneseq
    %v4944 = vshrl.u32 %v4943, 7
    %v4945 = vsub.s32 0, %v4944
    %v4946 = vrot.slane %v4941, %v4945
    %v4956 = vunpack.c.l.b16 %v4929
    %v4957 = vunpack.c.l.b16 %v4930
    %v4958 = vunpack.c.l.b16 %v4931
    %v4959 = vunpack.c.l.b16 %v4932
    %v4960 = vunpack.c.l.b16 %v4933
    %v4961 = vunpack.c.l.b16 %v4934
    %v4962 = vunpack.c.l.b16 %v4935
    %v4963 = vunpack.c.l.b16 %v4936
    %v4964 = vpack.c.b16 %v4957, %v4956
    %v4965 = vpack.c.b16 %v4959, %v4958
    %v4966 = vpack.c.b16 %v4961, %v4960
    %v4967 = vpack.c.b16 %v4963, %v4962
    %v4972 = vunpack.c.l.b16 %v4937
    %v4973 = vunpack.c.l.b16 %v4938
    %v4974 = vunpack.c.l.b16 %v4939
    %v4975 = vunpack.c.l.b16 %v4940
    %v4976 = vpack.c.b16 %v4973, %v4972
    %v4977 = vpack.c.b16 %v4975, %v4974
    %v4981 = vsel %vm64, %v4964, 0
    %v4984 = vsel %vm64, %v4965, 0
    %v4987 = vsel %vm64, %v4966, 0
    %v4990 = vsel %vm64, %v4967, 0
    %4992 = vmatprep.subr.bf16.mxu0 0
    %4993 = vmatpush1.bf16.msra.mxu0 %v4976
    %4994 = vmatprep.subr.bf16.mxu0 0
    %4995 = vmatpush1.bf16.msra.mxu0 %v4977
    %4996 = vmatprep.subr.bf16.mxu0 0
    %4997 = vmatpush1.bf16.msra.mxu0 0
    %4998 = vmatprep.subr.bf16.mxu0 0
    %4999 = vmatpush1.bf16.msra.mxu0 0
    %5000 = vmatprep.subr.bf16.mxu0 0
    %5001 = vmatpush1.bf16.msra.mxu0 0
    %5002 = vmatprep.subr.bf16.mxu0 0
    %5003 = vmatpush1.bf16.msra.mxu0 0
    %5004 = vmatprep.subr.bf16.mxu0 0
    %5005 = vmatpush1.bf16.msra.mxu0 0
    %5006 = vmatprep.subr.bf16.mxu0 0
    %5007 = vmatpush1.bf16.msra.mxu0 0
    %5008 = vmatprep.subr.bf16.mxu0 0
    %5009 = vmatpush1.bf16.msra.mxu0 0
    %5010 = vmatprep.subr.bf16.mxu0 0
    %5011 = vmatpush1.bf16.msra.mxu0 0
    %5012 = vmatprep.subr.bf16.mxu0 0
    %5013 = vmatpush1.bf16.msra.mxu0 0
    %5014 = vmatprep.subr.bf16.mxu0 0
    %5015 = vmatpush1.bf16.msra.mxu0 0
    %5016 = vmatprep.subr.bf16.mxu0 0
    %5017 = vmatpush1.bf16.msra.mxu0 0
    %5018 = vmatprep.subr.bf16.mxu0 0
    %5019 = vmatpush1.bf16.msra.mxu0 0
    %5020 = vmatprep.subr.bf16.mxu0 0
    %5021 = vmatpush1.bf16.msra.mxu0 0
    %5022 = vmatprep.subr.bf16.mxu0 0
    %5023 = vmatpush1.bf16.msra.mxu0 0
    %5024 = vmatprep.mubr.bf16.mxu0 0
    %5025 = vmatmul.mubr.bf16.gmra.mrb[0].mxu0 %v4981
    %v5026 = vpop.f32.mrb[0].mxu0
    %v5027 = vadd.f32 %v4946, %v5026
    %v5028 = vpop.f32.mrb[0].mxu0
    %v5029 = vpop.f32.mrb[0].mxu0
    %v5030 = vadd.f32 %v4946, %v5029
    %v5031 = vpop.f32.mrb[0].mxu0
    %5032 = vmatprep.mubr.bf16.mxu0 0
    %5033 = vmatmul.mubr.bf16.gmra.mrb[0].mxu0 %v4984
    %v5034 = vpop.f32.mrb[0].mxu0
    %v5035 = vadd.f32 %v4946, %v5034
    %v5036 = vpop.f32.mrb[0].mxu0
    %v5037 = vpop.f32.mrb[0].mxu0
    %v5038 = vadd.f32 %v4946, %v5037
    %v5039 = vpop.f32.mrb[0].mxu0
    %5040 = vmatprep.mubr.bf16.mxu0 0
    %5041 = vmatmul.mubr.bf16.gmra.mrb[0].mxu0 %v4987
    %v5042 = vpop.f32.mrb[0].mxu0
    %v5043 = vadd.f32 %v4946, %v5042
    %v5044 = vpop.f32.mrb[0].mxu0
    %v5045 = vpop.f32.mrb[0].mxu0
    %v5046 = vadd.f32 %v4946, %v5045
    %v5047 = vpop.f32.mrb[0].mxu0
    %5048 = vmatprep.mubr.bf16.mxu0 0
    %5049 = vmatmul.mubr.bf16.gmra.mrb[0].mxu0 %v4990
    %v5050 = vpop.f32.mrb[0].mxu0
    %v5051 = vadd.f32 %v4946, %v5050
    %v5052 = vpop.f32.mrb[0].mxu0
    %v5053 = vpop.f32.mrb[0].mxu0
    %v5054 = vadd.f32 %v4946, %v5053
    %v5055 = vpop.f32.mrb[0].mxu0
    %5056 = vdwg.mxu0
    %v5057 = vld [vmem:[#allocation3] ss:$2 sm:$0xff]
    %s5058 = scalar_lea.vmem [#allocation3], 24
    %v5059 = vld [vmem:[%s5058] ss:$2 sm:$0xff]
    %s5060 = scalar_lea.vmem [#allocation3], 48
    %v5061 = vld [vmem:[%s5060] ss:$2 sm:$0xff]
    %s5062 = scalar_lea.vmem [#allocation3], 72
    %v5063 = vld [vmem:[%s5062] ss:$2 sm:$0xff]
    %s5064 = scalar_lea.vmem [#allocation3], 96
    %v5065 = vld [vmem:[%s5064] ss:$2 sm:$0xff]
    %s5066 = scalar_lea.vmem [#allocation3], 120
    %v5067 = vld [vmem:[%s5066] ss:$2 sm:$0xff]
    %s5068 = scalar_lea.vmem [#allocation3], 144
    %v5069 = vld [vmem:[%s5068] ss:$2 sm:$0xff]
    %s5070 = scalar_lea.vmem [#allocation3], 168
    %v5071 = vld [vmem:[%s5070] ss:$2 sm:$0xff]
    %s5072 = scalar_lea.vmem [#allocation3], 192
    %v5073 = vld [vmem:[%s5072] ss:$2 sm:$0xff]
    %s5074 = scalar_lea.vmem [#allocation3], 216
    %v5075 = vld [vmem:[%s5074] ss:$2 sm:$0xff]
    %s5076 = scalar_lea.vmem [#allocation3], 240
    %v5077 = vld [vmem:[%s5076] ss:$2 sm:$0xff]
    %s5078 = scalar_lea.vmem [#allocation3], 264
    %v5079 = vld [vmem:[%s5078] ss:$2 sm:$0xff]
    %s5080 = scalar_lea.vmem [#allocation3], 288
    %v5081 = vld [vmem:[%s5080] ss:$2 sm:$0xff]
    %s5082 = scalar_lea.vmem [#allocation3], 312
    %v5083 = vld [vmem:[%s5082] ss:$2 sm:$0xff]
    %s5084 = scalar_lea.vmem [#allocation3], 336
    %v5085 = vld [vmem:[%s5084] ss:$2 sm:$0xff]
    %s5086 = scalar_lea.vmem [#allocation3], 360
    %v5087 = vld [vmem:[%s5086] ss:$2 sm:$0xff]
    %s5088 = scalar_lea.vmem [#allocation3], 384
    %v5089 = vld [vmem:[%s5088] ss:$2 sm:$0xff]
    %v5090 = vpack.c.bf16 %v5061, %v5057
    %v5091 = vpack.c.bf16 %v5069, %v5065
    %v5092 = vpack.c.bf16 %v5077, %v5073
    %v5093 = vpack.c.bf16 %v5085, %v5081
    %v5094 = vld [vmem:[%s8] sm:$0xf]
    %v5095 = vld [vmem:[%s8 + $0x4] sm:$0xf]
    %v5096 = vld [vmem:[%s8 + $0x8] sm:$0xf]
    %v5097 = vld [vmem:[%s8 + $0xc] sm:$0xf]
    %v5102 = vunpack.c.l.b16 %v5094
    %v5103 = vunpack.c.l.b16 %v5095
    %v5104 = vunpack.c.l.b16 %v5096
    %v5105 = vunpack.c.l.b16 %v5097
    %v5106 = vpack.c.b16 %v5103, %v5102
    %v5107 = vpack.c.b16 %v5105, %v5104
    %v5111 = vsel %vm64, %v5090, 0
    %v5114 = vsel %vm64, %v5091, 0
    %v5117 = vsel %vm64, %v5092, 0
    %v5120 = vsel %vm64, %v5093, 0
    %5122 = vmatprep.subr.bf16.mxu0 0
    %5123 = vmatpush1.bf16.msra.mxu0 %v5106
    %5124 = vmatprep.subr.bf16.mxu0 0
    %5125 = vmatpush1.bf16.msra.mxu0 %v5107
    %5126 = vmatprep.subr.bf16.mxu0 0
    %5127 = vmatpush1.bf16.msra.mxu0 0
    %5128 = vmatprep.subr.bf16.mxu0 0
    %5129 = vmatpush1.bf16.msra.mxu0 0
    %5130 = vmatprep.subr.bf16.mxu0 0
    %5131 = vmatpush1.bf16.msra.mxu0 0
    %5132 = vmatprep.subr.bf16.mxu0 0
    %5133 = vmatpush1.bf16.msra.mxu0 0
    %5134 = vmatprep.subr.bf16.mxu0 0
    %5135 = vmatpush1.bf16.msra.mxu0 0
    %5136 = vmatprep.subr.bf16.mxu0 0
    %5137 = vmatpush1.bf16.msra.mxu0 0
    %5138 = vmatprep.subr.bf16.mxu0 0
    %5139 = vmatpush1.bf16.msra.mxu0 0
    %5140 = vmatprep.subr.bf16.mxu0 0
    %5141 = vmatpush1.bf16.msra.mxu0 0
    %5142 = vmatprep.subr.bf16.mxu0 0
    %5143 = vmatpush1.bf16.msra.mxu0 0
    %5144 = vmatprep.subr.bf16.mxu0 0
    %5145 = vmatpush1.bf16.msra.mxu0 0
    %5146 = vmatprep.subr.bf16.mxu0 0
    %5147 = vmatpush1.bf16.msra.mxu0 0
    %5148 = vmatprep.subr.bf16.mxu0 0
    %5149 = vmatpush1.bf16.msra.mxu0 0
    %5150 = vmatprep.subr.bf16.mxu0 0
    %5151 = vmatpush1.bf16.msra.mxu0 0
    %5152 = vmatprep.subr.bf16.mxu0 0
    %5153 = vmatpush1.bf16.msra.mxu0 0
    %5154 = vmatprep.mubr.bf16.mxu0 0
    %5155 = vmatmul.mubr.bf16.gmra.mrb[0].mxu0 %v5111
    %v5156 = vpop.f32.mrb[0].mxu0
    %v5157 = vadd.f32 0.0, %v5156
    %v5158 = vpop.f32.mrb[0].mxu0
    %v5159 = vpop.f32.mrb[0].mxu0
    %v5160 = vadd.f32 0.0, %v5159
    %v5161 = vpop.f32.mrb[0].mxu0
    %5162 = vmatprep.mubr.bf16.mxu0 0
    %5163 = vmatmul.mubr.bf16.gmra.mrb[0].mxu0 %v5114
    %v5164 = vpop.f32.mrb[0].mxu0
    %v5165 = vadd.f32 0.0, %v5164
    %v5166 = vpop.f32.mrb[0].mxu0
    %v5167 = vpop.f32.mrb[0].mxu0
    %v5168 = vadd.f32 0.0, %v5167
    %v5169 = vpop.f32.mrb[0].mxu0
    %5170 = vmatprep.mubr.bf16.mxu0 0
    %5171 = vmatmul.mubr.bf16.gmra.mrb[0].mxu0 %v5117
    %v5172 = vpop.f32.mrb[0].mxu0
    %v5173 = vadd.f32 0.0, %v5172
    %v5174 = vpop.f32.mrb[0].mxu0
    %v5175 = vpop.f32.mrb[0].mxu0
    %v5176 = vadd.f32 0.0, %v5175
    %v5177 = vpop.f32.mrb[0].mxu0
    %5178 = vmatprep.mubr.bf16.mxu0 0
    %5179 = vmatmul.mubr.bf16.gmra.mrb[0].mxu0 %v5120
    %v5180 = vpop.f32.mrb[0].mxu0
    %v5181 = vadd.f32 0.0, %v5180
    %v5182 = vpop.f32.mrb[0].mxu0
    %v5183 = vpop.f32.mrb[0].mxu0
    %v5184 = vadd.f32 0.0, %v5183
    %v5185 = vpop.f32.mrb[0].mxu0
    %5186 = vdwg.mxu0
    %v5187 = vadd.f32 %v5027, %v5157
    %v5188 = vadd.f32 %v5030, %v5160
    %v5189 = vadd.f32 %v5035, %v5165
    %v5190 = vadd.f32 %v5038, %v5168
    %v5191 = vadd.f32 %v5043, %v5173
    %v5192 = vadd.f32 %v5046, %v5176
    %v5193 = vadd.f32 %v5051, %v5181
    %v5194 = vadd.f32 %v5054, %v5184
    %v5195 = vpack.c.bf16 %v5063, %v5059
    %v5196 = vpack.c.bf16 %v5071, %v5067
    %v5197 = vpack.c.bf16 %v5079, %v5075
    %v5198 = vpack.c.bf16 %v5087, %v5083
    %v5199 = vld [vmem:[%s8 + $0x30] sm:$0xf]
    %v5200 = vld [vmem:[%s8 + $0x34] sm:$0xf]
    %v5201 = vld [vmem:[%s8 + $0x38] sm:$0xf]
    %v5202 = vld [vmem:[%s8 + $0x3c] sm:$0xf]
    %v5207 = vunpack.c.l.b16 %v5199
    %v5208 = vunpack.c.l.b16 %v5200
    %v5209 = vunpack.c.l.b16 %v5201
    %v5210 = vunpack.c.l.b16 %v5202
    %v5211 = vpack.c.b16 %v5208, %v5207
    %v5212 = vpack.c.b16 %v5210, %v5209
    %v5216 = vsel %vm64, %v5195, 0
    %v5219 = vsel %vm64, %v5196, 0
    %v5222 = vsel %vm64, %v5197, 0
    %v5225 = vsel %vm64, %v5198, 0
    %5227 = vmatprep.subr.bf16.mxu0 0
    %5228 = vmatpush1.bf16.msra.mxu0 %v5211
    %5229 = vmatprep.subr.bf16.mxu0 0
    %5230 = vmatpush1.bf16.msra.mxu0 %v5212
    %5231 = vmatprep.subr.bf16.mxu0 0
    %5232 = vmatpush1.bf16.msra.mxu0 0
    %5233 = vmatprep.subr.bf16.mxu0 0
    %5234 = vmatpush1.bf16.msra.mxu0 0
    %5235 = vmatprep.subr.bf16.mxu0 0
    %5236 = vmatpush1.bf16.msra.mxu0 0
    %5237 = vmatprep.subr.bf16.mxu0 0
    %5238 = vmatpush1.bf16.msra.mxu0 0
    %5239 = vmatprep.subr.bf16.mxu0 0
    %5240 = vmatpush1.bf16.msra.mxu0 0
    %5241 = vmatprep.subr.bf16.mxu0 0
    %5242 = vmatpush1.bf16.msra.mxu0 0
    %5243 = vmatprep.subr.bf16.mxu0 0
    %5244 = vmatpush1.bf16.msra.mxu0 0
    %5245 = vmatprep.subr.bf16.mxu0 0
    %5246 = vmatpush1.bf16.msra.mxu0 0
    %5247 = vmatprep.subr.bf16.mxu0 0
    %5248 = vmatpush1.bf16.msra.mxu0 0
    %5249 = vmatprep.subr.bf16.mxu0 0
    %5250 = vmatpush1.bf16.msra.mxu0 0
    %5251 = vmatprep.subr.bf16.mxu0 0
    %5252 = vmatpush1.bf16.msra.mxu0 0
    %5253 = vmatprep.subr.bf16.mxu0 0
    %5254 = vmatpush1.bf16.msra.mxu0 0
    %5255 = vmatprep.subr.bf16.mxu0 0
    %5256 = vmatpush1.bf16.msra.mxu0 0
    %5257 = vmatprep.subr.bf16.mxu0 0
    %5258 = vmatpush1.bf16.msra.mxu0 0
    %5259 = vmatprep.mubr.bf16.mxu0 0
    %5260 = vmatmul.mubr.bf16.gmra.mrb[0].mxu0 %v5216
    %v5261 = vpop.f32.mrb[0].mxu0
    %v5262 = vadd.f32 0.0, %v5261
    %v5263 = vpop.f32.mrb[0].mxu0
    %v5264 = vpop.f32.mrb[0].mxu0
    %v5265 = vadd.f32 0.0, %v5264
    %v5266 = vpop.f32.mrb[0].mxu0
    %5267 = vmatprep.mubr.bf16.mxu0 0
    %5268 = vmatmul.mubr.bf16.gmra.mrb[0].mxu0 %v5219
    %v5269 = vpop.f32.mrb[0].mxu0
    %v5270 = vadd.f32 0.0, %v5269
    %v5271 = vpop.f32.mrb[0].mxu0
    %v5272 = vpop.f32.mrb[0].mxu0
    %v5273 = vadd.f32 0.0, %v5272
    %v5274 = vpop.f32.mrb[0].mxu0
    %5275 = vmatprep.mubr.bf16.mxu0 0
    %5276 = vmatmul.mubr.bf16.gmra.mrb[0].mxu0 %v5222
    %v5277 = vpop.f32.mrb[0].mxu0
    %v5278 = vadd.f32 0.0, %v5277
    %v5279 = vpop.f32.mrb[0].mxu0
    %v5280 = vpop.f32.mrb[0].mxu0
    %v5281 = vadd.f32 0.0, %v5280
    %v5282 = vpop.f32.mrb[0].mxu0
    %5283 = vmatprep.mubr.bf16.mxu0 0
    %5284 = vmatmul.mubr.bf16.gmra.mrb[0].mxu0 %v5225
    %v5285 = vpop.f32.mrb[0].mxu0
    %v5286 = vadd.f32 0.0, %v5285
    %v5287 = vpop.f32.mrb[0].mxu0
    %v5288 = vpop.f32.mrb[0].mxu0
    %v5289 = vadd.f32 0.0, %v5288
    %v5290 = vpop.f32.mrb[0].mxu0
    %5291 = vdwg.mxu0
    %v5292 = vadd.f32 %v5187, %v5262
    %v5293 = vadd.f32 %v5188, %v5265
    %v5294 = vadd.f32 %v5189, %v5270
    %v5295 = vadd.f32 %v5190, %v5273
    %v5296 = vadd.f32 %v5191, %v5278
    %v5297 = vadd.f32 %v5192, %v5281
    %v5298 = vadd.f32 %v5193, %v5286
    %v5299 = vadd.f32 %v5194, %v5289
    %v5300 = vpack.c.bf16 %v5065, %v5061
    %v5301 = vpack.c.bf16 %v5073, %v5069
    %v5302 = vpack.c.bf16 %v5081, %v5077
    %v5303 = vpack.c.bf16 %v5089, %v5085
    %v5304 = vld [vmem:[%s8 + $0x60] sm:$0xf]
    %v5305 = vld [vmem:[%s8 + $0x64] sm:$0xf]
    %v5306 = vld [vmem:[%s8 + $0x68] sm:$0xf]
    %v5307 = vld [vmem:[%s8 + $0x6c] sm:$0xf]
    %v5312 = vunpack.c.l.b16 %v5304
    %v5313 = vunpack.c.l.b16 %v5305
    %v5314 = vunpack.c.l.b16 %v5306
    %v5315 = vunpack.c.l.b16 %v5307
    %v5316 = vpack.c.b16 %v5313, %v5312
    %v5317 = vpack.c.b16 %v5315, %v5314
    %v5321 = vsel %vm64, %v5300, 0
    %v5324 = vsel %vm64, %v5301, 0
    %v5327 = vsel %vm64, %v5302, 0
    %v5330 = vsel %vm64, %v5303, 0
    %5332 = vmatprep.subr.bf16.mxu0 0
    %5333 = vmatpush1.bf16.msra.mxu0 %v5316
    %5334 = vmatprep.subr.bf16.mxu0 0
    %5335 = vmatpush1.bf16.msra.mxu0 %v5317
    %5336 = vmatprep.subr.bf16.mxu0 0
    %5337 = vmatpush1.bf16.msra.mxu0 0
    %5338 = vmatprep.subr.bf16.mxu0 0
    %5339 = vmatpush1.bf16.msra.mxu0 0
    %5340 = vmatprep.subr.bf16.mxu0 0
    %5341 = vmatpush1.bf16.msra.mxu0 0
    %5342 = vmatprep.subr.bf16.mxu0 0
    %5343 = vmatpush1.bf16.msra.mxu0 0
    %5344 = vmatprep.subr.bf16.mxu0 0
    %5345 = vmatpush1.bf16.msra.mxu0 0
    %5346 = vmatprep.subr.bf16.mxu0 0
    %5347 = vmatpush1.bf16.msra.mxu0 0
    %5348 = vmatprep.subr.bf16.mxu0 0
    %5349 = vmatpush1.bf16.msra.mxu0 0
    %5350 = vmatprep.subr.bf16.mxu0 0
    %5351 = vmatpush1.bf16.msra.mxu0 0
    %5352 = vmatprep.subr.bf16.mxu0 0
    %5353 = vmatpush1.bf16.msra.mxu0 0
    %5354 = vmatprep.subr.bf16.mxu0 0
    %5355 = vmatpush1.bf16.msra.mxu0 0
    %5356 = vmatprep.subr.bf16.mxu0 0
    %5357 = vmatpush1.bf16.msra.mxu0 0
    %5358 = vmatprep.subr.bf16.mxu0 0
    %5359 = vmatpush1.bf16.msra.mxu0 0
    %5360 = vmatprep.subr.bf16.mxu0 0
    %5361 = vmatpush1.bf16.msra.mxu0 0
    %5362 = vmatprep.subr.bf16.mxu0 0
    %5363 = vmatpush1.bf16.msra.mxu0 0
    %5364 = vmatprep.mubr.bf16.mxu0 0
    %5365 = vmatmul.mubr.bf16.gmra.mrb[0].mxu0 %v5321
    %v5366 = vpop.f32.mrb[0].mxu0
    %v5367 = vadd.f32 0.0, %v5366
    %v5368 = vpop.f32.mrb[0].mxu0
    %v5369 = vpop.f32.mrb[0].mxu0
    %v5370 = vadd.f32 0.0, %v5369
    %v5371 = vpop.f32.mrb[0].mxu0
    %5372 = vmatprep.mubr.bf16.mxu0 0
    %5373 = vmatmul.mubr.bf16.gmra.mrb[0].mxu0 %v5324
    %v5374 = vpop.f32.mrb[0].mxu0
    %v5375 = vadd.f32 0.0, %v5374
    %v5376 = vpop.f32.mrb[0].mxu0
    %v5377 = vpop.f32.mrb[0].mxu0
    %v5378 = vadd.f32 0.0, %v5377
    %v5379 = vpop.f32.mrb[0].mxu0
    %5380 = vmatprep.mubr.bf16.mxu0 0
    %5381 = vmatmul.mubr.bf16.gmra.mrb[0].mxu0 %v5327
    %v5382 = vpop.f32.mrb[0].mxu0
    %v5383 = vadd.f32 0.0, %v5382
    %v5384 = vpop.f32.mrb[0].mxu0
    %v5385 = vpop.f32.mrb[0].mxu0
    %v5386 = vadd.f32 0.0, %v5385
    %v5387 = vpop.f32.mrb[0].mxu0
    %5388 = vmatprep.mubr.bf16.mxu0 0
    %5389 = vmatmul.mubr.bf16.gmra.mrb[0].mxu0 %v5330
    %v5390 = vpop.f32.mrb[0].mxu0
    %v5391 = vadd.f32 0.0, %v5390
    %v5392 = vpop.f32.mrb[0].mxu0
    %v5393 = vpop.f32.mrb[0].mxu0
    %v5394 = vadd.f32 0.0, %v5393
    %v5395 = vpop.f32.mrb[0].mxu0
    %5396 = vdwg.mxu0
    %v5397 = vadd.f32 %v5292, %v5367
    %v5398 = vadd.f32 %v5293, %v5370
    %v5399 = vadd.f32 %v5294, %v5375
    %v5400 = vadd.f32 %v5295, %v5378
    %v5401 = vadd.f32 %v5296, %v5383
    %v5402 = vadd.f32 %v5297, %v5386
    %v5403 = vadd.f32 %v5298, %v5391
    %v5404 = vadd.f32 %v5299, %v5394
    %s5405 = scalar_lea.vmem [#allocation3], 1
    %v5406 = vld [vmem:[%s5405] ss:$2 sm:$0xff]
    %s5407 = scalar_lea.vmem [#allocation3], 25
    %v5408 = vld [vmem:[%s5407] ss:$2 sm:$0xff]
    %s5409 = scalar_lea.vmem [#allocation3], 49
    %v5410 = vld [vmem:[%s5409] ss:$2 sm:$0xff]
    %s5411 = scalar_lea.vmem [#allocation3], 73
    %v5412 = vld [vmem:[%s5411] ss:$2 sm:$0xff]
    %s5413 = scalar_lea.vmem [#allocation3], 97
    %v5414 = vld [vmem:[%s5413] ss:$2 sm:$0xff]
    %s5415 = scalar_lea.vmem [#allocation3], 121
    %v5416 = vld [vmem:[%s5415] ss:$2 sm:$0xff]
    %s5417 = scalar_lea.vmem [#allocation3], 145
    %v5418 = vld [vmem:[%s5417] ss:$2 sm:$0xff]
    %s5419 = scalar_lea.vmem [#allocation3], 169
    %v5420 = vld [vmem:[%s5419] ss:$2 sm:$0xff]
    %s5421 = scalar_lea.vmem [#allocation3], 193
    %v5422 = vld [vmem:[%s5421] ss:$2 sm:$0xff]
    %s5423 = scalar_lea.vmem [#allocation3], 217
    %v5424 = vld [vmem:[%s5423] ss:$2 sm:$0xff]
    %s5425 = scalar_lea.vmem [#allocation3], 241
    %v5426 = vld [vmem:[%s5425] ss:$2 sm:$0xff]
    %s5427 = scalar_lea.vmem [#allocation3], 265
    %v5428 = vld [vmem:[%s5427] ss:$2 sm:$0xff]
    %s5429 = scalar_lea.vmem [#allocation3], 289
    %v5430 = vld [vmem:[%s5429] ss:$2 sm:$0xff]
    %s5431 = scalar_lea.vmem [#allocation3], 313
    %v5432 = vld [vmem:[%s5431] ss:$2 sm:$0xff]
    %s5433 = scalar_lea.vmem [#allocation3], 337
    %v5434 = vld [vmem:[%s5433] ss:$2 sm:$0xff]
    %s5435 = scalar_lea.vmem [#allocation3], 361
    %v5436 = vld [vmem:[%s5435] ss:$2 sm:$0xff]
    %s5437 = scalar_lea.vmem [#allocation3], 385
    %v5438 = vld [vmem:[%s5437] ss:$2 sm:$0xff]
    %v5439 = vpack.c.bf16 %v5410, %v5406
    %v5440 = vpack.c.bf16 %v5418, %v5414
    %v5441 = vpack.c.bf16 %v5426, %v5422
    %v5442 = vpack.c.bf16 %v5434, %v5430
    %v5443 = vld [vmem:[%s8 + $0x10] sm:$0xf]
    %v5444 = vld [vmem:[%s8 + $0x14] sm:$0xf]
    %v5445 = vld [vmem:[%s8 + $0x18] sm:$0xf]
    %v5446 = vld [vmem:[%s8 + $0x1c] sm:$0xf]
    %v5451 = vunpack.c.l.b16 %v5443
    %v5452 = vunpack.c.l.b16 %v5444
    %v5453 = vunpack.c.l.b16 %v5445
    %v5454 = vunpack.c.l.b16 %v5446
    %v5455 = vpack.c.b16 %v5452, %v5451
    %v5456 = vpack.c.b16 %v5454, %v5453
    %v5460 = vsel %vm64, %v5439, 0
    %v5463 = vsel %vm64, %v5440, 0
    %v5466 = vsel %vm64, %v5441, 0
    %v5469 = vsel %vm64, %v5442, 0
    %5471 = vmatprep.subr.bf16.mxu0 0
    %5472 = vmatpush1.bf16.msra.mxu0 %v5455
    %5473 = vmatprep.subr.bf16.mxu0 0
    %5474 = vmatpush1.bf16.msra.mxu0 %v5456
    %5475 = vmatprep.subr.bf16.mxu0 0
    %5476 = vmatpush1.bf16.msra.mxu0 0
    %5477 = vmatprep.subr.bf16.mxu0 0
    %5478 = vmatpush1.bf16.msra.mxu0 0
    %5479 = vmatprep.subr.bf16.mxu0 0
    %5480 = vmatpush1.bf16.msra.mxu0 0
    %5481 = vmatprep.subr.bf16.mxu0 0
    %5482 = vmatpush1.bf16.msra.mxu0 0
    %5483 = vmatprep.subr.bf16.mxu0 0
    %5484 = vmatpush1.bf16.msra.mxu0 0
    %5485 = vmatprep.subr.bf16.mxu0 0
    %5486 = vmatpush1.bf16.msra.mxu0 0
    %5487 = vmatprep.subr.bf16.mxu0 0
    %5488 = vmatpush1.bf16.msra.mxu0 0
    %5489 = vmatprep.subr.bf16.mxu0 0
    %5490 = vmatpush1.bf16.msra.mxu0 0
    %5491 = vmatprep.subr.bf16.mxu0 0
    %5492 = vmatpush1.bf16.msra.mxu0 0
    %5493 = vmatprep.subr.bf16.mxu0 0
    %5494 = vmatpush1.bf16.msra.mxu0 0
    %5495 = vmatprep.subr.bf16.mxu0 0
    %5496 = vmatpush1.bf16.msra.mxu0 0
    %5497 = vmatprep.subr.bf16.mxu0 0
    %5498 = vmatpush1.bf16.msra.mxu0 0
    %5499 = vmatprep.subr.bf16.mxu0 0
    %5500 = vmatpush1.bf16.msra.mxu0 0
    %5501 = vmatprep.subr.bf16.mxu0 0
    %5502 = vmatpush1.bf16.msra.mxu0 0
    %5503 = vmatprep.mubr.bf16.mxu0 0
    %5504 = vmatmul.mubr.bf16.gmra.mrb[0].mxu0 %v5460
    %v5505 = vpop.f32.mrb[0].mxu0
    %v5506 = vadd.f32 0.0, %v5505
    %v5507 = vpop.f32.mrb[0].mxu0
    %v5508 = vpop.f32.mrb[0].mxu0
    %v5509 = vadd.f32 0.0, %v5508
    %v5510 = vpop.f32.mrb[0].mxu0
    %5511 = vmatprep.mubr.bf16.mxu0 0
    %5512 = vmatmul.mubr.bf16.gmra.mrb[0].mxu0 %v5463
    %v5513 = vpop.f32.mrb[0].mxu0
    %v5514 = vadd.f32 0.0, %v5513
    %v5515 = vpop.f32.mrb[0].mxu0
    %v5516 = vpop.f32.mrb[0].mxu0
    %v5517 = vadd.f32 0.0, %v5516
    %v5518 = vpop.f32.mrb[0].mxu0
    %5519 = vmatprep.mubr.bf16.mxu0 0
    %5520 = vmatmul.mubr.bf16.gmra.mrb[0].mxu0 %v5466
    %v5521 = vpop.f32.mrb[0].mxu0
    %v5522 = vadd.f32 0.0, %v5521
    %v5523 = vpop.f32.mrb[0].mxu0
    %v5524 = vpop.f32.mrb[0].mxu0
    %v5525 = vadd.f32 0.0, %v5524
    %v5526 = vpop.f32.mrb[0].mxu0
    %5527 = vmatprep.mubr.bf16.mxu0 0
    %5528 = vmatmul.mubr.bf16.gmra.mrb[0].mxu0 %v5469
    %v5529 = vpop.f32.mrb[0].mxu0
    %v5530 = vadd.f32 0.0, %v5529
    %v5531 = vpop.f32.mrb[0].mxu0
    %v5532 = vpop.f32.mrb[0].mxu0
    %v5533 = vadd.f32 0.0, %v5532
    %v5534 = vpop.f32.mrb[0].mxu0
    %5535 = vdwg.mxu0
    %v5536 = vadd.f32 %v5397, %v5506
    %v5537 = vadd.f32 %v5398, %v5509
    %v5538 = vadd.f32 %v5399, %v5514
    %v5539 = vadd.f32 %v5400, %v5517
    %v5540 = vadd.f32 %v5401, %v5522
    %v5541 = vadd.f32 %v5402, %v5525
    %v5542 = vadd.f32 %v5403, %v5530
    %v5543 = vadd.f32 %v5404, %v5533
    %v5544 = vpack.c.bf16 %v5412, %v5408
    %v5545 = vpack.c.bf16 %v5420, %v5416
    %v5546 = vpack.c.bf16 %v5428, %v5424
    %v5547 = vpack.c.bf16 %v5436, %v5432
    %v5548 = vld [vmem:[%s8 + $0x40] sm:$0xf]
    %v5549 = vld [vmem:[%s8 + $0x44] sm:$0xf]
    %v5550 = vld [vmem:[%s8 + $0x48] sm:$0xf]
    %v5551 = vld [vmem:[%s8 + $0x4c] sm:$0xf]
    %v5556 = vunpack.c.l.b16 %v5548
    %v5557 = vunpack.c.l.b16 %v5549
    %v5558 = vunpack.c.l.b16 %v5550
    %v5559 = vunpack.c.l.b16 %v5551
    %v5560 = vpack.c.b16 %v5557, %v5556
    %v5561 = vpack.c.b16 %v5559, %v5558
    %v5565 = vsel %vm64, %v5544, 0
    %v5568 = vsel %vm64, %v5545, 0
    %v5571 = vsel %vm64, %v5546, 0
    %v5574 = vsel %vm64, %v5547, 0
    %5576 = vmatprep.subr.bf16.mxu0 0
    %5577 = vmatpush1.bf16.msra.mxu0 %v5560
    %5578 = vmatprep.subr.bf16.mxu0 0
    %5579 = vmatpush1.bf16.msra.mxu0 %v5561
    %5580 = vmatprep.subr.bf16.mxu0 0
    %5581 = vmatpush1.bf16.msra.mxu0 0
    %5582 = vmatprep.subr.bf16.mxu0 0
    %5583 = vmatpush1.bf16.msra.mxu0 0
    %5584 = vmatprep.subr.bf16.mxu0 0
    %5585 = vmatpush1.bf16.msra.mxu0 0
    %5586 = vmatprep.subr.bf16.mxu0 0
    %5587 = vmatpush1.bf16.msra.mxu0 0
    %5588 = vmatprep.subr.bf16.mxu0 0
    %5589 = vmatpush1.bf16.msra.mxu0 0
    %5590 = vmatprep.subr.bf16.mxu0 0
    %5591 = vmatpush1.bf16.msra.mxu0 0
    %5592 = vmatprep.subr.bf16.mxu0 0
    %5593 = vmatpush1.bf16.msra.mxu0 0
    %5594 = vmatprep.subr.bf16.mxu0 0
    %5595 = vmatpush1.bf16.msra.mxu0 0
    %5596 = vmatprep.subr.bf16.mxu0 0
    %5597 = vmatpush1.bf16.msra.mxu0 0
    %5598 = vmatprep.subr.bf16.mxu0 0
    %5599 = vmatpush1.bf16.msra.mxu0 0
    %5600 = vmatprep.subr.bf16.mxu0 0
    %5601 = vmatpush1.bf16.msra.mxu0 0
    %5602 = vmatprep.subr.bf16.mxu0 0
    %5603 = vmatpush1.bf16.msra.mxu0 0
    %5604 = vmatprep.subr.bf16.mxu0 0
    %5605 = vmatpush1.bf16.msra.mxu0 0
    %5606 = vmatprep.subr.bf16.mxu0 0
    %5607 = vmatpush1.bf16.msra.mxu0 0
    %5608 = vmatprep.mubr.bf16.mxu0 0
    %5609 = vmatmul.mubr.bf16.gmra.mrb[0].mxu0 %v5565
    %v5610 = vpop.f32.mrb[0].mxu0
    %v5611 = vadd.f32 0.0, %v5610
    %v5612 = vpop.f32.mrb[0].mxu0
    %v5613 = vpop.f32.mrb[0].mxu0
    %v5614 = vadd.f32 0.0, %v5613
    %v5615 = vpop.f32.mrb[0].mxu0
    %5616 = vmatprep.mubr.bf16.mxu0 0
    %5617 = vmatmul.mubr.bf16.gmra.mrb[0].mxu0 %v5568
    %v5618 = vpop.f32.mrb[0].mxu0
    %v5619 = vadd.f32 0.0, %v5618
    %v5620 = vpop.f32.mrb[0].mxu0
    %v5621 = vpop.f32.mrb[0].mxu0
    %v5622 = vadd.f32 0.0, %v5621
    %v5623 = vpop.f32.mrb[0].mxu0
    %5624 = vmatprep.mubr.bf16.mxu0 0
    %5625 = vmatmul.mubr.bf16.gmra.mrb[0].mxu0 %v5571
    %v5626 = vpop.f32.mrb[0].mxu0
    %v5627 = vadd.f32 0.0, %v5626
    %v5628 = vpop.f32.mrb[0].mxu0
    %v5629 = vpop.f32.mrb[0].mxu0
    %v5630 = vadd.f32 0.0, %v5629
    %v5631 = vpop.f32.mrb[0].mxu0
    %5632 = vmatprep.mubr.bf16.mxu0 0
    %5633 = vmatmul.mubr.bf16.gmra.mrb[0].mxu0 %v5574
    %v5634 = vpop.f32.mrb[0].mxu0
    %v5635 = vadd.f32 0.0, %v5634
    %v5636 = vpop.f32.mrb[0].mxu0
    %v5637 = vpop.f32.mrb[0].mxu0
    %v5638 = vadd.f32 0.0, %v5637
    %v5639 = vpop.f32.mrb[0].mxu0
    %5640 = vdwg.mxu0
    %v5641 = vadd.f32 %v5536, %v5611
    %v5642 = vadd.f32 %v5537, %v5614
    %v5643 = vadd.f32 %v5538, %v5619
    %v5644 = vadd.f32 %v5539, %v5622
    %v5645 = vadd.f32 %v5540, %v5627
    %v5646 = vadd.f32 %v5541, %v5630
    %v5647 = vadd.f32 %v5542, %v5635
    %v5648 = vadd.f32 %v5543, %v5638
    %v5649 = vpack.c.bf16 %v5414, %v5410
    %v5650 = vpack.c.bf16 %v5422, %v5418
    %v5651 = vpack.c.bf16 %v5430, %v5426
    %v5652 = vpack.c.bf16 %v5438, %v5434
    %v5653 = vld [vmem:[%s8 + $0x70] sm:$0xf]
    %v5654 = vld [vmem:[%s8 + $0x74] sm:$0xf]
    %v5655 = vld [vmem:[%s8 + $0x78] sm:$0xf]
    %v5656 = vld [vmem:[%s8 + $0x7c] sm:$0xf]
    %v5661 = vunpack.c.l.b16 %v5653
    %v5662 = vunpack.c.l.b16 %v5654
    %v5663 = vunpack.c.l.b16 %v5655
    %v5664 = vunpack.c.l.b16 %v5656
    %v5665 = vpack.c.b16 %v5662, %v5661
    %v5666 = vpack.c.b16 %v5664, %v5663
    %v5670 = vsel %vm64, %v5649, 0
    %v5673 = vsel %vm64, %v5650, 0
    %v5676 = vsel %vm64, %v5651, 0
    %v5679 = vsel %vm64, %v5652, 0
    %5681 = vmatprep.subr.bf16.mxu0 0
    %5682 = vmatpush1.bf16.msra.mxu0 %v5665
    %5683 = vmatprep.subr.bf16.mxu0 0
    %5684 = vmatpush1.bf16.msra.mxu0 %v5666
    %5685 = vmatprep.subr.bf16.mxu0 0
    %5686 = vmatpush1.bf16.msra.mxu0 0
    %5687 = vmatprep.subr.bf16.mxu0 0
    %5688 = vmatpush1.bf16.msra.mxu0 0
    %5689 = vmatprep.subr.bf16.mxu0 0
    %5690 = vmatpush1.bf16.msra.mxu0 0
    %5691 = vmatprep.subr.bf16.mxu0 0
    %5692 = vmatpush1.bf16.msra.mxu0 0
    %5693 = vmatprep.subr.bf16.mxu0 0
    %5694 = vmatpush1.bf16.msra.mxu0 0
    %5695 = vmatprep.subr.bf16.mxu0 0
    %5696 = vmatpush1.bf16.msra.mxu0 0
    %5697 = vmatprep.subr.bf16.mxu0 0
    %5698 = vmatpush1.bf16.msra.mxu0 0
    %5699 = vmatprep.subr.bf16.mxu0 0
    %5700 = vmatpush1.bf16.msra.mxu0 0
    %5701 = vmatprep.subr.bf16.mxu0 0
    %5702 = vmatpush1.bf16.msra.mxu0 0
    %5703 = vmatprep.subr.bf16.mxu0 0
    %5704 = vmatpush1.bf16.msra.mxu0 0
    %5705 = vmatprep.subr.bf16.mxu0 0
    %5706 = vmatpush1.bf16.msra.mxu0 0
    %5707 = vmatprep.subr.bf16.mxu0 0
    %5708 = vmatpush1.bf16.msra.mxu0 0
    %5709 = vmatprep.subr.bf16.mxu0 0
    %5710 = vmatpush1.bf16.msra.mxu0 0
    %5711 = vmatprep.subr.bf16.mxu0 0
    %5712 = vmatpush1.bf16.msra.mxu0 0
    %5713 = vmatprep.mubr.bf16.mxu0 0
    %5714 = vmatmul.mubr.bf16.gmra.mrb[0].mxu0 %v5670
    %v5715 = vpop.f32.mrb[0].mxu0
    %v5716 = vadd.f32 0.0, %v5715
    %v5717 = vpop.f32.mrb[0].mxu0
    %v5718 = vpop.f32.mrb[0].mxu0
    %v5719 = vadd.f32 0.0, %v5718
    %v5720 = vpop.f32.mrb[0].mxu0
    %5721 = vmatprep.mubr.bf16.mxu0 0
    %5722 = vmatmul.mubr.bf16.gmra.mrb[0].mxu0 %v5673
    %v5723 = vpop.f32.mrb[0].mxu0
    %v5724 = vadd.f32 0.0, %v5723
    %v5725 = vpop.f32.mrb[0].mxu0
    %v5726 = vpop.f32.mrb[0].mxu0
    %v5727 = vadd.f32 0.0, %v5726
    %v5728 = vpop.f32.mrb[0].mxu0
    %5729 = vmatprep.mubr.bf16.mxu0 0
    %5730 = vmatmul.mubr.bf16.gmra.mrb[0].mxu0 %v5676
    %v5731 = vpop.f32.mrb[0].mxu0
    %v5732 = vadd.f32 0.0, %v5731
    %v5733 = vpop.f32.mrb[0].mxu0
    %v5734 = vpop.f32.mrb[0].mxu0
    %v5735 = vadd.f32 0.0, %v5734
    %v5736 = vpop.f32.mrb[0].mxu0
    %5737 = vmatprep.mubr.bf16.mxu0 0
    %5738 = vmatmul.mubr.bf16.gmra.mrb[0].mxu0 %v5679
    %v5739 = vpop.f32.mrb[0].mxu0
    %v5740 = vadd.f32 0.0, %v5739
    %v5741 = vpop.f32.mrb[0].mxu0
    %v5742 = vpop.f32.mrb[0].mxu0
    %v5743 = vadd.f32 0.0, %v5742
    %v5744 = vpop.f32.mrb[0].mxu0
    %5745 = vdwg.mxu0
    %v5746 = vadd.f32 %v5641, %v5716
    %v5747 = vadd.f32 %v5642, %v5719
    %v5748 = vadd.f32 %v5643, %v5724
    %v5749 = vadd.f32 %v5644, %v5727
    %v5750 = vadd.f32 %v5645, %v5732
    %v5751 = vadd.f32 %v5646, %v5735
    %v5752 = vadd.f32 %v5647, %v5740
    %v5753 = vadd.f32 %v5648, %v5743
    %s5754 = scalar_lea.vmem [#allocation3], 2
    %v5755 = vld [vmem:[%s5754] ss:$2 sm:$0xff]
    %s5756 = scalar_lea.vmem [#allocation3], 26
    %v5757 = vld [vmem:[%s5756] ss:$2 sm:$0xff]
    %s5758 = scalar_lea.vmem [#allocation3], 50
    %v5759 = vld [vmem:[%s5758] ss:$2 sm:$0xff]
    %s5760 = scalar_lea.vmem [#allocation3], 74
    %v5761 = vld [vmem:[%s5760] ss:$2 sm:$0xff]
    %s5762 = scalar_lea.vmem [#allocation3], 98
    %v5763 = vld [vmem:[%s5762] ss:$2 sm:$0xff]
    %s5764 = scalar_lea.vmem [#allocation3], 122
    %v5765 = vld [vmem:[%s5764] ss:$2 sm:$0xff]
    %s5766 = scalar_lea.vmem [#allocation3], 146
    %v5767 = vld [vmem:[%s5766] ss:$2 sm:$0xff]
    %s5768 = scalar_lea.vmem [#allocation3], 170
    %v5769 = vld [vmem:[%s5768] ss:$2 sm:$0xff]
    %s5770 = scalar_lea.vmem [#allocation3], 194
    %v5771 = vld [vmem:[%s5770] ss:$2 sm:$0xff]
    %s5772 = scalar_lea.vmem [#allocation3], 218
    %v5773 = vld [vmem:[%s5772] ss:$2 sm:$0xff]
    %s5774 = scalar_lea.vmem [#allocation3], 242
    %v5775 = vld [vmem:[%s5774] ss:$2 sm:$0xff]
    %s5776 = scalar_lea.vmem [#allocation3], 266
    %v5777 = vld [vmem:[%s5776] ss:$2 sm:$0xff]
    %s5778 = scalar_lea.vmem [#allocation3], 290
    %v5779 = vld [vmem:[%s5778] ss:$2 sm:$0xff]
    %s5780 = scalar_lea.vmem [#allocation3], 314
    %v5781 = vld [vmem:[%s5780] ss:$2 sm:$0xff]
    %s5782 = scalar_lea.vmem [#allocation3], 338
    %v5783 = vld [vmem:[%s5782] ss:$2 sm:$0xff]
    %s5784 = scalar_lea.vmem [#allocation3], 362
    %v5785 = vld [vmem:[%s5784] ss:$2 sm:$0xff]
    %s5786 = scalar_lea.vmem [#allocation3], 386
    %v5787 = vld [vmem:[%s5786] ss:$2 sm:$0xff]
    %v5788 = vpack.c.bf16 %v5759, %v5755
    %v5789 = vpack.c.bf16 %v5767, %v5763
    %v5790 = vpack.c.bf16 %v5775, %v5771
    %v5791 = vpack.c.bf16 %v5783, %v5779
    %v5792 = vld [vmem:[%s8 + $0x20] sm:$0xf]
    %v5793 = vld [vmem:[%s8 + $0x24] sm:$0xf]
    %v5794 = vld [vmem:[%s8 + $0x28] sm:$0xf]
    %v5795 = vld [vmem:[%s8 + $0x2c] sm:$0xf]
    %v5800 = vunpack.c.l.b16 %v5792
    %v5801 = vunpack.c.l.b16 %v5793
    %v5802 = vunpack.c.l.b16 %v5794
    %v5803 = vunpack.c.l.b16 %v5795
    %v5804 = vpack.c.b16 %v5801, %v5800
    %v5805 = vpack.c.b16 %v5803, %v5802
    %v5809 = vsel %vm64, %v5788, 0
    %v5812 = vsel %vm64, %v5789, 0
    %v5815 = vsel %vm64, %v5790, 0
    %v5818 = vsel %vm64, %v5791, 0
    %5820 = vmatprep.subr.bf16.mxu0 0
    %5821 = vmatpush1.bf16.msra.mxu0 %v5804
    %5822 = vmatprep.subr.bf16.mxu0 0
    %5823 = vmatpush1.bf16.msra.mxu0 %v5805
    %5824 = vmatprep.subr.bf16.mxu0 0
    %5825 = vmatpush1.bf16.msra.mxu0 0
    %5826 = vmatprep.subr.bf16.mxu0 0
    %5827 = vmatpush1.bf16.msra.mxu0 0
    %5828 = vmatprep.subr.bf16.mxu0 0
    %5829 = vmatpush1.bf16.msra.mxu0 0
    %5830 = vmatprep.subr.bf16.mxu0 0
    %5831 = vmatpush1.bf16.msra.mxu0 0
    %5832 = vmatprep.subr.bf16.mxu0 0
    %5833 = vmatpush1.bf16.msra.mxu0 0
    %5834 = vmatprep.subr.bf16.mxu0 0
    %5835 = vmatpush1.bf16.msra.mxu0 0
    %5836 = vmatprep.subr.bf16.mxu0 0
    %5837 = vmatpush1.bf16.msra.mxu0 0
    %5838 = vmatprep.subr.bf16.mxu0 0
    %5839 = vmatpush1.bf16.msra.mxu0 0
    %5840 = vmatprep.subr.bf16.mxu0 0
    %5841 = vmatpush1.bf16.msra.mxu0 0
    %5842 = vmatprep.subr.bf16.mxu0 0
    %5843 = vmatpush1.bf16.msra.mxu0 0
    %5844 = vmatprep.subr.bf16.mxu0 0
    %5845 = vmatpush1.bf16.msra.mxu0 0
    %5846 = vmatprep.subr.bf16.mxu0 0
    %5847 = vmatpush1.bf16.msra.mxu0 0
    %5848 = vmatprep.subr.bf16.mxu0 0
    %5849 = vmatpush1.bf16.msra.mxu0 0
    %5850 = vmatprep.subr.bf16.mxu0 0
    %5851 = vmatpush1.bf16.msra.mxu0 0
    %5852 = vmatprep.mubr.bf16.mxu0 0
    %5853 = vmatmul.mubr.bf16.gmra.mrb[0].mxu0 %v5809
    %v5854 = vpop.f32.mrb[0].mxu0
    %v5855 = vadd.f32 0.0, %v5854
    %v5856 = vpop.f32.mrb[0].mxu0
    %v5857 = vpop.f32.mrb[0].mxu0
    %v5858 = vadd.f32 0.0, %v5857
    %v5859 = vpop.f32.mrb[0].mxu0
    %5860 = vmatprep.mubr.bf16.mxu0 0
    %5861 = vmatmul.mubr.bf16.gmra.mrb[0].mxu0 %v5812
    %v5862 = vpop.f32.mrb[0].mxu0
    %v5863 = vadd.f32 0.0, %v5862
    %v5864 = vpop.f32.mrb[0].mxu0
    %v5865 = vpop.f32.mrb[0].mxu0
    %v5866 = vadd.f32 0.0, %v5865
    %v5867 = vpop.f32.mrb[0].mxu0
    %5868 = vmatprep.mubr.bf16.mxu0 0
    %5869 = vmatmul.mubr.bf16.gmra.mrb[0].mxu0 %v5815
    %v5870 = vpop.f32.mrb[0].mxu0
    %v5871 = vadd.f32 0.0, %v5870
    %v5872 = vpop.f32.mrb[0].mxu0
    %v5873 = vpop.f32.mrb[0].mxu0
    %v5874 = vadd.f32 0.0, %v5873
    %v5875 = vpop.f32.mrb[0].mxu0
    %5876 = vmatprep.mubr.bf16.mxu0 0
    %5877 = vmatmul.mubr.bf16.gmra.mrb[0].mxu0 %v5818
    %v5878 = vpop.f32.mrb[0].mxu0
    %v5879 = vadd.f32 0.0, %v5878
    %v5880 = vpop.f32.mrb[0].mxu0
    %v5881 = vpop.f32.mrb[0].mxu0
    %v5882 = vadd.f32 0.0, %v5881
    %v5883 = vpop.f32.mrb[0].mxu0
    %5884 = vdwg.mxu0
    %v5885 = vadd.f32 %v5746, %v5855
    %v5886 = vadd.f32 %v5747, %v5858
    %v5887 = vadd.f32 %v5748, %v5863
    %v5888 = vadd.f32 %v5749, %v5866
    %v5889 = vadd.f32 %v5750, %v5871
    %v5890 = vadd.f32 %v5751, %v5874
    %v5891 = vadd.f32 %v5752, %v5879
    %v5892 = vadd.f32 %v5753, %v5882
    %v5893 = vpack.c.bf16 %v5761, %v5757
    %v5894 = vpack.c.bf16 %v5769, %v5765
    %v5895 = vpack.c.bf16 %v5777, %v5773
    %v5896 = vpack.c.bf16 %v5785, %v5781
    %v5897 = vld [vmem:[%s8 + $0x50] sm:$0xf]
    %v5898 = vld [vmem:[%s8 + $0x54] sm:$0xf]
    %v5899 = vld [vmem:[%s8 + $0x58] sm:$0xf]
    %v5900 = vld [vmem:[%s8 + $0x5c] sm:$0xf]
    %v5905 = vunpack.c.l.b16 %v5897
    %v5906 = vunpack.c.l.b16 %v5898
    %v5907 = vunpack.c.l.b16 %v5899
    %v5908 = vunpack.c.l.b16 %v5900
    %v5909 = vpack.c.b16 %v5906, %v5905
    %v5910 = vpack.c.b16 %v5908, %v5907
    %v5914 = vsel %vm64, %v5893, 0
    %v5917 = vsel %vm64, %v5894, 0
    %v5920 = vsel %vm64, %v5895, 0
    %v5923 = vsel %vm64, %v5896, 0
    %5925 = vmatprep.subr.bf16.mxu0 0
    %5926 = vmatpush1.bf16.msra.mxu0 %v5909
    %5927 = vmatprep.subr.bf16.mxu0 0
    %5928 = vmatpush1.bf16.msra.mxu0 %v5910
    %5929 = vmatprep.subr.bf16.mxu0 0
    %5930 = vmatpush1.bf16.msra.mxu0 0
    %5931 = vmatprep.subr.bf16.mxu0 0
    %5932 = vmatpush1.bf16.msra.mxu0 0
    %5933 = vmatprep.subr.bf16.mxu0 0
    %5934 = vmatpush1.bf16.msra.mxu0 0
    %5935 = vmatprep.subr.bf16.mxu0 0
    %5936 = vmatpush1.bf16.msra.mxu0 0
    %5937 = vmatprep.subr.bf16.mxu0 0
    %5938 = vmatpush1.bf16.msra.mxu0 0
    %5939 = vmatprep.subr.bf16.mxu0 0
    %5940 = vmatpush1.bf16.msra.mxu0 0
    %5941 = vmatprep.subr.bf16.mxu0 0
    %5942 = vmatpush1.bf16.msra.mxu0 0
    %5943 = vmatprep.subr.bf16.mxu0 0
    %5944 = vmatpush1.bf16.msra.mxu0 0
    %5945 = vmatprep.subr.bf16.mxu0 0
    %5946 = vmatpush1.bf16.msra.mxu0 0
    %5947 = vmatprep.subr.bf16.mxu0 0
    %5948 = vmatpush1.bf16.msra.mxu0 0
    %5949 = vmatprep.subr.bf16.mxu0 0
    %5950 = vmatpush1.bf16.msra.mxu0 0
    %5951 = vmatprep.subr.bf16.mxu0 0
    %5952 = vmatpush1.bf16.msra.mxu0 0
    %5953 = vmatprep.subr.bf16.mxu0 0
    %5954 = vmatpush1.bf16.msra.mxu0 0
    %5955 = vmatprep.subr.bf16.mxu0 0
    %5956 = vmatpush1.bf16.msra.mxu0 0
    %5957 = vmatprep.mubr.bf16.mxu0 0
    %5958 = vmatmul.mubr.bf16.gmra.mrb[0].mxu0 %v5914
    %v5959 = vpop.f32.mrb[0].mxu0
    %v5960 = vadd.f32 0.0, %v5959
    %v5961 = vpop.f32.mrb[0].mxu0
    %v5962 = vpop.f32.mrb[0].mxu0
    %v5963 = vadd.f32 0.0, %v5962
    %v5964 = vpop.f32.mrb[0].mxu0
    %5965 = vmatprep.mubr.bf16.mxu0 0
    %5966 = vmatmul.mubr.bf16.gmra.mrb[0].mxu0 %v5917
    %v5967 = vpop.f32.mrb[0].mxu0
    %v5968 = vadd.f32 0.0, %v5967
    %v5969 = vpop.f32.mrb[0].mxu0
    %v5970 = vpop.f32.mrb[0].mxu0
    %v5971 = vadd.f32 0.0, %v5970
    %v5972 = vpop.f32.mrb[0].mxu0
    %5973 = vmatprep.mubr.bf16.mxu0 0
    %5974 = vmatmul.mubr.bf16.gmra.mrb[0].mxu0 %v5920
    %v5975 = vpop.f32.mrb[0].mxu0
    %v5976 = vadd.f32 0.0, %v5975
    %v5977 = vpop.f32.mrb[0].mxu0
    %v5978 = vpop.f32.mrb[0].mxu0
    %v5979 = vadd.f32 0.0, %v5978
    %v5980 = vpop.f32.mrb[0].mxu0
    %5981 = vmatprep.mubr.bf16.mxu0 0
    %5982 = vmatmul.mubr.bf16.gmra.mrb[0].mxu0 %v5923
    %v5983 = vpop.f32.mrb[0].mxu0
    %v5984 = vadd.f32 0.0, %v5983
    %v5985 = vpop.f32.mrb[0].mxu0
    %v5986 = vpop.f32.mrb[0].mxu0
    %v5987 = vadd.f32 0.0, %v5986
    %v5988 = vpop.f32.mrb[0].mxu0
    %5989 = vdwg.mxu0
    %v5990 = vadd.f32 %v5885, %v5960
    %v5991 = vadd.f32 %v5886, %v5963
    %v5992 = vadd.f32 %v5887, %v5968
    %v5993 = vadd.f32 %v5888, %v5971
    %v5994 = vadd.f32 %v5889, %v5976
    %v5995 = vadd.f32 %v5890, %v5979
    %v5996 = vadd.f32 %v5891, %v5984
    %v5997 = vadd.f32 %v5892, %v5987
    %v5998 = vpack.c.bf16 %v5763, %v5759
    %v5999 = vpack.c.bf16 %v5771, %v5767
    %v6000 = vpack.c.bf16 %v5779, %v5775
    %v6001 = vpack.c.bf16 %v5787, %v5783
    %v6002 = vld [vmem:[%s8 + $0x80] sm:$0xf]
    %v6003 = vld [vmem:[%s8 + $0x84] sm:$0xf]
    %v6004 = vld [vmem:[%s8 + $0x88] sm:$0xf]
    %v6005 = vld [vmem:[%s8 + $0x8c] sm:$0xf]
    %v6010 = vunpack.c.l.b16 %v6002
    %v6011 = vunpack.c.l.b16 %v6003
    %v6012 = vunpack.c.l.b16 %v6004
    %v6013 = vunpack.c.l.b16 %v6005
    %v6014 = vpack.c.b16 %v6011, %v6010
    %v6015 = vpack.c.b16 %v6013, %v6012
    %v6019 = vsel %vm64, %v5998, 0
    %v6022 = vsel %vm64, %v5999, 0
    %v6025 = vsel %vm64, %v6000, 0
    %v6028 = vsel %vm64, %v6001, 0
    %6030 = vmatprep.subr.bf16.mxu0 0
    %6031 = vmatpush1.bf16.msra.mxu0 %v6014
    %6032 = vmatprep.subr.bf16.mxu0 0
    %6033 = vmatpush1.bf16.msra.mxu0 %v6015
    %6034 = vmatprep.subr.bf16.mxu0 0
    %6035 = vmatpush1.bf16.msra.mxu0 0
    %6036 = vmatprep.subr.bf16.mxu0 0
    %6037 = vmatpush1.bf16.msra.mxu0 0
    %6038 = vmatprep.subr.bf16.mxu0 0
    %6039 = vmatpush1.bf16.msra.mxu0 0
    %6040 = vmatprep.subr.bf16.mxu0 0
    %6041 = vmatpush1.bf16.msra.mxu0 0
    %6042 = vmatprep.subr.bf16.mxu0 0
    %6043 = vmatpush1.bf16.msra.mxu0 0
    %6044 = vmatprep.subr.bf16.mxu0 0
    %6045 = vmatpush1.bf16.msra.mxu0 0
    %6046 = vmatprep.subr.bf16.mxu0 0
    %6047 = vmatpush1.bf16.msra.mxu0 0
    %6048 = vmatprep.subr.bf16.mxu0 0
    %6049 = vmatpush1.bf16.msra.mxu0 0
    %6050 = vmatprep.subr.bf16.mxu0 0
    %6051 = vmatpush1.bf16.msra.mxu0 0
    %6052 = vmatprep.subr.bf16.mxu0 0
    %6053 = vmatpush1.bf16.msra.mxu0 0
    %6054 = vmatprep.subr.bf16.mxu0 0
    %6055 = vmatpush1.bf16.msra.mxu0 0
    %6056 = vmatprep.subr.bf16.mxu0 0
    %6057 = vmatpush1.bf16.msra.mxu0 0
    %6058 = vmatprep.subr.bf16.mxu0 0
    %6059 = vmatpush1.bf16.msra.mxu0 0
    %6060 = vmatprep.subr.bf16.mxu0 0
    %6061 = vmatpush1.bf16.msra.mxu0 0
    %6062 = vmatprep.mubr.bf16.mxu0 0
    %6063 = vmatmul.mubr.bf16.gmra.mrb[0].mxu0 %v6019
    %v6064 = vpop.f32.mrb[0].mxu0
    %v6065 = vadd.f32 0.0, %v6064
    %v6066 = vpop.f32.mrb[0].mxu0
    %v6067 = vpop.f32.mrb[0].mxu0
    %v6068 = vadd.f32 0.0, %v6067
    %v6069 = vpop.f32.mrb[0].mxu0
    %6070 = vmatprep.mubr.bf16.mxu0 0
    %6071 = vmatmul.mubr.bf16.gmra.mrb[0].mxu0 %v6022
    %v6072 = vpop.f32.mrb[0].mxu0
    %v6073 = vadd.f32 0.0, %v6072
    %v6074 = vpop.f32.mrb[0].mxu0
    %v6075 = vpop.f32.mrb[0].mxu0
    %v6076 = vadd.f32 0.0, %v6075
    %v6077 = vpop.f32.mrb[0].mxu0
    %6078 = vmatprep.mubr.bf16.mxu0 0
    %6079 = vmatmul.mubr.bf16.gmra.mrb[0].mxu0 %v6025
    %v6080 = vpop.f32.mrb[0].mxu0
    %v6081 = vadd.f32 0.0, %v6080
    %v6082 = vpop.f32.mrb[0].mxu0
    %v6083 = vpop.f32.mrb[0].mxu0
    %v6084 = vadd.f32 0.0, %v6083
    %v6085 = vpop.f32.mrb[0].mxu0
    %6086 = vmatprep.mubr.bf16.mxu0 0
    %6087 = vmatmul.mubr.bf16.gmra.mrb[0].mxu0 %v6028
    %v6088 = vpop.f32.mrb[0].mxu0
    %v6089 = vadd.f32 0.0, %v6088
    %v6090 = vpop.f32.mrb[0].mxu0
    %v6091 = vpop.f32.mrb[0].mxu0
    %v6092 = vadd.f32 0.0, %v6091
    %v6093 = vpop.f32.mrb[0].mxu0
    %6094 = vdwg.mxu0
    %v6095 = vadd.f32 %v5990, %v6065
    %v6096 = vadd.f32 %v5991, %v6068
    %v6097 = vadd.f32 %v5992, %v6073
    %v6098 = vadd.f32 %v5993, %v6076
    %v6099 = vadd.f32 %v5994, %v6081
    %v6100 = vadd.f32 %v5995, %v6084
    %v6101 = vadd.f32 %v5996, %v6089
    %v6102 = vadd.f32 %v5997, %v6092
    %v6103 = vmax.f32 %v6095, 0.0
    %v6104 = vmax.f32 %v6096, 0.0
    %v6105 = vmax.f32 %v6097, 0.0
    %v6106 = vmax.f32 %v6098, 0.0
    %v6107 = vmax.f32 %v6099, 0.0
    %v6108 = vmax.f32 %v6100, 0.0
    %v6109 = vmax.f32 %v6101, 0.0
    %v6110 = vmax.f32 %v6102, 0.0
    %s6111 = scalar_lea.vmem [#allocation4], 16
    %6112 = vst.msk [vmem:[%s6111 + $0x1] sm:$0xff] %vm64, %v6103
    %6113 = vst.msk [vmem:[%s6111 + $0x11] sm:$0xff] %vm64, %v6104
    %6114 = vst.msk [vmem:[%s6111 + $0x21] sm:$0xff] %vm64, %v6105
    %6115 = vst.msk [vmem:[%s6111 + $0x31] sm:$0xff] %vm64, %v6106
    %6116 = vst.msk [vmem:[%s6111 + $0x41] sm:$0xff] %vm64, %v6107
    %6117 = vst.msk [vmem:[%s6111 + $0x51] sm:$0xff] %vm64, %v6108
    %6118 = vst.msk [vmem:[%s6111 + $0x61] sm:$0xff] %vm64, %v6109
    %6119 = vst.msk [vmem:[%s6111 + $0x71] sm:$0xff] %vm64, %v6110
    %v6120 = vld [vmem:[%s11] sm:$0xf]
    %v6121 = vld [vmem:[%s11 + $0x4] sm:$0xf]
    %v6122 = vld [vmem:[%s13] sm:$0xf]
    %v6123 = vld [vmem:[%s13 + $0x4] sm:$0xf]
    %v6124 = vld [vmem:[%s13 + $0x8] sm:$0xf]
    %v6125 = vld [vmem:[%s13 + $0xc] sm:$0xf]
    %v6126 = vld [vmem:[%s14] sm:$0x1]
    %v6128 = vlaneseq
    %v6129 = vshrl.u32 %v6128, 7
    %v6130 = vsub.s32 0, %v6129
    %v6131 = vrot.slane %v6126, %v6130
    %v6135 = vunpack.c.l.b16 %v6120
    %v6136 = vunpack.c.l.b16 %v6121
    %v6137 = vpack.c.b16 %v6136, %v6135
    %v6142 = vunpack.c.l.b16 %v6122
    %v6143 = vunpack.c.l.b16 %v6123
    %v6144 = vunpack.c.l.b16 %v6124
    %v6145 = vunpack.c.l.b16 %v6125
    %v6146 = vpack.c.b16 %v6143, %v6142
    %v6147 = vpack.c.b16 %v6145, %v6144
    %v6151 = vsel %vm64, %v6137, 0
    %6153 = vmatprep.subr.bf16.mxu0 0
    %6154 = vmatpush1.bf16.msra.mxu0 %v6146
    %6155 = vmatprep.subr.bf16.mxu0 0
    %6156 = vmatpush1.bf16.msra.mxu0 %v6147
    %6157 = vmatprep.subr.bf16.mxu0 0
    %6158 = vmatpush1.bf16.msra.mxu0 0
    %6159 = vmatprep.subr.bf16.mxu0 0
    %6160 = vmatpush1.bf16.msra.mxu0 0
    %6161 = vmatprep.subr.bf16.mxu0 0
    %6162 = vmatpush1.bf16.msra.mxu0 0
    %6163 = vmatprep.subr.bf16.mxu0 0
    %6164 = vmatpush1.bf16.msra.mxu0 0
    %6165 = vmatprep.subr.bf16.mxu0 0
    %6166 = vmatpush1.bf16.msra.mxu0 0
    %6167 = vmatprep.subr.bf16.mxu0 0
    %6168 = vmatpush1.bf16.msra.mxu0 0
    %6169 = vmatprep.subr.bf16.mxu0 0
    %6170 = vmatpush1.bf16.msra.mxu0 0
    %6171 = vmatprep.subr.bf16.mxu0 0
    %6172 = vmatpush1.bf16.msra.mxu0 0
    %6173 = vmatprep.subr.bf16.mxu0 0
    %6174 = vmatpush1.bf16.msra.mxu0 0
    %6175 = vmatprep.subr.bf16.mxu0 0
    %6176 = vmatpush1.bf16.msra.mxu0 0
    %6177 = vmatprep.subr.bf16.mxu0 0
    %6178 = vmatpush1.bf16.msra.mxu0 0
    %6179 = vmatprep.subr.bf16.mxu0 0
    %6180 = vmatpush1.bf16.msra.mxu0 0
    %6181 = vmatprep.subr.bf16.mxu0 0
    %6182 = vmatpush1.bf16.msra.mxu0 0
    %6183 = vmatprep.subr.bf16.mxu0 0
    %6184 = vmatpush1.bf16.msra.mxu0 0
    %6185 = vmatprep.mubr.bf16.mxu0 0
    %6186 = vmatmul.mubr.bf16.gmra.mrb[0].mxu0 %v6151
    %v6187 = vpop.f32.mrb[0].mxu0
    %v6188 = vadd.f32 %v6131, %v6187
    %v6189 = vpop.f32.mrb[0].mxu0
    %v6190 = vpop.f32.mrb[0].mxu0
    %v6191 = vadd.f32 %v6131, %v6190
    %v6192 = vpop.f32.mrb[0].mxu0
    %6193 = vdwg.mxu0
    %v6194 = vld [vmem:[#allocation4] ss:$2 sm:$0xf]
    %s6195 = scalar_lea.vmem [#allocation4], 16
    %v6196 = vld [vmem:[%s6195] ss:$2 sm:$0xf]
    %s6197 = scalar_lea.vmem [#allocation4], 32
    %v6198 = vld [vmem:[%s6197] ss:$2 sm:$0xf]
    %s6199 = scalar_lea.vmem [#allocation4], 48
    %v6200 = vld [vmem:[%s6199] ss:$2 sm:$0xf]
    %s6201 = scalar_lea.vmem [#allocation4], 64
    %v6202 = vld [vmem:[%s6201] ss:$2 sm:$0xf]
    %s6203 = scalar_lea.vmem [#allocation4], 80
    %v6204 = vld [vmem:[%s6203] ss:$2 sm:$0xf]
    %s6205 = scalar_lea.vmem [#allocation4], 96
    %v6206 = vld [vmem:[%s6205] ss:$2 sm:$0xf]
    %s6207 = scalar_lea.vmem [#allocation4], 112
    %v6208 = vld [vmem:[%s6207] ss:$2 sm:$0xf]
    %s6209 = scalar_lea.vmem [#allocation4], 128
    %v6210 = vld [vmem:[%s6209] ss:$2 sm:$0xf]
    %v6215 = vcombine.low %v6194, %v6198
    %v6216 = vcombine.low %v6202, %v6206
    %v6219 = vpack.c.bf16 %v6216, %v6215
    %v6220 = vld [vmem:[%s12] sm:$0xf]
    %v6221 = vld [vmem:[%s12 + $0x4] sm:$0xf]
    %v6222 = vld [vmem:[%s12 + $0x8] sm:$0xf]
    %v6223 = vld [vmem:[%s12 + $0xc] sm:$0xf]
    %v6228 = vunpack.c.l.b16 %v6220
    %v6229 = vunpack.c.l.b16 %v6221
    %v6230 = vunpack.c.l.b16 %v6222
    %v6231 = vunpack.c.l.b16 %v6223
    %v6232 = vpack.c.b16 %v6229, %v6228
    %v6233 = vpack.c.b16 %v6231, %v6230
    %v6237 = vsel %vm64, %v6219, 0
    %6239 = vmatprep.subr.bf16.mxu0 0
    %6240 = vmatpush1.bf16.msra.mxu0 %v6232
    %6241 = vmatprep.subr.bf16.mxu0 0
    %6242 = vmatpush1.bf16.msra.mxu0 %v6233
    %6243 = vmatprep.subr.bf16.mxu0 0
    %6244 = vmatpush1.bf16.msra.mxu0 0
    %6245 = vmatprep.subr.bf16.mxu0 0
    %6246 = vmatpush1.bf16.msra.mxu0 0
    %6247 = vmatprep.subr.bf16.mxu0 0
    %6248 = vmatpush1.bf16.msra.mxu0 0
    %6249 = vmatprep.subr.bf16.mxu0 0
    %6250 = vmatpush1.bf16.msra.mxu0 0
    %6251 = vmatprep.subr.bf16.mxu0 0
    %6252 = vmatpush1.bf16.msra.mxu0 0
    %6253 = vmatprep.subr.bf16.mxu0 0
    %6254 = vmatpush1.bf16.msra.mxu0 0
    %6255 = vmatprep.subr.bf16.mxu0 0
    %6256 = vmatpush1.bf16.msra.mxu0 0
    %6257 = vmatprep.subr.bf16.mxu0 0
    %6258 = vmatpush1.bf16.msra.mxu0 0
    %6259 = vmatprep.subr.bf16.mxu0 0
    %6260 = vmatpush1.bf16.msra.mxu0 0
    %6261 = vmatprep.subr.bf16.mxu0 0
    %6262 = vmatpush1.bf16.msra.mxu0 0
    %6263 = vmatprep.subr.bf16.mxu0 0
    %6264 = vmatpush1.bf16.msra.mxu0 0
    %6265 = vmatprep.subr.bf16.mxu0 0
    %6266 = vmatpush1.bf16.msra.mxu0 0
    %6267 = vmatprep.subr.bf16.mxu0 0
    %6268 = vmatpush1.bf16.msra.mxu0 0
    %6269 = vmatprep.subr.bf16.mxu0 0
    %6270 = vmatpush1.bf16.msra.mxu0 0
    %6271 = vmatprep.mubr.bf16.mxu0 0
    %6272 = vmatmul.mubr.bf16.gmra.mrb[0].mxu0 %v6237
    %v6273 = vpop.f32.mrb[0].mxu0
    %v6274 = vadd.f32 0.0, %v6273
    %v6275 = vpop.f32.mrb[0].mxu0
    %v6276 = vpop.f32.mrb[0].mxu0
    %v6277 = vadd.f32 0.0, %v6276
    %v6278 = vpop.f32.mrb[0].mxu0
    %6279 = vdwg.mxu0
    %v6280 = vadd.f32 %v6188, %v6274
    %v6281 = vadd.f32 %v6191, %v6277
    %v6286 = vcombine.low %v6196, %v6200
    %v6287 = vcombine.low %v6204, %v6208
    %v6290 = vpack.c.bf16 %v6287, %v6286
    %v6291 = vld [vmem:[%s12 + $0x30] sm:$0xf]
    %v6292 = vld [vmem:[%s12 + $0x34] sm:$0xf]
    %v6293 = vld [vmem:[%s12 + $0x38] sm:$0xf]
    %v6294 = vld [vmem:[%s12 + $0x3c] sm:$0xf]
    %v6299 = vunpack.c.l.b16 %v6291
    %v6300 = vunpack.c.l.b16 %v6292
    %v6301 = vunpack.c.l.b16 %v6293
    %v6302 = vunpack.c.l.b16 %v6294
    %v6303 = vpack.c.b16 %v6300, %v6299
    %v6304 = vpack.c.b16 %v6302, %v6301
    %v6308 = vsel %vm64, %v6290, 0
    %6310 = vmatprep.subr.bf16.mxu0 0
    %6311 = vmatpush1.bf16.msra.mxu0 %v6303
    %6312 = vmatprep.subr.bf16.mxu0 0
    %6313 = vmatpush1.bf16.msra.mxu0 %v6304
    %6314 = vmatprep.subr.bf16.mxu0 0
    %6315 = vmatpush1.bf16.msra.mxu0 0
    %6316 = vmatprep.subr.bf16.mxu0 0
    %6317 = vmatpush1.bf16.msra.mxu0 0
    %6318 = vmatprep.subr.bf16.mxu0 0
    %6319 = vmatpush1.bf16.msra.mxu0 0
    %6320 = vmatprep.subr.bf16.mxu0 0
    %6321 = vmatpush1.bf16.msra.mxu0 0
    %6322 = vmatprep.subr.bf16.mxu0 0
    %6323 = vmatpush1.bf16.msra.mxu0 0
    %6324 = vmatprep.subr.bf16.mxu0 0
    %6325 = vmatpush1.bf16.msra.mxu0 0
    %6326 = vmatprep.subr.bf16.mxu0 0
    %6327 = vmatpush1.bf16.msra.mxu0 0
    %6328 = vmatprep.subr.bf16.mxu0 0
    %6329 = vmatpush1.bf16.msra.mxu0 0
    %6330 = vmatprep.subr.bf16.mxu0 0
    %6331 = vmatpush1.bf16.msra.mxu0 0
    %6332 = vmatprep.subr.bf16.mxu0 0
    %6333 = vmatpush1.bf16.msra.mxu0 0
    %6334 = vmatprep.subr.bf16.mxu0 0
    %6335 = vmatpush1.bf16.msra.mxu0 0
    %6336 = vmatprep.subr.bf16.mxu0 0
    %6337 = vmatpush1.bf16.msra.mxu0 0
    %6338 = vmatprep.subr.bf16.mxu0 0
    %6339 = vmatpush1.bf16.msra.mxu0 0
    %6340 = vmatprep.subr.bf16.mxu0 0
    %6341 = vmatpush1.bf16.msra.mxu0 0
    %6342 = vmatprep.mubr.bf16.mxu0 0
    %6343 = vmatmul.mubr.bf16.gmra.mrb[0].mxu0 %v6308
    %v6344 = vpop.f32.mrb[0].mxu0
    %v6345 = vadd.f32 0.0, %v6344
    %v6346 = vpop.f32.mrb[0].mxu0
    %v6347 = vpop.f32.mrb[0].mxu0
    %v6348 = vadd.f32 0.0, %v6347
    %v6349 = vpop.f32.mrb[0].mxu0
    %6350 = vdwg.mxu0
    %v6351 = vadd.f32 %v6280, %v6345
    %v6352 = vadd.f32 %v6281, %v6348
    %v6354 = vcombine.low %v6198, %v6202
    %v6355 = vcombine.low %v6206, %v6210
    %v6358 = vpack.c.bf16 %v6355, %v6354
    %v6359 = vld [vmem:[%s12 + $0x60] sm:$0xf]
    %v6360 = vld [vmem:[%s12 + $0x64] sm:$0xf]
    %v6361 = vld [vmem:[%s12 + $0x68] sm:$0xf]
    %v6362 = vld [vmem:[%s12 + $0x6c] sm:$0xf]
    %v6367 = vunpack.c.l.b16 %v6359
    %v6368 = vunpack.c.l.b16 %v6360
    %v6369 = vunpack.c.l.b16 %v6361
    %v6370 = vunpack.c.l.b16 %v6362
    %v6371 = vpack.c.b16 %v6368, %v6367
    %v6372 = vpack.c.b16 %v6370, %v6369
    %v6376 = vsel %vm64, %v6358, 0
    %6378 = vmatprep.subr.bf16.mxu0 0
    %6379 = vmatpush1.bf16.msra.mxu0 %v6371
    %6380 = vmatprep.subr.bf16.mxu0 0
    %6381 = vmatpush1.bf16.msra.mxu0 %v6372
    %6382 = vmatprep.subr.bf16.mxu0 0
    %6383 = vmatpush1.bf16.msra.mxu0 0
    %6384 = vmatprep.subr.bf16.mxu0 0
    %6385 = vmatpush1.bf16.msra.mxu0 0
    %6386 = vmatprep.subr.bf16.mxu0 0
    %6387 = vmatpush1.bf16.msra.mxu0 0
    %6388 = vmatprep.subr.bf16.mxu0 0
    %6389 = vmatpush1.bf16.msra.mxu0 0
    %6390 = vmatprep.subr.bf16.mxu0 0
    %6391 = vmatpush1.bf16.msra.mxu0 0
    %6392 = vmatprep.subr.bf16.mxu0 0
    %6393 = vmatpush1.bf16.msra.mxu0 0
    %6394 = vmatprep.subr.bf16.mxu0 0
    %6395 = vmatpush1.bf16.msra.mxu0 0
    %6396 = vmatprep.subr.bf16.mxu0 0
    %6397 = vmatpush1.bf16.msra.mxu0 0
    %6398 = vmatprep.subr.bf16.mxu0 0
    %6399 = vmatpush1.bf16.msra.mxu0 0
    %6400 = vmatprep.subr.bf16.mxu0 0
    %6401 = vmatpush1.bf16.msra.mxu0 0
    %6402 = vmatprep.subr.bf16.mxu0 0
    %6403 = vmatpush1.bf16.msra.mxu0 0
    %6404 = vmatprep.subr.bf16.mxu0 0
    %6405 = vmatpush1.bf16.msra.mxu0 0
    %6406 = vmatprep.subr.bf16.mxu0 0
    %6407 = vmatpush1.bf16.msra.mxu0 0
    %6408 = vmatprep.subr.bf16.mxu0 0
    %6409 = vmatpush1.bf16.msra.mxu0 0
    %6410 = vmatprep.mubr.bf16.mxu0 0
    %6411 = vmatmul.mubr.bf16.gmra.mrb[0].mxu0 %v6376
    %v6412 = vpop.f32.mrb[0].mxu0
    %v6413 = vadd.f32 0.0, %v6412
    %v6414 = vpop.f32.mrb[0].mxu0
    %v6415 = vpop.f32.mrb[0].mxu0
    %v6416 = vadd.f32 0.0, %v6415
    %v6417 = vpop.f32.mrb[0].mxu0
    %6418 = vdwg.mxu0
    %v6419 = vadd.f32 %v6351, %v6413
    %v6420 = vadd.f32 %v6352, %v6416
    %s6421 = scalar_lea.vmem [#allocation4], 1
    %v6422 = vld [vmem:[%s6421] ss:$2 sm:$0xf]
    %s6423 = scalar_lea.vmem [#allocation4], 17
    %v6424 = vld [vmem:[%s6423] ss:$2 sm:$0xf]
    %s6425 = scalar_lea.vmem [#allocation4], 33
    %v6426 = vld [vmem:[%s6425] ss:$2 sm:$0xf]
    %s6427 = scalar_lea.vmem [#allocation4], 49
    %v6428 = vld [vmem:[%s6427] ss:$2 sm:$0xf]
    %s6429 = scalar_lea.vmem [#allocation4], 65
    %v6430 = vld [vmem:[%s6429] ss:$2 sm:$0xf]
    %s6431 = scalar_lea.vmem [#allocation4], 81
    %v6432 = vld [vmem:[%s6431] ss:$2 sm:$0xf]
    %s6433 = scalar_lea.vmem [#allocation4], 97
    %v6434 = vld [vmem:[%s6433] ss:$2 sm:$0xf]
    %s6435 = scalar_lea.vmem [#allocation4], 113
    %v6436 = vld [vmem:[%s6435] ss:$2 sm:$0xf]
    %s6437 = scalar_lea.vmem [#allocation4], 129
    %v6438 = vld [vmem:[%s6437] ss:$2 sm:$0xf]
    %v6443 = vcombine.low %v6422, %v6426
    %v6444 = vcombine.low %v6430, %v6434
    %v6447 = vpack.c.bf16 %v6444, %v6443
    %v6448 = vld [vmem:[%s12 + $0x10] sm:$0xf]
    %v6449 = vld [vmem:[%s12 + $0x14] sm:$0xf]
    %v6450 = vld [vmem:[%s12 + $0x18] sm:$0xf]
    %v6451 = vld [vmem:[%s12 + $0x1c] sm:$0xf]
    %v6456 = vunpack.c.l.b16 %v6448
    %v6457 = vunpack.c.l.b16 %v6449
    %v6458 = vunpack.c.l.b16 %v6450
    %v6459 = vunpack.c.l.b16 %v6451
    %v6460 = vpack.c.b16 %v6457, %v6456
    %v6461 = vpack.c.b16 %v6459, %v6458
    %v6465 = vsel %vm64, %v6447, 0
    %6467 = vmatprep.subr.bf16.mxu0 0
    %6468 = vmatpush1.bf16.msra.mxu0 %v6460
    %6469 = vmatprep.subr.bf16.mxu0 0
    %6470 = vmatpush1.bf16.msra.mxu0 %v6461
    %6471 = vmatprep.subr.bf16.mxu0 0
    %6472 = vmatpush1.bf16.msra.mxu0 0
    %6473 = vmatprep.subr.bf16.mxu0 0
    %6474 = vmatpush1.bf16.msra.mxu0 0
    %6475 = vmatprep.subr.bf16.mxu0 0
    %6476 = vmatpush1.bf16.msra.mxu0 0
    %6477 = vmatprep.subr.bf16.mxu0 0
    %6478 = vmatpush1.bf16.msra.mxu0 0
    %6479 = vmatprep.subr.bf16.mxu0 0
    %6480 = vmatpush1.bf16.msra.mxu0 0
    %6481 = vmatprep.subr.bf16.mxu0 0
    %6482 = vmatpush1.bf16.msra.mxu0 0
    %6483 = vmatprep.subr.bf16.mxu0 0
    %6484 = vmatpush1.bf16.msra.mxu0 0
    %6485 = vmatprep.subr.bf16.mxu0 0
    %6486 = vmatpush1.bf16.msra.mxu0 0
    %6487 = vmatprep.subr.bf16.mxu0 0
    %6488 = vmatpush1.bf16.msra.mxu0 0
    %6489 = vmatprep.subr.bf16.mxu0 0
    %6490 = vmatpush1.bf16.msra.mxu0 0
    %6491 = vmatprep.subr.bf16.mxu0 0
    %6492 = vmatpush1.bf16.msra.mxu0 0
    %6493 = vmatprep.subr.bf16.mxu0 0
    %6494 = vmatpush1.bf16.msra.mxu0 0
    %6495 = vmatprep.subr.bf16.mxu0 0
    %6496 = vmatpush1.bf16.msra.mxu0 0
    %6497 = vmatprep.subr.bf16.mxu0 0
    %6498 = vmatpush1.bf16.msra.mxu0 0
    %6499 = vmatprep.mubr.bf16.mxu0 0
    %6500 = vmatmul.mubr.bf16.gmra.mrb[0].mxu0 %v6465
    %v6501 = vpop.f32.mrb[0].mxu0
    %v6502 = vadd.f32 0.0, %v6501
    %v6503 = vpop.f32.mrb[0].mxu0
    %v6504 = vpop.f32.mrb[0].mxu0
    %v6505 = vadd.f32 0.0, %v6504
    %v6506 = vpop.f32.mrb[0].mxu0
    %6507 = vdwg.mxu0
    %v6508 = vadd.f32 %v6419, %v6502
    %v6509 = vadd.f32 %v6420, %v6505
    %v6514 = vcombine.low %v6424, %v6428
    %v6515 = vcombine.low %v6432, %v6436
    %v6518 = vpack.c.bf16 %v6515, %v6514
    %v6519 = vld [vmem:[%s12 + $0x40] sm:$0xf]
    %v6520 = vld [vmem:[%s12 + $0x44] sm:$0xf]
    %v6521 = vld [vmem:[%s12 + $0x48] sm:$0xf]
    %v6522 = vld [vmem:[%s12 + $0x4c] sm:$0xf]
    %v6527 = vunpack.c.l.b16 %v6519
    %v6528 = vunpack.c.l.b16 %v6520
    %v6529 = vunpack.c.l.b16 %v6521
    %v6530 = vunpack.c.l.b16 %v6522
    %v6531 = vpack.c.b16 %v6528, %v6527
    %v6532 = vpack.c.b16 %v6530, %v6529
    %v6536 = vsel %vm64, %v6518, 0
    %6538 = vmatprep.subr.bf16.mxu0 0
    %6539 = vmatpush1.bf16.msra.mxu0 %v6531
    %6540 = vmatprep.subr.bf16.mxu0 0
    %6541 = vmatpush1.bf16.msra.mxu0 %v6532
    %6542 = vmatprep.subr.bf16.mxu0 0
    %6543 = vmatpush1.bf16.msra.mxu0 0
    %6544 = vmatprep.subr.bf16.mxu0 0
    %6545 = vmatpush1.bf16.msra.mxu0 0
    %6546 = vmatprep.subr.bf16.mxu0 0
    %6547 = vmatpush1.bf16.msra.mxu0 0
    %6548 = vmatprep.subr.bf16.mxu0 0
    %6549 = vmatpush1.bf16.msra.mxu0 0
    %6550 = vmatprep.subr.bf16.mxu0 0
    %6551 = vmatpush1.bf16.msra.mxu0 0
    %6552 = vmatprep.subr.bf16.mxu0 0
    %6553 = vmatpush1.bf16.msra.mxu0 0
    %6554 = vmatprep.subr.bf16.mxu0 0
    %6555 = vmatpush1.bf16.msra.mxu0 0
    %6556 = vmatprep.subr.bf16.mxu0 0
    %6557 = vmatpush1.bf16.msra.mxu0 0
    %6558 = vmatprep.subr.bf16.mxu0 0
    %6559 = vmatpush1.bf16.msra.mxu0 0
    %6560 = vmatprep.subr.bf16.mxu0 0
    %6561 = vmatpush1.bf16.msra.mxu0 0
    %6562 = vmatprep.subr.bf16.mxu0 0
    %6563 = vmatpush1.bf16.msra.mxu0 0
    %6564 = vmatprep.subr.bf16.mxu0 0
    %6565 = vmatpush1.bf16.msra.mxu0 0
    %6566 = vmatprep.subr.bf16.mxu0 0
    %6567 = vmatpush1.bf16.msra.mxu0 0
    %6568 = vmatprep.subr.bf16.mxu0 0
    %6569 = vmatpush1.bf16.msra.mxu0 0
    %6570 = vmatprep.mubr.bf16.mxu0 0
    %6571 = vmatmul.mubr.bf16.gmra.mrb[0].mxu0 %v6536
    %v6572 = vpop.f32.mrb[0].mxu0
    %v6573 = vadd.f32 0.0, %v6572
    %v6574 = vpop.f32.mrb[0].mxu0
    %v6575 = vpop.f32.mrb[0].mxu0
    %v6576 = vadd.f32 0.0, %v6575
    %v6577 = vpop.f32.mrb[0].mxu0
    %6578 = vdwg.mxu0
    %v6579 = vadd.f32 %v6508, %v6573
    %v6580 = vadd.f32 %v6509, %v6576
    %v6582 = vcombine.low %v6426, %v6430
    %v6583 = vcombine.low %v6434, %v6438
    %v6586 = vpack.c.bf16 %v6583, %v6582
    %v6587 = vld [vmem:[%s12 + $0x70] sm:$0xf]
    %v6588 = vld [vmem:[%s12 + $0x74] sm:$0xf]
    %v6589 = vld [vmem:[%s12 + $0x78] sm:$0xf]
    %v6590 = vld [vmem:[%s12 + $0x7c] sm:$0xf]
    %v6595 = vunpack.c.l.b16 %v6587
    %v6596 = vunpack.c.l.b16 %v6588
    %v6597 = vunpack.c.l.b16 %v6589
    %v6598 = vunpack.c.l.b16 %v6590
    %v6599 = vpack.c.b16 %v6596, %v6595
    %v6600 = vpack.c.b16 %v6598, %v6597
    %v6604 = vsel %vm64, %v6586, 0
    %6606 = vmatprep.subr.bf16.mxu0 0
    %6607 = vmatpush1.bf16.msra.mxu0 %v6599
    %6608 = vmatprep.subr.bf16.mxu0 0
    %6609 = vmatpush1.bf16.msra.mxu0 %v6600
    %6610 = vmatprep.subr.bf16.mxu0 0
    %6611 = vmatpush1.bf16.msra.mxu0 0
    %6612 = vmatprep.subr.bf16.mxu0 0
    %6613 = vmatpush1.bf16.msra.mxu0 0
    %6614 = vmatprep.subr.bf16.mxu0 0
    %6615 = vmatpush1.bf16.msra.mxu0 0
    %6616 = vmatprep.subr.bf16.mxu0 0
    %6617 = vmatpush1.bf16.msra.mxu0 0
    %6618 = vmatprep.subr.bf16.mxu0 0
    %6619 = vmatpush1.bf16.msra.mxu0 0
    %6620 = vmatprep.subr.bf16.mxu0 0
    %6621 = vmatpush1.bf16.msra.mxu0 0
    %6622 = vmatprep.subr.bf16.mxu0 0
    %6623 = vmatpush1.bf16.msra.mxu0 0
    %6624 = vmatprep.subr.bf16.mxu0 0
    %6625 = vmatpush1.bf16.msra.mxu0 0
    %6626 = vmatprep.subr.bf16.mxu0 0
    %6627 = vmatpush1.bf16.msra.mxu0 0
    %6628 = vmatprep.subr.bf16.mxu0 0
    %6629 = vmatpush1.bf16.msra.mxu0 0
    %6630 = vmatprep.subr.bf16.mxu0 0
    %6631 = vmatpush1.bf16.msra.mxu0 0
    %6632 = vmatprep.subr.bf16.mxu0 0
    %6633 = vmatpush1.bf16.msra.mxu0 0
    %6634 = vmatprep.subr.bf16.mxu0 0
    %6635 = vmatpush1.bf16.msra.mxu0 0
    %6636 = vmatprep.subr.bf16.mxu0 0
    %6637 = vmatpush1.bf16.msra.mxu0 0
    %6638 = vmatprep.mubr.bf16.mxu0 0
    %6639 = vmatmul.mubr.bf16.gmra.mrb[0].mxu0 %v6604
    %v6640 = vpop.f32.mrb[0].mxu0
    %v6641 = vadd.f32 0.0, %v6640
    %v6642 = vpop.f32.mrb[0].mxu0
    %v6643 = vpop.f32.mrb[0].mxu0
    %v6644 = vadd.f32 0.0, %v6643
    %v6645 = vpop.f32.mrb[0].mxu0
    %6646 = vdwg.mxu0
    %v6647 = vadd.f32 %v6579, %v6641
    %v6648 = vadd.f32 %v6580, %v6644
    %s6649 = scalar_lea.vmem [#allocation4], 2
    %v6650 = vld [vmem:[%s6649] ss:$2 sm:$0xf]
    %s6651 = scalar_lea.vmem [#allocation4], 18
    %v6652 = vld [vmem:[%s6651] ss:$2 sm:$0xf]
    %s6653 = scalar_lea.vmem [#allocation4], 34
    %v6654 = vld [vmem:[%s6653] ss:$2 sm:$0xf]
    %s6655 = scalar_lea.vmem [#allocation4], 50
    %v6656 = vld [vmem:[%s6655] ss:$2 sm:$0xf]
    %s6657 = scalar_lea.vmem [#allocation4], 66
    %v6658 = vld [vmem:[%s6657] ss:$2 sm:$0xf]
    %s6659 = scalar_lea.vmem [#allocation4], 82
    %v6660 = vld [vmem:[%s6659] ss:$2 sm:$0xf]
    %s6661 = scalar_lea.vmem [#allocation4], 98
    %v6662 = vld [vmem:[%s6661] ss:$2 sm:$0xf]
    %s6663 = scalar_lea.vmem [#allocation4], 114
    %v6664 = vld [vmem:[%s6663] ss:$2 sm:$0xf]
    %s6665 = scalar_lea.vmem [#allocation4], 130
    %v6666 = vld [vmem:[%s6665] ss:$2 sm:$0xf]
    %v6671 = vcombine.low %v6650, %v6654
    %v6672 = vcombine.low %v6658, %v6662
    %v6675 = vpack.c.bf16 %v6672, %v6671
    %v6676 = vld [vmem:[%s12 + $0x20] sm:$0xf]
    %v6677 = vld [vmem:[%s12 + $0x24] sm:$0xf]
    %v6678 = vld [vmem:[%s12 + $0x28] sm:$0xf]
    %v6679 = vld [vmem:[%s12 + $0x2c] sm:$0xf]
    %v6684 = vunpack.c.l.b16 %v6676
    %v6685 = vunpack.c.l.b16 %v6677
    %v6686 = vunpack.c.l.b16 %v6678
    %v6687 = vunpack.c.l.b16 %v6679
    %v6688 = vpack.c.b16 %v6685, %v6684
    %v6689 = vpack.c.b16 %v6687, %v6686
    %v6693 = vsel %vm64, %v6675, 0
    %6695 = vmatprep.subr.bf16.mxu0 0
    %6696 = vmatpush1.bf16.msra.mxu0 %v6688
    %6697 = vmatprep.subr.bf16.mxu0 0
    %6698 = vmatpush1.bf16.msra.mxu0 %v6689
    %6699 = vmatprep.subr.bf16.mxu0 0
    %6700 = vmatpush1.bf16.msra.mxu0 0
    %6701 = vmatprep.subr.bf16.mxu0 0
    %6702 = vmatpush1.bf16.msra.mxu0 0
    %6703 = vmatprep.subr.bf16.mxu0 0
    %6704 = vmatpush1.bf16.msra.mxu0 0
    %6705 = vmatprep.subr.bf16.mxu0 0
    %6706 = vmatpush1.bf16.msra.mxu0 0
    %6707 = vmatprep.subr.bf16.mxu0 0
    %6708 = vmatpush1.bf16.msra.mxu0 0
    %6709 = vmatprep.subr.bf16.mxu0 0
    %6710 = vmatpush1.bf16.msra.mxu0 0
    %6711 = vmatprep.subr.bf16.mxu0 0
    %6712 = vmatpush1.bf16.msra.mxu0 0
    %6713 = vmatprep.subr.bf16.mxu0 0
    %6714 = vmatpush1.bf16.msra.mxu0 0
    %6715 = vmatprep.subr.bf16.mxu0 0
    %6716 = vmatpush1.bf16.msra.mxu0 0
    %6717 = vmatprep.subr.bf16.mxu0 0
    %6718 = vmatpush1.bf16.msra.mxu0 0
    %6719 = vmatprep.subr.bf16.mxu0 0
    %6720 = vmatpush1.bf16.msra.mxu0 0
    %6721 = vmatprep.subr.bf16.mxu0 0
    %6722 = vmatpush1.bf16.msra.mxu0 0
    %6723 = vmatprep.subr.bf16.mxu0 0
    %6724 = vmatpush1.bf16.msra.mxu0 0
    %6725 = vmatprep.subr.bf16.mxu0 0
    %6726 = vmatpush1.bf16.msra.mxu0 0
    %6727 = vmatprep.mubr.bf16.mxu0 0
    %6728 = vmatmul.mubr.bf16.gmra.mrb[0].mxu0 %v6693
    %v6729 = vpop.f32.mrb[0].mxu0
    %v6730 = vadd.f32 0.0, %v6729
    %v6731 = vpop.f32.mrb[0].mxu0
    %v6732 = vpop.f32.mrb[0].mxu0
    %v6733 = vadd.f32 0.0, %v6732
    %v6734 = vpop.f32.mrb[0].mxu0
    %6735 = vdwg.mxu0
    %v6736 = vadd.f32 %v6647, %v6730
    %v6737 = vadd.f32 %v6648, %v6733
    %v6742 = vcombine.low %v6652, %v6656
    %v6743 = vcombine.low %v6660, %v6664
    %v6746 = vpack.c.bf16 %v6743, %v6742
    %v6747 = vld [vmem:[%s12 + $0x50] sm:$0xf]
    %v6748 = vld [vmem:[%s12 + $0x54] sm:$0xf]
    %v6749 = vld [vmem:[%s12 + $0x58] sm:$0xf]
    %v6750 = vld [vmem:[%s12 + $0x5c] sm:$0xf]
    %v6755 = vunpack.c.l.b16 %v6747
    %v6756 = vunpack.c.l.b16 %v6748
    %v6757 = vunpack.c.l.b16 %v6749
    %v6758 = vunpack.c.l.b16 %v6750
    %v6759 = vpack.c.b16 %v6756, %v6755
    %v6760 = vpack.c.b16 %v6758, %v6757
    %v6764 = vsel %vm64, %v6746, 0
    %6766 = vmatprep.subr.bf16.mxu0 0
    %6767 = vmatpush1.bf16.msra.mxu0 %v6759
    %6768 = vmatprep.subr.bf16.mxu0 0
    %6769 = vmatpush1.bf16.msra.mxu0 %v6760
    %6770 = vmatprep.subr.bf16.mxu0 0
    %6771 = vmatpush1.bf16.msra.mxu0 0
    %6772 = vmatprep.subr.bf16.mxu0 0
    %6773 = vmatpush1.bf16.msra.mxu0 0
    %6774 = vmatprep.subr.bf16.mxu0 0
    %6775 = vmatpush1.bf16.msra.mxu0 0
    %6776 = vmatprep.subr.bf16.mxu0 0
    %6777 = vmatpush1.bf16.msra.mxu0 0
    %6778 = vmatprep.subr.bf16.mxu0 0
    %6779 = vmatpush1.bf16.msra.mxu0 0
    %6780 = vmatprep.subr.bf16.mxu0 0
    %6781 = vmatpush1.bf16.msra.mxu0 0
    %6782 = vmatprep.subr.bf16.mxu0 0
    %6783 = vmatpush1.bf16.msra.mxu0 0
    %6784 = vmatprep.subr.bf16.mxu0 0
    %6785 = vmatpush1.bf16.msra.mxu0 0
    %6786 = vmatprep.subr.bf16.mxu0 0
    %6787 = vmatpush1.bf16.msra.mxu0 0
    %6788 = vmatprep.subr.bf16.mxu0 0
    %6789 = vmatpush1.bf16.msra.mxu0 0
    %6790 = vmatprep.subr.bf16.mxu0 0
    %6791 = vmatpush1.bf16.msra.mxu0 0
    %6792 = vmatprep.subr.bf16.mxu0 0
    %6793 = vmatpush1.bf16.msra.mxu0 0
    %6794 = vmatprep.subr.bf16.mxu0 0
    %6795 = vmatpush1.bf16.msra.mxu0 0
    %6796 = vmatprep.subr.bf16.mxu0 0
    %6797 = vmatpush1.bf16.msra.mxu0 0
    %6798 = vmatprep.mubr.bf16.mxu0 0
    %6799 = vmatmul.mubr.bf16.gmra.mrb[0].mxu0 %v6764
    %v6800 = vpop.f32.mrb[0].mxu0
    %v6801 = vadd.f32 0.0, %v6800
    %v6802 = vpop.f32.mrb[0].mxu0
    %v6803 = vpop.f32.mrb[0].mxu0
    %v6804 = vadd.f32 0.0, %v6803
    %v6805 = vpop.f32.mrb[0].mxu0
    %6806 = vdwg.mxu0
    %v6807 = vadd.f32 %v6736, %v6801
    %v6808 = vadd.f32 %v6737, %v6804
    %v6810 = vcombine.low %v6654, %v6658
    %v6811 = vcombine.low %v6662, %v6666
    %v6814 = vpack.c.bf16 %v6811, %v6810
    %v6815 = vld [vmem:[%s12 + $0x80] sm:$0xf]
    %v6816 = vld [vmem:[%s12 + $0x84] sm:$0xf]
    %v6817 = vld [vmem:[%s12 + $0x88] sm:$0xf]
    %v6818 = vld [vmem:[%s12 + $0x8c] sm:$0xf]
    %v6823 = vunpack.c.l.b16 %v6815
    %v6824 = vunpack.c.l.b16 %v6816
    %v6825 = vunpack.c.l.b16 %v6817
    %v6826 = vunpack.c.l.b16 %v6818
    %v6827 = vpack.c.b16 %v6824, %v6823
    %v6828 = vpack.c.b16 %v6826, %v6825
    %v6832 = vsel %vm64, %v6814, 0
    %6834 = vmatprep.subr.bf16.mxu0 0
    %6835 = vmatpush1.bf16.msra.mxu0 %v6827
    %6836 = vmatprep.subr.bf16.mxu0 0
    %6837 = vmatpush1.bf16.msra.mxu0 %v6828
    %6838 = vmatprep.subr.bf16.mxu0 0
    %6839 = vmatpush1.bf16.msra.mxu0 0
    %6840 = vmatprep.subr.bf16.mxu0 0
    %6841 = vmatpush1.bf16.msra.mxu0 0
    %6842 = vmatprep.subr.bf16.mxu0 0
    %6843 = vmatpush1.bf16.msra.mxu0 0
    %6844 = vmatprep.subr.bf16.mxu0 0
    %6845 = vmatpush1.bf16.msra.mxu0 0
    %6846 = vmatprep.subr.bf16.mxu0 0
    %6847 = vmatpush1.bf16.msra.mxu0 0
    %6848 = vmatprep.subr.bf16.mxu0 0
    %6849 = vmatpush1.bf16.msra.mxu0 0
    %6850 = vmatprep.subr.bf16.mxu0 0
    %6851 = vmatpush1.bf16.msra.mxu0 0
    %6852 = vmatprep.subr.bf16.mxu0 0
    %6853 = vmatpush1.bf16.msra.mxu0 0
    %6854 = vmatprep.subr.bf16.mxu0 0
    %6855 = vmatpush1.bf16.msra.mxu0 0
    %6856 = vmatprep.subr.bf16.mxu0 0
    %6857 = vmatpush1.bf16.msra.mxu0 0
    %6858 = vmatprep.subr.bf16.mxu0 0
    %6859 = vmatpush1.bf16.msra.mxu0 0
    %6860 = vmatprep.subr.bf16.mxu0 0
    %6861 = vmatpush1.bf16.msra.mxu0 0
    %6862 = vmatprep.subr.bf16.mxu0 0
    %6863 = vmatpush1.bf16.msra.mxu0 0
    %6864 = vmatprep.subr.bf16.mxu0 0
    %6865 = vmatpush1.bf16.msra.mxu0 0
    %6866 = vmatprep.mubr.bf16.mxu0 0
    %6867 = vmatmul.mubr.bf16.gmra.mrb[0].mxu0 %v6832
    %v6868 = vpop.f32.mrb[0].mxu0
    %v6869 = vadd.f32 0.0, %v6868
    %v6870 = vpop.f32.mrb[0].mxu0
    %v6871 = vpop.f32.mrb[0].mxu0
    %v6872 = vadd.f32 0.0, %v6871
    %v6873 = vpop.f32.mrb[0].mxu0
    %6874 = vdwg.mxu0
    %v6875 = vadd.f32 %v6807, %v6869
    %v6876 = vadd.f32 %v6808, %v6872
    %v6877 = vmax.f32 %v6875, 0.0
    %v6878 = vmax.f32 %v6876, 0.0
    %v6881 = vcombine.high %v6877, %v6877
    %v6882 = vcombine.high %v6878, %v6878
    %s6885 = scalar_lea.vmem [#allocation5], 8
    %vm6886 = vcmask 257024
    %6887 = vst.msk [vmem:[%s6885 + $0x1] sm:$0xf] %vm6886, %v6877
    %6888 = vst.msk [vmem:[%s6885 + $0x9] sm:$0xf] %vm6886, %v6881
    %6889 = vst.msk [vmem:[%s6885 + $0x11] sm:$0xf] %vm6886, %v6878
    %6890 = vst.msk [vmem:[%s6885 + $0x19] sm:$0xf] %vm6886, %v6882
    %v6891 = vld [vmem:[%s15] sm:$0x3]
    %v6892 = vld [vmem:[%s17] sm:$0xf]
    %v6893 = vld [vmem:[%s17 + $0x4] sm:$0xf]
    %v6894 = vld [vmem:[%s17 + $0x8] sm:$0xf]
    %v6895 = vld [vmem:[%s17 + $0xc] sm:$0xf]
    %v6896 = vld [vmem:[%s18] sm:$0x1]
    %v6898 = vlaneseq
    %v6899 = vshrl.u32 %v6898, 7
    %v6900 = vsub.s32 0, %v6899
    %v6901 = vrot.slane %v6896, %v6900
    %v6907 = vunpack.c.l.b16 %v6892
    %v6908 = vunpack.c.l.b16 %v6893
    %v6909 = vunpack.c.l.b16 %v6894
    %v6910 = vunpack.c.l.b16 %v6895
    %v6911 = vpack.c.b16 %v6908, %v6907
    %v6912 = vpack.c.b16 %v6910, %v6909
    %v6916 = vsel %vm64, %v6891, 0
    %6918 = vmatprep.subr.bf16.mxu0 0
    %6919 = vmatpush1.bf16.msra.mxu0 %v6911
    %6920 = vmatprep.subr.bf16.mxu0 0
    %6921 = vmatpush1.bf16.msra.mxu0 %v6912
    %6922 = vmatprep.subr.bf16.mxu0 0
    %6923 = vmatpush1.bf16.msra.mxu0 0
    %6924 = vmatprep.subr.bf16.mxu0 0
    %6925 = vmatpush1.bf16.msra.mxu0 0
    %6926 = vmatprep.subr.bf16.mxu0 0
    %6927 = vmatpush1.bf16.msra.mxu0 0
    %6928 = vmatprep.subr.bf16.mxu0 0
    %6929 = vmatpush1.bf16.msra.mxu0 0
    %6930 = vmatprep.subr.bf16.mxu0 0
    %6931 = vmatpush1.bf16.msra.mxu0 0
    %6932 = vmatprep.subr.bf16.mxu0 0
    %6933 = vmatpush1.bf16.msra.mxu0 0
    %6934 = vmatprep.subr.bf16.mxu0 0
    %6935 = vmatpush1.bf16.msra.mxu0 0
    %6936 = vmatprep.subr.bf16.mxu0 0
    %6937 = vmatpush1.bf16.msra.mxu0 0
    %6938 = vmatprep.subr.bf16.mxu0 0
    %6939 = vmatpush1.bf16.msra.mxu0 0
    %6940 = vmatprep.subr.bf16.mxu0 0
    %6941 = vmatpush1.bf16.msra.mxu0 0
    %6942 = vmatprep.subr.bf16.mxu0 0
    %6943 = vmatpush1.bf16.msra.mxu0 0
    %6944 = vmatprep.subr.bf16.mxu0 0
    %6945 = vmatpush1.bf16.msra.mxu0 0
    %6946 = vmatprep.subr.bf16.mxu0 0
    %6947 = vmatpush1.bf16.msra.mxu0 0
    %6948 = vmatprep.subr.bf16.mxu0 0
    %6949 = vmatpush1.bf16.msra.mxu0 0
    %6950 = vmatprep.mubr.bf16.mxu0 0
    %6951 = vmatmul.mubr.bf16.gmra.mrb[0].mxu0 %v6916
    %v6952 = vpop.f32.mrb[0].mxu0
    %v6953 = vadd.f32 %v6901, %v6952
    %v6954 = vpop.f32.mrb[0].mxu0
    %v6955 = vpop.f32.mrb[0].mxu0
    %v6956 = vpop.f32.mrb[0].mxu0
    %6957 = vdwg.mxu0
    %v6958 = vld [vmem:[#allocation5] ss:$2 sm:$0x3]
    %s6959 = scalar_lea.vmem [#allocation5], 8
    %v6960 = vld [vmem:[%s6959] ss:$2 sm:$0x3]
    %s6961 = scalar_lea.vmem [#allocation5], 16
    %v6962 = vld [vmem:[%s6961] ss:$2 sm:$0x3]
    %s6963 = scalar_lea.vmem [#allocation5], 24
    %v6964 = vld [vmem:[%s6963] ss:$2 sm:$0x3]
    %s6965 = scalar_lea.vmem [#allocation5], 32
    %v6966 = vld [vmem:[%s6965] ss:$2 sm:$0x3]
    %v6969 = vcombine.low %v6958, %v6962
    %v6971 = vunpack.c.l.s4 1983009808
    %v6972 = vunpack.c.0.s8 %v6971
    %v6973 = vlaneseq
    %v6974 = vshrl.u32 %v6973, 7
    %v6975 = vsub.s32 %v6972, %v6974
    %v6976 = vrot.slane %v6969, %v6975
    %v6978 = vpack.c.bf16 %v6976, %v6976
    %v6979 = vld [vmem:[%s16] sm:$0xf]
    %v6980 = vld [vmem:[%s16 + $0x4] sm:$0xf]
    %v6981 = vld [vmem:[%s16 + $0x8] sm:$0xf]
    %v6982 = vld [vmem:[%s16 + $0xc] sm:$0xf]
    %v6987 = vunpack.c.l.b16 %v6979
    %v6988 = vunpack.c.l.b16 %v6980
    %v6989 = vunpack.c.l.b16 %v6981
    %v6990 = vunpack.c.l.b16 %v6982
    %v6991 = vpack.c.b16 %v6988, %v6987
    %v6992 = vpack.c.b16 %v6990, %v6989
    %v6996 = vsel %vm64, %v6978, 0
    %6998 = vmatprep.subr.bf16.mxu0 0
    %6999 = vmatpush1.bf16.msra.mxu0 %v6991
    %7000 = vmatprep.subr.bf16.mxu0 0
    %7001 = vmatpush1.bf16.msra.mxu0 %v6992
    %7002 = vmatprep.subr.bf16.mxu0 0
    %7003 = vmatpush1.bf16.msra.mxu0 0
    %7004 = vmatprep.subr.bf16.mxu0 0
    %7005 = vmatpush1.bf16.msra.mxu0 0
    %7006 = vmatprep.subr.bf16.mxu0 0
    %7007 = vmatpush1.bf16.msra.mxu0 0
    %7008 = vmatprep.subr.bf16.mxu0 0
    %7009 = vmatpush1.bf16.msra.mxu0 0
    %7010 = vmatprep.subr.bf16.mxu0 0
    %7011 = vmatpush1.bf16.msra.mxu0 0
    %7012 = vmatprep.subr.bf16.mxu0 0
    %7013 = vmatpush1.bf16.msra.mxu0 0
    %7014 = vmatprep.subr.bf16.mxu0 0
    %7015 = vmatpush1.bf16.msra.mxu0 0
    %7016 = vmatprep.subr.bf16.mxu0 0
    %7017 = vmatpush1.bf16.msra.mxu0 0
    %7018 = vmatprep.subr.bf16.mxu0 0
    %7019 = vmatpush1.bf16.msra.mxu0 0
    %7020 = vmatprep.subr.bf16.mxu0 0
    %7021 = vmatpush1.bf16.msra.mxu0 0
    %7022 = vmatprep.subr.bf16.mxu0 0
    %7023 = vmatpush1.bf16.msra.mxu0 0
    %7024 = vmatprep.subr.bf16.mxu0 0
    %7025 = vmatpush1.bf16.msra.mxu0 0
    %7026 = vmatprep.subr.bf16.mxu0 0
    %7027 = vmatpush1.bf16.msra.mxu0 0
    %7028 = vmatprep.subr.bf16.mxu0 0
    %7029 = vmatpush1.bf16.msra.mxu0 0
    %7030 = vmatprep.mubr.bf16.mxu0 0
    %7031 = vmatmul.mubr.bf16.gmra.mrb[0].mxu0 %v6996
    %v7032 = vpop.f32.mrb[0].mxu0
    %v7033 = vadd.f32 0.0, %v7032
    %v7034 = vpop.f32.mrb[0].mxu0
    %v7035 = vpop.f32.mrb[0].mxu0
    %v7036 = vpop.f32.mrb[0].mxu0
    %7037 = vdwg.mxu0
    %v7038 = vadd.f32 %v6953, %v7033
    %v7041 = vcombine.low %v6960, %v6964
    %v7043 = vunpack.c.l.s4 1983009808
    %v7044 = vunpack.c.0.s8 %v7043
    %v7045 = vlaneseq
    %v7046 = vshrl.u32 %v7045, 7
    %v7047 = vsub.s32 %v7044, %v7046
    %v7048 = vrot.slane %v7041, %v7047
    %v7050 = vpack.c.bf16 %v7048, %v7048
    %v7051 = vld [vmem:[%s16 + $0x30] sm:$0xf]
    %v7052 = vld [vmem:[%s16 + $0x34] sm:$0xf]
    %v7053 = vld [vmem:[%s16 + $0x38] sm:$0xf]
    %v7054 = vld [vmem:[%s16 + $0x3c] sm:$0xf]
    %v7059 = vunpack.c.l.b16 %v7051
    %v7060 = vunpack.c.l.b16 %v7052
    %v7061 = vunpack.c.l.b16 %v7053
    %v7062 = vunpack.c.l.b16 %v7054
    %v7063 = vpack.c.b16 %v7060, %v7059
    %v7064 = vpack.c.b16 %v7062, %v7061
    %v7068 = vsel %vm64, %v7050, 0
    %7070 = vmatprep.subr.bf16.mxu0 0
    %7071 = vmatpush1.bf16.msra.mxu0 %v7063
    %7072 = vmatprep.subr.bf16.mxu0 0
    %7073 = vmatpush1.bf16.msra.mxu0 %v7064
    %7074 = vmatprep.subr.bf16.mxu0 0
    %7075 = vmatpush1.bf16.msra.mxu0 0
    %7076 = vmatprep.subr.bf16.mxu0 0
    %7077 = vmatpush1.bf16.msra.mxu0 0
    %7078 = vmatprep.subr.bf16.mxu0 0
    %7079 = vmatpush1.bf16.msra.mxu0 0
    %7080 = vmatprep.subr.bf16.mxu0 0
    %7081 = vmatpush1.bf16.msra.mxu0 0
    %7082 = vmatprep.subr.bf16.mxu0 0
    %7083 = vmatpush1.bf16.msra.mxu0 0
    %7084 = vmatprep.subr.bf16.mxu0 0
    %7085 = vmatpush1.bf16.msra.mxu0 0
    %7086 = vmatprep.subr.bf16.mxu0 0
    %7087 = vmatpush1.bf16.msra.mxu0 0
    %7088 = vmatprep.subr.bf16.mxu0 0
    %7089 = vmatpush1.bf16.msra.mxu0 0
    %7090 = vmatprep.subr.bf16.mxu0 0
    %7091 = vmatpush1.bf16.msra.mxu0 0
    %7092 = vmatprep.subr.bf16.mxu0 0
    %7093 = vmatpush1.bf16.msra.mxu0 0
    %7094 = vmatprep.subr.bf16.mxu0 0
    %7095 = vmatpush1.bf16.msra.mxu0 0
    %7096 = vmatprep.subr.bf16.mxu0 0
    %7097 = vmatpush1.bf16.msra.mxu0 0
    %7098 = vmatprep.subr.bf16.mxu0 0
    %7099 = vmatpush1.bf16.msra.mxu0 0
    %7100 = vmatprep.subr.bf16.mxu0 0
    %7101 = vmatpush1.bf16.msra.mxu0 0
    %7102 = vmatprep.mubr.bf16.mxu0 0
    %7103 = vmatmul.mubr.bf16.gmra.mrb[0].mxu0 %v7068
    %v7104 = vpop.f32.mrb[0].mxu0
    %v7105 = vadd.f32 0.0, %v7104
    %v7106 = vpop.f32.mrb[0].mxu0
    %v7107 = vpop.f32.mrb[0].mxu0
    %v7108 = vpop.f32.mrb[0].mxu0
    %7109 = vdwg.mxu0
    %v7110 = vadd.f32 %v7038, %v7105
    %v7112 = vcombine.low %v6962, %v6966
    %v7114 = vunpack.c.l.s4 1983009808
    %v7115 = vunpack.c.0.s8 %v7114
    %v7116 = vlaneseq
    %v7117 = vshrl.u32 %v7116, 7
    %v7118 = vsub.s32 %v7115, %v7117
    %v7119 = vrot.slane %v7112, %v7118
    %v7121 = vpack.c.bf16 %v7119, %v7119
    %v7122 = vld [vmem:[%s16 + $0x60] sm:$0xf]
    %v7123 = vld [vmem:[%s16 + $0x64] sm:$0xf]
    %v7124 = vld [vmem:[%s16 + $0x68] sm:$0xf]
    %v7125 = vld [vmem:[%s16 + $0x6c] sm:$0xf]
    %v7130 = vunpack.c.l.b16 %v7122
    %v7131 = vunpack.c.l.b16 %v7123
    %v7132 = vunpack.c.l.b16 %v7124
    %v7133 = vunpack.c.l.b16 %v7125
    %v7134 = vpack.c.b16 %v7131, %v7130
    %v7135 = vpack.c.b16 %v7133, %v7132
    %v7139 = vsel %vm64, %v7121, 0
    %7141 = vmatprep.subr.bf16.mxu0 0
    %7142 = vmatpush1.bf16.msra.mxu0 %v7134
    %7143 = vmatprep.subr.bf16.mxu0 0
    %7144 = vmatpush1.bf16.msra.mxu0 %v7135
    %7145 = vmatprep.subr.bf16.mxu0 0
    %7146 = vmatpush1.bf16.msra.mxu0 0
    %7147 = vmatprep.subr.bf16.mxu0 0
    %7148 = vmatpush1.bf16.msra.mxu0 0
    %7149 = vmatprep.subr.bf16.mxu0 0
    %7150 = vmatpush1.bf16.msra.mxu0 0
    %7151 = vmatprep.subr.bf16.mxu0 0
    %7152 = vmatpush1.bf16.msra.mxu0 0
    %7153 = vmatprep.subr.bf16.mxu0 0
    %7154 = vmatpush1.bf16.msra.mxu0 0
    %7155 = vmatprep.subr.bf16.mxu0 0
    %7156 = vmatpush1.bf16.msra.mxu0 0
    %7157 = vmatprep.subr.bf16.mxu0 0
    %7158 = vmatpush1.bf16.msra.mxu0 0
    %7159 = vmatprep.subr.bf16.mxu0 0
    %7160 = vmatpush1.bf16.msra.mxu0 0
    %7161 = vmatprep.subr.bf16.mxu0 0
    %7162 = vmatpush1.bf16.msra.mxu0 0
    %7163 = vmatprep.subr.bf16.mxu0 0
    %7164 = vmatpush1.bf16.msra.mxu0 0
    %7165 = vmatprep.subr.bf16.mxu0 0
    %7166 = vmatpush1.bf16.msra.mxu0 0
    %7167 = vmatprep.subr.bf16.mxu0 0
    %7168 = vmatpush1.bf16.msra.mxu0 0
    %7169 = vmatprep.subr.bf16.mxu0 0
    %7170 = vmatpush1.bf16.msra.mxu0 0
    %7171 = vmatprep.subr.bf16.mxu0 0
    %7172 = vmatpush1.bf16.msra.mxu0 0
    %7173 = vmatprep.mubr.bf16.mxu0 0
    %7174 = vmatmul.mubr.bf16.gmra.mrb[0].mxu0 %v7139
    %v7175 = vpop.f32.mrb[0].mxu0
    %v7176 = vadd.f32 0.0, %v7175
    %v7177 = vpop.f32.mrb[0].mxu0
    %v7178 = vpop.f32.mrb[0].mxu0
    %v7179 = vpop.f32.mrb[0].mxu0
    %7180 = vdwg.mxu0
    %v7181 = vadd.f32 %v7110, %v7176
    %s7182 = scalar_lea.vmem [#allocation5], 1
    %v7183 = vld [vmem:[%s7182] ss:$2 sm:$0x3]
    %s7184 = scalar_lea.vmem [#allocation5], 9
    %v7185 = vld [vmem:[%s7184] ss:$2 sm:$0x3]
    %s7186 = scalar_lea.vmem [#allocation5], 17
    %v7187 = vld [vmem:[%s7186] ss:$2 sm:$0x3]
    %s7188 = scalar_lea.vmem [#allocation5], 25
    %v7189 = vld [vmem:[%s7188] ss:$2 sm:$0x3]
    %s7190 = scalar_lea.vmem [#allocation5], 33
    %v7191 = vld [vmem:[%s7190] ss:$2 sm:$0x3]
    %v7194 = vcombine.low %v7183, %v7187
    %v7196 = vunpack.c.l.s4 1983009808
    %v7197 = vunpack.c.0.s8 %v7196
    %v7198 = vlaneseq
    %v7199 = vshrl.u32 %v7198, 7
    %v7200 = vsub.s32 %v7197, %v7199
    %v7201 = vrot.slane %v7194, %v7200
    %v7203 = vpack.c.bf16 %v7201, %v7201
    %v7204 = vld [vmem:[%s16 + $0x10] sm:$0xf]
    %v7205 = vld [vmem:[%s16 + $0x14] sm:$0xf]
    %v7206 = vld [vmem:[%s16 + $0x18] sm:$0xf]
    %v7207 = vld [vmem:[%s16 + $0x1c] sm:$0xf]
    %v7212 = vunpack.c.l.b16 %v7204
    %v7213 = vunpack.c.l.b16 %v7205
    %v7214 = vunpack.c.l.b16 %v7206
    %v7215 = vunpack.c.l.b16 %v7207
    %v7216 = vpack.c.b16 %v7213, %v7212
    %v7217 = vpack.c.b16 %v7215, %v7214
    %v7221 = vsel %vm64, %v7203, 0
    %7223 = vmatprep.subr.bf16.mxu0 0
    %7224 = vmatpush1.bf16.msra.mxu0 %v7216
    %7225 = vmatprep.subr.bf16.mxu0 0
    %7226 = vmatpush1.bf16.msra.mxu0 %v7217
    %7227 = vmatprep.subr.bf16.mxu0 0
    %7228 = vmatpush1.bf16.msra.mxu0 0
    %7229 = vmatprep.subr.bf16.mxu0 0
    %7230 = vmatpush1.bf16.msra.mxu0 0
    %7231 = vmatprep.subr.bf16.mxu0 0
    %7232 = vmatpush1.bf16.msra.mxu0 0
    %7233 = vmatprep.subr.bf16.mxu0 0
    %7234 = vmatpush1.bf16.msra.mxu0 0
    %7235 = vmatprep.subr.bf16.mxu0 0
    %7236 = vmatpush1.bf16.msra.mxu0 0
    %7237 = vmatprep.subr.bf16.mxu0 0
    %7238 = vmatpush1.bf16.msra.mxu0 0
    %7239 = vmatprep.subr.bf16.mxu0 0
    %7240 = vmatpush1.bf16.msra.mxu0 0
    %7241 = vmatprep.subr.bf16.mxu0 0
    %7242 = vmatpush1.bf16.msra.mxu0 0
    %7243 = vmatprep.subr.bf16.mxu0 0
    %7244 = vmatpush1.bf16.msra.mxu0 0
    %7245 = vmatprep.subr.bf16.mxu0 0
    %7246 = vmatpush1.bf16.msra.mxu0 0
    %7247 = vmatprep.subr.bf16.mxu0 0
    %7248 = vmatpush1.bf16.msra.mxu0 0
    %7249 = vmatprep.subr.bf16.mxu0 0
    %7250 = vmatpush1.bf16.msra.mxu0 0
    %7251 = vmatprep.subr.bf16.mxu0 0
    %7252 = vmatpush1.bf16.msra.mxu0 0
    %7253 = vmatprep.subr.bf16.mxu0 0
    %7254 = vmatpush1.bf16.msra.mxu0 0
    %7255 = vmatprep.mubr.bf16.mxu0 0
    %7256 = vmatmul.mubr.bf16.gmra.mrb[0].mxu0 %v7221
    %v7257 = vpop.f32.mrb[0].mxu0
    %v7258 = vadd.f32 0.0, %v7257
    %v7259 = vpop.f32.mrb[0].mxu0
    %v7260 = vpop.f32.mrb[0].mxu0
    %v7261 = vpop.f32.mrb[0].mxu0
    %7262 = vdwg.mxu0
    %v7263 = vadd.f32 %v7181, %v7258
    %v7266 = vcombine.low %v7185, %v7189
    %v7268 = vunpack.c.l.s4 1983009808
    %v7269 = vunpack.c.0.s8 %v7268
    %v7270 = vlaneseq
    %v7271 = vshrl.u32 %v7270, 7
    %v7272 = vsub.s32 %v7269, %v7271
    %v7273 = vrot.slane %v7266, %v7272
    %v7275 = vpack.c.bf16 %v7273, %v7273
    %v7276 = vld [vmem:[%s16 + $0x40] sm:$0xf]
    %v7277 = vld [vmem:[%s16 + $0x44] sm:$0xf]
    %v7278 = vld [vmem:[%s16 + $0x48] sm:$0xf]
    %v7279 = vld [vmem:[%s16 + $0x4c] sm:$0xf]
    %v7284 = vunpack.c.l.b16 %v7276
    %v7285 = vunpack.c.l.b16 %v7277
    %v7286 = vunpack.c.l.b16 %v7278
    %v7287 = vunpack.c.l.b16 %v7279
    %v7288 = vpack.c.b16 %v7285, %v7284
    %v7289 = vpack.c.b16 %v7287, %v7286
    %v7293 = vsel %vm64, %v7275, 0
    %7295 = vmatprep.subr.bf16.mxu0 0
    %7296 = vmatpush1.bf16.msra.mxu0 %v7288
    %7297 = vmatprep.subr.bf16.mxu0 0
    %7298 = vmatpush1.bf16.msra.mxu0 %v7289
    %7299 = vmatprep.subr.bf16.mxu0 0
    %7300 = vmatpush1.bf16.msra.mxu0 0
    %7301 = vmatprep.subr.bf16.mxu0 0
    %7302 = vmatpush1.bf16.msra.mxu0 0
    %7303 = vmatprep.subr.bf16.mxu0 0
    %7304 = vmatpush1.bf16.msra.mxu0 0
    %7305 = vmatprep.subr.bf16.mxu0 0
    %7306 = vmatpush1.bf16.msra.mxu0 0
    %7307 = vmatprep.subr.bf16.mxu0 0
    %7308 = vmatpush1.bf16.msra.mxu0 0
    %7309 = vmatprep.subr.bf16.mxu0 0
    %7310 = vmatpush1.bf16.msra.mxu0 0
    %7311 = vmatprep.subr.bf16.mxu0 0
    %7312 = vmatpush1.bf16.msra.mxu0 0
    %7313 = vmatprep.subr.bf16.mxu0 0
    %7314 = vmatpush1.bf16.msra.mxu0 0
    %7315 = vmatprep.subr.bf16.mxu0 0
    %7316 = vmatpush1.bf16.msra.mxu0 0
    %7317 = vmatprep.subr.bf16.mxu0 0
    %7318 = vmatpush1.bf16.msra.mxu0 0
    %7319 = vmatprep.subr.bf16.mxu0 0
    %7320 = vmatpush1.bf16.msra.mxu0 0
    %7321 = vmatprep.subr.bf16.mxu0 0
    %7322 = vmatpush1.bf16.msra.mxu0 0
    %7323 = vmatprep.subr.bf16.mxu0 0
    %7324 = vmatpush1.bf16.msra.mxu0 0
    %7325 = vmatprep.subr.bf16.mxu0 0
    %7326 = vmatpush1.bf16.msra.mxu0 0
    %7327 = vmatprep.mubr.bf16.mxu0 0
    %7328 = vmatmul.mubr.bf16.gmra.mrb[0].mxu0 %v7293
    %v7329 = vpop.f32.mrb[0].mxu0
    %v7330 = vadd.f32 0.0, %v7329
    %v7331 = vpop.f32.mrb[0].mxu0
    %v7332 = vpop.f32.mrb[0].mxu0
    %v7333 = vpop.f32.mrb[0].mxu0
    %7334 = vdwg.mxu0
    %v7335 = vadd.f32 %v7263, %v7330
    %v7337 = vcombine.low %v7187, %v7191
    %v7339 = vunpack.c.l.s4 1983009808
    %v7340 = vunpack.c.0.s8 %v7339
    %v7341 = vlaneseq
    %v7342 = vshrl.u32 %v7341, 7
    %v7343 = vsub.s32 %v7340, %v7342
    %v7344 = vrot.slane %v7337, %v7343
    %v7346 = vpack.c.bf16 %v7344, %v7344
    %v7347 = vld [vmem:[%s16 + $0x70] sm:$0xf]
    %v7348 = vld [vmem:[%s16 + $0x74] sm:$0xf]
    %v7349 = vld [vmem:[%s16 + $0x78] sm:$0xf]
    %v7350 = vld [vmem:[%s16 + $0x7c] sm:$0xf]
    %v7355 = vunpack.c.l.b16 %v7347
    %v7356 = vunpack.c.l.b16 %v7348
    %v7357 = vunpack.c.l.b16 %v7349
    %v7358 = vunpack.c.l.b16 %v7350
    %v7359 = vpack.c.b16 %v7356, %v7355
    %v7360 = vpack.c.b16 %v7358, %v7357
    %v7364 = vsel %vm64, %v7346, 0
    %7366 = vmatprep.subr.bf16.mxu0 0
    %7367 = vmatpush1.bf16.msra.mxu0 %v7359
    %7368 = vmatprep.subr.bf16.mxu0 0
    %7369 = vmatpush1.bf16.msra.mxu0 %v7360
    %7370 = vmatprep.subr.bf16.mxu0 0
    %7371 = vmatpush1.bf16.msra.mxu0 0
    %7372 = vmatprep.subr.bf16.mxu0 0
    %7373 = vmatpush1.bf16.msra.mxu0 0
    %7374 = vmatprep.subr.bf16.mxu0 0
    %7375 = vmatpush1.bf16.msra.mxu0 0
    %7376 = vmatprep.subr.bf16.mxu0 0
    %7377 = vmatpush1.bf16.msra.mxu0 0
    %7378 = vmatprep.subr.bf16.mxu0 0
    %7379 = vmatpush1.bf16.msra.mxu0 0
    %7380 = vmatprep.subr.bf16.mxu0 0
    %7381 = vmatpush1.bf16.msra.mxu0 0
    %7382 = vmatprep.subr.bf16.mxu0 0
    %7383 = vmatpush1.bf16.msra.mxu0 0
    %7384 = vmatprep.subr.bf16.mxu0 0
    %7385 = vmatpush1.bf16.msra.mxu0 0
    %7386 = vmatprep.subr.bf16.mxu0 0
    %7387 = vmatpush1.bf16.msra.mxu0 0
    %7388 = vmatprep.subr.bf16.mxu0 0
    %7389 = vmatpush1.bf16.msra.mxu0 0
    %7390 = vmatprep.subr.bf16.mxu0 0
    %7391 = vmatpush1.bf16.msra.mxu0 0
    %7392 = vmatprep.subr.bf16.mxu0 0
    %7393 = vmatpush1.bf16.msra.mxu0 0
    %7394 = vmatprep.subr.bf16.mxu0 0
    %7395 = vmatpush1.bf16.msra.mxu0 0
    %7396 = vmatprep.subr.bf16.mxu0 0
    %7397 = vmatpush1.bf16.msra.mxu0 0
    %7398 = vmatprep.mubr.bf16.mxu0 0
    %7399 = vmatmul.mubr.bf16.gmra.mrb[0].mxu0 %v7364
    %v7400 = vpop.f32.mrb[0].mxu0
    %v7401 = vadd.f32 0.0, %v7400
    %v7402 = vpop.f32.mrb[0].mxu0
    %v7403 = vpop.f32.mrb[0].mxu0
    %v7404 = vpop.f32.mrb[0].mxu0
    %7405 = vdwg.mxu0
    %v7406 = vadd.f32 %v7335, %v7401
    %s7407 = scalar_lea.vmem [#allocation5], 2
    %v7408 = vld [vmem:[%s7407] ss:$2 sm:$0x3]
    %s7409 = scalar_lea.vmem [#allocation5], 10
    %v7410 = vld [vmem:[%s7409] ss:$2 sm:$0x3]
    %s7411 = scalar_lea.vmem [#allocation5], 18
    %v7412 = vld [vmem:[%s7411] ss:$2 sm:$0x3]
    %s7413 = scalar_lea.vmem [#allocation5], 26
    %v7414 = vld [vmem:[%s7413] ss:$2 sm:$0x3]
    %s7415 = scalar_lea.vmem [#allocation5], 34
    %v7416 = vld [vmem:[%s7415] ss:$2 sm:$0x3]
    %v7419 = vcombine.low %v7408, %v7412
    %v7421 = vunpack.c.l.s4 1983009808
    %v7422 = vunpack.c.0.s8 %v7421
    %v7423 = vlaneseq
    %v7424 = vshrl.u32 %v7423, 7
    %v7425 = vsub.s32 %v7422, %v7424
    %v7426 = vrot.slane %v7419, %v7425
    %v7428 = vpack.c.bf16 %v7426, %v7426
    %v7429 = vld [vmem:[%s16 + $0x20] sm:$0xf]
    %v7430 = vld [vmem:[%s16 + $0x24] sm:$0xf]
    %v7431 = vld [vmem:[%s16 + $0x28] sm:$0xf]
    %v7432 = vld [vmem:[%s16 + $0x2c] sm:$0xf]
    %v7437 = vunpack.c.l.b16 %v7429
    %v7438 = vunpack.c.l.b16 %v7430
    %v7439 = vunpack.c.l.b16 %v7431
    %v7440 = vunpack.c.l.b16 %v7432
    %v7441 = vpack.c.b16 %v7438, %v7437
    %v7442 = vpack.c.b16 %v7440, %v7439
    %v7446 = vsel %vm64, %v7428, 0
    %7448 = vmatprep.subr.bf16.mxu0 0
    %7449 = vmatpush1.bf16.msra.mxu0 %v7441
    %7450 = vmatprep.subr.bf16.mxu0 0
    %7451 = vmatpush1.bf16.msra.mxu0 %v7442
    %7452 = vmatprep.subr.bf16.mxu0 0
    %7453 = vmatpush1.bf16.msra.mxu0 0
    %7454 = vmatprep.subr.bf16.mxu0 0
    %7455 = vmatpush1.bf16.msra.mxu0 0
    %7456 = vmatprep.subr.bf16.mxu0 0
    %7457 = vmatpush1.bf16.msra.mxu0 0
    %7458 = vmatprep.subr.bf16.mxu0 0
    %7459 = vmatpush1.bf16.msra.mxu0 0
    %7460 = vmatprep.subr.bf16.mxu0 0
    %7461 = vmatpush1.bf16.msra.mxu0 0
    %7462 = vmatprep.subr.bf16.mxu0 0
    %7463 = vmatpush1.bf16.msra.mxu0 0
    %7464 = vmatprep.subr.bf16.mxu0 0
    %7465 = vmatpush1.bf16.msra.mxu0 0
    %7466 = vmatprep.subr.bf16.mxu0 0
    %7467 = vmatpush1.bf16.msra.mxu0 0
    %7468 = vmatprep.subr.bf16.mxu0 0
    %7469 = vmatpush1.bf16.msra.mxu0 0
    %7470 = vmatprep.subr.bf16.mxu0 0
    %7471 = vmatpush1.bf16.msra.mxu0 0
    %7472 = vmatprep.subr.bf16.mxu0 0
    %7473 = vmatpush1.bf16.msra.mxu0 0
    %7474 = vmatprep.subr.bf16.mxu0 0
    %7475 = vmatpush1.bf16.msra.mxu0 0
    %7476 = vmatprep.subr.bf16.mxu0 0
    %7477 = vmatpush1.bf16.msra.mxu0 0
    %7478 = vmatprep.subr.bf16.mxu0 0
    %7479 = vmatpush1.bf16.msra.mxu0 0
    %7480 = vmatprep.mubr.bf16.mxu0 0
    %7481 = vmatmul.mubr.bf16.gmra.mrb[0].mxu0 %v7446
    %v7482 = vpop.f32.mrb[0].mxu0
    %v7483 = vadd.f32 0.0, %v7482
    %v7484 = vpop.f32.mrb[0].mxu0
    %v7485 = vpop.f32.mrb[0].mxu0
    %v7486 = vpop.f32.mrb[0].mxu0
    %7487 = vdwg.mxu0
    %v7488 = vadd.f32 %v7406, %v7483
    %v7491 = vcombine.low %v7410, %v7414
    %v7493 = vunpack.c.l.s4 1983009808
    %v7494 = vunpack.c.0.s8 %v7493
    %v7495 = vlaneseq
    %v7496 = vshrl.u32 %v7495, 7
    %v7497 = vsub.s32 %v7494, %v7496
    %v7498 = vrot.slane %v7491, %v7497
    %v7500 = vpack.c.bf16 %v7498, %v7498
    %v7501 = vld [vmem:[%s16 + $0x50] sm:$0xf]
    %v7502 = vld [vmem:[%s16 + $0x54] sm:$0xf]
    %v7503 = vld [vmem:[%s16 + $0x58] sm:$0xf]
    %v7504 = vld [vmem:[%s16 + $0x5c] sm:$0xf]
    %v7509 = vunpack.c.l.b16 %v7501
    %v7510 = vunpack.c.l.b16 %v7502
    %v7511 = vunpack.c.l.b16 %v7503
    %v7512 = vunpack.c.l.b16 %v7504
    %v7513 = vpack.c.b16 %v7510, %v7509
    %v7514 = vpack.c.b16 %v7512, %v7511
    %v7518 = vsel %vm64, %v7500, 0
    %7520 = vmatprep.subr.bf16.mxu0 0
    %7521 = vmatpush1.bf16.msra.mxu0 %v7513
    %7522 = vmatprep.subr.bf16.mxu0 0
    %7523 = vmatpush1.bf16.msra.mxu0 %v7514
    %7524 = vmatprep.subr.bf16.mxu0 0
    %7525 = vmatpush1.bf16.msra.mxu0 0
    %7526 = vmatprep.subr.bf16.mxu0 0
    %7527 = vmatpush1.bf16.msra.mxu0 0
    %7528 = vmatprep.subr.bf16.mxu0 0
    %7529 = vmatpush1.bf16.msra.mxu0 0
    %7530 = vmatprep.subr.bf16.mxu0 0
    %7531 = vmatpush1.bf16.msra.mxu0 0
    %7532 = vmatprep.subr.bf16.mxu0 0
    %7533 = vmatpush1.bf16.msra.mxu0 0
    %7534 = vmatprep.subr.bf16.mxu0 0
    %7535 = vmatpush1.bf16.msra.mxu0 0
    %7536 = vmatprep.subr.bf16.mxu0 0
    %7537 = vmatpush1.bf16.msra.mxu0 0
    %7538 = vmatprep.subr.bf16.mxu0 0
    %7539 = vmatpush1.bf16.msra.mxu0 0
    %7540 = vmatprep.subr.bf16.mxu0 0
    %7541 = vmatpush1.bf16.msra.mxu0 0
    %7542 = vmatprep.subr.bf16.mxu0 0
    %7543 = vmatpush1.bf16.msra.mxu0 0
    %7544 = vmatprep.subr.bf16.mxu0 0
    %7545 = vmatpush1.bf16.msra.mxu0 0
    %7546 = vmatprep.subr.bf16.mxu0 0
    %7547 = vmatpush1.bf16.msra.mxu0 0
    %7548 = vmatprep.subr.bf16.mxu0 0
    %7549 = vmatpush1.bf16.msra.mxu0 0
    %7550 = vmatprep.subr.bf16.mxu0 0
    %7551 = vmatpush1.bf16.msra.mxu0 0
    %7552 = vmatprep.mubr.bf16.mxu0 0
    %7553 = vmatmul.mubr.bf16.gmra.mrb[0].mxu0 %v7518
    %v7554 = vpop.f32.mrb[0].mxu0
    %v7555 = vadd.f32 0.0, %v7554
    %v7556 = vpop.f32.mrb[0].mxu0
    %v7557 = vpop.f32.mrb[0].mxu0
    %v7558 = vpop.f32.mrb[0].mxu0
    %7559 = vdwg.mxu0
    %v7560 = vadd.f32 %v7488, %v7555
    %v7562 = vcombine.low %v7412, %v7416
    %v7564 = vunpack.c.l.s4 1983009808
    %v7565 = vunpack.c.0.s8 %v7564
    %v7566 = vlaneseq
    %v7567 = vshrl.u32 %v7566, 7
    %v7568 = vsub.s32 %v7565, %v7567
    %v7569 = vrot.slane %v7562, %v7568
    %v7571 = vpack.c.bf16 %v7569, %v7569
    %v7572 = vld [vmem:[%s16 + $0x80] sm:$0xf]
    %v7573 = vld [vmem:[%s16 + $0x84] sm:$0xf]
    %v7574 = vld [vmem:[%s16 + $0x88] sm:$0xf]
    %v7575 = vld [vmem:[%s16 + $0x8c] sm:$0xf]
    %v7580 = vunpack.c.l.b16 %v7572
    %v7581 = vunpack.c.l.b16 %v7573
    %v7582 = vunpack.c.l.b16 %v7574
    %v7583 = vunpack.c.l.b16 %v7575
    %v7584 = vpack.c.b16 %v7581, %v7580
    %v7585 = vpack.c.b16 %v7583, %v7582
    %v7589 = vsel %vm64, %v7571, 0
    %7591 = vmatprep.subr.bf16.mxu0 0
    %7592 = vmatpush1.bf16.msra.mxu0 %v7584
    %7593 = vmatprep.subr.bf16.mxu0 0
    %7594 = vmatpush1.bf16.msra.mxu0 %v7585
    %7595 = vmatprep.subr.bf16.mxu0 0
    %7596 = vmatpush1.bf16.msra.mxu0 0
    %7597 = vmatprep.subr.bf16.mxu0 0
    %7598 = vmatpush1.bf16.msra.mxu0 0
    %7599 = vmatprep.subr.bf16.mxu0 0
    %7600 = vmatpush1.bf16.msra.mxu0 0
    %7601 = vmatprep.subr.bf16.mxu0 0
    %7602 = vmatpush1.bf16.msra.mxu0 0
    %7603 = vmatprep.subr.bf16.mxu0 0
    %7604 = vmatpush1.bf16.msra.mxu0 0
    %7605 = vmatprep.subr.bf16.mxu0 0
    %7606 = vmatpush1.bf16.msra.mxu0 0
    %7607 = vmatprep.subr.bf16.mxu0 0
    %7608 = vmatpush1.bf16.msra.mxu0 0
    %7609 = vmatprep.subr.bf16.mxu0 0
    %7610 = vmatpush1.bf16.msra.mxu0 0
    %7611 = vmatprep.subr.bf16.mxu0 0
    %7612 = vmatpush1.bf16.msra.mxu0 0
    %7613 = vmatprep.subr.bf16.mxu0 0
    %7614 = vmatpush1.bf16.msra.mxu0 0
    %7615 = vmatprep.subr.bf16.mxu0 0
    %7616 = vmatpush1.bf16.msra.mxu0 0
    %7617 = vmatprep.subr.bf16.mxu0 0
    %7618 = vmatpush1.bf16.msra.mxu0 0
    %7619 = vmatprep.subr.bf16.mxu0 0
    %7620 = vmatpush1.bf16.msra.mxu0 0
    %7621 = vmatprep.subr.bf16.mxu0 0
    %7622 = vmatpush1.bf16.msra.mxu0 0
    %7623 = vmatprep.mubr.bf16.mxu0 0
    %7624 = vmatmul.mubr.bf16.gmra.mrb[0].mxu0 %v7589
    %v7625 = vpop.f32.mrb[0].mxu0
    %v7626 = vadd.f32 0.0, %v7625
    %v7627 = vpop.f32.mrb[0].mxu0
    %v7628 = vpop.f32.mrb[0].mxu0
    %v7629 = vpop.f32.mrb[0].mxu0
    %7630 = vdwg.mxu0
    %v7631 = vadd.f32 %v7560, %v7626
    %v7632 = vmax.f32 %v7631, 0.0
    %v7633 = vadd.f32 %v7632, 1.5
    %7634 = vst.msk [vmem:[#allocation6] sm:$0xf] %vm6886, %v7633
    // Predicated region
    $region78: #{model_forward.1} parent=1 // pred_check
      _
    $region79: #{model_forward.1} parent=1 // pred_check_branch
      %7636 = sbr.rel (0) target = $region81
    $region80: #{model_forward.1} parent=1 // pred_region
      %s7638 = ssub.s32 64, 64
      %7639 = vsyncadd [#allocation7], %s7638
      %s7641 = sshll.u32 [#allocation6], 4
      %s7642 = int_to_ptr.vmem [resolvable:$true] %s7641
      %7644 = dma.vmem_to_hbm [thread:$0]  %s7642, 64, %s19, [#allocation7]
    $region81: #{model_forward.1} parent=1 // pred_fallthru
      _
    // Predicated region
    $region82: #{model_forward.1} parent=1 // pred_check
      _
    $region83: #{model_forward.1} parent=1 // pred_check_branch
      %7646 = sbr.rel (0) target = $region85
    $region84: #{model_forward.1} parent=1 // pred_region
      %7647 = dma.done [#allocation7], 64
    $region85: #{model_forward.1} parent=1 // pred_fallthru
      _
    %7648 = vsyncpa [#allocation7], 1

</llo_original>
